<compile_context>
chip_gen: v7x
topology: tpu7x:2x2x1
jax: 0.10.0
libtpu: 0.0.40
codegen_flags: <defaults>
</compile_context>

<pallas_src>
import jax
import jax.numpy as jnp
from jax.experimental import pallas as pl
from jax.experimental.pallas import tpu as pltpu


_COMPILER_PARAMS = pltpu.CompilerParams(
    dimension_semantics=("arbitrary",),
    vmem_limit_bytes=32 * 1024 * 1024,
)


def _full_spec(shape):
    """BlockSpec covering the whole array as a single block."""
    shape = tuple(int(d) for d in shape)
    return pl.BlockSpec(shape, lambda i, _s=shape: (0,) * len(_s))


def _bytes(*arrays):
    return int(sum(a.size * a.dtype.itemsize for a in arrays))


# ----------------------------------------------------------------------------
# The single fused kernel: CSV branch + image branch + fusion head + softmax.
# ----------------------------------------------------------------------------
def make_fused_kernel(B):
    P = 256  # pooled positions per image (16 x 16)

    def kernel(xcsv_ref, pat_ref,
               w1_ref, b1_ref, s1_ref, t1_ref,
               w2_ref, b2_ref, s2_ref, t2_ref,
               w3_ref, b3_ref,
               cw_ref, cb_ref, cs_ref, ct_ref,
               wimg_ref, bimg_ref,
               wfa_ref, wfb_ref, bf1_ref,
               w2f_ref, b2f_ref, w3f_ref, b3f_ref,
               o_ref):
        f32 = jnp.float32
        bf16 = jnp.bfloat16

        # ---- CSV branch: (Linear -> BN -> ReLU) x2, Linear -> ReLU -------------
        x = xcsv_ref[...].astype(bf16)
        h = jnp.dot(x, w1_ref[...], preferred_element_type=f32) + b1_ref[...]
        h = jnp.maximum(h * s1_ref[...] + t1_ref[...], 0.0)
        h = jnp.dot(h.astype(bf16), w2_ref[...], preferred_element_type=f32) + b2_ref[...]
        h = jnp.maximum(h * s2_ref[...] + t2_ref[...], 0.0)
        hc = jnp.dot(h.astype(bf16), w3_ref[...], preferred_element_type=f32) + b3_ref[...]
        hc = jnp.maximum(hc, 0.0)                       # [B, 100]; dropout = identity

        # ---- Image branch: conv3x3(pad1) -> ReLU -> BN -> maxpool 2x2 ----------
        # Transposed orientation: rows = out channel, lanes = (batch, pooled pos).
        wk = cw_ref[...]                                # [18, 9] bf16
        pooled_t = None
        for tap in range(4):                            # the 4 taps of the 2x2 pool
            c = jnp.dot(wk, pat_ref[tap], preferred_element_type=f32)   # [18, B*256]
            y = jnp.maximum(c + cb_ref[...], 0.0) * cs_ref[...] + ct_ref[...]
            pooled_t = y if pooled_t is None else jnp.maximum(pooled_t, y)

        # img1_fc1 without any reshape: rows -> (batch, channel), MXU contraction
        # over the 256 pooled positions, then sum the channel-diagonal blocks.
        parts = [pooled_t[:, b * P:(b + 1) * P] for b in range(B)]       # [18, 256] each
        pall = jnp.concatenate(parts, axis=0) if B > 1 else parts[0]     # [B*18, 256]
        r = jnp.dot(pall.astype(bf16), wimg_ref[...],
                    preferred_element_type=f32)                          # [B*18, 1800]
        hi_rows = []
        for b in range(B):
            acc = r[b * 18:b * 18 + 1, 0:100]
            for oc in range(1, 18):
                acc = acc + r[b * 18 + oc:b * 18 + oc + 1, oc * 100:(oc + 1) * 100]
            hi_rows.append(acc)
        hi = jnp.concatenate(hi_rows, axis=0) if B > 1 else hi_rows[0]   # [B, 100]
        hi = jnp.maximum(hi + bimg_ref[...], 0.0)        # img1_fc1 bias + ReLU

        # ---- Fusion head: fc1 (split weight, concat-free) -> fc2 -> fc3 -> softmax
        h = (jnp.dot(hc.astype(bf16), wfa_ref[...], preferred_element_type=f32)
             + jnp.dot(hi.astype(bf16), wfb_ref[...], preferred_element_type=f32)
             + bf1_ref[...])
        h = jnp.maximum(h, 0.0)
        h = jnp.dot(h.astype(bf16), w2f_ref[...], preferred_element_type=f32) + b2f_ref[...]
        h = jnp.maximum(h, 0.0)
        z = jnp.dot(h.astype(bf16), w3f_ref[...], preferred_element_type=f32) + b3f_ref[...]
        z = z - jnp.max(z, axis=-1, keepdims=True)
        e = jnp.exp(z)
        o_ref[...] = e * pl.reciprocal(jnp.sum(e, axis=-1, keepdims=True), approx=True)

    return kernel


def fused_forward(params, x_csv, patches):
    p = params
    B = x_csv.shape[0]
    args = (x_csv, patches,
            p["csv_w1"], p["csv_b1"], p["bn1_scale"], p["bn1_shift"],
            p["csv_w2"], p["csv_b2"], p["bn2_scale"], p["bn2_shift"],
            p["csv_w3"], p["csv_b3"],
            p["conv_wk"], p["conv_b"], p["bn_img_scale"], p["bn_img_shift"],
            p["img_w1"], p["img_b1"],
            p["fc1_wa"], p["fc1_wb"], p["fc1_b"],
            p["fc2_w"], p["fc2_b"], p["fc3_w"], p["fc3_b"])
    nout = p["fc3_w"].shape[1]
    mm = (p["csv_w1"].shape[0] * 2000 + 2000 * 600 + 600 * 100
          + 100 * 600 + 100 * 600 + 600 * 1200 + 1200 * nout)
    flops = 2 * (B * mm + 4 * 18 * 9 * B * 256 + B * 18 * 256 * 1800)
    return pl.pallas_call(
        make_fused_kernel(B),
        out_shape=jax.ShapeDtypeStruct((B, nout), jnp.float32),
        grid=(1,),
        in_specs=[_full_spec(a.shape) for a in args],
        out_specs=_full_spec((B, nout)),
        compiler_params=_COMPILER_PARAMS,
        cost_estimate=pl.CostEstimate(flops=int(flops), transcendentals=B * nout,
                                      bytes_accessed=_bytes(*args) + B * nout * 4),
    )(*args)


# ----------------------------------------------------------------------------
# Tiny XLA glue: pack the 2x2-pool / 3x3-conv taps into [4, 9, B*256] bf16
# (lane-dense minor dim, ~65 KB padded in HBM instead of ~2 MB before).
# patches[tap, kh*3+kw, b*256 + pi*16 + pj] = pad(img)[b, 2*pi+ti+kh, 2*pj+tj+kw]
# ----------------------------------------------------------------------------
def build_pool_patches(x_img1):
    B = x_img1.shape[0]
    xp = jnp.pad(x_img1[..., 0], ((0, 0), (1, 1), (1, 1)))            # [B, 34, 34]
    taps = []
    for ti in range(2):
        for tj in range(2):
            rows = []
            for kh in range(3):
                for kw in range(3):
                    sl = xp[:, ti + kh:ti + kh + 31:2, tj + kw:tj + kw + 31:2]  # [B,16,16]
                    rows.append(sl.reshape(B * 256))
            taps.append(jnp.stack(rows, axis=0))                      # [9, B*256]
    return jnp.stack(taps, axis=0).astype(jnp.bfloat16)               # [4, 9, B*256]


# ----------------------------------------------------------------------------
# Parameter construction (deterministic, in-script).  MXU weights in bf16,
# biases / folded BN in f32.
# ----------------------------------------------------------------------------
def dense_init(key, fan_in, fan_out):
    kw, kb = jax.random.split(key)
    w = jax.random.normal(kw, (fan_in, fan_out), jnp.float32) * 0.02
    b = (jax.random.normal(kb, (fan_out,), jnp.float32) * 0.01).reshape(1, fan_out)
    return w, b


def bn_fold_init(key, n, eps=1e-5):
    k1, k2, k3, k4 = jax.random.split(key, 4)
    gamma = 1.0 + 0.1 * jax.random.normal(k1, (n,), jnp.float32)
    beta = 0.1 * jax.random.normal(k2, (n,), jnp.float32)
    mean = 0.05 * jax.random.normal(k3, (n,), jnp.float32)
    var = 1.0 + 0.1 * jnp.abs(jax.random.normal(k4, (n,), jnp.float32))
    scale = gamma / jnp.sqrt(var + eps)
    shift = beta - mean * scale
    return scale, shift


def make_params(num_csv_features, key):
    ks = jax.random.split(key, 12)
    p = {}

    w, b = dense_init(ks[0], num_csv_features, 2000)
    p["csv_w1"], p["csv_b1"] = w.astype(jnp.bfloat16), b
    s, t = bn_fold_init(ks[1], 2000)
    p["bn1_scale"], p["bn1_shift"] = s.reshape(1, 2000), t.reshape(1, 2000)

    w, b = dense_init(ks[2], 2000, 600)
    p["csv_w2"], p["csv_b2"] = w.astype(jnp.bfloat16), b
    s, t = bn_fold_init(ks[3], 600)
    p["bn2_scale"], p["bn2_shift"] = s.reshape(1, 600), t.reshape(1, 600)

    w, b = dense_init(ks[4], 600, 100)
    p["csv_w3"], p["csv_b3"] = w.astype(jnp.bfloat16), b

    # Conv2d(1 -> 18, 3x3, pad 1): torch weight [oc, ic, kh, kw] -> [oc, kh*3+kw]
    kcw, kcb = jax.random.split(ks[5])
    conv_w = jax.random.normal(kcw, (18, 1, 3, 3), jnp.float32) * 0.05
    p["conv_wk"] = conv_w.reshape(18, 9).astype(jnp.bfloat16)          # [18, 9]
    p["conv_b"] = (jax.random.normal(kcb, (18,), jnp.float32) * 0.01).reshape(18, 1)
    s, t = bn_fold_init(ks[6], 18)
    p["bn_img_scale"], p["bn_img_shift"] = s.reshape(18, 1), t.reshape(18, 1)

    # img1_fc1: torch rows are the NCHW flatten index oc*256 + p.  Pre-permute
    # once to [p, oc*100 + n] so the in-kernel contraction over positions plus
    # the channel-diagonal sum reproduces flat @ W exactly.
    w, b = dense_init(ks[7], 18 * 16 * 16, 100)
    p["img_w1"] = (w.reshape(18, 256, 100).transpose(1, 0, 2)
                    .reshape(256, 18 * 100).astype(jnp.bfloat16))      # [256, 1800]
    p["img_b1"] = b

    # fc1 split: rows 0..99 multiply the csv features, rows 100..199 the image
    # features (matches torch.cat([x_csv, x_img1], dim=1) order).
    w, b = dense_init(ks[8], 200, 600)
    p["fc1_wa"] = w[:100].astype(jnp.bfloat16)
    p["fc1_wb"] = w[100:].astype(jnp.bfloat16)
    p["fc1_b"] = b

    w, b = dense_init(ks[9], 600, 1200)
    p["fc2_w"], p["fc2_b"] = w.astype(jnp.bfloat16), b
    w, b = dense_init(ks[10], 1200, 12)
    p["fc3_w"], p["fc3_b"] = w.astype(jnp.bfloat16), b
    return p


# ----------------------------------------------------------------------------
# Forward pass (mirrors ModelCSVIMG1.forward)
# ----------------------------------------------------------------------------
def model_forward(params, x_csv, x_img1):
    patches = build_pool_patches(x_img1)          # [4, 9, B*256] bf16 (tiny XLA glue)
    return fused_forward(params, x_csv, patches)  # one fused Pallas kernel


if __name__ == "__main__":
    B = 2
    NUM_CSV = 32
    key = jax.random.PRNGKey(0)
    k_params, k_csv, k_img = jax.random.split(key, 3)

    params = make_params(NUM_CSV, k_params)
    x_csv = jax.random.normal(k_csv, (B, NUM_CSV), jnp.float32)
    x_img1 = jax.random.normal(k_img, (B, 32, 32, 1), jnp.float32)   # NHWC

    fwd = jax.jit(model_forward)
    out = jax.block_until_ready(fwd(params, x_csv, x_img1))

    assert out.shape == (B, 12)
    assert bool(jnp.all(jnp.isfinite(out)))
    assert bool(jnp.allclose(jnp.sum(out, axis=1), 1.0, atol=1e-2))
    print("KERNEL_OK")
</pallas_src>

<mosaic_0001>
module attributes {stable_mosaic.version = 11 : i64} {
  func.func @kernel(%arg0: i32, %arg1: memref<2x32xf32, #tpu.memory_space<vmem>>, %arg2: memref<4x9x512xbf16, #tpu.memory_space<vmem>>, %arg3: memref<32x2000xbf16, #tpu.memory_space<vmem>>, %arg4: memref<1x2000xf32, #tpu.memory_space<vmem>>, %arg5: memref<1x2000xf32, #tpu.memory_space<vmem>>, %arg6: memref<1x2000xf32, #tpu.memory_space<vmem>>, %arg7: memref<2000x600xbf16, #tpu.memory_space<vmem>>, %arg8: memref<1x600xf32, #tpu.memory_space<vmem>>, %arg9: memref<1x600xf32, #tpu.memory_space<vmem>>, %arg10: memref<1x600xf32, #tpu.memory_space<vmem>>, %arg11: memref<600x100xbf16, #tpu.memory_space<vmem>>, %arg12: memref<1x100xf32, #tpu.memory_space<vmem>>, %arg13: memref<18x9xbf16, #tpu.memory_space<vmem>>, %arg14: memref<18x1xf32, #tpu.memory_space<vmem>>, %arg15: memref<18x1xf32, #tpu.memory_space<vmem>>, %arg16: memref<18x1xf32, #tpu.memory_space<vmem>>, %arg17: memref<256x1800xbf16, #tpu.memory_space<vmem>>, %arg18: memref<1x100xf32, #tpu.memory_space<vmem>>, %arg19: memref<100x600xbf16, #tpu.memory_space<vmem>>, %arg20: memref<100x600xbf16, #tpu.memory_space<vmem>>, %arg21: memref<1x600xf32, #tpu.memory_space<vmem>>, %arg22: memref<600x1200xbf16, #tpu.memory_space<vmem>>, %arg23: memref<1x1200xf32, #tpu.memory_space<vmem>>, %arg24: memref<1200x12xbf16, #tpu.memory_space<vmem>>, %arg25: memref<1x12xf32, #tpu.memory_space<vmem>>, %arg26: memref<2x12xf32, #tpu.memory_space<vmem>>) attributes {dimension_semantics = [#tpu.dimension_semantics<arbitrary>], iteration_bounds = array<i64: 1>, scalar_prefetch = 0 : i64, scratch_operands = 0 : i64, tpu.core_type = #tpu.core_type<tc>, window_params = [{pipeline_mode = #tpu.pipeline_mode<synchronous>, transform_indices = @transform_0, window_bounds = array<i64: 2, 32>}, {pipeline_mode = #tpu.pipeline_mode<synchronous>, transform_indices = @transform_1, window_bounds = array<i64: 4, 9, 512>}, {pipeline_mode = #tpu.pipeline_mode<synchronous>, transform_indices = @transform_2, window_bounds = array<i64: 32, 2000>}, {pipeline_mode = #tpu.pipeline_mode<synchronous>, transform_indices = @transform_3, window_bounds = array<i64: 1, 2000>}, {pipeline_mode = #tpu.pipeline_mode<synchronous>, transform_indices = @transform_4, window_bounds = array<i64: 1, 2000>}, {pipeline_mode = #tpu.pipeline_mode<synchronous>, transform_indices = @transform_5, window_bounds = array<i64: 1, 2000>}, {pipeline_mode = #tpu.pipeline_mode<synchronous>, transform_indices = @transform_6, window_bounds = array<i64: 2000, 600>}, {pipeline_mode = #tpu.pipeline_mode<synchronous>, transform_indices = @transform_7, window_bounds = array<i64: 1, 600>}, {pipeline_mode = #tpu.pipeline_mode<synchronous>, transform_indices = @transform_8, window_bounds = array<i64: 1, 600>}, {pipeline_mode = #tpu.pipeline_mode<synchronous>, transform_indices = @transform_9, window_bounds = array<i64: 1, 600>}, {pipeline_mode = #tpu.pipeline_mode<synchronous>, transform_indices = @transform_10, window_bounds = array<i64: 600, 100>}, {pipeline_mode = #tpu.pipeline_mode<synchronous>, transform_indices = @transform_11, window_bounds = array<i64: 1, 100>}, {pipeline_mode = #tpu.pipeline_mode<synchronous>, transform_indices = @transform_12, window_bounds = array<i64: 18, 9>}, {pipeline_mode = #tpu.pipeline_mode<synchronous>, transform_indices = @transform_13, window_bounds = array<i64: 18, 1>}, {pipeline_mode = #tpu.pipeline_mode<synchronous>, transform_indices = @transform_14, window_bounds = array<i64: 18, 1>}, {pipeline_mode = #tpu.pipeline_mode<synchronous>, transform_indices = @transform_15, window_bounds = array<i64: 18, 1>}, {pipeline_mode = #tpu.pipeline_mode<synchronous>, transform_indices = @transform_16, window_bounds = array<i64: 256, 1800>}, {pipeline_mode = #tpu.pipeline_mode<synchronous>, transform_indices = @transform_17, window_bounds = array<i64: 1, 100>}, {pipeline_mode = #tpu.pipeline_mode<synchronous>, transform_indices = @transform_18, window_bounds = array<i64: 100, 600>}, {pipeline_mode = #tpu.pipeline_mode<synchronous>, transform_indices = @transform_19, window_bounds = array<i64: 100, 600>}, {pipeline_mode = #tpu.pipeline_mode<synchronous>, transform_indices = @transform_20, window_bounds = array<i64: 1, 600>}, {pipeline_mode = #tpu.pipeline_mode<synchronous>, transform_indices = @transform_21, window_bounds = array<i64: 600, 1200>}, {pipeline_mode = #tpu.pipeline_mode<synchronous>, transform_indices = @transform_22, window_bounds = array<i64: 1, 1200>}, {pipeline_mode = #tpu.pipeline_mode<synchronous>, transform_indices = @transform_23, window_bounds = array<i64: 1200, 12>}, {pipeline_mode = #tpu.pipeline_mode<synchronous>, transform_indices = @transform_24, window_bounds = array<i64: 1, 12>}, {pipeline_mode = #tpu.pipeline_mode<synchronous>, transform_indices = @transform_25, window_bounds = array<i64: 2, 12>}]} {
    %c0 = arith.constant 0 : index
    %c0_0 = arith.constant 0 : index
    %0 = vector.load %arg1[%c0, %c0_0] : memref<2x32xf32, #tpu.memory_space<vmem>>, vector<2x32xf32>
    %1 = arith.truncf %0 : vector<2x32xf32> to vector<2x32xbf16>
    %c0_1 = arith.constant 0 : index
    %c0_2 = arith.constant 0 : index
    %2 = vector.load %arg3[%c0_1, %c0_2] : memref<32x2000xbf16, #tpu.memory_space<vmem>>, vector<32x2000xbf16>
    %cst = arith.constant dense<0.000000e+00> : vector<2x2000xf32>
    %3 = tpu.matmul %1, %2, %cst {dimension_numbers = #tpu.dot_dimension_numbers<[1], [0], [0], [1], [0, 0, 1, 1], [], []>} : vector<2x32xbf16>, vector<32x2000xbf16>, vector<2x2000xf32> -> vector<2x2000xf32>
    %c0_3 = arith.constant 0 : index
    %c0_4 = arith.constant 0 : index
    %4 = vector.load %arg4[%c0_3, %c0_4] : memref<1x2000xf32, #tpu.memory_space<vmem>>, vector<1x2000xf32>
    %5 = vector.broadcast %4 : vector<1x2000xf32> to vector<2x2000xf32>
    %6 = arith.addf %3, %5 : vector<2x2000xf32>
    %c0_5 = arith.constant 0 : index
    %c0_6 = arith.constant 0 : index
    %7 = vector.load %arg5[%c0_5, %c0_6] : memref<1x2000xf32, #tpu.memory_space<vmem>>, vector<1x2000xf32>
    %8 = vector.broadcast %7 : vector<1x2000xf32> to vector<2x2000xf32>
    %9 = arith.mulf %6, %8 : vector<2x2000xf32>
    %c0_7 = arith.constant 0 : index
    %c0_8 = arith.constant 0 : index
    %10 = vector.load %arg6[%c0_7, %c0_8] : memref<1x2000xf32, #tpu.memory_space<vmem>>, vector<1x2000xf32>
    %11 = vector.broadcast %10 : vector<1x2000xf32> to vector<2x2000xf32>
    %12 = arith.addf %9, %11 : vector<2x2000xf32>
    %cst_9 = arith.constant 0.000000e+00 : f32
    %13 = vector.broadcast %cst_9 : f32 to vector<2x2000xf32>
    %14 = arith.maximumf %12, %13 : vector<2x2000xf32>
    %15 = arith.truncf %14 : vector<2x2000xf32> to vector<2x2000xbf16>
    %c0_10 = arith.constant 0 : index
    %c0_11 = arith.constant 0 : index
    %16 = vector.load %arg7[%c0_10, %c0_11] : memref<2000x600xbf16, #tpu.memory_space<vmem>>, vector<2000x600xbf16>
    %cst_12 = arith.constant dense<0.000000e+00> : vector<2x600xf32>
    %17 = tpu.matmul %15, %16, %cst_12 {dimension_numbers = #tpu.dot_dimension_numbers<[1], [0], [0], [1], [0, 0, 1, 1], [], []>} : vector<2x2000xbf16>, vector<2000x600xbf16>, vector<2x600xf32> -> vector<2x600xf32>
    %c0_13 = arith.constant 0 : index
    %c0_14 = arith.constant 0 : index
    %18 = vector.load %arg8[%c0_13, %c0_14] : memref<1x600xf32, #tpu.memory_space<vmem>>, vector<1x600xf32>
    %19 = vector.broadcast %18 : vector<1x600xf32> to vector<2x600xf32>
    %20 = arith.addf %17, %19 : vector<2x600xf32>
    %c0_15 = arith.constant 0 : index
    %c0_16 = arith.constant 0 : index
    %21 = vector.load %arg9[%c0_15, %c0_16] : memref<1x600xf32, #tpu.memory_space<vmem>>, vector<1x600xf32>
    %22 = vector.broadcast %21 : vector<1x600xf32> to vector<2x600xf32>
    %23 = arith.mulf %20, %22 : vector<2x600xf32>
    %c0_17 = arith.constant 0 : index
    %c0_18 = arith.constant 0 : index
    %24 = vector.load %arg10[%c0_17, %c0_18] : memref<1x600xf32, #tpu.memory_space<vmem>>, vector<1x600xf32>
    %25 = vector.broadcast %24 : vector<1x600xf32> to vector<2x600xf32>
    %26 = arith.addf %23, %25 : vector<2x600xf32>
    %cst_19 = arith.constant 0.000000e+00 : f32
    %27 = vector.broadcast %cst_19 : f32 to vector<2x600xf32>
    %28 = arith.maximumf %26, %27 : vector<2x600xf32>
    %29 = arith.truncf %28 : vector<2x600xf32> to vector<2x600xbf16>
    %c0_20 = arith.constant 0 : index
    %c0_21 = arith.constant 0 : index
    %30 = vector.load %arg11[%c0_20, %c0_21] : memref<600x100xbf16, #tpu.memory_space<vmem>>, vector<600x100xbf16>
    %cst_22 = arith.constant dense<0.000000e+00> : vector<2x100xf32>
    %31 = tpu.matmul %29, %30, %cst_22 {dimension_numbers = #tpu.dot_dimension_numbers<[1], [0], [0], [1], [0, 0, 1, 1], [], []>} : vector<2x600xbf16>, vector<600x100xbf16>, vector<2x100xf32> -> vector<2x100xf32>
    %c0_23 = arith.constant 0 : index
    %c0_24 = arith.constant 0 : index
    %32 = vector.load %arg12[%c0_23, %c0_24] : memref<1x100xf32, #tpu.memory_space<vmem>>, vector<1x100xf32>
    %33 = vector.broadcast %32 : vector<1x100xf32> to vector<2x100xf32>
    %34 = arith.addf %31, %33 : vector<2x100xf32>
    %cst_25 = arith.constant 0.000000e+00 : f32
    %35 = vector.broadcast %cst_25 : f32 to vector<2x100xf32>
    %36 = arith.maximumf %34, %35 : vector<2x100xf32>
    %c0_26 = arith.constant 0 : index
    %c0_27 = arith.constant 0 : index
    %37 = vector.load %arg13[%c0_26, %c0_27] : memref<18x9xbf16, #tpu.memory_space<vmem>>, vector<18x9xbf16>
    %c0_28 = arith.constant 0 : index
    %c0_29 = arith.constant 0 : index
    %c0_30 = arith.constant 0 : index
    %38 = vector.load %arg2[%c0_28, %c0_29, %c0_30] : memref<4x9x512xbf16, #tpu.memory_space<vmem>>, vector<1x9x512xbf16>
    %39 = vector.shape_cast %38 : vector<1x9x512xbf16> to vector<9x512xbf16>
    %cst_31 = arith.constant dense<0.000000e+00> : vector<18x512xf32>
    %40 = tpu.matmul %37, %39, %cst_31 {dimension_numbers = #tpu.dot_dimension_numbers<[1], [0], [0], [1], [0, 0, 1, 1], [], []>} : vector<18x9xbf16>, vector<9x512xbf16>, vector<18x512xf32> -> vector<18x512xf32>
    %c0_32 = arith.constant 0 : index
    %c0_33 = arith.constant 0 : index
    %41 = vector.load %arg14[%c0_32, %c0_33] : memref<18x1xf32, #tpu.memory_space<vmem>>, vector<18x1xf32>
    %42 = vector.broadcast %41 : vector<18x1xf32> to vector<18x512xf32>
    %43 = arith.addf %40, %42 : vector<18x512xf32>
    %cst_34 = arith.constant 0.000000e+00 : f32
    %44 = vector.broadcast %cst_34 : f32 to vector<18x512xf32>
    %45 = arith.maximumf %43, %44 : vector<18x512xf32>
    %c0_35 = arith.constant 0 : index
    %c0_36 = arith.constant 0 : index
    %46 = vector.load %arg15[%c0_35, %c0_36] : memref<18x1xf32, #tpu.memory_space<vmem>>, vector<18x1xf32>
    %47 = vector.broadcast %46 : vector<18x1xf32> to vector<18x512xf32>
    %48 = arith.mulf %45, %47 : vector<18x512xf32>
    %c0_37 = arith.constant 0 : index
    %c0_38 = arith.constant 0 : index
    %49 = vector.load %arg16[%c0_37, %c0_38] : memref<18x1xf32, #tpu.memory_space<vmem>>, vector<18x1xf32>
    %50 = vector.broadcast %49 : vector<18x1xf32> to vector<18x512xf32>
    %51 = arith.addf %48, %50 : vector<18x512xf32>
    %c1 = arith.constant 1 : index
    %c0_39 = arith.constant 0 : index
    %c0_40 = arith.constant 0 : index
    %52 = vector.load %arg2[%c1, %c0_39, %c0_40] : memref<4x9x512xbf16, #tpu.memory_space<vmem>>, vector<1x9x512xbf16>
    %53 = vector.shape_cast %52 : vector<1x9x512xbf16> to vector<9x512xbf16>
    %cst_41 = arith.constant dense<0.000000e+00> : vector<18x512xf32>
    %54 = tpu.matmul %37, %53, %cst_41 {dimension_numbers = #tpu.dot_dimension_numbers<[1], [0], [0], [1], [0, 0, 1, 1], [], []>} : vector<18x9xbf16>, vector<9x512xbf16>, vector<18x512xf32> -> vector<18x512xf32>
    %c0_42 = arith.constant 0 : index
    %c0_43 = arith.constant 0 : index
    %55 = vector.load %arg14[%c0_42, %c0_43] : memref<18x1xf32, #tpu.memory_space<vmem>>, vector<18x1xf32>
    %56 = vector.broadcast %55 : vector<18x1xf32> to vector<18x512xf32>
    %57 = arith.addf %54, %56 : vector<18x512xf32>
    %cst_44 = arith.constant 0.000000e+00 : f32
    %58 = vector.broadcast %cst_44 : f32 to vector<18x512xf32>
    %59 = arith.maximumf %57, %58 : vector<18x512xf32>
    %c0_45 = arith.constant 0 : index
    %c0_46 = arith.constant 0 : index
    %60 = vector.load %arg15[%c0_45, %c0_46] : memref<18x1xf32, #tpu.memory_space<vmem>>, vector<18x1xf32>
    %61 = vector.broadcast %60 : vector<18x1xf32> to vector<18x512xf32>
    %62 = arith.mulf %59, %61 : vector<18x512xf32>
    %c0_47 = arith.constant 0 : index
    %c0_48 = arith.constant 0 : index
    %63 = vector.load %arg16[%c0_47, %c0_48] : memref<18x1xf32, #tpu.memory_space<vmem>>, vector<18x1xf32>
    %64 = vector.broadcast %63 : vector<18x1xf32> to vector<18x512xf32>
    %65 = arith.addf %62, %64 : vector<18x512xf32>
    %66 = arith.maximumf %51, %65 : vector<18x512xf32>
    %c2 = arith.constant 2 : index
    %c0_49 = arith.constant 0 : index
    %c0_50 = arith.constant 0 : index
    %67 = vector.load %arg2[%c2, %c0_49, %c0_50] : memref<4x9x512xbf16, #tpu.memory_space<vmem>>, vector<1x9x512xbf16>
    %68 = vector.shape_cast %67 : vector<1x9x512xbf16> to vector<9x512xbf16>
    %cst_51 = arith.constant dense<0.000000e+00> : vector<18x512xf32>
    %69 = tpu.matmul %37, %68, %cst_51 {dimension_numbers = #tpu.dot_dimension_numbers<[1], [0], [0], [1], [0, 0, 1, 1], [], []>} : vector<18x9xbf16>, vector<9x512xbf16>, vector<18x512xf32> -> vector<18x512xf32>
    %c0_52 = arith.constant 0 : index
    %c0_53 = arith.constant 0 : index
    %70 = vector.load %arg14[%c0_52, %c0_53] : memref<18x1xf32, #tpu.memory_space<vmem>>, vector<18x1xf32>
    %71 = vector.broadcast %70 : vector<18x1xf32> to vector<18x512xf32>
    %72 = arith.addf %69, %71 : vector<18x512xf32>
    %cst_54 = arith.constant 0.000000e+00 : f32
    %73 = vector.broadcast %cst_54 : f32 to vector<18x512xf32>
    %74 = arith.maximumf %72, %73 : vector<18x512xf32>
    %c0_55 = arith.constant 0 : index
    %c0_56 = arith.constant 0 : index
    %75 = vector.load %arg15[%c0_55, %c0_56] : memref<18x1xf32, #tpu.memory_space<vmem>>, vector<18x1xf32>
    %76 = vector.broadcast %75 : vector<18x1xf32> to vector<18x512xf32>
    %77 = arith.mulf %74, %76 : vector<18x512xf32>
    %c0_57 = arith.constant 0 : index
    %c0_58 = arith.constant 0 : index
    %78 = vector.load %arg16[%c0_57, %c0_58] : memref<18x1xf32, #tpu.memory_space<vmem>>, vector<18x1xf32>
    %79 = vector.broadcast %78 : vector<18x1xf32> to vector<18x512xf32>
    %80 = arith.addf %77, %79 : vector<18x512xf32>
    %81 = arith.maximumf %66, %80 : vector<18x512xf32>
    %c3 = arith.constant 3 : index
    %c0_59 = arith.constant 0 : index
    %c0_60 = arith.constant 0 : index
    %82 = vector.load %arg2[%c3, %c0_59, %c0_60] : memref<4x9x512xbf16, #tpu.memory_space<vmem>>, vector<1x9x512xbf16>
    %83 = vector.shape_cast %82 : vector<1x9x512xbf16> to vector<9x512xbf16>
    %cst_61 = arith.constant dense<0.000000e+00> : vector<18x512xf32>
    %84 = tpu.matmul %37, %83, %cst_61 {dimension_numbers = #tpu.dot_dimension_numbers<[1], [0], [0], [1], [0, 0, 1, 1], [], []>} : vector<18x9xbf16>, vector<9x512xbf16>, vector<18x512xf32> -> vector<18x512xf32>
    %c0_62 = arith.constant 0 : index
    %c0_63 = arith.constant 0 : index
    %85 = vector.load %arg14[%c0_62, %c0_63] : memref<18x1xf32, #tpu.memory_space<vmem>>, vector<18x1xf32>
    %86 = vector.broadcast %85 : vector<18x1xf32> to vector<18x512xf32>
    %87 = arith.addf %84, %86 : vector<18x512xf32>
    %cst_64 = arith.constant 0.000000e+00 : f32
    %88 = vector.broadcast %cst_64 : f32 to vector<18x512xf32>
    %89 = arith.maximumf %87, %88 : vector<18x512xf32>
    %c0_65 = arith.constant 0 : index
    %c0_66 = arith.constant 0 : index
    %90 = vector.load %arg15[%c0_65, %c0_66] : memref<18x1xf32, #tpu.memory_space<vmem>>, vector<18x1xf32>
    %91 = vector.broadcast %90 : vector<18x1xf32> to vector<18x512xf32>
    %92 = arith.mulf %89, %91 : vector<18x512xf32>
    %c0_67 = arith.constant 0 : index
    %c0_68 = arith.constant 0 : index
    %93 = vector.load %arg16[%c0_67, %c0_68] : memref<18x1xf32, #tpu.memory_space<vmem>>, vector<18x1xf32>
    %94 = vector.broadcast %93 : vector<18x1xf32> to vector<18x512xf32>
    %95 = arith.addf %92, %94 : vector<18x512xf32>
    %96 = arith.maximumf %81, %95 : vector<18x512xf32>
    %97 = vector.extract_strided_slice %96 {offsets = [0, 0], sizes = [18, 256], strides = [1, 1]} : vector<18x512xf32> to vector<18x256xf32>
    %98 = vector.extract_strided_slice %96 {offsets = [0, 256], sizes = [18, 256], strides = [1, 1]} : vector<18x512xf32> to vector<18x256xf32>
    %99 = tpu.concatenate %97, %98 in 0 : vector<18x256xf32>, vector<18x256xf32> -> vector<36x256xf32>
    %100 = arith.truncf %99 : vector<36x256xf32> to vector<36x256xbf16>
    %c0_69 = arith.constant 0 : index
    %c0_70 = arith.constant 0 : index
    %101 = vector.load %arg17[%c0_69, %c0_70] : memref<256x1800xbf16, #tpu.memory_space<vmem>>, vector<256x1800xbf16>
    %cst_71 = arith.constant dense<0.000000e+00> : vector<36x1800xf32>
    %102 = tpu.matmul %100, %101, %cst_71 {dimension_numbers = #tpu.dot_dimension_numbers<[1], [0], [0], [1], [0, 0, 1, 1], [], []>} : vector<36x256xbf16>, vector<256x1800xbf16>, vector<36x1800xf32> -> vector<36x1800xf32>
    %103 = vector.extract_strided_slice %102 {offsets = [0, 0], sizes = [1, 100], strides = [1, 1]} : vector<36x1800xf32> to vector<1x100xf32>
    %104 = vector.extract_strided_slice %102 {offsets = [1, 100], sizes = [1, 100], strides = [1, 1]} : vector<36x1800xf32> to vector<1x100xf32>
    %105 = arith.addf %103, %104 : vector<1x100xf32>
    %106 = vector.extract_strided_slice %102 {offsets = [2, 200], sizes = [1, 100], strides = [1, 1]} : vector<36x1800xf32> to vector<1x100xf32>
    %107 = arith.addf %105, %106 : vector<1x100xf32>
    %108 = vector.extract_strided_slice %102 {offsets = [3, 300], sizes = [1, 100], strides = [1, 1]} : vector<36x1800xf32> to vector<1x100xf32>
    %109 = arith.addf %107, %108 : vector<1x100xf32>
    %110 = vector.extract_strided_slice %102 {offsets = [4, 400], sizes = [1, 100], strides = [1, 1]} : vector<36x1800xf32> to vector<1x100xf32>
    %111 = arith.addf %109, %110 : vector<1x100xf32>
    %112 = vector.extract_strided_slice %102 {offsets = [5, 500], sizes = [1, 100], strides = [1, 1]} : vector<36x1800xf32> to vector<1x100xf32>
    %113 = arith.addf %111, %112 : vector<1x100xf32>
    %114 = vector.extract_strided_slice %102 {offsets = [6, 600], sizes = [1, 100], strides = [1, 1]} : vector<36x1800xf32> to vector<1x100xf32>
    %115 = arith.addf %113, %114 : vector<1x100xf32>
    %116 = vector.extract_strided_slice %102 {offsets = [7, 700], sizes = [1, 100], strides = [1, 1]} : vector<36x1800xf32> to vector<1x100xf32>
    %117 = arith.addf %115, %116 : vector<1x100xf32>
    %118 = vector.extract_strided_slice %102 {offsets = [8, 800], sizes = [1, 100], strides = [1, 1]} : vector<36x1800xf32> to vector<1x100xf32>
    %119 = arith.addf %117, %118 : vector<1x100xf32>
    %120 = vector.extract_strided_slice %102 {offsets = [9, 900], sizes = [1, 100], strides = [1, 1]} : vector<36x1800xf32> to vector<1x100xf32>
    %121 = arith.addf %119, %120 : vector<1x100xf32>
    %122 = vector.extract_strided_slice %102 {offsets = [10, 1000], sizes = [1, 100], strides = [1, 1]} : vector<36x1800xf32> to vector<1x100xf32>
    %123 = arith.addf %121, %122 : vector<1x100xf32>
    %124 = vector.extract_strided_slice %102 {offsets = [11, 1100], sizes = [1, 100], strides = [1, 1]} : vector<36x1800xf32> to vector<1x100xf32>
    %125 = arith.addf %123, %124 : vector<1x100xf32>
    %126 = vector.extract_strided_slice %102 {offsets = [12, 1200], sizes = [1, 100], strides = [1, 1]} : vector<36x1800xf32> to vector<1x100xf32>
    %127 = arith.addf %125, %126 : vector<1x100xf32>
    %128 = vector.extract_strided_slice %102 {offsets = [13, 1300], sizes = [1, 100], strides = [1, 1]} : vector<36x1800xf32> to vector<1x100xf32>
    %129 = arith.addf %127, %128 : vector<1x100xf32>
    %130 = vector.extract_strided_slice %102 {offsets = [14, 1400], sizes = [1, 100], strides = [1, 1]} : vector<36x1800xf32> to vector<1x100xf32>
    %131 = arith.addf %129, %130 : vector<1x100xf32>
    %132 = vector.extract_strided_slice %102 {offsets = [15, 1500], sizes = [1, 100], strides = [1, 1]} : vector<36x1800xf32> to vector<1x100xf32>
    %133 = arith.addf %131, %132 : vector<1x100xf32>
    %134 = vector.extract_strided_slice %102 {offsets = [16, 1600], sizes = [1, 100], strides = [1, 1]} : vector<36x1800xf32> to vector<1x100xf32>
    %135 = arith.addf %133, %134 : vector<1x100xf32>
    %136 = vector.extract_strided_slice %102 {offsets = [17, 1700], sizes = [1, 100], strides = [1, 1]} : vector<36x1800xf32> to vector<1x100xf32>
    %137 = arith.addf %135, %136 : vector<1x100xf32>
    %138 = vector.extract_strided_slice %102 {offsets = [18, 0], sizes = [1, 100], strides = [1, 1]} : vector<36x1800xf32> to vector<1x100xf32>
    %139 = vector.extract_strided_slice %102 {offsets = [19, 100], sizes = [1, 100], strides = [1, 1]} : vector<36x1800xf32> to vector<1x100xf32>
    %140 = arith.addf %138, %139 : vector<1x100xf32>
    %141 = vector.extract_strided_slice %102 {offsets = [20, 200], sizes = [1, 100], strides = [1, 1]} : vector<36x1800xf32> to vector<1x100xf32>
    %142 = arith.addf %140, %141 : vector<1x100xf32>
    %143 = vector.extract_strided_slice %102 {offsets = [21, 300], sizes = [1, 100], strides = [1, 1]} : vector<36x1800xf32> to vector<1x100xf32>
    %144 = arith.addf %142, %143 : vector<1x100xf32>
    %145 = vector.extract_strided_slice %102 {offsets = [22, 400], sizes = [1, 100], strides = [1, 1]} : vector<36x1800xf32> to vector<1x100xf32>
    %146 = arith.addf %144, %145 : vector<1x100xf32>
    %147 = vector.extract_strided_slice %102 {offsets = [23, 500], sizes = [1, 100], strides = [1, 1]} : vector<36x1800xf32> to vector<1x100xf32>
    %148 = arith.addf %146, %147 : vector<1x100xf32>
    %149 = vector.extract_strided_slice %102 {offsets = [24, 600], sizes = [1, 100], strides = [1, 1]} : vector<36x1800xf32> to vector<1x100xf32>
    %150 = arith.addf %148, %149 : vector<1x100xf32>
    %151 = vector.extract_strided_slice %102 {offsets = [25, 700], sizes = [1, 100], strides = [1, 1]} : vector<36x1800xf32> to vector<1x100xf32>
    %152 = arith.addf %150, %151 : vector<1x100xf32>
    %153 = vector.extract_strided_slice %102 {offsets = [26, 800], sizes = [1, 100], strides = [1, 1]} : vector<36x1800xf32> to vector<1x100xf32>
    %154 = arith.addf %152, %153 : vector<1x100xf32>
    %155 = vector.extract_strided_slice %102 {offsets = [27, 900], sizes = [1, 100], strides = [1, 1]} : vector<36x1800xf32> to vector<1x100xf32>
    %156 = arith.addf %154, %155 : vector<1x100xf32>
    %157 = vector.extract_strided_slice %102 {offsets = [28, 1000], sizes = [1, 100], strides = [1, 1]} : vector<36x1800xf32> to vector<1x100xf32>
    %158 = arith.addf %156, %157 : vector<1x100xf32>
    %159 = vector.extract_strided_slice %102 {offsets = [29, 1100], sizes = [1, 100], strides = [1, 1]} : vector<36x1800xf32> to vector<1x100xf32>
    %160 = arith.addf %158, %159 : vector<1x100xf32>
    %161 = vector.extract_strided_slice %102 {offsets = [30, 1200], sizes = [1, 100], strides = [1, 1]} : vector<36x1800xf32> to vector<1x100xf32>
    %162 = arith.addf %160, %161 : vector<1x100xf32>
    %163 = vector.extract_strided_slice %102 {offsets = [31, 1300], sizes = [1, 100], strides = [1, 1]} : vector<36x1800xf32> to vector<1x100xf32>
    %164 = arith.addf %162, %163 : vector<1x100xf32>
    %165 = vector.extract_strided_slice %102 {offsets = [32, 1400], sizes = [1, 100], strides = [1, 1]} : vector<36x1800xf32> to vector<1x100xf32>
    %166 = arith.addf %164, %165 : vector<1x100xf32>
    %167 = vector.extract_strided_slice %102 {offsets = [33, 1500], sizes = [1, 100], strides = [1, 1]} : vector<36x1800xf32> to vector<1x100xf32>
    %168 = arith.addf %166, %167 : vector<1x100xf32>
    %169 = vector.extract_strided_slice %102 {offsets = [34, 1600], sizes = [1, 100], strides = [1, 1]} : vector<36x1800xf32> to vector<1x100xf32>
    %170 = arith.addf %168, %169 : vector<1x100xf32>
    %171 = vector.extract_strided_slice %102 {offsets = [35, 1700], sizes = [1, 100], strides = [1, 1]} : vector<36x1800xf32> to vector<1x100xf32>
    %172 = arith.addf %170, %171 : vector<1x100xf32>
    %173 = tpu.concatenate %137, %172 in 0 : vector<1x100xf32>, vector<1x100xf32> -> vector<2x100xf32>
    %c0_72 = arith.constant 0 : index
    %c0_73 = arith.constant 0 : index
    %174 = vector.load %arg18[%c0_72, %c0_73] : memref<1x100xf32, #tpu.memory_space<vmem>>, vector<1x100xf32>
    %175 = vector.broadcast %174 : vector<1x100xf32> to vector<2x100xf32>
    %176 = arith.addf %173, %175 : vector<2x100xf32>
    %cst_74 = arith.constant 0.000000e+00 : f32
    %177 = vector.broadcast %cst_74 : f32 to vector<2x100xf32>
    %178 = arith.maximumf %176, %177 : vector<2x100xf32>
    %179 = arith.truncf %36 : vector<2x100xf32> to vector<2x100xbf16>
    %c0_75 = arith.constant 0 : index
    %c0_76 = arith.constant 0 : index
    %180 = vector.load %arg19[%c0_75, %c0_76] : memref<100x600xbf16, #tpu.memory_space<vmem>>, vector<100x600xbf16>
    %cst_77 = arith.constant dense<0.000000e+00> : vector<2x600xf32>
    %181 = tpu.matmul %179, %180, %cst_77 {dimension_numbers = #tpu.dot_dimension_numbers<[1], [0], [0], [1], [0, 0, 1, 1], [], []>} : vector<2x100xbf16>, vector<100x600xbf16>, vector<2x600xf32> -> vector<2x600xf32>
    %182 = arith.truncf %178 : vector<2x100xf32> to vector<2x100xbf16>
    %c0_78 = arith.constant 0 : index
    %c0_79 = arith.constant 0 : index
    %183 = vector.load %arg20[%c0_78, %c0_79] : memref<100x600xbf16, #tpu.memory_space<vmem>>, vector<100x600xbf16>
    %cst_80 = arith.constant dense<0.000000e+00> : vector<2x600xf32>
    %184 = tpu.matmul %182, %183, %cst_80 {dimension_numbers = #tpu.dot_dimension_numbers<[1], [0], [0], [1], [0, 0, 1, 1], [], []>} : vector<2x100xbf16>, vector<100x600xbf16>, vector<2x600xf32> -> vector<2x600xf32>
    %185 = arith.addf %181, %184 : vector<2x600xf32>
    %c0_81 = arith.constant 0 : index
    %c0_82 = arith.constant 0 : index
    %186 = vector.load %arg21[%c0_81, %c0_82] : memref<1x600xf32, #tpu.memory_space<vmem>>, vector<1x600xf32>
    %187 = vector.broadcast %186 : vector<1x600xf32> to vector<2x600xf32>
    %188 = arith.addf %185, %187 : vector<2x600xf32>
    %cst_83 = arith.constant 0.000000e+00 : f32
    %189 = vector.broadcast %cst_83 : f32 to vector<2x600xf32>
    %190 = arith.maximumf %188, %189 : vector<2x600xf32>
    %191 = arith.truncf %190 : vector<2x600xf32> to vector<2x600xbf16>
    %c0_84 = arith.constant 0 : index
    %c0_85 = arith.constant 0 : index
    %192 = vector.load %arg22[%c0_84, %c0_85] : memref<600x1200xbf16, #tpu.memory_space<vmem>>, vector<600x1200xbf16>
    %cst_86 = arith.constant dense<0.000000e+00> : vector<2x1200xf32>
    %193 = tpu.matmul %191, %192, %cst_86 {dimension_numbers = #tpu.dot_dimension_numbers<[1], [0], [0], [1], [0, 0, 1, 1], [], []>} : vector<2x600xbf16>, vector<600x1200xbf16>, vector<2x1200xf32> -> vector<2x1200xf32>
    %c0_87 = arith.constant 0 : index
    %c0_88 = arith.constant 0 : index
    %194 = vector.load %arg23[%c0_87, %c0_88] : memref<1x1200xf32, #tpu.memory_space<vmem>>, vector<1x1200xf32>
    %195 = vector.broadcast %194 : vector<1x1200xf32> to vector<2x1200xf32>
    %196 = arith.addf %193, %195 : vector<2x1200xf32>
    %cst_89 = arith.constant 0.000000e+00 : f32
    %197 = vector.broadcast %cst_89 : f32 to vector<2x1200xf32>
    %198 = arith.maximumf %196, %197 : vector<2x1200xf32>
    %199 = arith.truncf %198 : vector<2x1200xf32> to vector<2x1200xbf16>
    %c0_90 = arith.constant 0 : index
    %c0_91 = arith.constant 0 : index
    %200 = vector.load %arg24[%c0_90, %c0_91] : memref<1200x12xbf16, #tpu.memory_space<vmem>>, vector<1200x12xbf16>
    %cst_92 = arith.constant dense<0.000000e+00> : vector<2x12xf32>
    %201 = tpu.matmul %199, %200, %cst_92 {dimension_numbers = #tpu.dot_dimension_numbers<[1], [0], [0], [1], [0, 0, 1, 1], [], []>} : vector<2x1200xbf16>, vector<1200x12xbf16>, vector<2x12xf32> -> vector<2x12xf32>
    %c0_93 = arith.constant 0 : index
    %c0_94 = arith.constant 0 : index
    %202 = vector.load %arg25[%c0_93, %c0_94] : memref<1x12xf32, #tpu.memory_space<vmem>>, vector<1x12xf32>
    %203 = vector.broadcast %202 : vector<1x12xf32> to vector<2x12xf32>
    %204 = arith.addf %201, %203 : vector<2x12xf32>
    %cst_95 = arith.constant dense<0xFF800000> : vector<2xf32>
    %205 = vector.multi_reduction <maximumf>, %204, %cst_95 [1] : vector<2x12xf32> to vector<2xf32>
    %206 = vector.shape_cast %205 : vector<2xf32> to vector<2x1xf32>
    %207 = vector.broadcast %206 : vector<2x1xf32> to vector<2x12xf32>
    %208 = arith.subf %204, %207 : vector<2x12xf32>
    %209 = math.exp %208 : vector<2x12xf32>
    %cst_96 = arith.constant dense<0.000000e+00> : vector<2xf32>
    %210 = vector.multi_reduction <add>, %209, %cst_96 [1] : vector<2x12xf32> to vector<2xf32>
    %211 = vector.shape_cast %210 : vector<2xf32> to vector<2x1xf32>
    %212 = tpu.reciprocal %211 {approx = true} : vector<2x1xf32> -> vector<2x1xf32>
    %213 = vector.broadcast %212 : vector<2x1xf32> to vector<2x12xf32>
    %214 = arith.mulf %209, %213 : vector<2x12xf32>
    %c0_97 = arith.constant 0 : index
    %c0_98 = arith.constant 0 : index
    %215 = vector.load %arg26[%c0_97, %c0_98] : memref<2x12xf32, #tpu.memory_space<vmem>>, vector<2x12xf32>
    tpu.vector_store %arg26[%c0_97, %c0_98], %214 {strides = array<i32>} : memref<2x12xf32, #tpu.memory_space<vmem>>, vector<2x12xf32>,
    return
  }
  func.func @transform_0(%arg0: i32) -> (i32, i32) {
    %c0_i32 = arith.constant 0 : i32
    %c0_i32_0 = arith.constant 0 : i32
    %c0_i32_1 = arith.constant 0 : i32
    return %c0_i32, %c0_i32_0 : i32, i32
  }
  func.func @transform_1(%arg0: i32) -> (i32, i32, i32) {
    %c0_i32 = arith.constant 0 : i32
    %c0_i32_0 = arith.constant 0 : i32
    %c0_i32_1 = arith.constant 0 : i32
    %c0_i32_2 = arith.constant 0 : i32
    return %c0_i32, %c0_i32_0, %c0_i32_1 : i32, i32, i32
  }
  func.func @transform_2(%arg0: i32) -> (i32, i32) {
    %c0_i32 = arith.constant 0 : i32
    %c0_i32_0 = arith.constant 0 : i32
    %c0_i32_1 = arith.constant 0 : i32
    return %c0_i32, %c0_i32_0 : i32, i32
  }
  func.func @transform_3(%arg0: i32) -> (i32, i32) {
    %c0_i32 = arith.constant 0 : i32
    %c0_i32_0 = arith.constant 0 : i32
    %c0_i32_1 = arith.constant 0 : i32
    return %c0_i32, %c0_i32_0 : i32, i32
  }
  func.func @transform_4(%arg0: i32) -> (i32, i32) {
    %c0_i32 = arith.constant 0 : i32
    %c0_i32_0 = arith.constant 0 : i32
    %c0_i32_1 = arith.constant 0 : i32
    return %c0_i32, %c0_i32_0 : i32, i32
  }
  func.func @transform_5(%arg0: i32) -> (i32, i32) {
    %c0_i32 = arith.constant 0 : i32
    %c0_i32_0 = arith.constant 0 : i32
    %c0_i32_1 = arith.constant 0 : i32
    return %c0_i32, %c0_i32_0 : i32, i32
  }
  func.func @transform_6(%arg0: i32) -> (i32, i32) {
    %c0_i32 = arith.constant 0 : i32
    %c0_i32_0 = arith.constant 0 : i32
    %c0_i32_1 = arith.constant 0 : i32
    return %c0_i32, %c0_i32_0 : i32, i32
  }
  func.func @transform_7(%arg0: i32) -> (i32, i32) {
    %c0_i32 = arith.constant 0 : i32
    %c0_i32_0 = arith.constant 0 : i32
    %c0_i32_1 = arith.constant 0 : i32
    return %c0_i32, %c0_i32_0 : i32, i32
  }
  func.func @transform_8(%arg0: i32) -> (i32, i32) {
    %c0_i32 = arith.constant 0 : i32
    %c0_i32_0 = arith.constant 0 : i32
    %c0_i32_1 = arith.constant 0 : i32
    return %c0_i32, %c0_i32_0 : i32, i32
  }
  func.func @transform_9(%arg0: i32) -> (i32, i32) {
    %c0_i32 = arith.constant 0 : i32
    %c0_i32_0 = arith.constant 0 : i32
    %c0_i32_1 = arith.constant 0 : i32
    return %c0_i32, %c0_i32_0 : i32, i32
  }
  func.func @transform_10(%arg0: i32) -> (i32, i32) {
    %c0_i32 = arith.constant 0 : i32
    %c0_i32_0 = arith.constant 0 : i32
    %c0_i32_1 = arith.constant 0 : i32
    return %c0_i32, %c0_i32_0 : i32, i32
  }
  func.func @transform_11(%arg0: i32) -> (i32, i32) {
    %c0_i32 = arith.constant 0 : i32
    %c0_i32_0 = arith.constant 0 : i32
    %c0_i32_1 = arith.constant 0 : i32
    return %c0_i32, %c0_i32_0 : i32, i32
  }
  func.func @transform_12(%arg0: i32) -> (i32, i32) {
    %c0_i32 = arith.constant 0 : i32
    %c0_i32_0 = arith.constant 0 : i32
    %c0_i32_1 = arith.constant 0 : i32
    return %c0_i32, %c0_i32_0 : i32, i32
  }
  func.func @transform_13(%arg0: i32) -> (i32, i32) {
    %c0_i32 = arith.constant 0 : i32
    %c0_i32_0 = arith.constant 0 : i32
    %c0_i32_1 = arith.constant 0 : i32
    return %c0_i32, %c0_i32_0 : i32, i32
  }
  func.func @transform_14(%arg0: i32) -> (i32, i32) {
    %c0_i32 = arith.constant 0 : i32
    %c0_i32_0 = arith.constant 0 : i32
    %c0_i32_1 = arith.constant 0 : i32
    return %c0_i32, %c0_i32_0 : i32, i32
  }
  func.func @transform_15(%arg0: i32) -> (i32, i32) {
    %c0_i32 = arith.constant 0 : i32
    %c0_i32_0 = arith.constant 0 : i32
    %c0_i32_1 = arith.constant 0 : i32
    return %c0_i32, %c0_i32_0 : i32, i32
  }
  func.func @transform_16(%arg0: i32) -> (i32, i32) {
    %c0_i32 = arith.constant 0 : i32
    %c0_i32_0 = arith.constant 0 : i32
    %c0_i32_1 = arith.constant 0 : i32
    return %c0_i32, %c0_i32_0 : i32, i32
  }
  func.func @transform_17(%arg0: i32) -> (i32, i32) {
    %c0_i32 = arith.constant 0 : i32
    %c0_i32_0 = arith.constant 0 : i32
    %c0_i32_1 = arith.constant 0 : i32
    return %c0_i32, %c0_i32_0 : i32, i32
  }
  func.func @transform_18(%arg0: i32) -> (i32, i32) {
    %c0_i32 = arith.constant 0 : i32
    %c0_i32_0 = arith.constant 0 : i32
    %c0_i32_1 = arith.constant 0 : i32
    return %c0_i32, %c0_i32_0 : i32, i32
  }
  func.func @transform_19(%arg0: i32) -> (i32, i32) {
    %c0_i32 = arith.constant 0 : i32
    %c0_i32_0 = arith.constant 0 : i32
    %c0_i32_1 = arith.constant 0 : i32
    return %c0_i32, %c0_i32_0 : i32, i32
  }
  func.func @transform_20(%arg0: i32) -> (i32, i32) {
    %c0_i32 = arith.constant 0 : i32
    %c0_i32_0 = arith.constant 0 : i32
    %c0_i32_1 = arith.constant 0 : i32
    return %c0_i32, %c0_i32_0 : i32, i32
  }
  func.func @transform_21(%arg0: i32) -> (i32, i32) {
    %c0_i32 = arith.constant 0 : i32
    %c0_i32_0 = arith.constant 0 : i32
    %c0_i32_1 = arith.constant 0 : i32
    return %c0_i32, %c0_i32_0 : i32, i32
  }
  func.func @transform_22(%arg0: i32) -> (i32, i32) {
    %c0_i32 = arith.constant 0 : i32
    %c0_i32_0 = arith.constant 0 : i32
    %c0_i32_1 = arith.constant 0 : i32
    return %c0_i32, %c0_i32_0 : i32, i32
  }
  func.func @transform_23(%arg0: i32) -> (i32, i32) {
    %c0_i32 = arith.constant 0 : i32
    %c0_i32_0 = arith.constant 0 : i32
    %c0_i32_1 = arith.constant 0 : i32
    return %c0_i32, %c0_i32_0 : i32, i32
  }
  func.func @transform_24(%arg0: i32) -> (i32, i32) {
    %c0_i32 = arith.constant 0 : i32
    %c0_i32_0 = arith.constant 0 : i32
    %c0_i32_1 = arith.constant 0 : i32
    return %c0_i32, %c0_i32_0 : i32, i32
  }
  func.func @transform_25(%arg0: i32) -> (i32, i32) {
    %c0_i32 = arith.constant 0 : i32
    %c0_i32_0 = arith.constant 0 : i32
    %c0_i32_1 = arith.constant 0 : i32
    return %c0_i32, %c0_i32_0 : i32, i32
  }
}

</mosaic_0001>

<llo_original>
// kernel: model_forward.1
$region0: #{model_forward.1}
  #allocation0 [shape = 'u32[]', space=smem, size = 0x4, offset = 0x4, fixed_abs, tag = 'smem constant byte address 0x4 - core index']
  #allocation1 [shape = 'u32[144,128]{1,0:T(1,128)}', space=vmem, size = 0x12000, scoped, tag = 'internal scratch']
  %s0 = inlined_call_operand.vmem [shape: f32[2,32], index: 0, kind: input, shape index: {}]
  %s1 = inlined_call_operand.vmem [shape: bf16[4,9,512], index: 1, kind: input, shape index: {}]
  %s2 = inlined_call_operand.vmem [shape: bf16[32,2000], index: 2, kind: input, shape index: {}]
  %s3 = inlined_call_operand.vmem [shape: f32[1,2000], index: 3, kind: input, shape index: {}]
  %s4 = inlined_call_operand.vmem [shape: f32[1,2000], index: 4, kind: input, shape index: {}]
  %s5 = inlined_call_operand.vmem [shape: f32[1,2000], index: 5, kind: input, shape index: {}]
  %s6 = inlined_call_operand.vmem [shape: bf16[2000,600], index: 6, kind: input, shape index: {}]
  %s7 = inlined_call_operand.vmem [shape: f32[1,600], index: 7, kind: input, shape index: {}]
  %s8 = inlined_call_operand.vmem [shape: f32[1,600], index: 8, kind: input, shape index: {}]
  %s9 = inlined_call_operand.vmem [shape: f32[1,600], index: 9, kind: input, shape index: {}]
  %s10 = inlined_call_operand.vmem [shape: bf16[600,100], index: 10, kind: input, shape index: {}]
  %s11 = inlined_call_operand.vmem [shape: f32[1,100], index: 11, kind: input, shape index: {}]
  %s12 = inlined_call_operand.vmem [shape: bf16[18,9], index: 12, kind: input, shape index: {}]
  %s13 = inlined_call_operand.vmem [shape: f32[18,1], index: 13, kind: input, shape index: {}]
  %s14 = inlined_call_operand.vmem [shape: f32[18,1], index: 14, kind: input, shape index: {}]
  %s15 = inlined_call_operand.vmem [shape: f32[18,1], index: 15, kind: input, shape index: {}]
  %s16 = inlined_call_operand.vmem [shape: bf16[256,1800], index: 16, kind: input, shape index: {}]
  %s17 = inlined_call_operand.vmem [shape: f32[1,100], index: 17, kind: input, shape index: {}]
  %s18 = inlined_call_operand.vmem [shape: bf16[100,600], index: 18, kind: input, shape index: {}]
  %s19 = inlined_call_operand.vmem [shape: bf16[100,600], index: 19, kind: input, shape index: {}]
  %s20 = inlined_call_operand.vmem [shape: f32[1,600], index: 20, kind: input, shape index: {}]
  %s21 = inlined_call_operand.vmem [shape: bf16[600,1200], index: 21, kind: input, shape index: {}]
  %s22 = inlined_call_operand.vmem [shape: f32[1,1200], index: 22, kind: input, shape index: {}]
  %s23 = inlined_call_operand.vmem [shape: bf16[1200,12], index: 23, kind: input, shape index: {}]
  %s24 = inlined_call_operand.vmem [shape: f32[1,12], index: 24, kind: input, shape index: {}]
  %s25 = inlined_call_operand.hbm [shape: f32[2,12], index: 25, kind: output, shape index: {}]
  %s26 = sld [smem:[#allocation0]]
  $region110: #{model_forward.1} parent=0
    _
  %s28 = ssub.s32 1, %s26
  %s29 = scalar_select 0, %s28, %s26
  $region1: #{model_forward.1} parent=0
    #allocation2 [shape = 'u8[1024]{0}', space=vmem, size = 0x400, scoped, tag = 'output window, operand 0, single buffered']
    #allocation3 [shape = 's32[1]{0}', space=sflag, size = 0x4, scoped, tag = 'scoped memory for model_forward.1']
    %30 = vsyncpa [#allocation3], 0
    // Predicated region
    $region2: #{model_forward.1} parent=1 // pred_check
      _
    $region3: #{model_forward.1} parent=1 // pred_check_branch
      %32 = sbr.rel (0) target = $region5
    $region4: #{model_forward.1} parent=1 // pred_region
      _
    $region5: #{model_forward.1} parent=1 // pred_fallthru
      _
    // Predicated region
    $region6: #{model_forward.1} parent=1 // pred_check
      _
    $region7: #{model_forward.1} parent=1 // pred_check_branch
      %34 = sbr.rel (0) target = $region9
    $region8: #{model_forward.1} parent=1 // pred_region
      _
    $region9: #{model_forward.1} parent=1 // pred_fallthru
      _
    // Predicated region
    $region10: #{model_forward.1} parent=1 // pred_check
      _
    $region11: #{model_forward.1} parent=1 // pred_check_branch
      %36 = sbr.rel (0) target = $region13
    $region12: #{model_forward.1} parent=1 // pred_region
      _
    $region13: #{model_forward.1} parent=1 // pred_fallthru
      _
    // Predicated region
    $region14: #{model_forward.1} parent=1 // pred_check
      _
    $region15: #{model_forward.1} parent=1 // pred_check_branch
      %38 = sbr.rel (0) target = $region17
    $region16: #{model_forward.1} parent=1 // pred_region
      _
    $region17: #{model_forward.1} parent=1 // pred_fallthru
      _
    // Predicated region
    $region18: #{model_forward.1} parent=1 // pred_check
      _
    $region19: #{model_forward.1} parent=1 // pred_check_branch
      %40 = sbr.rel (0) target = $region21
    $region20: #{model_forward.1} parent=1 // pred_region
      _
    $region21: #{model_forward.1} parent=1 // pred_fallthru
      _
    // Predicated region
    $region22: #{model_forward.1} parent=1 // pred_check
      _
    $region23: #{model_forward.1} parent=1 // pred_check_branch
      %42 = sbr.rel (0) target = $region25
    $region24: #{model_forward.1} parent=1 // pred_region
      _
    $region25: #{model_forward.1} parent=1 // pred_fallthru
      _
    // Predicated region
    $region26: #{model_forward.1} parent=1 // pred_check
      _
    $region27: #{model_forward.1} parent=1 // pred_check_branch
      %44 = sbr.rel (0) target = $region29
    $region28: #{model_forward.1} parent=1 // pred_region
      _
    $region29: #{model_forward.1} parent=1 // pred_fallthru
      _
    // Predicated region
    $region30: #{model_forward.1} parent=1 // pred_check
      _
    $region31: #{model_forward.1} parent=1 // pred_check_branch
      %46 = sbr.rel (0) target = $region33
    $region32: #{model_forward.1} parent=1 // pred_region
      _
    $region33: #{model_forward.1} parent=1 // pred_fallthru
      _
    // Predicated region
    $region34: #{model_forward.1} parent=1 // pred_check
      _
    $region35: #{model_forward.1} parent=1 // pred_check_branch
      %48 = sbr.rel (0) target = $region37
    $region36: #{model_forward.1} parent=1 // pred_region
      _
    $region37: #{model_forward.1} parent=1 // pred_fallthru
      _
    // Predicated region
    $region38: #{model_forward.1} parent=1 // pred_check
      _
    $region39: #{model_forward.1} parent=1 // pred_check_branch
      %50 = sbr.rel (0) target = $region41
    $region40: #{model_forward.1} parent=1 // pred_region
      _
    $region41: #{model_forward.1} parent=1 // pred_fallthru
      _
    // Predicated region
    $region42: #{model_forward.1} parent=1 // pred_check
      _
    $region43: #{model_forward.1} parent=1 // pred_check_branch
      %52 = sbr.rel (0) target = $region45
    $region44: #{model_forward.1} parent=1 // pred_region
      _
    $region45: #{model_forward.1} parent=1 // pred_fallthru
      _
    // Predicated region
    $region46: #{model_forward.1} parent=1 // pred_check
      _
    $region47: #{model_forward.1} parent=1 // pred_check_branch
      %54 = sbr.rel (0) target = $region49
    $region48: #{model_forward.1} parent=1 // pred_region
      _
    $region49: #{model_forward.1} parent=1 // pred_fallthru
      _
    // Predicated region
    $region50: #{model_forward.1} parent=1 // pred_check
      _
    $region51: #{model_forward.1} parent=1 // pred_check_branch
      %56 = sbr.rel (0) target = $region53
    $region52: #{model_forward.1} parent=1 // pred_region
      _
    $region53: #{model_forward.1} parent=1 // pred_fallthru
      _
    // Predicated region
    $region54: #{model_forward.1} parent=1 // pred_check
      _
    $region55: #{model_forward.1} parent=1 // pred_check_branch
      %58 = sbr.rel (0) target = $region57
    $region56: #{model_forward.1} parent=1 // pred_region
      _
    $region57: #{model_forward.1} parent=1 // pred_fallthru
      _
    // Predicated region
    $region58: #{model_forward.1} parent=1 // pred_check
      _
    $region59: #{model_forward.1} parent=1 // pred_check_branch
      %60 = sbr.rel (0) target = $region61
    $region60: #{model_forward.1} parent=1 // pred_region
      _
    $region61: #{model_forward.1} parent=1 // pred_fallthru
      _
    // Predicated region
    $region62: #{model_forward.1} parent=1 // pred_check
      _
    $region63: #{model_forward.1} parent=1 // pred_check_branch
      %62 = sbr.rel (0) target = $region65
    $region64: #{model_forward.1} parent=1 // pred_region
      _
    $region65: #{model_forward.1} parent=1 // pred_fallthru
      _
    // Predicated region
    $region66: #{model_forward.1} parent=1 // pred_check
      _
    $region67: #{model_forward.1} parent=1 // pred_check_branch
      %64 = sbr.rel (0) target = $region69
    $region68: #{model_forward.1} parent=1 // pred_region
      _
    $region69: #{model_forward.1} parent=1 // pred_fallthru
      _
    // Predicated region
    $region70: #{model_forward.1} parent=1 // pred_check
      _
    $region71: #{model_forward.1} parent=1 // pred_check_branch
      %66 = sbr.rel (0) target = $region73
    $region72: #{model_forward.1} parent=1 // pred_region
      _
    $region73: #{model_forward.1} parent=1 // pred_fallthru
      _
    // Predicated region
    $region74: #{model_forward.1} parent=1 // pred_check
      _
    $region75: #{model_forward.1} parent=1 // pred_check_branch
      %68 = sbr.rel (0) target = $region77
    $region76: #{model_forward.1} parent=1 // pred_region
      _
    $region77: #{model_forward.1} parent=1 // pred_fallthru
      _
    // Predicated region
    $region78: #{model_forward.1} parent=1 // pred_check
      _
    $region79: #{model_forward.1} parent=1 // pred_check_branch
      %70 = sbr.rel (0) target = $region81
    $region80: #{model_forward.1} parent=1 // pred_region
      _
    $region81: #{model_forward.1} parent=1 // pred_fallthru
      _
    // Predicated region
    $region82: #{model_forward.1} parent=1 // pred_check
      _
    $region83: #{model_forward.1} parent=1 // pred_check_branch
      %72 = sbr.rel (0) target = $region85
    $region84: #{model_forward.1} parent=1 // pred_region
      _
    $region85: #{model_forward.1} parent=1 // pred_fallthru
      _
    // Predicated region
    $region86: #{model_forward.1} parent=1 // pred_check
      _
    $region87: #{model_forward.1} parent=1 // pred_check_branch
      %74 = sbr.rel (0) target = $region89
    $region88: #{model_forward.1} parent=1 // pred_region
      _
    $region89: #{model_forward.1} parent=1 // pred_fallthru
      _
    // Predicated region
    $region90: #{model_forward.1} parent=1 // pred_check
      _
    $region91: #{model_forward.1} parent=1 // pred_check_branch
      %76 = sbr.rel (0) target = $region93
    $region92: #{model_forward.1} parent=1 // pred_region
      _
    $region93: #{model_forward.1} parent=1 // pred_fallthru
      _
    // Predicated region
    $region94: #{model_forward.1} parent=1 // pred_check
      _
    $region95: #{model_forward.1} parent=1 // pred_check_branch
      %78 = sbr.rel (0) target = $region97
    $region96: #{model_forward.1} parent=1 // pred_region
      _
    $region97: #{model_forward.1} parent=1 // pred_fallthru
      _
    // Predicated region
    $region98: #{model_forward.1} parent=1 // pred_check
      _
    $region99: #{model_forward.1} parent=1 // pred_check_branch
      %80 = sbr.rel (0) target = $region101
    $region100: #{model_forward.1} parent=1 // pred_region
      _
    $region101: #{model_forward.1} parent=1 // pred_fallthru
      _
    %v82 = vld [vmem:[%s0] sm:$0x3]
    %v83 = vpack.c.bf16 %v82, %v82
    %v84 = vld [vmem:[%s2] sm:$0xff]
    %v85 = vld [vmem:[%s2 + $0x8] sm:$0xff]
    %v86 = vld [vmem:[%s2 + $0x10] sm:$0xff]
    %v87 = vld [vmem:[%s2 + $0x18] sm:$0xff]
    %v88 = vld [vmem:[%s2 + $0x20] sm:$0xff]
    %v89 = vld [vmem:[%s2 + $0x28] sm:$0xff]
    %v90 = vld [vmem:[%s2 + $0x30] sm:$0xff]
    %v91 = vld [vmem:[%s2 + $0x38] sm:$0xff]
    %v92 = vld [vmem:[%s2 + $0x40] sm:$0xff]
    %v93 = vld [vmem:[%s2 + $0x48] sm:$0xff]
    %v94 = vld [vmem:[%s2 + $0x50] sm:$0xff]
    %v95 = vld [vmem:[%s2 + $0x58] sm:$0xff]
    %v96 = vld [vmem:[%s2 + $0x60] sm:$0xff]
    %v97 = vld [vmem:[%s2 + $0x68] sm:$0xff]
    %v98 = vld [vmem:[%s2 + $0x70] sm:$0xff]
    %v99 = vld [vmem:[%s2 + $0x78] sm:$0xff]
    %v100 = vld [vmem:[%s2 + $0x80] sm:$0xff]
    %v101 = vld [vmem:[%s2 + $0x88] sm:$0xff]
    %v102 = vld [vmem:[%s2 + $0x90] sm:$0xff]
    %v103 = vld [vmem:[%s2 + $0x98] sm:$0xff]
    %v104 = vld [vmem:[%s2 + $0xa0] sm:$0xff]
    %v105 = vld [vmem:[%s2 + $0xa8] sm:$0xff]
    %v106 = vld [vmem:[%s2 + $0xb0] sm:$0xff]
    %v107 = vld [vmem:[%s2 + $0xb8] sm:$0xff]
    %v108 = vld [vmem:[%s2 + $0xc0] sm:$0xff]
    %v109 = vld [vmem:[%s2 + $0xc8] sm:$0xff]
    %v110 = vld [vmem:[%s2 + $0xd0] sm:$0xff]
    %v111 = vld [vmem:[%s2 + $0xd8] sm:$0xff]
    %v112 = vld [vmem:[%s2 + $0xe0] sm:$0xff]
    %v113 = vld [vmem:[%s2 + $0xe8] sm:$0xff]
    %v114 = vld [vmem:[%s2 + $0xf0] sm:$0xff]
    %v115 = vld [vmem:[%s2 + $0xf8] sm:$0xff]
    %v116 = vld [vmem:[%s3] sm:$0xff]
    %v117 = vld [vmem:[%s3 + $0x8] sm:$0xff]
    %v120 = vlaneseq
    %v121 = vshrl.u32 %v120, 7
    %v122 = vsub.s32 0, %v121
    %v123 = vrot.slane %v116, %v122
    %v124 = vlaneseq
    %v125 = vshrl.u32 %v124, 7
    %v126 = vsub.s32 1, %v125
    %v127 = vrot.slane %v116, %v126
    %v128 = vlaneseq
    %v129 = vshrl.u32 %v128, 7
    %v130 = vsub.s32 2, %v129
    %v131 = vrot.slane %v116, %v130
    %v132 = vlaneseq
    %v133 = vshrl.u32 %v132, 7
    %v134 = vsub.s32 3, %v133
    %v135 = vrot.slane %v116, %v134
    %v136 = vlaneseq
    %v137 = vshrl.u32 %v136, 7
    %v138 = vsub.s32 4, %v137
    %v139 = vrot.slane %v116, %v138
    %v140 = vlaneseq
    %v141 = vshrl.u32 %v140, 7
    %v142 = vsub.s32 5, %v141
    %v143 = vrot.slane %v116, %v142
    %v144 = vlaneseq
    %v145 = vshrl.u32 %v144, 7
    %v146 = vsub.s32 6, %v145
    %v147 = vrot.slane %v116, %v146
    %v148 = vlaneseq
    %v149 = vshrl.u32 %v148, 7
    %v150 = vsub.s32 7, %v149
    %v151 = vrot.slane %v116, %v150
    %v152 = vlaneseq
    %v153 = vshrl.u32 %v152, 7
    %v154 = vsub.s32 0, %v153
    %v155 = vrot.slane %v117, %v154
    %v156 = vlaneseq
    %v157 = vshrl.u32 %v156, 7
    %v158 = vsub.s32 1, %v157
    %v159 = vrot.slane %v117, %v158
    %v160 = vlaneseq
    %v161 = vshrl.u32 %v160, 7
    %v162 = vsub.s32 2, %v161
    %v163 = vrot.slane %v117, %v162
    %v164 = vlaneseq
    %v165 = vshrl.u32 %v164, 7
    %v166 = vsub.s32 3, %v165
    %v167 = vrot.slane %v117, %v166
    %v168 = vlaneseq
    %v169 = vshrl.u32 %v168, 7
    %v170 = vsub.s32 4, %v169
    %v171 = vrot.slane %v117, %v170
    %v172 = vlaneseq
    %v173 = vshrl.u32 %v172, 7
    %v174 = vsub.s32 5, %v173
    %v175 = vrot.slane %v117, %v174
    %v176 = vlaneseq
    %v177 = vshrl.u32 %v176, 7
    %v178 = vsub.s32 6, %v177
    %v179 = vrot.slane %v117, %v178
    %v180 = vlaneseq
    %v181 = vshrl.u32 %v180, 7
    %v182 = vsub.s32 7, %v181
    %v183 = vrot.slane %v117, %v182
    %v232 = vunpack.c.l.b16 %v84
    %v233 = vunpack.c.h.b16 %v84
    %v234 = vunpack.c.l.b16 %v85
    %v235 = vunpack.c.h.b16 %v85
    %v236 = vunpack.c.l.b16 %v86
    %v237 = vunpack.c.h.b16 %v86
    %v238 = vunpack.c.l.b16 %v87
    %v239 = vunpack.c.h.b16 %v87
    %v240 = vunpack.c.l.b16 %v88
    %v241 = vunpack.c.h.b16 %v88
    %v242 = vunpack.c.l.b16 %v89
    %v243 = vunpack.c.h.b16 %v89
    %v244 = vunpack.c.l.b16 %v90
    %v245 = vunpack.c.h.b16 %v90
    %v246 = vunpack.c.l.b16 %v91
    %v247 = vunpack.c.h.b16 %v91
    %v248 = vunpack.c.l.b16 %v92
    %v249 = vunpack.c.h.b16 %v92
    %v250 = vunpack.c.l.b16 %v93
    %v251 = vunpack.c.h.b16 %v93
    %v252 = vunpack.c.l.b16 %v94
    %v253 = vunpack.c.h.b16 %v94
    %v254 = vunpack.c.l.b16 %v95
    %v255 = vunpack.c.h.b16 %v95
    %v256 = vunpack.c.l.b16 %v96
    %v257 = vunpack.c.h.b16 %v96
    %v258 = vunpack.c.l.b16 %v97
    %v259 = vunpack.c.h.b16 %v97
    %v260 = vunpack.c.l.b16 %v98
    %v261 = vunpack.c.h.b16 %v98
    %v262 = vunpack.c.l.b16 %v99
    %v263 = vunpack.c.h.b16 %v99
    %v264 = vunpack.c.l.b16 %v100
    %v265 = vunpack.c.h.b16 %v100
    %v266 = vunpack.c.l.b16 %v101
    %v267 = vunpack.c.h.b16 %v101
    %v268 = vunpack.c.l.b16 %v102
    %v269 = vunpack.c.h.b16 %v102
    %v270 = vunpack.c.l.b16 %v103
    %v271 = vunpack.c.h.b16 %v103
    %v272 = vunpack.c.l.b16 %v104
    %v273 = vunpack.c.h.b16 %v104
    %v274 = vunpack.c.l.b16 %v105
    %v275 = vunpack.c.h.b16 %v105
    %v276 = vunpack.c.l.b16 %v106
    %v277 = vunpack.c.h.b16 %v106
    %v278 = vunpack.c.l.b16 %v107
    %v279 = vunpack.c.h.b16 %v107
    %v280 = vunpack.c.l.b16 %v108
    %v281 = vunpack.c.h.b16 %v108
    %v282 = vunpack.c.l.b16 %v109
    %v283 = vunpack.c.h.b16 %v109
    %v284 = vunpack.c.l.b16 %v110
    %v285 = vunpack.c.h.b16 %v110
    %v286 = vunpack.c.l.b16 %v111
    %v287 = vunpack.c.h.b16 %v111
    %v288 = vunpack.c.l.b16 %v112
    %v289 = vunpack.c.h.b16 %v112
    %v290 = vunpack.c.l.b16 %v113
    %v291 = vunpack.c.h.b16 %v113
    %v292 = vunpack.c.l.b16 %v114
    %v293 = vunpack.c.h.b16 %v114
    %v294 = vunpack.c.l.b16 %v115
    %v295 = vunpack.c.h.b16 %v115
    %v296 = vpack.c.b16 %v248, %v232
    %v297 = vpack.c.b16 %v249, %v233
    %v298 = vpack.c.b16 %v250, %v234
    %v299 = vpack.c.b16 %v251, %v235
    %v300 = vpack.c.b16 %v252, %v236
    %v301 = vpack.c.b16 %v253, %v237
    %v302 = vpack.c.b16 %v254, %v238
    %v303 = vpack.c.b16 %v255, %v239
    %v304 = vpack.c.b16 %v256, %v240
    %v305 = vpack.c.b16 %v257, %v241
    %v306 = vpack.c.b16 %v258, %v242
    %v307 = vpack.c.b16 %v259, %v243
    %v308 = vpack.c.b16 %v260, %v244
    %v309 = vpack.c.b16 %v261, %v245
    %v310 = vpack.c.b16 %v262, %v246
    %v311 = vpack.c.b16 %v263, %v247
    %v312 = vpack.c.b16 %v280, %v264
    %v313 = vpack.c.b16 %v281, %v265
    %v314 = vpack.c.b16 %v282, %v266
    %v315 = vpack.c.b16 %v283, %v267
    %v316 = vpack.c.b16 %v284, %v268
    %v317 = vpack.c.b16 %v285, %v269
    %v318 = vpack.c.b16 %v286, %v270
    %v319 = vpack.c.b16 %v287, %v271
    %v320 = vpack.c.b16 %v288, %v272
    %v321 = vpack.c.b16 %v289, %v273
    %v322 = vpack.c.b16 %v290, %v274
    %v323 = vpack.c.b16 %v291, %v275
    %v324 = vpack.c.b16 %v292, %v276
    %v325 = vpack.c.b16 %v293, %v277
    %v326 = vpack.c.b16 %v294, %v278
    %v327 = vpack.c.b16 %v295, %v279
    %vm360 = vcmask 261120
    %v362 = vsel %vm360, %v83, 0
    %364 = vmatprep.subr.bf16.mxu0 %v297
    %365 = vmatpush1.bf16.msra.mxu0 %v296
    %366 = vmatprep.subr.bf16.mxu0 %v313
    %367 = vmatpush1.bf16.msra.mxu0 %v312
    %368 = vmatprep.subr.bf16.mxu0 0
    %369 = vmatpush1.bf16.msra.mxu0 0
    %370 = vmatprep.subr.bf16.mxu0 0
    %371 = vmatpush1.bf16.msra.mxu0 0
    %372 = vmatprep.subr.bf16.mxu0 0
    %373 = vmatpush1.bf16.msra.mxu0 0
    %374 = vmatprep.subr.bf16.mxu0 0
    %375 = vmatpush1.bf16.msra.mxu0 0
    %376 = vmatprep.subr.bf16.mxu0 0
    %377 = vmatpush1.bf16.msra.mxu0 0
    %378 = vmatprep.subr.bf16.mxu0 0
    %379 = vmatpush1.bf16.msra.mxu0 0
    %380 = vmatprep.subr.bf16.mxu0 0
    %381 = vmatpush1.bf16.msra.mxu0 0
    %382 = vmatprep.subr.bf16.mxu0 0
    %383 = vmatpush1.bf16.msra.mxu0 0
    %384 = vmatprep.subr.bf16.mxu0 0
    %385 = vmatpush1.bf16.msra.mxu0 0
    %386 = vmatprep.subr.bf16.mxu0 0
    %387 = vmatpush1.bf16.msra.mxu0 0
    %388 = vmatprep.subr.bf16.mxu0 0
    %389 = vmatpush1.bf16.msra.mxu0 0
    %390 = vmatprep.subr.bf16.mxu0 0
    %391 = vmatpush1.bf16.msra.mxu0 0
    %392 = vmatprep.subr.bf16.mxu0 0
    %393 = vmatpush1.bf16.msra.mxu0 0
    %394 = vmatprep.subr.bf16.mxu0 0
    %395 = vmatpush1.bf16.msra.mxu0 0
    %396 = vmatprep.mubr.bf16.mxu0 0
    %397 = vmatmul.mubr.bf16.gmra.mrb[0].mxu0 %v362
    %v398 = vpop.f32.mrb[0].mxu0
    %v399 = vadd.f32 %v123, %v398
    %v400 = vpop.f32.mrb[0].mxu0
    %v401 = vadd.f32 %v127, %v400
    %v402 = vpop.f32.mrb[0].mxu0
    %v403 = vpop.f32.mrb[0].mxu0
    %404 = vdwg.mxu0
    %405 = vmatprep.subr.bf16.mxu0 %v299
    %406 = vmatpush1.bf16.msra.mxu0 %v298
    %407 = vmatprep.subr.bf16.mxu0 %v315
    %408 = vmatpush1.bf16.msra.mxu0 %v314
    %409 = vmatprep.subr.bf16.mxu0 0
    %410 = vmatpush1.bf16.msra.mxu0 0
    %411 = vmatprep.subr.bf16.mxu0 0
    %412 = vmatpush1.bf16.msra.mxu0 0
    %413 = vmatprep.subr.bf16.mxu0 0
    %414 = vmatpush1.bf16.msra.mxu0 0
    %415 = vmatprep.subr.bf16.mxu0 0
    %416 = vmatpush1.bf16.msra.mxu0 0
    %417 = vmatprep.subr.bf16.mxu0 0
    %418 = vmatpush1.bf16.msra.mxu0 0
    %419 = vmatprep.subr.bf16.mxu0 0
    %420 = vmatpush1.bf16.msra.mxu0 0
    %421 = vmatprep.subr.bf16.mxu0 0
    %422 = vmatpush1.bf16.msra.mxu0 0
    %423 = vmatprep.subr.bf16.mxu0 0
    %424 = vmatpush1.bf16.msra.mxu0 0
    %425 = vmatprep.subr.bf16.mxu0 0
    %426 = vmatpush1.bf16.msra.mxu0 0
    %427 = vmatprep.subr.bf16.mxu0 0
    %428 = vmatpush1.bf16.msra.mxu0 0
    %429 = vmatprep.subr.bf16.mxu0 0
    %430 = vmatpush1.bf16.msra.mxu0 0
    %431 = vmatprep.subr.bf16.mxu0 0
    %432 = vmatpush1.bf16.msra.mxu0 0
    %433 = vmatprep.subr.bf16.mxu0 0
    %434 = vmatpush1.bf16.msra.mxu0 0
    %435 = vmatprep.subr.bf16.mxu0 0
    %436 = vmatpush1.bf16.msra.mxu0 0
    %437 = vmatprep.mubr.bf16.mxu0 0
    %438 = vmatmul.mubr.bf16.gmra.mrb[0].mxu0 %v362
    %v439 = vpop.f32.mrb[0].mxu0
    %v440 = vadd.f32 %v131, %v439
    %v441 = vpop.f32.mrb[0].mxu0
    %v442 = vadd.f32 %v135, %v441
    %v443 = vpop.f32.mrb[0].mxu0
    %v444 = vpop.f32.mrb[0].mxu0
    %445 = vdwg.mxu0
    %446 = vmatprep.subr.bf16.mxu0 %v301
    %447 = vmatpush1.bf16.msra.mxu0 %v300
    %448 = vmatprep.subr.bf16.mxu0 %v317
    %449 = vmatpush1.bf16.msra.mxu0 %v316
    %450 = vmatprep.subr.bf16.mxu0 0
    %451 = vmatpush1.bf16.msra.mxu0 0
    %452 = vmatprep.subr.bf16.mxu0 0
    %453 = vmatpush1.bf16.msra.mxu0 0
    %454 = vmatprep.subr.bf16.mxu0 0
    %455 = vmatpush1.bf16.msra.mxu0 0
    %456 = vmatprep.subr.bf16.mxu0 0
    %457 = vmatpush1.bf16.msra.mxu0 0
    %458 = vmatprep.subr.bf16.mxu0 0
    %459 = vmatpush1.bf16.msra.mxu0 0
    %460 = vmatprep.subr.bf16.mxu0 0
    %461 = vmatpush1.bf16.msra.mxu0 0
    %462 = vmatprep.subr.bf16.mxu0 0
    %463 = vmatpush1.bf16.msra.mxu0 0
    %464 = vmatprep.subr.bf16.mxu0 0
    %465 = vmatpush1.bf16.msra.mxu0 0
    %466 = vmatprep.subr.bf16.mxu0 0
    %467 = vmatpush1.bf16.msra.mxu0 0
    %468 = vmatprep.subr.bf16.mxu0 0
    %469 = vmatpush1.bf16.msra.mxu0 0
    %470 = vmatprep.subr.bf16.mxu0 0
    %471 = vmatpush1.bf16.msra.mxu0 0
    %472 = vmatprep.subr.bf16.mxu0 0
    %473 = vmatpush1.bf16.msra.mxu0 0
    %474 = vmatprep.subr.bf16.mxu0 0
    %475 = vmatpush1.bf16.msra.mxu0 0
    %476 = vmatprep.subr.bf16.mxu0 0
    %477 = vmatpush1.bf16.msra.mxu0 0
    %478 = vmatprep.mubr.bf16.mxu0 0
    %479 = vmatmul.mubr.bf16.gmra.mrb[0].mxu0 %v362
    %v480 = vpop.f32.mrb[0].mxu0
    %v481 = vadd.f32 %v139, %v480
    %v482 = vpop.f32.mrb[0].mxu0
    %v483 = vadd.f32 %v143, %v482
    %v484 = vpop.f32.mrb[0].mxu0
    %v485 = vpop.f32.mrb[0].mxu0
    %486 = vdwg.mxu0
    %487 = vmatprep.subr.bf16.mxu0 %v303
    %488 = vmatpush1.bf16.msra.mxu0 %v302
    %489 = vmatprep.subr.bf16.mxu0 %v319
    %490 = vmatpush1.bf16.msra.mxu0 %v318
    %491 = vmatprep.subr.bf16.mxu0 0
    %492 = vmatpush1.bf16.msra.mxu0 0
    %493 = vmatprep.subr.bf16.mxu0 0
    %494 = vmatpush1.bf16.msra.mxu0 0
    %495 = vmatprep.subr.bf16.mxu0 0
    %496 = vmatpush1.bf16.msra.mxu0 0
    %497 = vmatprep.subr.bf16.mxu0 0
    %498 = vmatpush1.bf16.msra.mxu0 0
    %499 = vmatprep.subr.bf16.mxu0 0
    %500 = vmatpush1.bf16.msra.mxu0 0
    %501 = vmatprep.subr.bf16.mxu0 0
    %502 = vmatpush1.bf16.msra.mxu0 0
    %503 = vmatprep.subr.bf16.mxu0 0
    %504 = vmatpush1.bf16.msra.mxu0 0
    %505 = vmatprep.subr.bf16.mxu0 0
    %506 = vmatpush1.bf16.msra.mxu0 0
    %507 = vmatprep.subr.bf16.mxu0 0
    %508 = vmatpush1.bf16.msra.mxu0 0
    %509 = vmatprep.subr.bf16.mxu0 0
    %510 = vmatpush1.bf16.msra.mxu0 0
    %511 = vmatprep.subr.bf16.mxu0 0
    %512 = vmatpush1.bf16.msra.mxu0 0
    %513 = vmatprep.subr.bf16.mxu0 0
    %514 = vmatpush1.bf16.msra.mxu0 0
    %515 = vmatprep.subr.bf16.mxu0 0
    %516 = vmatpush1.bf16.msra.mxu0 0
    %517 = vmatprep.subr.bf16.mxu0 0
    %518 = vmatpush1.bf16.msra.mxu0 0
    %519 = vmatprep.mubr.bf16.mxu0 0
    %520 = vmatmul.mubr.bf16.gmra.mrb[0].mxu0 %v362
    %v521 = vpop.f32.mrb[0].mxu0
    %v522 = vadd.f32 %v147, %v521
    %v523 = vpop.f32.mrb[0].mxu0
    %v524 = vadd.f32 %v151, %v523
    %v525 = vpop.f32.mrb[0].mxu0
    %v526 = vpop.f32.mrb[0].mxu0
    %527 = vdwg.mxu0
    %528 = vmatprep.subr.bf16.mxu0 %v305
    %529 = vmatpush1.bf16.msra.mxu0 %v304
    %530 = vmatprep.subr.bf16.mxu0 %v321
    %531 = vmatpush1.bf16.msra.mxu0 %v320
    %532 = vmatprep.subr.bf16.mxu0 0
    %533 = vmatpush1.bf16.msra.mxu0 0
    %534 = vmatprep.subr.bf16.mxu0 0
    %535 = vmatpush1.bf16.msra.mxu0 0
    %536 = vmatprep.subr.bf16.mxu0 0
    %537 = vmatpush1.bf16.msra.mxu0 0
    %538 = vmatprep.subr.bf16.mxu0 0
    %539 = vmatpush1.bf16.msra.mxu0 0
    %540 = vmatprep.subr.bf16.mxu0 0
    %541 = vmatpush1.bf16.msra.mxu0 0
    %542 = vmatprep.subr.bf16.mxu0 0
    %543 = vmatpush1.bf16.msra.mxu0 0
    %544 = vmatprep.subr.bf16.mxu0 0
    %545 = vmatpush1.bf16.msra.mxu0 0
    %546 = vmatprep.subr.bf16.mxu0 0
    %547 = vmatpush1.bf16.msra.mxu0 0
    %548 = vmatprep.subr.bf16.mxu0 0
    %549 = vmatpush1.bf16.msra.mxu0 0
    %550 = vmatprep.subr.bf16.mxu0 0
    %551 = vmatpush1.bf16.msra.mxu0 0
    %552 = vmatprep.subr.bf16.mxu0 0
    %553 = vmatpush1.bf16.msra.mxu0 0
    %554 = vmatprep.subr.bf16.mxu0 0
    %555 = vmatpush1.bf16.msra.mxu0 0
    %556 = vmatprep.subr.bf16.mxu0 0
    %557 = vmatpush1.bf16.msra.mxu0 0
    %558 = vmatprep.subr.bf16.mxu0 0
    %559 = vmatpush1.bf16.msra.mxu0 0
    %560 = vmatprep.mubr.bf16.mxu0 0
    %561 = vmatmul.mubr.bf16.gmra.mrb[0].mxu0 %v362
    %v562 = vpop.f32.mrb[0].mxu0
    %v563 = vadd.f32 %v155, %v562
    %v564 = vpop.f32.mrb[0].mxu0
    %v565 = vadd.f32 %v159, %v564
    %v566 = vpop.f32.mrb[0].mxu0
    %v567 = vpop.f32.mrb[0].mxu0
    %568 = vdwg.mxu0
    %569 = vmatprep.subr.bf16.mxu0 %v307
    %570 = vmatpush1.bf16.msra.mxu0 %v306
    %571 = vmatprep.subr.bf16.mxu0 %v323
    %572 = vmatpush1.bf16.msra.mxu0 %v322
    %573 = vmatprep.subr.bf16.mxu0 0
    %574 = vmatpush1.bf16.msra.mxu0 0
    %575 = vmatprep.subr.bf16.mxu0 0
    %576 = vmatpush1.bf16.msra.mxu0 0
    %577 = vmatprep.subr.bf16.mxu0 0
    %578 = vmatpush1.bf16.msra.mxu0 0
    %579 = vmatprep.subr.bf16.mxu0 0
    %580 = vmatpush1.bf16.msra.mxu0 0
    %581 = vmatprep.subr.bf16.mxu0 0
    %582 = vmatpush1.bf16.msra.mxu0 0
    %583 = vmatprep.subr.bf16.mxu0 0
    %584 = vmatpush1.bf16.msra.mxu0 0
    %585 = vmatprep.subr.bf16.mxu0 0
    %586 = vmatpush1.bf16.msra.mxu0 0
    %587 = vmatprep.subr.bf16.mxu0 0
    %588 = vmatpush1.bf16.msra.mxu0 0
    %589 = vmatprep.subr.bf16.mxu0 0
    %590 = vmatpush1.bf16.msra.mxu0 0
    %591 = vmatprep.subr.bf16.mxu0 0
    %592 = vmatpush1.bf16.msra.mxu0 0
    %593 = vmatprep.subr.bf16.mxu0 0
    %594 = vmatpush1.bf16.msra.mxu0 0
    %595 = vmatprep.subr.bf16.mxu0 0
    %596 = vmatpush1.bf16.msra.mxu0 0
    %597 = vmatprep.subr.bf16.mxu0 0
    %598 = vmatpush1.bf16.msra.mxu0 0
    %599 = vmatprep.subr.bf16.mxu0 0
    %600 = vmatpush1.bf16.msra.mxu0 0
    %601 = vmatprep.mubr.bf16.mxu0 0
    %602 = vmatmul.mubr.bf16.gmra.mrb[0].mxu0 %v362
    %v603 = vpop.f32.mrb[0].mxu0
    %v604 = vadd.f32 %v163, %v603
    %v605 = vpop.f32.mrb[0].mxu0
    %v606 = vadd.f32 %v167, %v605
    %v607 = vpop.f32.mrb[0].mxu0
    %v608 = vpop.f32.mrb[0].mxu0
    %609 = vdwg.mxu0
    %610 = vmatprep.subr.bf16.mxu0 %v309
    %611 = vmatpush1.bf16.msra.mxu0 %v308
    %612 = vmatprep.subr.bf16.mxu0 %v325
    %613 = vmatpush1.bf16.msra.mxu0 %v324
    %614 = vmatprep.subr.bf16.mxu0 0
    %615 = vmatpush1.bf16.msra.mxu0 0
    %616 = vmatprep.subr.bf16.mxu0 0
    %617 = vmatpush1.bf16.msra.mxu0 0
    %618 = vmatprep.subr.bf16.mxu0 0
    %619 = vmatpush1.bf16.msra.mxu0 0
    %620 = vmatprep.subr.bf16.mxu0 0
    %621 = vmatpush1.bf16.msra.mxu0 0
    %622 = vmatprep.subr.bf16.mxu0 0
    %623 = vmatpush1.bf16.msra.mxu0 0
    %624 = vmatprep.subr.bf16.mxu0 0
    %625 = vmatpush1.bf16.msra.mxu0 0
    %626 = vmatprep.subr.bf16.mxu0 0
    %627 = vmatpush1.bf16.msra.mxu0 0
    %628 = vmatprep.subr.bf16.mxu0 0
    %629 = vmatpush1.bf16.msra.mxu0 0
    %630 = vmatprep.subr.bf16.mxu0 0
    %631 = vmatpush1.bf16.msra.mxu0 0
    %632 = vmatprep.subr.bf16.mxu0 0
    %633 = vmatpush1.bf16.msra.mxu0 0
    %634 = vmatprep.subr.bf16.mxu0 0
    %635 = vmatpush1.bf16.msra.mxu0 0
    %636 = vmatprep.subr.bf16.mxu0 0
    %637 = vmatpush1.bf16.msra.mxu0 0
    %638 = vmatprep.subr.bf16.mxu0 0
    %639 = vmatpush1.bf16.msra.mxu0 0
    %640 = vmatprep.subr.bf16.mxu0 0
    %641 = vmatpush1.bf16.msra.mxu0 0
    %642 = vmatprep.mubr.bf16.mxu0 0
    %643 = vmatmul.mubr.bf16.gmra.mrb[0].mxu0 %v362
    %v644 = vpop.f32.mrb[0].mxu0
    %v645 = vadd.f32 %v171, %v644
    %v646 = vpop.f32.mrb[0].mxu0
    %v647 = vadd.f32 %v175, %v646
    %v648 = vpop.f32.mrb[0].mxu0
    %v649 = vpop.f32.mrb[0].mxu0
    %650 = vdwg.mxu0
    %651 = vmatprep.subr.bf16.mxu0 %v311
    %652 = vmatpush1.bf16.msra.mxu0 %v310
    %653 = vmatprep.subr.bf16.mxu0 %v327
    %654 = vmatpush1.bf16.msra.mxu0 %v326
    %655 = vmatprep.subr.bf16.mxu0 0
    %656 = vmatpush1.bf16.msra.mxu0 0
    %657 = vmatprep.subr.bf16.mxu0 0
    %658 = vmatpush1.bf16.msra.mxu0 0
    %659 = vmatprep.subr.bf16.mxu0 0
    %660 = vmatpush1.bf16.msra.mxu0 0
    %661 = vmatprep.subr.bf16.mxu0 0
    %662 = vmatpush1.bf16.msra.mxu0 0
    %663 = vmatprep.subr.bf16.mxu0 0
    %664 = vmatpush1.bf16.msra.mxu0 0
    %665 = vmatprep.subr.bf16.mxu0 0
    %666 = vmatpush1.bf16.msra.mxu0 0
    %667 = vmatprep.subr.bf16.mxu0 0
    %668 = vmatpush1.bf16.msra.mxu0 0
    %669 = vmatprep.subr.bf16.mxu0 0
    %670 = vmatpush1.bf16.msra.mxu0 0
    %671 = vmatprep.subr.bf16.mxu0 0
    %672 = vmatpush1.bf16.msra.mxu0 0
    %673 = vmatprep.subr.bf16.mxu0 0
    %674 = vmatpush1.bf16.msra.mxu0 0
    %675 = vmatprep.subr.bf16.mxu0 0
    %676 = vmatpush1.bf16.msra.mxu0 0
    %677 = vmatprep.subr.bf16.mxu0 0
    %678 = vmatpush1.bf16.msra.mxu0 0
    %679 = vmatprep.subr.bf16.mxu0 0
    %680 = vmatpush1.bf16.msra.mxu0 0
    %681 = vmatprep.subr.bf16.mxu0 0
    %682 = vmatpush1.bf16.msra.mxu0 0
    %683 = vmatprep.mubr.bf16.mxu0 0
    %684 = vmatmul.mubr.bf16.gmra.mrb[0].mxu0 %v362
    %v685 = vpop.f32.mrb[0].mxu0
    %v686 = vadd.f32 %v179, %v685
    %v687 = vpop.f32.mrb[0].mxu0
    %v688 = vadd.f32 %v183, %v687
    %v689 = vpop.f32.mrb[0].mxu0
    %v690 = vpop.f32.mrb[0].mxu0
    %691 = vdwg.mxu0
    %v692 = vld [vmem:[%s4] sm:$0xff]
    %v693 = vld [vmem:[%s4 + $0x8] sm:$0xff]
    %v696 = vlaneseq
    %v697 = vshrl.u32 %v696, 7
    %v698 = vsub.s32 0, %v697
    %v699 = vrot.slane %v692, %v698
    %v700 = vlaneseq
    %v701 = vshrl.u32 %v700, 7
    %v702 = vsub.s32 1, %v701
    %v703 = vrot.slane %v692, %v702
    %v704 = vlaneseq
    %v705 = vshrl.u32 %v704, 7
    %v706 = vsub.s32 2, %v705
    %v707 = vrot.slane %v692, %v706
    %v708 = vlaneseq
    %v709 = vshrl.u32 %v708, 7
    %v710 = vsub.s32 3, %v709
    %v711 = vrot.slane %v692, %v710
    %v712 = vlaneseq
    %v713 = vshrl.u32 %v712, 7
    %v714 = vsub.s32 4, %v713
    %v715 = vrot.slane %v692, %v714
    %v716 = vlaneseq
    %v717 = vshrl.u32 %v716, 7
    %v718 = vsub.s32 5, %v717
    %v719 = vrot.slane %v692, %v718
    %v720 = vlaneseq
    %v721 = vshrl.u32 %v720, 7
    %v722 = vsub.s32 6, %v721
    %v723 = vrot.slane %v692, %v722
    %v724 = vlaneseq
    %v725 = vshrl.u32 %v724, 7
    %v726 = vsub.s32 7, %v725
    %v727 = vrot.slane %v692, %v726
    %v728 = vlaneseq
    %v729 = vshrl.u32 %v728, 7
    %v730 = vsub.s32 0, %v729
    %v731 = vrot.slane %v693, %v730
    %v732 = vlaneseq
    %v733 = vshrl.u32 %v732, 7
    %v734 = vsub.s32 1, %v733
    %v735 = vrot.slane %v693, %v734
    %v736 = vlaneseq
    %v737 = vshrl.u32 %v736, 7
    %v738 = vsub.s32 2, %v737
    %v739 = vrot.slane %v693, %v738
    %v740 = vlaneseq
    %v741 = vshrl.u32 %v740, 7
    %v742 = vsub.s32 3, %v741
    %v743 = vrot.slane %v693, %v742
    %v744 = vlaneseq
    %v745 = vshrl.u32 %v744, 7
    %v746 = vsub.s32 4, %v745
    %v747 = vrot.slane %v693, %v746
    %v748 = vlaneseq
    %v749 = vshrl.u32 %v748, 7
    %v750 = vsub.s32 5, %v749
    %v751 = vrot.slane %v693, %v750
    %v752 = vlaneseq
    %v753 = vshrl.u32 %v752, 7
    %v754 = vsub.s32 6, %v753
    %v755 = vrot.slane %v693, %v754
    %v756 = vlaneseq
    %v757 = vshrl.u32 %v756, 7
    %v758 = vsub.s32 7, %v757
    %v759 = vrot.slane %v693, %v758
    %v776 = vmul.f32 %v399, %v699
    %v777 = vmul.f32 %v401, %v703
    %v778 = vmul.f32 %v440, %v707
    %v779 = vmul.f32 %v442, %v711
    %v780 = vmul.f32 %v481, %v715
    %v781 = vmul.f32 %v483, %v719
    %v782 = vmul.f32 %v522, %v723
    %v783 = vmul.f32 %v524, %v727
    %v784 = vmul.f32 %v563, %v731
    %v785 = vmul.f32 %v565, %v735
    %v786 = vmul.f32 %v604, %v739
    %v787 = vmul.f32 %v606, %v743
    %v788 = vmul.f32 %v645, %v747
    %v789 = vmul.f32 %v647, %v751
    %v790 = vmul.f32 %v686, %v755
    %v791 = vmul.f32 %v688, %v759
    %v792 = vld [vmem:[%s5] sm:$0xff]
    %v793 = vld [vmem:[%s5 + $0x8] sm:$0xff]
    %v796 = vlaneseq
    %v797 = vshrl.u32 %v796, 7
    %v798 = vsub.s32 0, %v797
    %v799 = vrot.slane %v792, %v798
    %v800 = vlaneseq
    %v801 = vshrl.u32 %v800, 7
    %v802 = vsub.s32 1, %v801
    %v803 = vrot.slane %v792, %v802
    %v804 = vlaneseq
    %v805 = vshrl.u32 %v804, 7
    %v806 = vsub.s32 2, %v805
    %v807 = vrot.slane %v792, %v806
    %v808 = vlaneseq
    %v809 = vshrl.u32 %v808, 7
    %v810 = vsub.s32 3, %v809
    %v811 = vrot.slane %v792, %v810
    %v812 = vlaneseq
    %v813 = vshrl.u32 %v812, 7
    %v814 = vsub.s32 4, %v813
    %v815 = vrot.slane %v792, %v814
    %v816 = vlaneseq
    %v817 = vshrl.u32 %v816, 7
    %v818 = vsub.s32 5, %v817
    %v819 = vrot.slane %v792, %v818
    %v820 = vlaneseq
    %v821 = vshrl.u32 %v820, 7
    %v822 = vsub.s32 6, %v821
    %v823 = vrot.slane %v792, %v822
    %v824 = vlaneseq
    %v825 = vshrl.u32 %v824, 7
    %v826 = vsub.s32 7, %v825
    %v827 = vrot.slane %v792, %v826
    %v828 = vlaneseq
    %v829 = vshrl.u32 %v828, 7
    %v830 = vsub.s32 0, %v829
    %v831 = vrot.slane %v793, %v830
    %v832 = vlaneseq
    %v833 = vshrl.u32 %v832, 7
    %v834 = vsub.s32 1, %v833
    %v835 = vrot.slane %v793, %v834
    %v836 = vlaneseq
    %v837 = vshrl.u32 %v836, 7
    %v838 = vsub.s32 2, %v837
    %v839 = vrot.slane %v793, %v838
    %v840 = vlaneseq
    %v841 = vshrl.u32 %v840, 7
    %v842 = vsub.s32 3, %v841
    %v843 = vrot.slane %v793, %v842
    %v844 = vlaneseq
    %v845 = vshrl.u32 %v844, 7
    %v846 = vsub.s32 4, %v845
    %v847 = vrot.slane %v793, %v846
    %v848 = vlaneseq
    %v849 = vshrl.u32 %v848, 7
    %v850 = vsub.s32 5, %v849
    %v851 = vrot.slane %v793, %v850
    %v852 = vlaneseq
    %v853 = vshrl.u32 %v852, 7
    %v854 = vsub.s32 6, %v853
    %v855 = vrot.slane %v793, %v854
    %v856 = vlaneseq
    %v857 = vshrl.u32 %v856, 7
    %v858 = vsub.s32 7, %v857
    %v859 = vrot.slane %v793, %v858
    %v876 = vadd.f32 %v776, %v799
    %v877 = vadd.f32 %v777, %v803
    %v878 = vadd.f32 %v778, %v807
    %v879 = vadd.f32 %v779, %v811
    %v880 = vadd.f32 %v780, %v815
    %v881 = vadd.f32 %v781, %v819
    %v882 = vadd.f32 %v782, %v823
    %v883 = vadd.f32 %v783, %v827
    %v884 = vadd.f32 %v784, %v831
    %v885 = vadd.f32 %v785, %v835
    %v886 = vadd.f32 %v786, %v839
    %v887 = vadd.f32 %v787, %v843
    %v888 = vadd.f32 %v788, %v847
    %v889 = vadd.f32 %v789, %v851
    %v890 = vadd.f32 %v790, %v855
    %v891 = vadd.f32 %v791, %v859
    %v892 = vmax.f32 %v876, 0.0
    %v893 = vmax.f32 %v877, 0.0
    %v894 = vmax.f32 %v878, 0.0
    %v895 = vmax.f32 %v879, 0.0
    %v896 = vmax.f32 %v880, 0.0
    %v897 = vmax.f32 %v881, 0.0
    %v898 = vmax.f32 %v882, 0.0
    %v899 = vmax.f32 %v883, 0.0
    %v900 = vmax.f32 %v884, 0.0
    %v901 = vmax.f32 %v885, 0.0
    %v902 = vmax.f32 %v886, 0.0
    %v903 = vmax.f32 %v887, 0.0
    %v904 = vmax.f32 %v888, 0.0
    %v905 = vmax.f32 %v889, 0.0
    %v906 = vmax.f32 %v890, 0.0
    %v907 = vmax.f32 %v891, 0.0
    %v908 = vpack.c.bf16 %v892, %v892
    %v909 = vpack.c.bf16 %v893, %v893
    %v910 = vpack.c.bf16 %v894, %v894
    %v911 = vpack.c.bf16 %v895, %v895
    %v912 = vpack.c.bf16 %v896, %v896
    %v913 = vpack.c.bf16 %v897, %v897
    %v914 = vpack.c.bf16 %v898, %v898
    %v915 = vpack.c.bf16 %v899, %v899
    %v916 = vpack.c.bf16 %v900, %v900
    %v917 = vpack.c.bf16 %v901, %v901
    %v918 = vpack.c.bf16 %v902, %v902
    %v919 = vpack.c.bf16 %v903, %v903
    %v920 = vpack.c.bf16 %v904, %v904
    %v921 = vpack.c.bf16 %v905, %v905
    %v922 = vpack.c.bf16 %v906, %v906
    %v923 = vpack.c.bf16 %v907, %v907
    %v924 = vld [vmem:[%s6] sm:$0xff]
    %v925 = vld [vmem:[%s6 + $0x8] sm:$0xff]
    %v926 = vld [vmem:[%s6 + $0x10] sm:$0xf]
    %v927 = vld [vmem:[%s6 + $0x14] sm:$0xff]
    %v928 = vld [vmem:[%s6 + $0x1c] sm:$0xff]
    %v929 = vld [vmem:[%s6 + $0x24] sm:$0xf]
    %v930 = vld [vmem:[%s6 + $0x28] sm:$0xff]
    %v931 = vld [vmem:[%s6 + $0x30] sm:$0xff]
    %v932 = vld [vmem:[%s6 + $0x38] sm:$0xf]
    %v933 = vld [vmem:[%s6 + $0x3c] sm:$0xff]
    %v934 = vld [vmem:[%s6 + $0x44] sm:$0xff]
    %v935 = vld [vmem:[%s6 + $0x4c] sm:$0xf]
    %v936 = vld [vmem:[%s6 + $0x50] sm:$0xff]
    %v937 = vld [vmem:[%s6 + $0x58] sm:$0xff]
    %v938 = vld [vmem:[%s6 + $0x60] sm:$0xf]
    %v939 = vld [vmem:[%s6 + $0x64] sm:$0xff]
    %v940 = vld [vmem:[%s6 + $0x6c] sm:$0xff]
    %v941 = vld [vmem:[%s6 + $0x74] sm:$0xf]
    %v942 = vld [vmem:[%s6 + $0x78] sm:$0xff]
    %v943 = vld [vmem:[%s6 + $0x80] sm:$0xff]
    %v944 = vld [vmem:[%s6 + $0x88] sm:$0xf]
    %v945 = vld [vmem:[%s6 + $0x8c] sm:$0xff]
    %v946 = vld [vmem:[%s6 + $0x94] sm:$0xff]
    %v947 = vld [vmem:[%s6 + $0x9c] sm:$0xf]
    %v948 = vld [vmem:[%s6 + $0xa0] sm:$0xff]
    %v949 = vld [vmem:[%s6 + $0xa8] sm:$0xff]
    %v950 = vld [vmem:[%s6 + $0xb0] sm:$0xf]
    %v951 = vld [vmem:[%s6 + $0xb4] sm:$0xff]
    %v952 = vld [vmem:[%s6 + $0xbc] sm:$0xff]
    %v953 = vld [vmem:[%s6 + $0xc4] sm:$0xf]
    %v954 = vld [vmem:[%s6 + $0xc8] sm:$0xff]
    %v955 = vld [vmem:[%s6 + $0xd0] sm:$0xff]
    %v956 = vld [vmem:[%s6 + $0xd8] sm:$0xf]
    %v957 = vld [vmem:[%s6 + $0xdc] sm:$0xff]
    %v958 = vld [vmem:[%s6 + $0xe4] sm:$0xff]
    %v959 = vld [vmem:[%s6 + $0xec] sm:$0xf]
    %v960 = vld [vmem:[%s6 + $0xf0] sm:$0xff]
    %v961 = vld [vmem:[%s6 + $0xf8] sm:$0xff]
    %v962 = vld [vmem:[%s6 + $0x100] sm:$0xf]
    %v963 = vld [vmem:[%s6 + $0x104] sm:$0xff]
    %v964 = vld [vmem:[%s6 + $0x10c] sm:$0xff]
    %v965 = vld [vmem:[%s6 + $0x114] sm:$0xf]
    %v966 = vld [vmem:[%s6 + $0x118] sm:$0xff]
    %v967 = vld [vmem:[%s6 + $0x120] sm:$0xff]
    %v968 = vld [vmem:[%s6 + $0x128] sm:$0xf]
    %v969 = vld [vmem:[%s6 + $0x12c] sm:$0xff]
    %v970 = vld [vmem:[%s6 + $0x134] sm:$0xff]
    %v971 = vld [vmem:[%s6 + $0x13c] sm:$0xf]
    %v972 = vld [vmem:[%s6 + $0x140] sm:$0xff]
    %v973 = vld [vmem:[%s6 + $0x148] sm:$0xff]
    %v974 = vld [vmem:[%s6 + $0x150] sm:$0xf]
    %v975 = vld [vmem:[%s6 + $0x154] sm:$0xff]
    %v976 = vld [vmem:[%s6 + $0x15c] sm:$0xff]
    %v977 = vld [vmem:[%s6 + $0x164] sm:$0xf]
    %v978 = vld [vmem:[%s6 + $0x168] sm:$0xff]
    %v979 = vld [vmem:[%s6 + $0x170] sm:$0xff]
    %v980 = vld [vmem:[%s6 + $0x178] sm:$0xf]
    %v981 = vld [vmem:[%s6 + $0x17c] sm:$0xff]
    %v982 = vld [vmem:[%s6 + $0x184] sm:$0xff]
    %v983 = vld [vmem:[%s6 + $0x18c] sm:$0xf]
    %v984 = vld [vmem:[%s6 + $0x190] sm:$0xff]
    %v985 = vld [vmem:[%s6 + $0x198] sm:$0xff]
    %v986 = vld [vmem:[%s6 + $0x1a0] sm:$0xf]
    %v987 = vld [vmem:[%s6 + $0x1a4] sm:$0xff]
    %v988 = vld [vmem:[%s6 + $0x1ac] sm:$0xff]
    %v989 = vld [vmem:[%s6 + $0x1b4] sm:$0xf]
    %v990 = vld [vmem:[%s6 + $0x1b8] sm:$0xff]
    %v991 = vld [vmem:[%s6 + $0x1c0] sm:$0xff]
    %v992 = vld [vmem:[%s6 + $0x1c8] sm:$0xf]
    %v993 = vld [vmem:[%s6 + $0x1cc] sm:$0xff]
    %v994 = vld [vmem:[%s6 + $0x1d4] sm:$0xff]
    %v995 = vld [vmem:[%s6 + $0x1dc] sm:$0xf]
    %v996 = vld [vmem:[%s6 + $0x1e0] sm:$0xff]
    %v997 = vld [vmem:[%s6 + $0x1e8] sm:$0xff]
    %v998 = vld [vmem:[%s6 + $0x1f0] sm:$0xf]
    %v999 = vld [vmem:[%s6 + $0x1f4] sm:$0xff]
    %v1000 = vld [vmem:[%s6 + $0x1fc] sm:$0xff]
    %v1001 = vld [vmem:[%s6 + $0x204] sm:$0xf]
    %v1002 = vld [vmem:[%s6 + $0x208] sm:$0xff]
    %v1003 = vld [vmem:[%s6 + $0x210] sm:$0xff]
    %v1004 = vld [vmem:[%s6 + $0x218] sm:$0xf]
    %v1005 = vld [vmem:[%s6 + $0x21c] sm:$0xff]
    %v1006 = vld [vmem:[%s6 + $0x224] sm:$0xff]
    %v1007 = vld [vmem:[%s6 + $0x22c] sm:$0xf]
    %v1008 = vld [vmem:[%s6 + $0x230] sm:$0xff]
    %v1009 = vld [vmem:[%s6 + $0x238] sm:$0xff]
    %v1010 = vld [vmem:[%s6 + $0x240] sm:$0xf]
    %v1011 = vld [vmem:[%s6 + $0x244] sm:$0xff]
    %v1012 = vld [vmem:[%s6 + $0x24c] sm:$0xff]
    %v1013 = vld [vmem:[%s6 + $0x254] sm:$0xf]
    %v1014 = vld [vmem:[%s6 + $0x258] sm:$0xff]
    %v1015 = vld [vmem:[%s6 + $0x260] sm:$0xff]
    %v1016 = vld [vmem:[%s6 + $0x268] sm:$0xf]
    %v1017 = vld [vmem:[%s6 + $0x26c] sm:$0xff]
    %v1018 = vld [vmem:[%s6 + $0x274] sm:$0xff]
    %v1019 = vld [vmem:[%s6 + $0x27c] sm:$0xf]
    %v1020 = vld [vmem:[%s6 + $0x280] sm:$0xff]
    %v1021 = vld [vmem:[%s6 + $0x288] sm:$0xff]
    %v1022 = vld [vmem:[%s6 + $0x290] sm:$0xf]
    %v1023 = vld [vmem:[%s6 + $0x294] sm:$0xff]
    %v1024 = vld [vmem:[%s6 + $0x29c] sm:$0xff]
    %v1025 = vld [vmem:[%s6 + $0x2a4] sm:$0xf]
    %v1026 = vld [vmem:[%s6 + $0x2a8] sm:$0xff]
    %v1027 = vld [vmem:[%s6 + $0x2b0] sm:$0xff]
    %v1028 = vld [vmem:[%s6 + $0x2b8] sm:$0xf]
    %v1029 = vld [vmem:[%s6 + $0x2bc] sm:$0xff]
    %v1030 = vld [vmem:[%s6 + $0x2c4] sm:$0xff]
    %v1031 = vld [vmem:[%s6 + $0x2cc] sm:$0xf]
    %v1032 = vld [vmem:[%s6 + $0x2d0] sm:$0xff]
    %v1033 = vld [vmem:[%s6 + $0x2d8] sm:$0xff]
    %v1034 = vld [vmem:[%s6 + $0x2e0] sm:$0xf]
    %v1035 = vld [vmem:[%s6 + $0x2e4] sm:$0xff]
    %v1036 = vld [vmem:[%s6 + $0x2ec] sm:$0xff]
    %v1037 = vld [vmem:[%s6 + $0x2f4] sm:$0xf]
    %v1038 = vld [vmem:[%s6 + $0x2f8] sm:$0xff]
    %v1039 = vld [vmem:[%s6 + $0x300] sm:$0xff]
    %v1040 = vld [vmem:[%s6 + $0x308] sm:$0xf]
    %v1041 = vld [vmem:[%s6 + $0x30c] sm:$0xff]
    %v1042 = vld [vmem:[%s6 + $0x314] sm:$0xff]
    %v1043 = vld [vmem:[%s6 + $0x31c] sm:$0xf]
    %v1044 = vld [vmem:[%s6 + $0x320] sm:$0xff]
    %v1045 = vld [vmem:[%s6 + $0x328] sm:$0xff]
    %v1046 = vld [vmem:[%s6 + $0x330] sm:$0xf]
    %v1047 = vld [vmem:[%s6 + $0x334] sm:$0xff]
    %v1048 = vld [vmem:[%s6 + $0x33c] sm:$0xff]
    %v1049 = vld [vmem:[%s6 + $0x344] sm:$0xf]
    %v1050 = vld [vmem:[%s6 + $0x348] sm:$0xff]
    %v1051 = vld [vmem:[%s6 + $0x350] sm:$0xff]
    %v1052 = vld [vmem:[%s6 + $0x358] sm:$0xf]
    %v1053 = vld [vmem:[%s6 + $0x35c] sm:$0xff]
    %v1054 = vld [vmem:[%s6 + $0x364] sm:$0xff]
    %v1055 = vld [vmem:[%s6 + $0x36c] sm:$0xf]
    %v1056 = vld [vmem:[%s6 + $0x370] sm:$0xff]
    %v1057 = vld [vmem:[%s6 + $0x378] sm:$0xff]
    %v1058 = vld [vmem:[%s6 + $0x380] sm:$0xf]
    %v1059 = vld [vmem:[%s6 + $0x384] sm:$0xff]
    %v1060 = vld [vmem:[%s6 + $0x38c] sm:$0xff]
    %v1061 = vld [vmem:[%s6 + $0x394] sm:$0xf]
    %v1062 = vld [vmem:[%s6 + $0x398] sm:$0xff]
    %v1063 = vld [vmem:[%s6 + $0x3a0] sm:$0xff]
    %v1064 = vld [vmem:[%s6 + $0x3a8] sm:$0xf]
    %v1065 = vld [vmem:[%s6 + $0x3ac] sm:$0xff]
    %v1066 = vld [vmem:[%s6 + $0x3b4] sm:$0xff]
    %v1067 = vld [vmem:[%s6 + $0x3bc] sm:$0xf]
    %v1068 = vld [vmem:[%s6 + $0x3c0] sm:$0xff]
    %v1069 = vld [vmem:[%s6 + $0x3c8] sm:$0xff]
    %v1070 = vld [vmem:[%s6 + $0x3d0] sm:$0xf]
    %v1071 = vld [vmem:[%s6 + $0x3d4] sm:$0xff]
    %v1072 = vld [vmem:[%s6 + $0x3dc] sm:$0xff]
    %v1073 = vld [vmem:[%s6 + $0x3e4] sm:$0xf]
    %v1074 = vld [vmem:[%s6 + $0x3e8] sm:$0xff]
    %v1075 = vld [vmem:[%s6 + $0x3f0] sm:$0xff]
    %v1076 = vld [vmem:[%s6 + $0x3f8] sm:$0xf]
    %v1077 = vld [vmem:[%s6 + $0x3fc] sm:$0xff]
    %v1078 = vld [vmem:[%s6 + $0x404] sm:$0xff]
    %v1079 = vld [vmem:[%s6 + $0x40c] sm:$0xf]
    %v1080 = vld [vmem:[%s6 + $0x410] sm:$0xff]
    %v1081 = vld [vmem:[%s6 + $0x418] sm:$0xff]
    %v1082 = vld [vmem:[%s6 + $0x420] sm:$0xf]
    %v1083 = vld [vmem:[%s6 + $0x424] sm:$0xff]
    %v1084 = vld [vmem:[%s6 + $0x42c] sm:$0xff]
    %v1085 = vld [vmem:[%s6 + $0x434] sm:$0xf]
    %v1086 = vld [vmem:[%s6 + $0x438] sm:$0xff]
    %v1087 = vld [vmem:[%s6 + $0x440] sm:$0xff]
    %v1088 = vld [vmem:[%s6 + $0x448] sm:$0xf]
    %v1089 = vld [vmem:[%s6 + $0x44c] sm:$0xff]
    %v1090 = vld [vmem:[%s6 + $0x454] sm:$0xff]
    %v1091 = vld [vmem:[%s6 + $0x45c] sm:$0xf]
    %v1092 = vld [vmem:[%s6 + $0x460] sm:$0xff]
    %v1093 = vld [vmem:[%s6 + $0x468] sm:$0xff]
    %v1094 = vld [vmem:[%s6 + $0x470] sm:$0xf]
    %v1095 = vld [vmem:[%s6 + $0x474] sm:$0xff]
    %v1096 = vld [vmem:[%s6 + $0x47c] sm:$0xff]
    %v1097 = vld [vmem:[%s6 + $0x484] sm:$0xf]
    %v1098 = vld [vmem:[%s6 + $0x488] sm:$0xff]
    %v1099 = vld [vmem:[%s6 + $0x490] sm:$0xff]
    %v1100 = vld [vmem:[%s6 + $0x498] sm:$0xf]
    %v1101 = vld [vmem:[%s6 + $0x49c] sm:$0xff]
    %v1102 = vld [vmem:[%s6 + $0x4a4] sm:$0xff]
    %v1103 = vld [vmem:[%s6 + $0x4ac] sm:$0xf]
    %v1104 = vld [vmem:[%s6 + $0x4b0] sm:$0xff]
    %v1105 = vld [vmem:[%s6 + $0x4b8] sm:$0xff]
    %v1106 = vld [vmem:[%s6 + $0x4c0] sm:$0xf]
    %v1107 = vld [vmem:[%s6 + $0x4c4] sm:$0xff]
    %v1108 = vld [vmem:[%s6 + $0x4cc] sm:$0xff]
    %v1109 = vld [vmem:[%s6 + $0x4d4] sm:$0xf]
    %v1110 = vld [vmem:[%s6 + $0x4d8] sm:$0xff]
    %v1111 = vld [vmem:[%s6 + $0x4e0] sm:$0xff]
    %v1112 = vld [vmem:[%s6 + $0x4e8] sm:$0xf]
    %v1113 = vld [vmem:[%s6 + $0x4ec] sm:$0xff]
    %v1114 = vld [vmem:[%s6 + $0x4f4] sm:$0xff]
    %v1115 = vld [vmem:[%s6 + $0x4fc] sm:$0xf]
    %v1116 = vld [vmem:[%s6 + $0x500] sm:$0xff]
    %v1117 = vld [vmem:[%s6 + $0x508] sm:$0xff]
    %v1118 = vld [vmem:[%s6 + $0x510] sm:$0xf]
    %v1119 = vld [vmem:[%s6 + $0x514] sm:$0xff]
    %v1120 = vld [vmem:[%s6 + $0x51c] sm:$0xff]
    %v1121 = vld [vmem:[%s6 + $0x524] sm:$0xf]
    %v1122 = vld [vmem:[%s6 + $0x528] sm:$0xff]
    %v1123 = vld [vmem:[%s6 + $0x530] sm:$0xff]
    %v1124 = vld [vmem:[%s6 + $0x538] sm:$0xf]
    %v1125 = vld [vmem:[%s6 + $0x53c] sm:$0xff]
    %v1126 = vld [vmem:[%s6 + $0x544] sm:$0xff]
    %v1127 = vld [vmem:[%s6 + $0x54c] sm:$0xf]
    %v1128 = vld [vmem:[%s6 + $0x550] sm:$0xff]
    %v1129 = vld [vmem:[%s6 + $0x558] sm:$0xff]
    %v1130 = vld [vmem:[%s6 + $0x560] sm:$0xf]
    %v1131 = vld [vmem:[%s6 + $0x564] sm:$0xff]
    %v1132 = vld [vmem:[%s6 + $0x56c] sm:$0xff]
    %v1133 = vld [vmem:[%s6 + $0x574] sm:$0xf]
    %v1134 = vld [vmem:[%s6 + $0x578] sm:$0xff]
    %v1135 = vld [vmem:[%s6 + $0x580] sm:$0xff]
    %v1136 = vld [vmem:[%s6 + $0x588] sm:$0xf]
    %v1137 = vld [vmem:[%s6 + $0x58c] sm:$0xff]
    %v1138 = vld [vmem:[%s6 + $0x594] sm:$0xff]
    %v1139 = vld [vmem:[%s6 + $0x59c] sm:$0xf]
    %v1140 = vld [vmem:[%s6 + $0x5a0] sm:$0xff]
    %v1141 = vld [vmem:[%s6 + $0x5a8] sm:$0xff]
    %v1142 = vld [vmem:[%s6 + $0x5b0] sm:$0xf]
    %v1143 = vld [vmem:[%s6 + $0x5b4] sm:$0xff]
    %v1144 = vld [vmem:[%s6 + $0x5bc] sm:$0xff]
    %v1145 = vld [vmem:[%s6 + $0x5c4] sm:$0xf]
    %v1146 = vld [vmem:[%s6 + $0x5c8] sm:$0xff]
    %v1147 = vld [vmem:[%s6 + $0x5d0] sm:$0xff]
    %v1148 = vld [vmem:[%s6 + $0x5d8] sm:$0xf]
    %v1149 = vld [vmem:[%s6 + $0x5dc] sm:$0xff]
    %v1150 = vld [vmem:[%s6 + $0x5e4] sm:$0xff]
    %v1151 = vld [vmem:[%s6 + $0x5ec] sm:$0xf]
    %v1152 = vld [vmem:[%s6 + $0x5f0] sm:$0xff]
    %v1153 = vld [vmem:[%s6 + $0x5f8] sm:$0xff]
    %v1154 = vld [vmem:[%s6 + $0x600] sm:$0xf]
    %v1155 = vld [vmem:[%s6 + $0x604] sm:$0xff]
    %v1156 = vld [vmem:[%s6 + $0x60c] sm:$0xff]
    %v1157 = vld [vmem:[%s6 + $0x614] sm:$0xf]
    %v1158 = vld [vmem:[%s6 + $0x618] sm:$0xff]
    %v1159 = vld [vmem:[%s6 + $0x620] sm:$0xff]
    %v1160 = vld [vmem:[%s6 + $0x628] sm:$0xf]
    %v1161 = vld [vmem:[%s6 + $0x62c] sm:$0xff]
    %v1162 = vld [vmem:[%s6 + $0x634] sm:$0xff]
    %v1163 = vld [vmem:[%s6 + $0x63c] sm:$0xf]
    %v1164 = vld [vmem:[%s6 + $0x640] sm:$0xff]
    %v1165 = vld [vmem:[%s6 + $0x648] sm:$0xff]
    %v1166 = vld [vmem:[%s6 + $0x650] sm:$0xf]
    %v1167 = vld [vmem:[%s6 + $0x654] sm:$0xff]
    %v1168 = vld [vmem:[%s6 + $0x65c] sm:$0xff]
    %v1169 = vld [vmem:[%s6 + $0x664] sm:$0xf]
    %v1170 = vld [vmem:[%s6 + $0x668] sm:$0xff]
    %v1171 = vld [vmem:[%s6 + $0x670] sm:$0xff]
    %v1172 = vld [vmem:[%s6 + $0x678] sm:$0xf]
    %v1173 = vld [vmem:[%s6 + $0x67c] sm:$0xff]
    %v1174 = vld [vmem:[%s6 + $0x684] sm:$0xff]
    %v1175 = vld [vmem:[%s6 + $0x68c] sm:$0xf]
    %v1176 = vld [vmem:[%s6 + $0x690] sm:$0xff]
    %v1177 = vld [vmem:[%s6 + $0x698] sm:$0xff]
    %v1178 = vld [vmem:[%s6 + $0x6a0] sm:$0xf]
    %v1179 = vld [vmem:[%s6 + $0x6a4] sm:$0xff]
    %v1180 = vld [vmem:[%s6 + $0x6ac] sm:$0xff]
    %v1181 = vld [vmem:[%s6 + $0x6b4] sm:$0xf]
    %v1182 = vld [vmem:[%s6 + $0x6b8] sm:$0xff]
    %v1183 = vld [vmem:[%s6 + $0x6c0] sm:$0xff]
    %v1184 = vld [vmem:[%s6 + $0x6c8] sm:$0xf]
    %v1185 = vld [vmem:[%s6 + $0x6cc] sm:$0xff]
    %v1186 = vld [vmem:[%s6 + $0x6d4] sm:$0xff]
    %v1187 = vld [vmem:[%s6 + $0x6dc] sm:$0xf]
    %v1188 = vld [vmem:[%s6 + $0x6e0] sm:$0xff]
    %v1189 = vld [vmem:[%s6 + $0x6e8] sm:$0xff]
    %v1190 = vld [vmem:[%s6 + $0x6f0] sm:$0xf]
    %v1191 = vld [vmem:[%s6 + $0x6f4] sm:$0xff]
    %v1192 = vld [vmem:[%s6 + $0x6fc] sm:$0xff]
    %v1193 = vld [vmem:[%s6 + $0x704] sm:$0xf]
    %v1194 = vld [vmem:[%s6 + $0x708] sm:$0xff]
    %v1195 = vld [vmem:[%s6 + $0x710] sm:$0xff]
    %v1196 = vld [vmem:[%s6 + $0x718] sm:$0xf]
    %v1197 = vld [vmem:[%s6 + $0x71c] sm:$0xff]
    %v1198 = vld [vmem:[%s6 + $0x724] sm:$0xff]
    %v1199 = vld [vmem:[%s6 + $0x72c] sm:$0xf]
    %v1200 = vld [vmem:[%s6 + $0x730] sm:$0xff]
    %v1201 = vld [vmem:[%s6 + $0x738] sm:$0xff]
    %v1202 = vld [vmem:[%s6 + $0x740] sm:$0xf]
    %v1203 = vld [vmem:[%s6 + $0x744] sm:$0xff]
    %v1204 = vld [vmem:[%s6 + $0x74c] sm:$0xff]
    %v1205 = vld [vmem:[%s6 + $0x754] sm:$0xf]
    %v1206 = vld [vmem:[%s6 + $0x758] sm:$0xff]
    %v1207 = vld [vmem:[%s6 + $0x760] sm:$0xff]
    %v1208 = vld [vmem:[%s6 + $0x768] sm:$0xf]
    %v1209 = vld [vmem:[%s6 + $0x76c] sm:$0xff]
    %v1210 = vld [vmem:[%s6 + $0x774] sm:$0xff]
    %v1211 = vld [vmem:[%s6 + $0x77c] sm:$0xf]
    %v1212 = vld [vmem:[%s6 + $0x780] sm:$0xff]
    %v1213 = vld [vmem:[%s6 + $0x788] sm:$0xff]
    %v1214 = vld [vmem:[%s6 + $0x790] sm:$0xf]
    %v1215 = vld [vmem:[%s6 + $0x794] sm:$0xff]
    %v1216 = vld [vmem:[%s6 + $0x79c] sm:$0xff]
    %v1217 = vld [vmem:[%s6 + $0x7a4] sm:$0xf]
    %v1218 = vld [vmem:[%s6 + $0x7a8] sm:$0xff]
    %v1219 = vld [vmem:[%s6 + $0x7b0] sm:$0xff]
    %v1220 = vld [vmem:[%s6 + $0x7b8] sm:$0xf]
    %v1221 = vld [vmem:[%s6 + $0x7bc] sm:$0xff]
    %v1222 = vld [vmem:[%s6 + $0x7c4] sm:$0xff]
    %v1223 = vld [vmem:[%s6 + $0x7cc] sm:$0xf]
    %v1224 = vld [vmem:[%s6 + $0x7d0] sm:$0xff]
    %v1225 = vld [vmem:[%s6 + $0x7d8] sm:$0xff]
    %v1226 = vld [vmem:[%s6 + $0x7e0] sm:$0xf]
    %v1227 = vld [vmem:[%s6 + $0x7e4] sm:$0xff]
    %v1228 = vld [vmem:[%s6 + $0x7ec] sm:$0xff]
    %v1229 = vld [vmem:[%s6 + $0x7f4] sm:$0xf]
    %v1230 = vld [vmem:[%s6 + $0x7f8] sm:$0xff]
    %v1231 = vld [vmem:[%s6 + $0x800] sm:$0xff]
    %v1232 = vld [vmem:[%s6 + $0x808] sm:$0xf]
    %v1233 = vld [vmem:[%s6 + $0x80c] sm:$0xff]
    %v1234 = vld [vmem:[%s6 + $0x814] sm:$0xff]
    %v1235 = vld [vmem:[%s6 + $0x81c] sm:$0xf]
    %v1236 = vld [vmem:[%s6 + $0x820] sm:$0xff]
    %v1237 = vld [vmem:[%s6 + $0x828] sm:$0xff]
    %v1238 = vld [vmem:[%s6 + $0x830] sm:$0xf]
    %v1239 = vld [vmem:[%s6 + $0x834] sm:$0xff]
    %v1240 = vld [vmem:[%s6 + $0x83c] sm:$0xff]
    %v1241 = vld [vmem:[%s6 + $0x844] sm:$0xf]
    %v1242 = vld [vmem:[%s6 + $0x848] sm:$0xff]
    %v1243 = vld [vmem:[%s6 + $0x850] sm:$0xff]
    %v1244 = vld [vmem:[%s6 + $0x858] sm:$0xf]
    %v1245 = vld [vmem:[%s6 + $0x85c] sm:$0xff]
    %v1246 = vld [vmem:[%s6 + $0x864] sm:$0xff]
    %v1247 = vld [vmem:[%s6 + $0x86c] sm:$0xf]
    %v1248 = vld [vmem:[%s6 + $0x870] sm:$0xff]
    %v1249 = vld [vmem:[%s6 + $0x878] sm:$0xff]
    %v1250 = vld [vmem:[%s6 + $0x880] sm:$0xf]
    %v1251 = vld [vmem:[%s6 + $0x884] sm:$0xff]
    %v1252 = vld [vmem:[%s6 + $0x88c] sm:$0xff]
    %v1253 = vld [vmem:[%s6 + $0x894] sm:$0xf]
    %v1254 = vld [vmem:[%s6 + $0x898] sm:$0xff]
    %v1255 = vld [vmem:[%s6 + $0x8a0] sm:$0xff]
    %v1256 = vld [vmem:[%s6 + $0x8a8] sm:$0xf]
    %v1257 = vld [vmem:[%s6 + $0x8ac] sm:$0xff]
    %v1258 = vld [vmem:[%s6 + $0x8b4] sm:$0xff]
    %v1259 = vld [vmem:[%s6 + $0x8bc] sm:$0xf]
    %v1260 = vld [vmem:[%s6 + $0x8c0] sm:$0xff]
    %v1261 = vld [vmem:[%s6 + $0x8c8] sm:$0xff]
    %v1262 = vld [vmem:[%s6 + $0x8d0] sm:$0xf]
    %v1263 = vld [vmem:[%s6 + $0x8d4] sm:$0xff]
    %v1264 = vld [vmem:[%s6 + $0x8dc] sm:$0xff]
    %v1265 = vld [vmem:[%s6 + $0x8e4] sm:$0xf]
    %v1266 = vld [vmem:[%s6 + $0x8e8] sm:$0xff]
    %v1267 = vld [vmem:[%s6 + $0x8f0] sm:$0xff]
    %v1268 = vld [vmem:[%s6 + $0x8f8] sm:$0xf]
    %v1269 = vld [vmem:[%s6 + $0x8fc] sm:$0xff]
    %v1270 = vld [vmem:[%s6 + $0x904] sm:$0xff]
    %v1271 = vld [vmem:[%s6 + $0x90c] sm:$0xf]
    %v1272 = vld [vmem:[%s6 + $0x910] sm:$0xff]
    %v1273 = vld [vmem:[%s6 + $0x918] sm:$0xff]
    %v1274 = vld [vmem:[%s6 + $0x920] sm:$0xf]
    %v1275 = vld [vmem:[%s6 + $0x924] sm:$0xff]
    %v1276 = vld [vmem:[%s6 + $0x92c] sm:$0xff]
    %v1277 = vld [vmem:[%s6 + $0x934] sm:$0xf]
    %v1278 = vld [vmem:[%s6 + $0x938] sm:$0xff]
    %v1279 = vld [vmem:[%s6 + $0x940] sm:$0xff]
    %v1280 = vld [vmem:[%s6 + $0x948] sm:$0xf]
    %v1281 = vld [vmem:[%s6 + $0x94c] sm:$0xff]
    %v1282 = vld [vmem:[%s6 + $0x954] sm:$0xff]
    %v1283 = vld [vmem:[%s6 + $0x95c] sm:$0xf]
    %v1284 = vld [vmem:[%s6 + $0x960] sm:$0xff]
    %v1285 = vld [vmem:[%s6 + $0x968] sm:$0xff]
    %v1286 = vld [vmem:[%s6 + $0x970] sm:$0xf]
    %v1287 = vld [vmem:[%s6 + $0x974] sm:$0xff]
    %v1288 = vld [vmem:[%s6 + $0x97c] sm:$0xff]
    %v1289 = vld [vmem:[%s6 + $0x984] sm:$0xf]
    %v1290 = vld [vmem:[%s6 + $0x988] sm:$0xff]
    %v1291 = vld [vmem:[%s6 + $0x990] sm:$0xff]
    %v1292 = vld [vmem:[%s6 + $0x998] sm:$0xf]
    %v1293 = vld [vmem:[%s6 + $0x99c] sm:$0xff]
    %v1294 = vld [vmem:[%s6 + $0x9a4] sm:$0xff]
    %v1295 = vld [vmem:[%s6 + $0x9ac] sm:$0xf]
    %v1296 = vld [vmem:[%s6 + $0x9b0] sm:$0xff]
    %v1297 = vld [vmem:[%s6 + $0x9b8] sm:$0xff]
    %v1298 = vld [vmem:[%s6 + $0x9c0] sm:$0xf]
    %v1299 = vld [vmem:[%s6 + $0x9c4] sm:$0xff]
    %v1300 = vld [vmem:[%s6 + $0x9cc] sm:$0xff]
    %v1301 = vld [vmem:[%s6 + $0x9d4] sm:$0xf]
    %v1302 = vld [vmem:[%s6 + $0x9d8] sm:$0xff]
    %v1303 = vld [vmem:[%s6 + $0x9e0] sm:$0xff]
    %v1304 = vld [vmem:[%s6 + $0x9e8] sm:$0xf]
    %v1305 = vld [vmem:[%s6 + $0x9ec] sm:$0xff]
    %v1306 = vld [vmem:[%s6 + $0x9f4] sm:$0xff]
    %v1307 = vld [vmem:[%s6 + $0x9fc] sm:$0xf]
    %v1308 = vld [vmem:[%s6 + $0xa00] sm:$0xff]
    %v1309 = vld [vmem:[%s6 + $0xa08] sm:$0xff]
    %v1310 = vld [vmem:[%s6 + $0xa10] sm:$0xf]
    %v1311 = vld [vmem:[%s6 + $0xa14] sm:$0xff]
    %v1312 = vld [vmem:[%s6 + $0xa1c] sm:$0xff]
    %v1313 = vld [vmem:[%s6 + $0xa24] sm:$0xf]
    %v1314 = vld [vmem:[%s6 + $0xa28] sm:$0xff]
    %v1315 = vld [vmem:[%s6 + $0xa30] sm:$0xff]
    %v1316 = vld [vmem:[%s6 + $0xa38] sm:$0xf]
    %v1317 = vld [vmem:[%s6 + $0xa3c] sm:$0xff]
    %v1318 = vld [vmem:[%s6 + $0xa44] sm:$0xff]
    %v1319 = vld [vmem:[%s6 + $0xa4c] sm:$0xf]
    %v1320 = vld [vmem:[%s6 + $0xa50] sm:$0xff]
    %v1321 = vld [vmem:[%s6 + $0xa58] sm:$0xff]
    %v1322 = vld [vmem:[%s6 + $0xa60] sm:$0xf]
    %v1323 = vld [vmem:[%s6 + $0xa64] sm:$0xff]
    %v1324 = vld [vmem:[%s6 + $0xa6c] sm:$0xff]
    %v1325 = vld [vmem:[%s6 + $0xa74] sm:$0xf]
    %v1326 = vld [vmem:[%s6 + $0xa78] sm:$0xff]
    %v1327 = vld [vmem:[%s6 + $0xa80] sm:$0xff]
    %v1328 = vld [vmem:[%s6 + $0xa88] sm:$0xf]
    %v1329 = vld [vmem:[%s6 + $0xa8c] sm:$0xff]
    %v1330 = vld [vmem:[%s6 + $0xa94] sm:$0xff]
    %v1331 = vld [vmem:[%s6 + $0xa9c] sm:$0xf]
    %v1332 = vld [vmem:[%s6 + $0xaa0] sm:$0xff]
    %v1333 = vld [vmem:[%s6 + $0xaa8] sm:$0xff]
    %v1334 = vld [vmem:[%s6 + $0xab0] sm:$0xf]
    %v1335 = vld [vmem:[%s6 + $0xab4] sm:$0xff]
    %v1336 = vld [vmem:[%s6 + $0xabc] sm:$0xff]
    %v1337 = vld [vmem:[%s6 + $0xac4] sm:$0xf]
    %v1338 = vld [vmem:[%s6 + $0xac8] sm:$0xff]
    %v1339 = vld [vmem:[%s6 + $0xad0] sm:$0xff]
    %v1340 = vld [vmem:[%s6 + $0xad8] sm:$0xf]
    %v1341 = vld [vmem:[%s6 + $0xadc] sm:$0xff]
    %v1342 = vld [vmem:[%s6 + $0xae4] sm:$0xff]
    %v1343 = vld [vmem:[%s6 + $0xaec] sm:$0xf]
    %v1344 = vld [vmem:[%s6 + $0xaf0] sm:$0xff]
    %v1345 = vld [vmem:[%s6 + $0xaf8] sm:$0xff]
    %v1346 = vld [vmem:[%s6 + $0xb00] sm:$0xf]
    %v1347 = vld [vmem:[%s6 + $0xb04] sm:$0xff]
    %v1348 = vld [vmem:[%s6 + $0xb0c] sm:$0xff]
    %v1349 = vld [vmem:[%s6 + $0xb14] sm:$0xf]
    %v1350 = vld [vmem:[%s6 + $0xb18] sm:$0xff]
    %v1351 = vld [vmem:[%s6 + $0xb20] sm:$0xff]
    %v1352 = vld [vmem:[%s6 + $0xb28] sm:$0xf]
    %v1353 = vld [vmem:[%s6 + $0xb2c] sm:$0xff]
    %v1354 = vld [vmem:[%s6 + $0xb34] sm:$0xff]
    %v1355 = vld [vmem:[%s6 + $0xb3c] sm:$0xf]
    %v1356 = vld [vmem:[%s6 + $0xb40] sm:$0xff]
    %v1357 = vld [vmem:[%s6 + $0xb48] sm:$0xff]
    %v1358 = vld [vmem:[%s6 + $0xb50] sm:$0xf]
    %v1359 = vld [vmem:[%s6 + $0xb54] sm:$0xff]
    %v1360 = vld [vmem:[%s6 + $0xb5c] sm:$0xff]
    %v1361 = vld [vmem:[%s6 + $0xb64] sm:$0xf]
    %v1362 = vld [vmem:[%s6 + $0xb68] sm:$0xff]
    %v1363 = vld [vmem:[%s6 + $0xb70] sm:$0xff]
    %v1364 = vld [vmem:[%s6 + $0xb78] sm:$0xf]
    %v1365 = vld [vmem:[%s6 + $0xb7c] sm:$0xff]
    %v1366 = vld [vmem:[%s6 + $0xb84] sm:$0xff]
    %v1367 = vld [vmem:[%s6 + $0xb8c] sm:$0xf]
    %v1368 = vld [vmem:[%s6 + $0xb90] sm:$0xff]
    %v1369 = vld [vmem:[%s6 + $0xb98] sm:$0xff]
    %v1370 = vld [vmem:[%s6 + $0xba0] sm:$0xf]
    %v1371 = vld [vmem:[%s6 + $0xba4] sm:$0xff]
    %v1372 = vld [vmem:[%s6 + $0xbac] sm:$0xff]
    %v1373 = vld [vmem:[%s6 + $0xbb4] sm:$0xf]
    %v1374 = vld [vmem:[%s6 + $0xbb8] sm:$0xff]
    %v1375 = vld [vmem:[%s6 + $0xbc0] sm:$0xff]
    %v1376 = vld [vmem:[%s6 + $0xbc8] sm:$0xf]
    %v1377 = vld [vmem:[%s6 + $0xbcc] sm:$0xff]
    %v1378 = vld [vmem:[%s6 + $0xbd4] sm:$0xff]
    %v1379 = vld [vmem:[%s6 + $0xbdc] sm:$0xf]
    %v1380 = vld [vmem:[%s6 + $0xbe0] sm:$0xff]
    %v1381 = vld [vmem:[%s6 + $0xbe8] sm:$0xff]
    %v1382 = vld [vmem:[%s6 + $0xbf0] sm:$0xf]
    %v1383 = vld [vmem:[%s6 + $0xbf4] sm:$0xff]
    %v1384 = vld [vmem:[%s6 + $0xbfc] sm:$0xff]
    %v1385 = vld [vmem:[%s6 + $0xc04] sm:$0xf]
    %v1386 = vld [vmem:[%s6 + $0xc08] sm:$0xff]
    %v1387 = vld [vmem:[%s6 + $0xc10] sm:$0xff]
    %v1388 = vld [vmem:[%s6 + $0xc18] sm:$0xf]
    %v1389 = vld [vmem:[%s6 + $0xc1c] sm:$0xff]
    %v1390 = vld [vmem:[%s6 + $0xc24] sm:$0xff]
    %v1391 = vld [vmem:[%s6 + $0xc2c] sm:$0xf]
    %v1392 = vld [vmem:[%s6 + $0xc30] sm:$0xff]
    %v1393 = vld [vmem:[%s6 + $0xc38] sm:$0xff]
    %v1394 = vld [vmem:[%s6 + $0xc40] sm:$0xf]
    %v1395 = vld [vmem:[%s6 + $0xc44] sm:$0xff]
    %v1396 = vld [vmem:[%s6 + $0xc4c] sm:$0xff]
    %v1397 = vld [vmem:[%s6 + $0xc54] sm:$0xf]
    %v1398 = vld [vmem:[%s6 + $0xc58] sm:$0xff]
    %v1399 = vld [vmem:[%s6 + $0xc60] sm:$0xff]
    %v1400 = vld [vmem:[%s6 + $0xc68] sm:$0xf]
    %v1401 = vld [vmem:[%s6 + $0xc6c] sm:$0xff]
    %v1402 = vld [vmem:[%s6 + $0xc74] sm:$0xff]
    %v1403 = vld [vmem:[%s6 + $0xc7c] sm:$0xf]
    %v1404 = vld [vmem:[%s6 + $0xc80] sm:$0xff]
    %v1405 = vld [vmem:[%s6 + $0xc88] sm:$0xff]
    %v1406 = vld [vmem:[%s6 + $0xc90] sm:$0xf]
    %v1407 = vld [vmem:[%s6 + $0xc94] sm:$0xff]
    %v1408 = vld [vmem:[%s6 + $0xc9c] sm:$0xff]
    %v1409 = vld [vmem:[%s6 + $0xca4] sm:$0xf]
    %v1410 = vld [vmem:[%s6 + $0xca8] sm:$0xff]
    %v1411 = vld [vmem:[%s6 + $0xcb0] sm:$0xff]
    %v1412 = vld [vmem:[%s6 + $0xcb8] sm:$0xf]
    %v1413 = vld [vmem:[%s6 + $0xcbc] sm:$0xff]
    %v1414 = vld [vmem:[%s6 + $0xcc4] sm:$0xff]
    %v1415 = vld [vmem:[%s6 + $0xccc] sm:$0xf]
    %v1416 = vld [vmem:[%s6 + $0xcd0] sm:$0xff]
    %v1417 = vld [vmem:[%s6 + $0xcd8] sm:$0xff]
    %v1418 = vld [vmem:[%s6 + $0xce0] sm:$0xf]
    %v1419 = vld [vmem:[%s6 + $0xce4] sm:$0xff]
    %v1420 = vld [vmem:[%s6 + $0xcec] sm:$0xff]
    %v1421 = vld [vmem:[%s6 + $0xcf4] sm:$0xf]
    %v1422 = vld [vmem:[%s6 + $0xcf8] sm:$0xff]
    %v1423 = vld [vmem:[%s6 + $0xd00] sm:$0xff]
    %v1424 = vld [vmem:[%s6 + $0xd08] sm:$0xf]
    %v1425 = vld [vmem:[%s6 + $0xd0c] sm:$0xff]
    %v1426 = vld [vmem:[%s6 + $0xd14] sm:$0xff]
    %v1427 = vld [vmem:[%s6 + $0xd1c] sm:$0xf]
    %v1428 = vld [vmem:[%s6 + $0xd20] sm:$0xff]
    %v1429 = vld [vmem:[%s6 + $0xd28] sm:$0xff]
    %v1430 = vld [vmem:[%s6 + $0xd30] sm:$0xf]
    %v1431 = vld [vmem:[%s6 + $0xd34] sm:$0xff]
    %v1432 = vld [vmem:[%s6 + $0xd3c] sm:$0xff]
    %v1433 = vld [vmem:[%s6 + $0xd44] sm:$0xf]
    %v1434 = vld [vmem:[%s6 + $0xd48] sm:$0xff]
    %v1435 = vld [vmem:[%s6 + $0xd50] sm:$0xff]
    %v1436 = vld [vmem:[%s6 + $0xd58] sm:$0xf]
    %v1437 = vld [vmem:[%s6 + $0xd5c] sm:$0xff]
    %v1438 = vld [vmem:[%s6 + $0xd64] sm:$0xff]
    %v1439 = vld [vmem:[%s6 + $0xd6c] sm:$0xf]
    %v1440 = vld [vmem:[%s6 + $0xd70] sm:$0xff]
    %v1441 = vld [vmem:[%s6 + $0xd78] sm:$0xff]
    %v1442 = vld [vmem:[%s6 + $0xd80] sm:$0xf]
    %v1443 = vld [vmem:[%s6 + $0xd84] sm:$0xff]
    %v1444 = vld [vmem:[%s6 + $0xd8c] sm:$0xff]
    %v1445 = vld [vmem:[%s6 + $0xd94] sm:$0xf]
    %v1446 = vld [vmem:[%s6 + $0xd98] sm:$0xff]
    %v1447 = vld [vmem:[%s6 + $0xda0] sm:$0xff]
    %v1448 = vld [vmem:[%s6 + $0xda8] sm:$0xf]
    %v1449 = vld [vmem:[%s6 + $0xdac] sm:$0xff]
    %v1450 = vld [vmem:[%s6 + $0xdb4] sm:$0xff]
    %v1451 = vld [vmem:[%s6 + $0xdbc] sm:$0xf]
    %v1452 = vld [vmem:[%s6 + $0xdc0] sm:$0xff]
    %v1453 = vld [vmem:[%s6 + $0xdc8] sm:$0xff]
    %v1454 = vld [vmem:[%s6 + $0xdd0] sm:$0xf]
    %v1455 = vld [vmem:[%s6 + $0xdd4] sm:$0xff]
    %v1456 = vld [vmem:[%s6 + $0xddc] sm:$0xff]
    %v1457 = vld [vmem:[%s6 + $0xde4] sm:$0xf]
    %v1458 = vld [vmem:[%s6 + $0xde8] sm:$0xff]
    %v1459 = vld [vmem:[%s6 + $0xdf0] sm:$0xff]
    %v1460 = vld [vmem:[%s6 + $0xdf8] sm:$0xf]
    %v1461 = vld [vmem:[%s6 + $0xdfc] sm:$0xff]
    %v1462 = vld [vmem:[%s6 + $0xe04] sm:$0xff]
    %v1463 = vld [vmem:[%s6 + $0xe0c] sm:$0xf]
    %v1464 = vld [vmem:[%s6 + $0xe10] sm:$0xff]
    %v1465 = vld [vmem:[%s6 + $0xe18] sm:$0xff]
    %v1466 = vld [vmem:[%s6 + $0xe20] sm:$0xf]
    %v1467 = vld [vmem:[%s6 + $0xe24] sm:$0xff]
    %v1468 = vld [vmem:[%s6 + $0xe2c] sm:$0xff]
    %v1469 = vld [vmem:[%s6 + $0xe34] sm:$0xf]
    %v1470 = vld [vmem:[%s6 + $0xe38] sm:$0xff]
    %v1471 = vld [vmem:[%s6 + $0xe40] sm:$0xff]
    %v1472 = vld [vmem:[%s6 + $0xe48] sm:$0xf]
    %v1473 = vld [vmem:[%s6 + $0xe4c] sm:$0xff]
    %v1474 = vld [vmem:[%s6 + $0xe54] sm:$0xff]
    %v1475 = vld [vmem:[%s6 + $0xe5c] sm:$0xf]
    %v1476 = vld [vmem:[%s6 + $0xe60] sm:$0xff]
    %v1477 = vld [vmem:[%s6 + $0xe68] sm:$0xff]
    %v1478 = vld [vmem:[%s6 + $0xe70] sm:$0xf]
    %v1479 = vld [vmem:[%s6 + $0xe74] sm:$0xff]
    %v1480 = vld [vmem:[%s6 + $0xe7c] sm:$0xff]
    %v1481 = vld [vmem:[%s6 + $0xe84] sm:$0xf]
    %v1482 = vld [vmem:[%s6 + $0xe88] sm:$0xff]
    %v1483 = vld [vmem:[%s6 + $0xe90] sm:$0xff]
    %v1484 = vld [vmem:[%s6 + $0xe98] sm:$0xf]
    %v1485 = vld [vmem:[%s6 + $0xe9c] sm:$0xff]
    %v1486 = vld [vmem:[%s6 + $0xea4] sm:$0xff]
    %v1487 = vld [vmem:[%s6 + $0xeac] sm:$0xf]
    %v1488 = vld [vmem:[%s6 + $0xeb0] sm:$0xff]
    %v1489 = vld [vmem:[%s6 + $0xeb8] sm:$0xff]
    %v1490 = vld [vmem:[%s6 + $0xec0] sm:$0xf]
    %v1491 = vld [vmem:[%s6 + $0xec4] sm:$0xff]
    %v1492 = vld [vmem:[%s6 + $0xecc] sm:$0xff]
    %v1493 = vld [vmem:[%s6 + $0xed4] sm:$0xf]
    %v1494 = vld [vmem:[%s6 + $0xed8] sm:$0xff]
    %v1495 = vld [vmem:[%s6 + $0xee0] sm:$0xff]
    %v1496 = vld [vmem:[%s6 + $0xee8] sm:$0xf]
    %v1497 = vld [vmem:[%s6 + $0xeec] sm:$0xff]
    %v1498 = vld [vmem:[%s6 + $0xef4] sm:$0xff]
    %v1499 = vld [vmem:[%s6 + $0xefc] sm:$0xf]
    %v1500 = vld [vmem:[%s6 + $0xf00] sm:$0xff]
    %v1501 = vld [vmem:[%s6 + $0xf08] sm:$0xff]
    %v1502 = vld [vmem:[%s6 + $0xf10] sm:$0xf]
    %v1503 = vld [vmem:[%s6 + $0xf14] sm:$0xff]
    %v1504 = vld [vmem:[%s6 + $0xf1c] sm:$0xff]
    %v1505 = vld [vmem:[%s6 + $0xf24] sm:$0xf]
    %v1506 = vld [vmem:[%s6 + $0xf28] sm:$0xff]
    %v1507 = vld [vmem:[%s6 + $0xf30] sm:$0xff]
    %v1508 = vld [vmem:[%s6 + $0xf38] sm:$0xf]
    %v1509 = vld [vmem:[%s6 + $0xf3c] sm:$0xff]
    %v1510 = vld [vmem:[%s6 + $0xf44] sm:$0xff]
    %v1511 = vld [vmem:[%s6 + $0xf4c] sm:$0xf]
    %v1512 = vld [vmem:[%s6 + $0xf50] sm:$0xff]
    %v1513 = vld [vmem:[%s6 + $0xf58] sm:$0xff]
    %v1514 = vld [vmem:[%s6 + $0xf60] sm:$0xf]
    %v1515 = vld [vmem:[%s6 + $0xf64] sm:$0xff]
    %v1516 = vld [vmem:[%s6 + $0xf6c] sm:$0xff]
    %v1517 = vld [vmem:[%s6 + $0xf74] sm:$0xf]
    %v1518 = vld [vmem:[%s6 + $0xf78] sm:$0xff]
    %v1519 = vld [vmem:[%s6 + $0xf80] sm:$0xff]
    %v1520 = vld [vmem:[%s6 + $0xf88] sm:$0xf]
    %v1521 = vld [vmem:[%s6 + $0xf8c] sm:$0xff]
    %v1522 = vld [vmem:[%s6 + $0xf94] sm:$0xff]
    %v1523 = vld [vmem:[%s6 + $0xf9c] sm:$0xf]
    %v1524 = vld [vmem:[%s6 + $0xfa0] sm:$0xff]
    %v1525 = vld [vmem:[%s6 + $0xfa8] sm:$0xff]
    %v1526 = vld [vmem:[%s6 + $0xfb0] sm:$0xf]
    %v1527 = vld [vmem:[%s6 + $0xfb4] sm:$0xff]
    %v1528 = vld [vmem:[%s6 + $0xfbc] sm:$0xff]
    %v1529 = vld [vmem:[%s6 + $0xfc4] sm:$0xf]
    %v1530 = vld [vmem:[%s6 + $0xfc8] sm:$0xff]
    %v1531 = vld [vmem:[%s6 + $0xfd0] sm:$0xff]
    %v1532 = vld [vmem:[%s6 + $0xfd8] sm:$0xf]
    %v1533 = vld [vmem:[%s6 + $0xfdc] sm:$0xff]
    %v1534 = vld [vmem:[%s6 + $0xfe4] sm:$0xff]
    %v1535 = vld [vmem:[%s6 + $0xfec] sm:$0xf]
    %v1536 = vld [vmem:[%s6 + $0xff0] sm:$0xff]
    %v1537 = vld [vmem:[%s6 + $0xff8] sm:$0xff]
    %v1538 = vld [vmem:[%s6 + $0x1000] sm:$0xf]
    %v1539 = vld [vmem:[%s6 + $0x1004] sm:$0xff]
    %v1540 = vld [vmem:[%s6 + $0x100c] sm:$0xff]
    %v1541 = vld [vmem:[%s6 + $0x1014] sm:$0xf]
    %v1542 = vld [vmem:[%s6 + $0x1018] sm:$0xff]
    %v1543 = vld [vmem:[%s6 + $0x1020] sm:$0xff]
    %v1544 = vld [vmem:[%s6 + $0x1028] sm:$0xf]
    %v1545 = vld [vmem:[%s6 + $0x102c] sm:$0xff]
    %v1546 = vld [vmem:[%s6 + $0x1034] sm:$0xff]
    %v1547 = vld [vmem:[%s6 + $0x103c] sm:$0xf]
    %v1548 = vld [vmem:[%s6 + $0x1040] sm:$0xff]
    %v1549 = vld [vmem:[%s6 + $0x1048] sm:$0xff]
    %v1550 = vld [vmem:[%s6 + $0x1050] sm:$0xf]
    %v1551 = vld [vmem:[%s6 + $0x1054] sm:$0xff]
    %v1552 = vld [vmem:[%s6 + $0x105c] sm:$0xff]
    %v1553 = vld [vmem:[%s6 + $0x1064] sm:$0xf]
    %v1554 = vld [vmem:[%s6 + $0x1068] sm:$0xff]
    %v1555 = vld [vmem:[%s6 + $0x1070] sm:$0xff]
    %v1556 = vld [vmem:[%s6 + $0x1078] sm:$0xf]
    %v1557 = vld [vmem:[%s6 + $0x107c] sm:$0xff]
    %v1558 = vld [vmem:[%s6 + $0x1084] sm:$0xff]
    %v1559 = vld [vmem:[%s6 + $0x108c] sm:$0xf]
    %v1560 = vld [vmem:[%s6 + $0x1090] sm:$0xff]
    %v1561 = vld [vmem:[%s6 + $0x1098] sm:$0xff]
    %v1562 = vld [vmem:[%s6 + $0x10a0] sm:$0xf]
    %v1563 = vld [vmem:[%s6 + $0x10a4] sm:$0xff]
    %v1564 = vld [vmem:[%s6 + $0x10ac] sm:$0xff]
    %v1565 = vld [vmem:[%s6 + $0x10b4] sm:$0xf]
    %v1566 = vld [vmem:[%s6 + $0x10b8] sm:$0xff]
    %v1567 = vld [vmem:[%s6 + $0x10c0] sm:$0xff]
    %v1568 = vld [vmem:[%s6 + $0x10c8] sm:$0xf]
    %v1569 = vld [vmem:[%s6 + $0x10cc] sm:$0xff]
    %v1570 = vld [vmem:[%s6 + $0x10d4] sm:$0xff]
    %v1571 = vld [vmem:[%s6 + $0x10dc] sm:$0xf]
    %v1572 = vld [vmem:[%s6 + $0x10e0] sm:$0xff]
    %v1573 = vld [vmem:[%s6 + $0x10e8] sm:$0xff]
    %v1574 = vld [vmem:[%s6 + $0x10f0] sm:$0xf]
    %v1575 = vld [vmem:[%s6 + $0x10f4] sm:$0xff]
    %v1576 = vld [vmem:[%s6 + $0x10fc] sm:$0xff]
    %v1577 = vld [vmem:[%s6 + $0x1104] sm:$0xf]
    %v1578 = vld [vmem:[%s6 + $0x1108] sm:$0xff]
    %v1579 = vld [vmem:[%s6 + $0x1110] sm:$0xff]
    %v1580 = vld [vmem:[%s6 + $0x1118] sm:$0xf]
    %v1581 = vld [vmem:[%s6 + $0x111c] sm:$0xff]
    %v1582 = vld [vmem:[%s6 + $0x1124] sm:$0xff]
    %v1583 = vld [vmem:[%s6 + $0x112c] sm:$0xf]
    %v1584 = vld [vmem:[%s6 + $0x1130] sm:$0xff]
    %v1585 = vld [vmem:[%s6 + $0x1138] sm:$0xff]
    %v1586 = vld [vmem:[%s6 + $0x1140] sm:$0xf]
    %v1587 = vld [vmem:[%s6 + $0x1144] sm:$0xff]
    %v1588 = vld [vmem:[%s6 + $0x114c] sm:$0xff]
    %v1589 = vld [vmem:[%s6 + $0x1154] sm:$0xf]
    %v1590 = vld [vmem:[%s6 + $0x1158] sm:$0xff]
    %v1591 = vld [vmem:[%s6 + $0x1160] sm:$0xff]
    %v1592 = vld [vmem:[%s6 + $0x1168] sm:$0xf]
    %v1593 = vld [vmem:[%s6 + $0x116c] sm:$0xff]
    %v1594 = vld [vmem:[%s6 + $0x1174] sm:$0xff]
    %v1595 = vld [vmem:[%s6 + $0x117c] sm:$0xf]
    %v1596 = vld [vmem:[%s6 + $0x1180] sm:$0xff]
    %v1597 = vld [vmem:[%s6 + $0x1188] sm:$0xff]
    %v1598 = vld [vmem:[%s6 + $0x1190] sm:$0xf]
    %v1599 = vld [vmem:[%s6 + $0x1194] sm:$0xff]
    %v1600 = vld [vmem:[%s6 + $0x119c] sm:$0xff]
    %v1601 = vld [vmem:[%s6 + $0x11a4] sm:$0xf]
    %v1602 = vld [vmem:[%s6 + $0x11a8] sm:$0xff]
    %v1603 = vld [vmem:[%s6 + $0x11b0] sm:$0xff]
    %v1604 = vld [vmem:[%s6 + $0x11b8] sm:$0xf]
    %v1605 = vld [vmem:[%s6 + $0x11bc] sm:$0xff]
    %v1606 = vld [vmem:[%s6 + $0x11c4] sm:$0xff]
    %v1607 = vld [vmem:[%s6 + $0x11cc] sm:$0xf]
    %v1608 = vld [vmem:[%s6 + $0x11d0] sm:$0xff]
    %v1609 = vld [vmem:[%s6 + $0x11d8] sm:$0xff]
    %v1610 = vld [vmem:[%s6 + $0x11e0] sm:$0xf]
    %v1611 = vld [vmem:[%s6 + $0x11e4] sm:$0xff]
    %v1612 = vld [vmem:[%s6 + $0x11ec] sm:$0xff]
    %v1613 = vld [vmem:[%s6 + $0x11f4] sm:$0xf]
    %v1614 = vld [vmem:[%s6 + $0x11f8] sm:$0xff]
    %v1615 = vld [vmem:[%s6 + $0x1200] sm:$0xff]
    %v1616 = vld [vmem:[%s6 + $0x1208] sm:$0xf]
    %v1617 = vld [vmem:[%s6 + $0x120c] sm:$0xff]
    %v1618 = vld [vmem:[%s6 + $0x1214] sm:$0xff]
    %v1619 = vld [vmem:[%s6 + $0x121c] sm:$0xf]
    %v1620 = vld [vmem:[%s6 + $0x1220] sm:$0xff]
    %v1621 = vld [vmem:[%s6 + $0x1228] sm:$0xff]
    %v1622 = vld [vmem:[%s6 + $0x1230] sm:$0xf]
    %v1623 = vld [vmem:[%s6 + $0x1234] sm:$0xff]
    %v1624 = vld [vmem:[%s6 + $0x123c] sm:$0xff]
    %v1625 = vld [vmem:[%s6 + $0x1244] sm:$0xf]
    %v1626 = vld [vmem:[%s6 + $0x1248] sm:$0xff]
    %v1627 = vld [vmem:[%s6 + $0x1250] sm:$0xff]
    %v1628 = vld [vmem:[%s6 + $0x1258] sm:$0xf]
    %v1629 = vld [vmem:[%s6 + $0x125c] sm:$0xff]
    %v1630 = vld [vmem:[%s6 + $0x1264] sm:$0xff]
    %v1631 = vld [vmem:[%s6 + $0x126c] sm:$0xf]
    %v1632 = vld [vmem:[%s6 + $0x1270] sm:$0xff]
    %v1633 = vld [vmem:[%s6 + $0x1278] sm:$0xff]
    %v1634 = vld [vmem:[%s6 + $0x1280] sm:$0xf]
    %v1635 = vld [vmem:[%s6 + $0x1284] sm:$0xff]
    %v1636 = vld [vmem:[%s6 + $0x128c] sm:$0xff]
    %v1637 = vld [vmem:[%s6 + $0x1294] sm:$0xf]
    %v1638 = vld [vmem:[%s6 + $0x1298] sm:$0xff]
    %v1639 = vld [vmem:[%s6 + $0x12a0] sm:$0xff]
    %v1640 = vld [vmem:[%s6 + $0x12a8] sm:$0xf]
    %v1641 = vld [vmem:[%s6 + $0x12ac] sm:$0xff]
    %v1642 = vld [vmem:[%s6 + $0x12b4] sm:$0xff]
    %v1643 = vld [vmem:[%s6 + $0x12bc] sm:$0xf]
    %v1644 = vld [vmem:[%s6 + $0x12c0] sm:$0xff]
    %v1645 = vld [vmem:[%s6 + $0x12c8] sm:$0xff]
    %v1646 = vld [vmem:[%s6 + $0x12d0] sm:$0xf]
    %v1647 = vld [vmem:[%s6 + $0x12d4] sm:$0xff]
    %v1648 = vld [vmem:[%s6 + $0x12dc] sm:$0xff]
    %v1649 = vld [vmem:[%s6 + $0x12e4] sm:$0xf]
    %v1650 = vld [vmem:[%s6 + $0x12e8] sm:$0xff]
    %v1651 = vld [vmem:[%s6 + $0x12f0] sm:$0xff]
    %v1652 = vld [vmem:[%s6 + $0x12f8] sm:$0xf]
    %v1653 = vld [vmem:[%s6 + $0x12fc] sm:$0xff]
    %v1654 = vld [vmem:[%s6 + $0x1304] sm:$0xff]
    %v1655 = vld [vmem:[%s6 + $0x130c] sm:$0xf]
    %v1656 = vld [vmem:[%s6 + $0x1310] sm:$0xff]
    %v1657 = vld [vmem:[%s6 + $0x1318] sm:$0xff]
    %v1658 = vld [vmem:[%s6 + $0x1320] sm:$0xf]
    %v1659 = vld [vmem:[%s6 + $0x1324] sm:$0xff]
    %v1660 = vld [vmem:[%s6 + $0x132c] sm:$0xff]
    %v1661 = vld [vmem:[%s6 + $0x1334] sm:$0xf]
    %v1662 = vld [vmem:[%s6 + $0x1338] sm:$0xff]
    %v1663 = vld [vmem:[%s6 + $0x1340] sm:$0xff]
    %v1664 = vld [vmem:[%s6 + $0x1348] sm:$0xf]
    %v1665 = vld [vmem:[%s6 + $0x134c] sm:$0xff]
    %v1666 = vld [vmem:[%s6 + $0x1354] sm:$0xff]
    %v1667 = vld [vmem:[%s6 + $0x135c] sm:$0xf]
    %v1668 = vld [vmem:[%s6 + $0x1360] sm:$0xff]
    %v1669 = vld [vmem:[%s6 + $0x1368] sm:$0xff]
    %v1670 = vld [vmem:[%s6 + $0x1370] sm:$0xf]
    %v1671 = vld [vmem:[%s6 + $0x1374] sm:$0xff]
    %v1672 = vld [vmem:[%s6 + $0x137c] sm:$0xff]
    %v1673 = vld [vmem:[%s6 + $0x1384] sm:$0xf]
    %v1674 = vld [vmem:[%s7] sm:$0x1f]
    %v1676 = vlaneseq
    %v1677 = vshrl.u32 %v1676, 7
    %v1678 = vsub.s32 0, %v1677
    %v1679 = vrot.slane %v1674, %v1678
    %v1680 = vlaneseq
    %v1681 = vshrl.u32 %v1680, 7
    %v1682 = vsub.s32 1, %v1681
    %v1683 = vrot.slane %v1674, %v1682
    %v1684 = vlaneseq
    %v1685 = vshrl.u32 %v1684, 7
    %v1686 = vsub.s32 2, %v1685
    %v1687 = vrot.slane %v1674, %v1686
    %v1688 = vlaneseq
    %v1689 = vshrl.u32 %v1688, 7
    %v1690 = vsub.s32 3, %v1689
    %v1691 = vrot.slane %v1674, %v1690
    %v1692 = vlaneseq
    %v1693 = vshrl.u32 %v1692, 7
    %v1694 = vsub.s32 4, %v1693
    %v1695 = vrot.slane %v1674, %v1694
    %v2451 = vunpack.c.l.b16 %v924
    %v2452 = vunpack.c.h.b16 %v924
    %v2453 = vunpack.c.l.b16 %v925
    %v2454 = vunpack.c.h.b16 %v925
    %v2455 = vunpack.c.l.b16 %v926
    %v2456 = vunpack.c.l.b16 %v927
    %v2457 = vunpack.c.h.b16 %v927
    %v2458 = vunpack.c.l.b16 %v928
    %v2459 = vunpack.c.h.b16 %v928
    %v2460 = vunpack.c.l.b16 %v929
    %v2461 = vunpack.c.l.b16 %v930
    %v2462 = vunpack.c.h.b16 %v930
    %v2463 = vunpack.c.l.b16 %v931
    %v2464 = vunpack.c.h.b16 %v931
    %v2465 = vunpack.c.l.b16 %v932
    %v2466 = vunpack.c.l.b16 %v933
    %v2467 = vunpack.c.h.b16 %v933
    %v2468 = vunpack.c.l.b16 %v934
    %v2469 = vunpack.c.h.b16 %v934
    %v2470 = vunpack.c.l.b16 %v935
    %v2471 = vunpack.c.l.b16 %v936
    %v2472 = vunpack.c.h.b16 %v936
    %v2473 = vunpack.c.l.b16 %v937
    %v2474 = vunpack.c.h.b16 %v937
    %v2475 = vunpack.c.l.b16 %v938
    %v2476 = vunpack.c.l.b16 %v939
    %v2477 = vunpack.c.h.b16 %v939
    %v2478 = vunpack.c.l.b16 %v940
    %v2479 = vunpack.c.h.b16 %v940
    %v2480 = vunpack.c.l.b16 %v941
    %v2481 = vunpack.c.l.b16 %v942
    %v2482 = vunpack.c.h.b16 %v942
    %v2483 = vunpack.c.l.b16 %v943
    %v2484 = vunpack.c.h.b16 %v943
    %v2485 = vunpack.c.l.b16 %v944
    %v2486 = vunpack.c.l.b16 %v945
    %v2487 = vunpack.c.h.b16 %v945
    %v2488 = vunpack.c.l.b16 %v946
    %v2489 = vunpack.c.h.b16 %v946
    %v2490 = vunpack.c.l.b16 %v947
    %v2491 = vunpack.c.l.b16 %v948
    %v2492 = vunpack.c.h.b16 %v948
    %v2493 = vunpack.c.l.b16 %v949
    %v2494 = vunpack.c.h.b16 %v949
    %v2495 = vunpack.c.l.b16 %v950
    %v2496 = vunpack.c.l.b16 %v951
    %v2497 = vunpack.c.h.b16 %v951
    %v2498 = vunpack.c.l.b16 %v952
    %v2499 = vunpack.c.h.b16 %v952
    %v2500 = vunpack.c.l.b16 %v953
    %v2501 = vunpack.c.l.b16 %v954
    %v2502 = vunpack.c.h.b16 %v954
    %v2503 = vunpack.c.l.b16 %v955
    %v2504 = vunpack.c.h.b16 %v955
    %v2505 = vunpack.c.l.b16 %v956
    %v2506 = vunpack.c.l.b16 %v957
    %v2507 = vunpack.c.h.b16 %v957
    %v2508 = vunpack.c.l.b16 %v958
    %v2509 = vunpack.c.h.b16 %v958
    %v2510 = vunpack.c.l.b16 %v959
    %v2511 = vunpack.c.l.b16 %v960
    %v2512 = vunpack.c.h.b16 %v960
    %v2513 = vunpack.c.l.b16 %v961
    %v2514 = vunpack.c.h.b16 %v961
    %v2515 = vunpack.c.l.b16 %v962
    %v2516 = vunpack.c.l.b16 %v963
    %v2517 = vunpack.c.h.b16 %v963
    %v2518 = vunpack.c.l.b16 %v964
    %v2519 = vunpack.c.h.b16 %v964
    %v2520 = vunpack.c.l.b16 %v965
    %v2521 = vunpack.c.l.b16 %v966
    %v2522 = vunpack.c.h.b16 %v966
    %v2523 = vunpack.c.l.b16 %v967
    %v2524 = vunpack.c.h.b16 %v967
    %v2525 = vunpack.c.l.b16 %v968
    %v2526 = vunpack.c.l.b16 %v969
    %v2527 = vunpack.c.h.b16 %v969
    %v2528 = vunpack.c.l.b16 %v970
    %v2529 = vunpack.c.h.b16 %v970
    %v2530 = vunpack.c.l.b16 %v971
    %v2531 = vunpack.c.l.b16 %v972
    %v2532 = vunpack.c.h.b16 %v972
    %v2533 = vunpack.c.l.b16 %v973
    %v2534 = vunpack.c.h.b16 %v973
    %v2535 = vunpack.c.l.b16 %v974
    %v2536 = vunpack.c.l.b16 %v975
    %v2537 = vunpack.c.h.b16 %v975
    %v2538 = vunpack.c.l.b16 %v976
    %v2539 = vunpack.c.h.b16 %v976
    %v2540 = vunpack.c.l.b16 %v977
    %v2541 = vunpack.c.l.b16 %v978
    %v2542 = vunpack.c.h.b16 %v978
    %v2543 = vunpack.c.l.b16 %v979
    %v2544 = vunpack.c.h.b16 %v979
    %v2545 = vunpack.c.l.b16 %v980
    %v2546 = vunpack.c.l.b16 %v981
    %v2547 = vunpack.c.h.b16 %v981
    %v2548 = vunpack.c.l.b16 %v982
    %v2549 = vunpack.c.h.b16 %v982
    %v2550 = vunpack.c.l.b16 %v983
    %v2551 = vunpack.c.l.b16 %v984
    %v2552 = vunpack.c.h.b16 %v984
    %v2553 = vunpack.c.l.b16 %v985
    %v2554 = vunpack.c.h.b16 %v985
    %v2555 = vunpack.c.l.b16 %v986
    %v2556 = vunpack.c.l.b16 %v987
    %v2557 = vunpack.c.h.b16 %v987
    %v2558 = vunpack.c.l.b16 %v988
    %v2559 = vunpack.c.h.b16 %v988
    %v2560 = vunpack.c.l.b16 %v989
    %v2561 = vunpack.c.l.b16 %v990
    %v2562 = vunpack.c.h.b16 %v990
    %v2563 = vunpack.c.l.b16 %v991
    %v2564 = vunpack.c.h.b16 %v991
    %v2565 = vunpack.c.l.b16 %v992
    %v2566 = vunpack.c.l.b16 %v993
    %v2567 = vunpack.c.h.b16 %v993
    %v2568 = vunpack.c.l.b16 %v994
    %v2569 = vunpack.c.h.b16 %v994
    %v2570 = vunpack.c.l.b16 %v995
    %v2571 = vunpack.c.l.b16 %v996
    %v2572 = vunpack.c.h.b16 %v996
    %v2573 = vunpack.c.l.b16 %v997
    %v2574 = vunpack.c.h.b16 %v997
    %v2575 = vunpack.c.l.b16 %v998
    %v2576 = vunpack.c.l.b16 %v999
    %v2577 = vunpack.c.h.b16 %v999
    %v2578 = vunpack.c.l.b16 %v1000
    %v2579 = vunpack.c.h.b16 %v1000
    %v2580 = vunpack.c.l.b16 %v1001
    %v2581 = vunpack.c.l.b16 %v1002
    %v2582 = vunpack.c.h.b16 %v1002
    %v2583 = vunpack.c.l.b16 %v1003
    %v2584 = vunpack.c.h.b16 %v1003
    %v2585 = vunpack.c.l.b16 %v1004
    %v2586 = vunpack.c.l.b16 %v1005
    %v2587 = vunpack.c.h.b16 %v1005
    %v2588 = vunpack.c.l.b16 %v1006
    %v2589 = vunpack.c.h.b16 %v1006
    %v2590 = vunpack.c.l.b16 %v1007
    %v2591 = vunpack.c.l.b16 %v1008
    %v2592 = vunpack.c.h.b16 %v1008
    %v2593 = vunpack.c.l.b16 %v1009
    %v2594 = vunpack.c.h.b16 %v1009
    %v2595 = vunpack.c.l.b16 %v1010
    %v2596 = vunpack.c.l.b16 %v1011
    %v2597 = vunpack.c.h.b16 %v1011
    %v2598 = vunpack.c.l.b16 %v1012
    %v2599 = vunpack.c.h.b16 %v1012
    %v2600 = vunpack.c.l.b16 %v1013
    %v2601 = vunpack.c.l.b16 %v1014
    %v2602 = vunpack.c.h.b16 %v1014
    %v2603 = vunpack.c.l.b16 %v1015
    %v2604 = vunpack.c.h.b16 %v1015
    %v2605 = vunpack.c.l.b16 %v1016
    %v2606 = vunpack.c.l.b16 %v1017
    %v2607 = vunpack.c.h.b16 %v1017
    %v2608 = vunpack.c.l.b16 %v1018
    %v2609 = vunpack.c.h.b16 %v1018
    %v2610 = vunpack.c.l.b16 %v1019
    %v2611 = vunpack.c.l.b16 %v1020
    %v2612 = vunpack.c.h.b16 %v1020
    %v2613 = vunpack.c.l.b16 %v1021
    %v2614 = vunpack.c.h.b16 %v1021
    %v2615 = vunpack.c.l.b16 %v1022
    %v2616 = vunpack.c.l.b16 %v1023
    %v2617 = vunpack.c.h.b16 %v1023
    %v2618 = vunpack.c.l.b16 %v1024
    %v2619 = vunpack.c.h.b16 %v1024
    %v2620 = vunpack.c.l.b16 %v1025
    %v2621 = vunpack.c.l.b16 %v1026
    %v2622 = vunpack.c.h.b16 %v1026
    %v2623 = vunpack.c.l.b16 %v1027
    %v2624 = vunpack.c.h.b16 %v1027
    %v2625 = vunpack.c.l.b16 %v1028
    %v2626 = vunpack.c.l.b16 %v1029
    %v2627 = vunpack.c.h.b16 %v1029
    %v2628 = vunpack.c.l.b16 %v1030
    %v2629 = vunpack.c.h.b16 %v1030
    %v2630 = vunpack.c.l.b16 %v1031
    %v2631 = vunpack.c.l.b16 %v1032
    %v2632 = vunpack.c.h.b16 %v1032
    %v2633 = vunpack.c.l.b16 %v1033
    %v2634 = vunpack.c.h.b16 %v1033
    %v2635 = vunpack.c.l.b16 %v1034
    %v2636 = vunpack.c.l.b16 %v1035
    %v2637 = vunpack.c.h.b16 %v1035
    %v2638 = vunpack.c.l.b16 %v1036
    %v2639 = vunpack.c.h.b16 %v1036
    %v2640 = vunpack.c.l.b16 %v1037
    %v2641 = vunpack.c.l.b16 %v1038
    %v2642 = vunpack.c.h.b16 %v1038
    %v2643 = vunpack.c.l.b16 %v1039
    %v2644 = vunpack.c.h.b16 %v1039
    %v2645 = vunpack.c.l.b16 %v1040
    %v2646 = vunpack.c.l.b16 %v1041
    %v2647 = vunpack.c.h.b16 %v1041
    %v2648 = vunpack.c.l.b16 %v1042
    %v2649 = vunpack.c.h.b16 %v1042
    %v2650 = vunpack.c.l.b16 %v1043
    %v2651 = vunpack.c.l.b16 %v1044
    %v2652 = vunpack.c.h.b16 %v1044
    %v2653 = vunpack.c.l.b16 %v1045
    %v2654 = vunpack.c.h.b16 %v1045
    %v2655 = vunpack.c.l.b16 %v1046
    %v2656 = vunpack.c.l.b16 %v1047
    %v2657 = vunpack.c.h.b16 %v1047
    %v2658 = vunpack.c.l.b16 %v1048
    %v2659 = vunpack.c.h.b16 %v1048
    %v2660 = vunpack.c.l.b16 %v1049
    %v2661 = vunpack.c.l.b16 %v1050
    %v2662 = vunpack.c.h.b16 %v1050
    %v2663 = vunpack.c.l.b16 %v1051
    %v2664 = vunpack.c.h.b16 %v1051
    %v2665 = vunpack.c.l.b16 %v1052
    %v2666 = vunpack.c.l.b16 %v1053
    %v2667 = vunpack.c.h.b16 %v1053
    %v2668 = vunpack.c.l.b16 %v1054
    %v2669 = vunpack.c.h.b16 %v1054
    %v2670 = vunpack.c.l.b16 %v1055
    %v2671 = vunpack.c.l.b16 %v1056
    %v2672 = vunpack.c.h.b16 %v1056
    %v2673 = vunpack.c.l.b16 %v1057
    %v2674 = vunpack.c.h.b16 %v1057
    %v2675 = vunpack.c.l.b16 %v1058
    %v2676 = vunpack.c.l.b16 %v1059
    %v2677 = vunpack.c.h.b16 %v1059
    %v2678 = vunpack.c.l.b16 %v1060
    %v2679 = vunpack.c.h.b16 %v1060
    %v2680 = vunpack.c.l.b16 %v1061
    %v2681 = vunpack.c.l.b16 %v1062
    %v2682 = vunpack.c.h.b16 %v1062
    %v2683 = vunpack.c.l.b16 %v1063
    %v2684 = vunpack.c.h.b16 %v1063
    %v2685 = vunpack.c.l.b16 %v1064
    %v2686 = vunpack.c.l.b16 %v1065
    %v2687 = vunpack.c.h.b16 %v1065
    %v2688 = vunpack.c.l.b16 %v1066
    %v2689 = vunpack.c.h.b16 %v1066
    %v2690 = vunpack.c.l.b16 %v1067
    %v2691 = vunpack.c.l.b16 %v1068
    %v2692 = vunpack.c.h.b16 %v1068
    %v2693 = vunpack.c.l.b16 %v1069
    %v2694 = vunpack.c.h.b16 %v1069
    %v2695 = vunpack.c.l.b16 %v1070
    %v2696 = vunpack.c.l.b16 %v1071
    %v2697 = vunpack.c.h.b16 %v1071
    %v2698 = vunpack.c.l.b16 %v1072
    %v2699 = vunpack.c.h.b16 %v1072
    %v2700 = vunpack.c.l.b16 %v1073
    %v2701 = vunpack.c.l.b16 %v1074
    %v2702 = vunpack.c.h.b16 %v1074
    %v2703 = vunpack.c.l.b16 %v1075
    %v2704 = vunpack.c.h.b16 %v1075
    %v2705 = vunpack.c.l.b16 %v1076
    %v2706 = vunpack.c.l.b16 %v1077
    %v2707 = vunpack.c.h.b16 %v1077
    %v2708 = vunpack.c.l.b16 %v1078
    %v2709 = vunpack.c.h.b16 %v1078
    %v2710 = vunpack.c.l.b16 %v1079
    %v2711 = vunpack.c.l.b16 %v1080
    %v2712 = vunpack.c.h.b16 %v1080
    %v2713 = vunpack.c.l.b16 %v1081
    %v2714 = vunpack.c.h.b16 %v1081
    %v2715 = vunpack.c.l.b16 %v1082
    %v2716 = vunpack.c.l.b16 %v1083
    %v2717 = vunpack.c.h.b16 %v1083
    %v2718 = vunpack.c.l.b16 %v1084
    %v2719 = vunpack.c.h.b16 %v1084
    %v2720 = vunpack.c.l.b16 %v1085
    %v2721 = vunpack.c.l.b16 %v1086
    %v2722 = vunpack.c.h.b16 %v1086
    %v2723 = vunpack.c.l.b16 %v1087
    %v2724 = vunpack.c.h.b16 %v1087
    %v2725 = vunpack.c.l.b16 %v1088
    %v2726 = vunpack.c.l.b16 %v1089
    %v2727 = vunpack.c.h.b16 %v1089
    %v2728 = vunpack.c.l.b16 %v1090
    %v2729 = vunpack.c.h.b16 %v1090
    %v2730 = vunpack.c.l.b16 %v1091
    %v2731 = vunpack.c.l.b16 %v1092
    %v2732 = vunpack.c.h.b16 %v1092
    %v2733 = vunpack.c.l.b16 %v1093
    %v2734 = vunpack.c.h.b16 %v1093
    %v2735 = vunpack.c.l.b16 %v1094
    %v2736 = vunpack.c.l.b16 %v1095
    %v2737 = vunpack.c.h.b16 %v1095
    %v2738 = vunpack.c.l.b16 %v1096
    %v2739 = vunpack.c.h.b16 %v1096
    %v2740 = vunpack.c.l.b16 %v1097
    %v2741 = vunpack.c.l.b16 %v1098
    %v2742 = vunpack.c.h.b16 %v1098
    %v2743 = vunpack.c.l.b16 %v1099
    %v2744 = vunpack.c.h.b16 %v1099
    %v2745 = vunpack.c.l.b16 %v1100
    %v2746 = vunpack.c.l.b16 %v1101
    %v2747 = vunpack.c.h.b16 %v1101
    %v2748 = vunpack.c.l.b16 %v1102
    %v2749 = vunpack.c.h.b16 %v1102
    %v2750 = vunpack.c.l.b16 %v1103
    %v2751 = vunpack.c.l.b16 %v1104
    %v2752 = vunpack.c.h.b16 %v1104
    %v2753 = vunpack.c.l.b16 %v1105
    %v2754 = vunpack.c.h.b16 %v1105
    %v2755 = vunpack.c.l.b16 %v1106
    %v2756 = vunpack.c.l.b16 %v1107
    %v2757 = vunpack.c.h.b16 %v1107
    %v2758 = vunpack.c.l.b16 %v1108
    %v2759 = vunpack.c.h.b16 %v1108
    %v2760 = vunpack.c.l.b16 %v1109
    %v2761 = vunpack.c.l.b16 %v1110
    %v2762 = vunpack.c.h.b16 %v1110
    %v2763 = vunpack.c.l.b16 %v1111
    %v2764 = vunpack.c.h.b16 %v1111
    %v2765 = vunpack.c.l.b16 %v1112
    %v2766 = vunpack.c.l.b16 %v1113
    %v2767 = vunpack.c.h.b16 %v1113
    %v2768 = vunpack.c.l.b16 %v1114
    %v2769 = vunpack.c.h.b16 %v1114
    %v2770 = vunpack.c.l.b16 %v1115
    %v2771 = vunpack.c.l.b16 %v1116
    %v2772 = vunpack.c.h.b16 %v1116
    %v2773 = vunpack.c.l.b16 %v1117
    %v2774 = vunpack.c.h.b16 %v1117
    %v2775 = vunpack.c.l.b16 %v1118
    %v2776 = vunpack.c.l.b16 %v1119
    %v2777 = vunpack.c.h.b16 %v1119
    %v2778 = vunpack.c.l.b16 %v1120
    %v2779 = vunpack.c.h.b16 %v1120
    %v2780 = vunpack.c.l.b16 %v1121
    %v2781 = vunpack.c.l.b16 %v1122
    %v2782 = vunpack.c.h.b16 %v1122
    %v2783 = vunpack.c.l.b16 %v1123
    %v2784 = vunpack.c.h.b16 %v1123
    %v2785 = vunpack.c.l.b16 %v1124
    %v2786 = vunpack.c.l.b16 %v1125
    %v2787 = vunpack.c.h.b16 %v1125
    %v2788 = vunpack.c.l.b16 %v1126
    %v2789 = vunpack.c.h.b16 %v1126
    %v2790 = vunpack.c.l.b16 %v1127
    %v2791 = vunpack.c.l.b16 %v1128
    %v2792 = vunpack.c.h.b16 %v1128
    %v2793 = vunpack.c.l.b16 %v1129
    %v2794 = vunpack.c.h.b16 %v1129
    %v2795 = vunpack.c.l.b16 %v1130
    %v2796 = vunpack.c.l.b16 %v1131
    %v2797 = vunpack.c.h.b16 %v1131
    %v2798 = vunpack.c.l.b16 %v1132
    %v2799 = vunpack.c.h.b16 %v1132
    %v2800 = vunpack.c.l.b16 %v1133
    %v2801 = vunpack.c.l.b16 %v1134
    %v2802 = vunpack.c.h.b16 %v1134
    %v2803 = vunpack.c.l.b16 %v1135
    %v2804 = vunpack.c.h.b16 %v1135
    %v2805 = vunpack.c.l.b16 %v1136
    %v2806 = vunpack.c.l.b16 %v1137
    %v2807 = vunpack.c.h.b16 %v1137
    %v2808 = vunpack.c.l.b16 %v1138
    %v2809 = vunpack.c.h.b16 %v1138
    %v2810 = vunpack.c.l.b16 %v1139
    %v2811 = vunpack.c.l.b16 %v1140
    %v2812 = vunpack.c.h.b16 %v1140
    %v2813 = vunpack.c.l.b16 %v1141
    %v2814 = vunpack.c.h.b16 %v1141
    %v2815 = vunpack.c.l.b16 %v1142
    %v2816 = vunpack.c.l.b16 %v1143
    %v2817 = vunpack.c.h.b16 %v1143
    %v2818 = vunpack.c.l.b16 %v1144
    %v2819 = vunpack.c.h.b16 %v1144
    %v2820 = vunpack.c.l.b16 %v1145
    %v2821 = vunpack.c.l.b16 %v1146
    %v2822 = vunpack.c.h.b16 %v1146
    %v2823 = vunpack.c.l.b16 %v1147
    %v2824 = vunpack.c.h.b16 %v1147
    %v2825 = vunpack.c.l.b16 %v1148
    %v2826 = vunpack.c.l.b16 %v1149
    %v2827 = vunpack.c.h.b16 %v1149
    %v2828 = vunpack.c.l.b16 %v1150
    %v2829 = vunpack.c.h.b16 %v1150
    %v2830 = vunpack.c.l.b16 %v1151
    %v2831 = vunpack.c.l.b16 %v1152
    %v2832 = vunpack.c.h.b16 %v1152
    %v2833 = vunpack.c.l.b16 %v1153
    %v2834 = vunpack.c.h.b16 %v1153
    %v2835 = vunpack.c.l.b16 %v1154
    %v2836 = vunpack.c.l.b16 %v1155
    %v2837 = vunpack.c.h.b16 %v1155
    %v2838 = vunpack.c.l.b16 %v1156
    %v2839 = vunpack.c.h.b16 %v1156
    %v2840 = vunpack.c.l.b16 %v1157
    %v2841 = vunpack.c.l.b16 %v1158
    %v2842 = vunpack.c.h.b16 %v1158
    %v2843 = vunpack.c.l.b16 %v1159
    %v2844 = vunpack.c.h.b16 %v1159
    %v2845 = vunpack.c.l.b16 %v1160
    %v2846 = vunpack.c.l.b16 %v1161
    %v2847 = vunpack.c.h.b16 %v1161
    %v2848 = vunpack.c.l.b16 %v1162
    %v2849 = vunpack.c.h.b16 %v1162
    %v2850 = vunpack.c.l.b16 %v1163
    %v2851 = vunpack.c.l.b16 %v1164
    %v2852 = vunpack.c.h.b16 %v1164
    %v2853 = vunpack.c.l.b16 %v1165
    %v2854 = vunpack.c.h.b16 %v1165
    %v2855 = vunpack.c.l.b16 %v1166
    %v2856 = vunpack.c.l.b16 %v1167
    %v2857 = vunpack.c.h.b16 %v1167
    %v2858 = vunpack.c.l.b16 %v1168
    %v2859 = vunpack.c.h.b16 %v1168
    %v2860 = vunpack.c.l.b16 %v1169
    %v2861 = vunpack.c.l.b16 %v1170
    %v2862 = vunpack.c.h.b16 %v1170
    %v2863 = vunpack.c.l.b16 %v1171
    %v2864 = vunpack.c.h.b16 %v1171
    %v2865 = vunpack.c.l.b16 %v1172
    %v2866 = vunpack.c.l.b16 %v1173
    %v2867 = vunpack.c.h.b16 %v1173
    %v2868 = vunpack.c.l.b16 %v1174
    %v2869 = vunpack.c.h.b16 %v1174
    %v2870 = vunpack.c.l.b16 %v1175
    %v2871 = vunpack.c.l.b16 %v1176
    %v2872 = vunpack.c.h.b16 %v1176
    %v2873 = vunpack.c.l.b16 %v1177
    %v2874 = vunpack.c.h.b16 %v1177
    %v2875 = vunpack.c.l.b16 %v1178
    %v2876 = vunpack.c.l.b16 %v1179
    %v2877 = vunpack.c.h.b16 %v1179
    %v2878 = vunpack.c.l.b16 %v1180
    %v2879 = vunpack.c.h.b16 %v1180
    %v2880 = vunpack.c.l.b16 %v1181
    %v2881 = vunpack.c.l.b16 %v1182
    %v2882 = vunpack.c.h.b16 %v1182
    %v2883 = vunpack.c.l.b16 %v1183
    %v2884 = vunpack.c.h.b16 %v1183
    %v2885 = vunpack.c.l.b16 %v1184
    %v2886 = vunpack.c.l.b16 %v1185
    %v2887 = vunpack.c.h.b16 %v1185
    %v2888 = vunpack.c.l.b16 %v1186
    %v2889 = vunpack.c.h.b16 %v1186
    %v2890 = vunpack.c.l.b16 %v1187
    %v2891 = vunpack.c.l.b16 %v1188
    %v2892 = vunpack.c.h.b16 %v1188
    %v2893 = vunpack.c.l.b16 %v1189
    %v2894 = vunpack.c.h.b16 %v1189
    %v2895 = vunpack.c.l.b16 %v1190
    %v2896 = vunpack.c.l.b16 %v1191
    %v2897 = vunpack.c.h.b16 %v1191
    %v2898 = vunpack.c.l.b16 %v1192
    %v2899 = vunpack.c.h.b16 %v1192
    %v2900 = vunpack.c.l.b16 %v1193
    %v2901 = vunpack.c.l.b16 %v1194
    %v2902 = vunpack.c.h.b16 %v1194
    %v2903 = vunpack.c.l.b16 %v1195
    %v2904 = vunpack.c.h.b16 %v1195
    %v2905 = vunpack.c.l.b16 %v1196
    %v2906 = vunpack.c.l.b16 %v1197
    %v2907 = vunpack.c.h.b16 %v1197
    %v2908 = vunpack.c.l.b16 %v1198
    %v2909 = vunpack.c.h.b16 %v1198
    %v2910 = vunpack.c.l.b16 %v1199
    %v2911 = vunpack.c.l.b16 %v1200
    %v2912 = vunpack.c.h.b16 %v1200
    %v2913 = vunpack.c.l.b16 %v1201
    %v2914 = vunpack.c.h.b16 %v1201
    %v2915 = vunpack.c.l.b16 %v1202
    %v2916 = vunpack.c.l.b16 %v1203
    %v2917 = vunpack.c.h.b16 %v1203
    %v2918 = vunpack.c.l.b16 %v1204
    %v2919 = vunpack.c.h.b16 %v1204
    %v2920 = vunpack.c.l.b16 %v1205
    %v2921 = vunpack.c.l.b16 %v1206
    %v2922 = vunpack.c.h.b16 %v1206
    %v2923 = vunpack.c.l.b16 %v1207
    %v2924 = vunpack.c.h.b16 %v1207
    %v2925 = vunpack.c.l.b16 %v1208
    %v2926 = vunpack.c.l.b16 %v1209
    %v2927 = vunpack.c.h.b16 %v1209
    %v2928 = vunpack.c.l.b16 %v1210
    %v2929 = vunpack.c.h.b16 %v1210
    %v2930 = vunpack.c.l.b16 %v1211
    %v2931 = vunpack.c.l.b16 %v1212
    %v2932 = vunpack.c.h.b16 %v1212
    %v2933 = vunpack.c.l.b16 %v1213
    %v2934 = vunpack.c.h.b16 %v1213
    %v2935 = vunpack.c.l.b16 %v1214
    %v2936 = vunpack.c.l.b16 %v1215
    %v2937 = vunpack.c.h.b16 %v1215
    %v2938 = vunpack.c.l.b16 %v1216
    %v2939 = vunpack.c.h.b16 %v1216
    %v2940 = vunpack.c.l.b16 %v1217
    %v2941 = vunpack.c.l.b16 %v1218
    %v2942 = vunpack.c.h.b16 %v1218
    %v2943 = vunpack.c.l.b16 %v1219
    %v2944 = vunpack.c.h.b16 %v1219
    %v2945 = vunpack.c.l.b16 %v1220
    %v2946 = vunpack.c.l.b16 %v1221
    %v2947 = vunpack.c.h.b16 %v1221
    %v2948 = vunpack.c.l.b16 %v1222
    %v2949 = vunpack.c.h.b16 %v1222
    %v2950 = vunpack.c.l.b16 %v1223
    %v2951 = vunpack.c.l.b16 %v1224
    %v2952 = vunpack.c.h.b16 %v1224
    %v2953 = vunpack.c.l.b16 %v1225
    %v2954 = vunpack.c.h.b16 %v1225
    %v2955 = vunpack.c.l.b16 %v1226
    %v2956 = vunpack.c.l.b16 %v1227
    %v2957 = vunpack.c.h.b16 %v1227
    %v2958 = vunpack.c.l.b16 %v1228
    %v2959 = vunpack.c.h.b16 %v1228
    %v2960 = vunpack.c.l.b16 %v1229
    %v2961 = vunpack.c.l.b16 %v1230
    %v2962 = vunpack.c.h.b16 %v1230
    %v2963 = vunpack.c.l.b16 %v1231
    %v2964 = vunpack.c.h.b16 %v1231
    %v2965 = vunpack.c.l.b16 %v1232
    %v2966 = vunpack.c.l.b16 %v1233
    %v2967 = vunpack.c.h.b16 %v1233
    %v2968 = vunpack.c.l.b16 %v1234
    %v2969 = vunpack.c.h.b16 %v1234
    %v2970 = vunpack.c.l.b16 %v1235
    %v2971 = vunpack.c.l.b16 %v1236
    %v2972 = vunpack.c.h.b16 %v1236
    %v2973 = vunpack.c.l.b16 %v1237
    %v2974 = vunpack.c.h.b16 %v1237
    %v2975 = vunpack.c.l.b16 %v1238
    %v2976 = vunpack.c.l.b16 %v1239
    %v2977 = vunpack.c.h.b16 %v1239
    %v2978 = vunpack.c.l.b16 %v1240
    %v2979 = vunpack.c.h.b16 %v1240
    %v2980 = vunpack.c.l.b16 %v1241
    %v2981 = vunpack.c.l.b16 %v1242
    %v2982 = vunpack.c.h.b16 %v1242
    %v2983 = vunpack.c.l.b16 %v1243
    %v2984 = vunpack.c.h.b16 %v1243
    %v2985 = vunpack.c.l.b16 %v1244
    %v2986 = vunpack.c.l.b16 %v1245
    %v2987 = vunpack.c.h.b16 %v1245
    %v2988 = vunpack.c.l.b16 %v1246
    %v2989 = vunpack.c.h.b16 %v1246
    %v2990 = vunpack.c.l.b16 %v1247
    %v2991 = vunpack.c.l.b16 %v1248
    %v2992 = vunpack.c.h.b16 %v1248
    %v2993 = vunpack.c.l.b16 %v1249
    %v2994 = vunpack.c.h.b16 %v1249
    %v2995 = vunpack.c.l.b16 %v1250
    %v2996 = vunpack.c.l.b16 %v1251
    %v2997 = vunpack.c.h.b16 %v1251
    %v2998 = vunpack.c.l.b16 %v1252
    %v2999 = vunpack.c.h.b16 %v1252
    %v3000 = vunpack.c.l.b16 %v1253
    %v3001 = vunpack.c.l.b16 %v1254
    %v3002 = vunpack.c.h.b16 %v1254
    %v3003 = vunpack.c.l.b16 %v1255
    %v3004 = vunpack.c.h.b16 %v1255
    %v3005 = vunpack.c.l.b16 %v1256
    %v3006 = vunpack.c.l.b16 %v1257
    %v3007 = vunpack.c.h.b16 %v1257
    %v3008 = vunpack.c.l.b16 %v1258
    %v3009 = vunpack.c.h.b16 %v1258
    %v3010 = vunpack.c.l.b16 %v1259
    %v3011 = vunpack.c.l.b16 %v1260
    %v3012 = vunpack.c.h.b16 %v1260
    %v3013 = vunpack.c.l.b16 %v1261
    %v3014 = vunpack.c.h.b16 %v1261
    %v3015 = vunpack.c.l.b16 %v1262
    %v3016 = vunpack.c.l.b16 %v1263
    %v3017 = vunpack.c.h.b16 %v1263
    %v3018 = vunpack.c.l.b16 %v1264
    %v3019 = vunpack.c.h.b16 %v1264
    %v3020 = vunpack.c.l.b16 %v1265
    %v3021 = vunpack.c.l.b16 %v1266
    %v3022 = vunpack.c.h.b16 %v1266
    %v3023 = vunpack.c.l.b16 %v1267
    %v3024 = vunpack.c.h.b16 %v1267
    %v3025 = vunpack.c.l.b16 %v1268
    %v3026 = vunpack.c.l.b16 %v1269
    %v3027 = vunpack.c.h.b16 %v1269
    %v3028 = vunpack.c.l.b16 %v1270
    %v3029 = vunpack.c.h.b16 %v1270
    %v3030 = vunpack.c.l.b16 %v1271
    %v3031 = vunpack.c.l.b16 %v1272
    %v3032 = vunpack.c.h.b16 %v1272
    %v3033 = vunpack.c.l.b16 %v1273
    %v3034 = vunpack.c.h.b16 %v1273
    %v3035 = vunpack.c.l.b16 %v1274
    %v3036 = vunpack.c.l.b16 %v1275
    %v3037 = vunpack.c.h.b16 %v1275
    %v3038 = vunpack.c.l.b16 %v1276
    %v3039 = vunpack.c.h.b16 %v1276
    %v3040 = vunpack.c.l.b16 %v1277
    %v3041 = vunpack.c.l.b16 %v1278
    %v3042 = vunpack.c.h.b16 %v1278
    %v3043 = vunpack.c.l.b16 %v1279
    %v3044 = vunpack.c.h.b16 %v1279
    %v3045 = vunpack.c.l.b16 %v1280
    %v3046 = vunpack.c.l.b16 %v1281
    %v3047 = vunpack.c.h.b16 %v1281
    %v3048 = vunpack.c.l.b16 %v1282
    %v3049 = vunpack.c.h.b16 %v1282
    %v3050 = vunpack.c.l.b16 %v1283
    %v3051 = vunpack.c.l.b16 %v1284
    %v3052 = vunpack.c.h.b16 %v1284
    %v3053 = vunpack.c.l.b16 %v1285
    %v3054 = vunpack.c.h.b16 %v1285
    %v3055 = vunpack.c.l.b16 %v1286
    %v3056 = vunpack.c.l.b16 %v1287
    %v3057 = vunpack.c.h.b16 %v1287
    %v3058 = vunpack.c.l.b16 %v1288
    %v3059 = vunpack.c.h.b16 %v1288
    %v3060 = vunpack.c.l.b16 %v1289
    %v3061 = vunpack.c.l.b16 %v1290
    %v3062 = vunpack.c.h.b16 %v1290
    %v3063 = vunpack.c.l.b16 %v1291
    %v3064 = vunpack.c.h.b16 %v1291
    %v3065 = vunpack.c.l.b16 %v1292
    %v3066 = vunpack.c.l.b16 %v1293
    %v3067 = vunpack.c.h.b16 %v1293
    %v3068 = vunpack.c.l.b16 %v1294
    %v3069 = vunpack.c.h.b16 %v1294
    %v3070 = vunpack.c.l.b16 %v1295
    %v3071 = vunpack.c.l.b16 %v1296
    %v3072 = vunpack.c.h.b16 %v1296
    %v3073 = vunpack.c.l.b16 %v1297
    %v3074 = vunpack.c.h.b16 %v1297
    %v3075 = vunpack.c.l.b16 %v1298
    %v3076 = vunpack.c.l.b16 %v1299
    %v3077 = vunpack.c.h.b16 %v1299
    %v3078 = vunpack.c.l.b16 %v1300
    %v3079 = vunpack.c.h.b16 %v1300
    %v3080 = vunpack.c.l.b16 %v1301
    %v3081 = vunpack.c.l.b16 %v1302
    %v3082 = vunpack.c.h.b16 %v1302
    %v3083 = vunpack.c.l.b16 %v1303
    %v3084 = vunpack.c.h.b16 %v1303
    %v3085 = vunpack.c.l.b16 %v1304
    %v3086 = vunpack.c.l.b16 %v1305
    %v3087 = vunpack.c.h.b16 %v1305
    %v3088 = vunpack.c.l.b16 %v1306
    %v3089 = vunpack.c.h.b16 %v1306
    %v3090 = vunpack.c.l.b16 %v1307
    %v3091 = vunpack.c.l.b16 %v1308
    %v3092 = vunpack.c.h.b16 %v1308
    %v3093 = vunpack.c.l.b16 %v1309
    %v3094 = vunpack.c.h.b16 %v1309
    %v3095 = vunpack.c.l.b16 %v1310
    %v3096 = vunpack.c.l.b16 %v1311
    %v3097 = vunpack.c.h.b16 %v1311
    %v3098 = vunpack.c.l.b16 %v1312
    %v3099 = vunpack.c.h.b16 %v1312
    %v3100 = vunpack.c.l.b16 %v1313
    %v3101 = vunpack.c.l.b16 %v1314
    %v3102 = vunpack.c.h.b16 %v1314
    %v3103 = vunpack.c.l.b16 %v1315
    %v3104 = vunpack.c.h.b16 %v1315
    %v3105 = vunpack.c.l.b16 %v1316
    %v3106 = vunpack.c.l.b16 %v1317
    %v3107 = vunpack.c.h.b16 %v1317
    %v3108 = vunpack.c.l.b16 %v1318
    %v3109 = vunpack.c.h.b16 %v1318
    %v3110 = vunpack.c.l.b16 %v1319
    %v3111 = vunpack.c.l.b16 %v1320
    %v3112 = vunpack.c.h.b16 %v1320
    %v3113 = vunpack.c.l.b16 %v1321
    %v3114 = vunpack.c.h.b16 %v1321
    %v3115 = vunpack.c.l.b16 %v1322
    %v3116 = vunpack.c.l.b16 %v1323
    %v3117 = vunpack.c.h.b16 %v1323
    %v3118 = vunpack.c.l.b16 %v1324
    %v3119 = vunpack.c.h.b16 %v1324
    %v3120 = vunpack.c.l.b16 %v1325
    %v3121 = vunpack.c.l.b16 %v1326
    %v3122 = vunpack.c.h.b16 %v1326
    %v3123 = vunpack.c.l.b16 %v1327
    %v3124 = vunpack.c.h.b16 %v1327
    %v3125 = vunpack.c.l.b16 %v1328
    %v3126 = vunpack.c.l.b16 %v1329
    %v3127 = vunpack.c.h.b16 %v1329
    %v3128 = vunpack.c.l.b16 %v1330
    %v3129 = vunpack.c.h.b16 %v1330
    %v3130 = vunpack.c.l.b16 %v1331
    %v3131 = vunpack.c.l.b16 %v1332
    %v3132 = vunpack.c.h.b16 %v1332
    %v3133 = vunpack.c.l.b16 %v1333
    %v3134 = vunpack.c.h.b16 %v1333
    %v3135 = vunpack.c.l.b16 %v1334
    %v3136 = vunpack.c.l.b16 %v1335
    %v3137 = vunpack.c.h.b16 %v1335
    %v3138 = vunpack.c.l.b16 %v1336
    %v3139 = vunpack.c.h.b16 %v1336
    %v3140 = vunpack.c.l.b16 %v1337
    %v3141 = vunpack.c.l.b16 %v1338
    %v3142 = vunpack.c.h.b16 %v1338
    %v3143 = vunpack.c.l.b16 %v1339
    %v3144 = vunpack.c.h.b16 %v1339
    %v3145 = vunpack.c.l.b16 %v1340
    %v3146 = vunpack.c.l.b16 %v1341
    %v3147 = vunpack.c.h.b16 %v1341
    %v3148 = vunpack.c.l.b16 %v1342
    %v3149 = vunpack.c.h.b16 %v1342
    %v3150 = vunpack.c.l.b16 %v1343
    %v3151 = vunpack.c.l.b16 %v1344
    %v3152 = vunpack.c.h.b16 %v1344
    %v3153 = vunpack.c.l.b16 %v1345
    %v3154 = vunpack.c.h.b16 %v1345
    %v3155 = vunpack.c.l.b16 %v1346
    %v3156 = vunpack.c.l.b16 %v1347
    %v3157 = vunpack.c.h.b16 %v1347
    %v3158 = vunpack.c.l.b16 %v1348
    %v3159 = vunpack.c.h.b16 %v1348
    %v3160 = vunpack.c.l.b16 %v1349
    %v3161 = vunpack.c.l.b16 %v1350
    %v3162 = vunpack.c.h.b16 %v1350
    %v3163 = vunpack.c.l.b16 %v1351
    %v3164 = vunpack.c.h.b16 %v1351
    %v3165 = vunpack.c.l.b16 %v1352
    %v3166 = vunpack.c.l.b16 %v1353
    %v3167 = vunpack.c.h.b16 %v1353
    %v3168 = vunpack.c.l.b16 %v1354
    %v3169 = vunpack.c.h.b16 %v1354
    %v3170 = vunpack.c.l.b16 %v1355
    %v3171 = vunpack.c.l.b16 %v1356
    %v3172 = vunpack.c.h.b16 %v1356
    %v3173 = vunpack.c.l.b16 %v1357
    %v3174 = vunpack.c.h.b16 %v1357
    %v3175 = vunpack.c.l.b16 %v1358
    %v3176 = vunpack.c.l.b16 %v1359
    %v3177 = vunpack.c.h.b16 %v1359
    %v3178 = vunpack.c.l.b16 %v1360
    %v3179 = vunpack.c.h.b16 %v1360
    %v3180 = vunpack.c.l.b16 %v1361
    %v3181 = vunpack.c.l.b16 %v1362
    %v3182 = vunpack.c.h.b16 %v1362
    %v3183 = vunpack.c.l.b16 %v1363
    %v3184 = vunpack.c.h.b16 %v1363
    %v3185 = vunpack.c.l.b16 %v1364
    %v3186 = vunpack.c.l.b16 %v1365
    %v3187 = vunpack.c.h.b16 %v1365
    %v3188 = vunpack.c.l.b16 %v1366
    %v3189 = vunpack.c.h.b16 %v1366
    %v3190 = vunpack.c.l.b16 %v1367
    %v3191 = vunpack.c.l.b16 %v1368
    %v3192 = vunpack.c.h.b16 %v1368
    %v3193 = vunpack.c.l.b16 %v1369
    %v3194 = vunpack.c.h.b16 %v1369
    %v3195 = vunpack.c.l.b16 %v1370
    %v3196 = vunpack.c.l.b16 %v1371
    %v3197 = vunpack.c.h.b16 %v1371
    %v3198 = vunpack.c.l.b16 %v1372
    %v3199 = vunpack.c.h.b16 %v1372
    %v3200 = vunpack.c.l.b16 %v1373
    %v3201 = vunpack.c.l.b16 %v1374
    %v3202 = vunpack.c.h.b16 %v1374
    %v3203 = vunpack.c.l.b16 %v1375
    %v3204 = vunpack.c.h.b16 %v1375
    %v3205 = vunpack.c.l.b16 %v1376
    %v3206 = vunpack.c.l.b16 %v1377
    %v3207 = vunpack.c.h.b16 %v1377
    %v3208 = vunpack.c.l.b16 %v1378
    %v3209 = vunpack.c.h.b16 %v1378
    %v3210 = vunpack.c.l.b16 %v1379
    %v3211 = vunpack.c.l.b16 %v1380
    %v3212 = vunpack.c.h.b16 %v1380
    %v3213 = vunpack.c.l.b16 %v1381
    %v3214 = vunpack.c.h.b16 %v1381
    %v3215 = vunpack.c.l.b16 %v1382
    %v3216 = vunpack.c.l.b16 %v1383
    %v3217 = vunpack.c.h.b16 %v1383
    %v3218 = vunpack.c.l.b16 %v1384
    %v3219 = vunpack.c.h.b16 %v1384
    %v3220 = vunpack.c.l.b16 %v1385
    %v3221 = vunpack.c.l.b16 %v1386
    %v3222 = vunpack.c.h.b16 %v1386
    %v3223 = vunpack.c.l.b16 %v1387
    %v3224 = vunpack.c.h.b16 %v1387
    %v3225 = vunpack.c.l.b16 %v1388
    %v3226 = vunpack.c.l.b16 %v1389
    %v3227 = vunpack.c.h.b16 %v1389
    %v3228 = vunpack.c.l.b16 %v1390
    %v3229 = vunpack.c.h.b16 %v1390
    %v3230 = vunpack.c.l.b16 %v1391
    %v3231 = vunpack.c.l.b16 %v1392
    %v3232 = vunpack.c.h.b16 %v1392
    %v3233 = vunpack.c.l.b16 %v1393
    %v3234 = vunpack.c.h.b16 %v1393
    %v3235 = vunpack.c.l.b16 %v1394
    %v3236 = vunpack.c.l.b16 %v1395
    %v3237 = vunpack.c.h.b16 %v1395
    %v3238 = vunpack.c.l.b16 %v1396
    %v3239 = vunpack.c.h.b16 %v1396
    %v3240 = vunpack.c.l.b16 %v1397
    %v3241 = vunpack.c.l.b16 %v1398
    %v3242 = vunpack.c.h.b16 %v1398
    %v3243 = vunpack.c.l.b16 %v1399
    %v3244 = vunpack.c.h.b16 %v1399
    %v3245 = vunpack.c.l.b16 %v1400
    %v3246 = vunpack.c.l.b16 %v1401
    %v3247 = vunpack.c.h.b16 %v1401
    %v3248 = vunpack.c.l.b16 %v1402
    %v3249 = vunpack.c.h.b16 %v1402
    %v3250 = vunpack.c.l.b16 %v1403
    %v3251 = vunpack.c.l.b16 %v1404
    %v3252 = vunpack.c.h.b16 %v1404
    %v3253 = vunpack.c.l.b16 %v1405
    %v3254 = vunpack.c.h.b16 %v1405
    %v3255 = vunpack.c.l.b16 %v1406
    %v3256 = vunpack.c.l.b16 %v1407
    %v3257 = vunpack.c.h.b16 %v1407
    %v3258 = vunpack.c.l.b16 %v1408
    %v3259 = vunpack.c.h.b16 %v1408
    %v3260 = vunpack.c.l.b16 %v1409
    %v3261 = vunpack.c.l.b16 %v1410
    %v3262 = vunpack.c.h.b16 %v1410
    %v3263 = vunpack.c.l.b16 %v1411
    %v3264 = vunpack.c.h.b16 %v1411
    %v3265 = vunpack.c.l.b16 %v1412
    %v3266 = vunpack.c.l.b16 %v1413
    %v3267 = vunpack.c.h.b16 %v1413
    %v3268 = vunpack.c.l.b16 %v1414
    %v3269 = vunpack.c.h.b16 %v1414
    %v3270 = vunpack.c.l.b16 %v1415
    %v3271 = vunpack.c.l.b16 %v1416
    %v3272 = vunpack.c.h.b16 %v1416
    %v3273 = vunpack.c.l.b16 %v1417
    %v3274 = vunpack.c.h.b16 %v1417
    %v3275 = vunpack.c.l.b16 %v1418
    %v3276 = vunpack.c.l.b16 %v1419
    %v3277 = vunpack.c.h.b16 %v1419
    %v3278 = vunpack.c.l.b16 %v1420
    %v3279 = vunpack.c.h.b16 %v1420
    %v3280 = vunpack.c.l.b16 %v1421
    %v3281 = vunpack.c.l.b16 %v1422
    %v3282 = vunpack.c.h.b16 %v1422
    %v3283 = vunpack.c.l.b16 %v1423
    %v3284 = vunpack.c.h.b16 %v1423
    %v3285 = vunpack.c.l.b16 %v1424
    %v3286 = vunpack.c.l.b16 %v1425
    %v3287 = vunpack.c.h.b16 %v1425
    %v3288 = vunpack.c.l.b16 %v1426
    %v3289 = vunpack.c.h.b16 %v1426
    %v3290 = vunpack.c.l.b16 %v1427
    %v3291 = vunpack.c.l.b16 %v1428
    %v3292 = vunpack.c.h.b16 %v1428
    %v3293 = vunpack.c.l.b16 %v1429
    %v3294 = vunpack.c.h.b16 %v1429
    %v3295 = vunpack.c.l.b16 %v1430
    %v3296 = vunpack.c.l.b16 %v1431
    %v3297 = vunpack.c.h.b16 %v1431
    %v3298 = vunpack.c.l.b16 %v1432
    %v3299 = vunpack.c.h.b16 %v1432
    %v3300 = vunpack.c.l.b16 %v1433
    %v3301 = vunpack.c.l.b16 %v1434
    %v3302 = vunpack.c.h.b16 %v1434
    %v3303 = vunpack.c.l.b16 %v1435
    %v3304 = vunpack.c.h.b16 %v1435
    %v3305 = vunpack.c.l.b16 %v1436
    %v3306 = vunpack.c.l.b16 %v1437
    %v3307 = vunpack.c.h.b16 %v1437
    %v3308 = vunpack.c.l.b16 %v1438
    %v3309 = vunpack.c.h.b16 %v1438
    %v3310 = vunpack.c.l.b16 %v1439
    %v3311 = vunpack.c.l.b16 %v1440
    %v3312 = vunpack.c.h.b16 %v1440
    %v3313 = vunpack.c.l.b16 %v1441
    %v3314 = vunpack.c.h.b16 %v1441
    %v3315 = vunpack.c.l.b16 %v1442
    %v3316 = vunpack.c.l.b16 %v1443
    %v3317 = vunpack.c.h.b16 %v1443
    %v3318 = vunpack.c.l.b16 %v1444
    %v3319 = vunpack.c.h.b16 %v1444
    %v3320 = vunpack.c.l.b16 %v1445
    %v3321 = vunpack.c.l.b16 %v1446
    %v3322 = vunpack.c.h.b16 %v1446
    %v3323 = vunpack.c.l.b16 %v1447
    %v3324 = vunpack.c.h.b16 %v1447
    %v3325 = vunpack.c.l.b16 %v1448
    %v3326 = vunpack.c.l.b16 %v1449
    %v3327 = vunpack.c.h.b16 %v1449
    %v3328 = vunpack.c.l.b16 %v1450
    %v3329 = vunpack.c.h.b16 %v1450
    %v3330 = vunpack.c.l.b16 %v1451
    %v3331 = vunpack.c.l.b16 %v1452
    %v3332 = vunpack.c.h.b16 %v1452
    %v3333 = vunpack.c.l.b16 %v1453
    %v3334 = vunpack.c.h.b16 %v1453
    %v3335 = vunpack.c.l.b16 %v1454
    %v3336 = vunpack.c.l.b16 %v1455
    %v3337 = vunpack.c.h.b16 %v1455
    %v3338 = vunpack.c.l.b16 %v1456
    %v3339 = vunpack.c.h.b16 %v1456
    %v3340 = vunpack.c.l.b16 %v1457
    %v3341 = vunpack.c.l.b16 %v1458
    %v3342 = vunpack.c.h.b16 %v1458
    %v3343 = vunpack.c.l.b16 %v1459
    %v3344 = vunpack.c.h.b16 %v1459
    %v3345 = vunpack.c.l.b16 %v1460
    %v3346 = vunpack.c.l.b16 %v1461
    %v3347 = vunpack.c.h.b16 %v1461
    %v3348 = vunpack.c.l.b16 %v1462
    %v3349 = vunpack.c.h.b16 %v1462
    %v3350 = vunpack.c.l.b16 %v1463
    %v3351 = vunpack.c.l.b16 %v1464
    %v3352 = vunpack.c.h.b16 %v1464
    %v3353 = vunpack.c.l.b16 %v1465
    %v3354 = vunpack.c.h.b16 %v1465
    %v3355 = vunpack.c.l.b16 %v1466
    %v3356 = vunpack.c.l.b16 %v1467
    %v3357 = vunpack.c.h.b16 %v1467
    %v3358 = vunpack.c.l.b16 %v1468
    %v3359 = vunpack.c.h.b16 %v1468
    %v3360 = vunpack.c.l.b16 %v1469
    %v3361 = vunpack.c.l.b16 %v1470
    %v3362 = vunpack.c.h.b16 %v1470
    %v3363 = vunpack.c.l.b16 %v1471
    %v3364 = vunpack.c.h.b16 %v1471
    %v3365 = vunpack.c.l.b16 %v1472
    %v3366 = vunpack.c.l.b16 %v1473
    %v3367 = vunpack.c.h.b16 %v1473
    %v3368 = vunpack.c.l.b16 %v1474
    %v3369 = vunpack.c.h.b16 %v1474
    %v3370 = vunpack.c.l.b16 %v1475
    %v3371 = vunpack.c.l.b16 %v1476
    %v3372 = vunpack.c.h.b16 %v1476
    %v3373 = vunpack.c.l.b16 %v1477
    %v3374 = vunpack.c.h.b16 %v1477
    %v3375 = vunpack.c.l.b16 %v1478
    %v3376 = vunpack.c.l.b16 %v1479
    %v3377 = vunpack.c.h.b16 %v1479
    %v3378 = vunpack.c.l.b16 %v1480
    %v3379 = vunpack.c.h.b16 %v1480
    %v3380 = vunpack.c.l.b16 %v1481
    %v3381 = vunpack.c.l.b16 %v1482
    %v3382 = vunpack.c.h.b16 %v1482
    %v3383 = vunpack.c.l.b16 %v1483
    %v3384 = vunpack.c.h.b16 %v1483
    %v3385 = vunpack.c.l.b16 %v1484
    %v3386 = vunpack.c.l.b16 %v1485
    %v3387 = vunpack.c.h.b16 %v1485
    %v3388 = vunpack.c.l.b16 %v1486
    %v3389 = vunpack.c.h.b16 %v1486
    %v3390 = vunpack.c.l.b16 %v1487
    %v3391 = vunpack.c.l.b16 %v1488
    %v3392 = vunpack.c.h.b16 %v1488
    %v3393 = vunpack.c.l.b16 %v1489
    %v3394 = vunpack.c.h.b16 %v1489
    %v3395 = vunpack.c.l.b16 %v1490
    %v3396 = vunpack.c.l.b16 %v1491
    %v3397 = vunpack.c.h.b16 %v1491
    %v3398 = vunpack.c.l.b16 %v1492
    %v3399 = vunpack.c.h.b16 %v1492
    %v3400 = vunpack.c.l.b16 %v1493
    %v3401 = vunpack.c.l.b16 %v1494
    %v3402 = vunpack.c.h.b16 %v1494
    %v3403 = vunpack.c.l.b16 %v1495
    %v3404 = vunpack.c.h.b16 %v1495
    %v3405 = vunpack.c.l.b16 %v1496
    %v3406 = vunpack.c.l.b16 %v1497
    %v3407 = vunpack.c.h.b16 %v1497
    %v3408 = vunpack.c.l.b16 %v1498
    %v3409 = vunpack.c.h.b16 %v1498
    %v3410 = vunpack.c.l.b16 %v1499
    %v3411 = vunpack.c.l.b16 %v1500
    %v3412 = vunpack.c.h.b16 %v1500
    %v3413 = vunpack.c.l.b16 %v1501
    %v3414 = vunpack.c.h.b16 %v1501
    %v3415 = vunpack.c.l.b16 %v1502
    %v3416 = vunpack.c.l.b16 %v1503
    %v3417 = vunpack.c.h.b16 %v1503
    %v3418 = vunpack.c.l.b16 %v1504
    %v3419 = vunpack.c.h.b16 %v1504
    %v3420 = vunpack.c.l.b16 %v1505
    %v3421 = vunpack.c.l.b16 %v1506
    %v3422 = vunpack.c.h.b16 %v1506
    %v3423 = vunpack.c.l.b16 %v1507
    %v3424 = vunpack.c.h.b16 %v1507
    %v3425 = vunpack.c.l.b16 %v1508
    %v3426 = vunpack.c.l.b16 %v1509
    %v3427 = vunpack.c.h.b16 %v1509
    %v3428 = vunpack.c.l.b16 %v1510
    %v3429 = vunpack.c.h.b16 %v1510
    %v3430 = vunpack.c.l.b16 %v1511
    %v3431 = vunpack.c.l.b16 %v1512
    %v3432 = vunpack.c.h.b16 %v1512
    %v3433 = vunpack.c.l.b16 %v1513
    %v3434 = vunpack.c.h.b16 %v1513
    %v3435 = vunpack.c.l.b16 %v1514
    %v3436 = vunpack.c.l.b16 %v1515
    %v3437 = vunpack.c.h.b16 %v1515
    %v3438 = vunpack.c.l.b16 %v1516
    %v3439 = vunpack.c.h.b16 %v1516
    %v3440 = vunpack.c.l.b16 %v1517
    %v3441 = vunpack.c.l.b16 %v1518
    %v3442 = vunpack.c.h.b16 %v1518
    %v3443 = vunpack.c.l.b16 %v1519
    %v3444 = vunpack.c.h.b16 %v1519
    %v3445 = vunpack.c.l.b16 %v1520
    %v3446 = vunpack.c.l.b16 %v1521
    %v3447 = vunpack.c.h.b16 %v1521
    %v3448 = vunpack.c.l.b16 %v1522
    %v3449 = vunpack.c.h.b16 %v1522
    %v3450 = vunpack.c.l.b16 %v1523
    %v3451 = vunpack.c.l.b16 %v1524
    %v3452 = vunpack.c.h.b16 %v1524
    %v3453 = vunpack.c.l.b16 %v1525
    %v3454 = vunpack.c.h.b16 %v1525
    %v3455 = vunpack.c.l.b16 %v1526
    %v3456 = vunpack.c.l.b16 %v1527
    %v3457 = vunpack.c.h.b16 %v1527
    %v3458 = vunpack.c.l.b16 %v1528
    %v3459 = vunpack.c.h.b16 %v1528
    %v3460 = vunpack.c.l.b16 %v1529
    %v3461 = vunpack.c.l.b16 %v1530
    %v3462 = vunpack.c.h.b16 %v1530
    %v3463 = vunpack.c.l.b16 %v1531
    %v3464 = vunpack.c.h.b16 %v1531
    %v3465 = vunpack.c.l.b16 %v1532
    %v3466 = vunpack.c.l.b16 %v1533
    %v3467 = vunpack.c.h.b16 %v1533
    %v3468 = vunpack.c.l.b16 %v1534
    %v3469 = vunpack.c.h.b16 %v1534
    %v3470 = vunpack.c.l.b16 %v1535
    %v3471 = vunpack.c.l.b16 %v1536
    %v3472 = vunpack.c.h.b16 %v1536
    %v3473 = vunpack.c.l.b16 %v1537
    %v3474 = vunpack.c.h.b16 %v1537
    %v3475 = vunpack.c.l.b16 %v1538
    %v3476 = vunpack.c.l.b16 %v1539
    %v3477 = vunpack.c.h.b16 %v1539
    %v3478 = vunpack.c.l.b16 %v1540
    %v3479 = vunpack.c.h.b16 %v1540
    %v3480 = vunpack.c.l.b16 %v1541
    %v3481 = vunpack.c.l.b16 %v1542
    %v3482 = vunpack.c.h.b16 %v1542
    %v3483 = vunpack.c.l.b16 %v1543
    %v3484 = vunpack.c.h.b16 %v1543
    %v3485 = vunpack.c.l.b16 %v1544
    %v3486 = vunpack.c.l.b16 %v1545
    %v3487 = vunpack.c.h.b16 %v1545
    %v3488 = vunpack.c.l.b16 %v1546
    %v3489 = vunpack.c.h.b16 %v1546
    %v3490 = vunpack.c.l.b16 %v1547
    %v3491 = vunpack.c.l.b16 %v1548
    %v3492 = vunpack.c.h.b16 %v1548
    %v3493 = vunpack.c.l.b16 %v1549
    %v3494 = vunpack.c.h.b16 %v1549
    %v3495 = vunpack.c.l.b16 %v1550
    %v3496 = vunpack.c.l.b16 %v1551
    %v3497 = vunpack.c.h.b16 %v1551
    %v3498 = vunpack.c.l.b16 %v1552
    %v3499 = vunpack.c.h.b16 %v1552
    %v3500 = vunpack.c.l.b16 %v1553
    %v3501 = vunpack.c.l.b16 %v1554
    %v3502 = vunpack.c.h.b16 %v1554
    %v3503 = vunpack.c.l.b16 %v1555
    %v3504 = vunpack.c.h.b16 %v1555
    %v3505 = vunpack.c.l.b16 %v1556
    %v3506 = vunpack.c.l.b16 %v1557
    %v3507 = vunpack.c.h.b16 %v1557
    %v3508 = vunpack.c.l.b16 %v1558
    %v3509 = vunpack.c.h.b16 %v1558
    %v3510 = vunpack.c.l.b16 %v1559
    %v3511 = vunpack.c.l.b16 %v1560
    %v3512 = vunpack.c.h.b16 %v1560
    %v3513 = vunpack.c.l.b16 %v1561
    %v3514 = vunpack.c.h.b16 %v1561
    %v3515 = vunpack.c.l.b16 %v1562
    %v3516 = vunpack.c.l.b16 %v1563
    %v3517 = vunpack.c.h.b16 %v1563
    %v3518 = vunpack.c.l.b16 %v1564
    %v3519 = vunpack.c.h.b16 %v1564
    %v3520 = vunpack.c.l.b16 %v1565
    %v3521 = vunpack.c.l.b16 %v1566
    %v3522 = vunpack.c.h.b16 %v1566
    %v3523 = vunpack.c.l.b16 %v1567
    %v3524 = vunpack.c.h.b16 %v1567
    %v3525 = vunpack.c.l.b16 %v1568
    %v3526 = vunpack.c.l.b16 %v1569
    %v3527 = vunpack.c.h.b16 %v1569
    %v3528 = vunpack.c.l.b16 %v1570
    %v3529 = vunpack.c.h.b16 %v1570
    %v3530 = vunpack.c.l.b16 %v1571
    %v3531 = vunpack.c.l.b16 %v1572
    %v3532 = vunpack.c.h.b16 %v1572
    %v3533 = vunpack.c.l.b16 %v1573
    %v3534 = vunpack.c.h.b16 %v1573
    %v3535 = vunpack.c.l.b16 %v1574
    %v3536 = vunpack.c.l.b16 %v1575
    %v3537 = vunpack.c.h.b16 %v1575
    %v3538 = vunpack.c.l.b16 %v1576
    %v3539 = vunpack.c.h.b16 %v1576
    %v3540 = vunpack.c.l.b16 %v1577
    %v3541 = vunpack.c.l.b16 %v1578
    %v3542 = vunpack.c.h.b16 %v1578
    %v3543 = vunpack.c.l.b16 %v1579
    %v3544 = vunpack.c.h.b16 %v1579
    %v3545 = vunpack.c.l.b16 %v1580
    %v3546 = vunpack.c.l.b16 %v1581
    %v3547 = vunpack.c.h.b16 %v1581
    %v3548 = vunpack.c.l.b16 %v1582
    %v3549 = vunpack.c.h.b16 %v1582
    %v3550 = vunpack.c.l.b16 %v1583
    %v3551 = vunpack.c.l.b16 %v1584
    %v3552 = vunpack.c.h.b16 %v1584
    %v3553 = vunpack.c.l.b16 %v1585
    %v3554 = vunpack.c.h.b16 %v1585
    %v3555 = vunpack.c.l.b16 %v1586
    %v3556 = vunpack.c.l.b16 %v1587
    %v3557 = vunpack.c.h.b16 %v1587
    %v3558 = vunpack.c.l.b16 %v1588
    %v3559 = vunpack.c.h.b16 %v1588
    %v3560 = vunpack.c.l.b16 %v1589
    %v3561 = vunpack.c.l.b16 %v1590
    %v3562 = vunpack.c.h.b16 %v1590
    %v3563 = vunpack.c.l.b16 %v1591
    %v3564 = vunpack.c.h.b16 %v1591
    %v3565 = vunpack.c.l.b16 %v1592
    %v3566 = vunpack.c.l.b16 %v1593
    %v3567 = vunpack.c.h.b16 %v1593
    %v3568 = vunpack.c.l.b16 %v1594
    %v3569 = vunpack.c.h.b16 %v1594
    %v3570 = vunpack.c.l.b16 %v1595
    %v3571 = vunpack.c.l.b16 %v1596
    %v3572 = vunpack.c.h.b16 %v1596
    %v3573 = vunpack.c.l.b16 %v1597
    %v3574 = vunpack.c.h.b16 %v1597
    %v3575 = vunpack.c.l.b16 %v1598
    %v3576 = vunpack.c.l.b16 %v1599
    %v3577 = vunpack.c.h.b16 %v1599
    %v3578 = vunpack.c.l.b16 %v1600
    %v3579 = vunpack.c.h.b16 %v1600
    %v3580 = vunpack.c.l.b16 %v1601
    %v3581 = vunpack.c.l.b16 %v1602
    %v3582 = vunpack.c.h.b16 %v1602
    %v3583 = vunpack.c.l.b16 %v1603
    %v3584 = vunpack.c.h.b16 %v1603
    %v3585 = vunpack.c.l.b16 %v1604
    %v3586 = vunpack.c.l.b16 %v1605
    %v3587 = vunpack.c.h.b16 %v1605
    %v3588 = vunpack.c.l.b16 %v1606
    %v3589 = vunpack.c.h.b16 %v1606
    %v3590 = vunpack.c.l.b16 %v1607
    %v3591 = vunpack.c.l.b16 %v1608
    %v3592 = vunpack.c.h.b16 %v1608
    %v3593 = vunpack.c.l.b16 %v1609
    %v3594 = vunpack.c.h.b16 %v1609
    %v3595 = vunpack.c.l.b16 %v1610
    %v3596 = vunpack.c.l.b16 %v1611
    %v3597 = vunpack.c.h.b16 %v1611
    %v3598 = vunpack.c.l.b16 %v1612
    %v3599 = vunpack.c.h.b16 %v1612
    %v3600 = vunpack.c.l.b16 %v1613
    %v3601 = vunpack.c.l.b16 %v1614
    %v3602 = vunpack.c.h.b16 %v1614
    %v3603 = vunpack.c.l.b16 %v1615
    %v3604 = vunpack.c.h.b16 %v1615
    %v3605 = vunpack.c.l.b16 %v1616
    %v3606 = vunpack.c.l.b16 %v1617
    %v3607 = vunpack.c.h.b16 %v1617
    %v3608 = vunpack.c.l.b16 %v1618
    %v3609 = vunpack.c.h.b16 %v1618
    %v3610 = vunpack.c.l.b16 %v1619
    %v3611 = vunpack.c.l.b16 %v1620
    %v3612 = vunpack.c.h.b16 %v1620
    %v3613 = vunpack.c.l.b16 %v1621
    %v3614 = vunpack.c.h.b16 %v1621
    %v3615 = vunpack.c.l.b16 %v1622
    %v3616 = vunpack.c.l.b16 %v1623
    %v3617 = vunpack.c.h.b16 %v1623
    %v3618 = vunpack.c.l.b16 %v1624
    %v3619 = vunpack.c.h.b16 %v1624
    %v3620 = vunpack.c.l.b16 %v1625
    %v3621 = vunpack.c.l.b16 %v1626
    %v3622 = vunpack.c.h.b16 %v1626
    %v3623 = vunpack.c.l.b16 %v1627
    %v3624 = vunpack.c.h.b16 %v1627
    %v3625 = vunpack.c.l.b16 %v1628
    %v3626 = vunpack.c.l.b16 %v1629
    %v3627 = vunpack.c.h.b16 %v1629
    %v3628 = vunpack.c.l.b16 %v1630
    %v3629 = vunpack.c.h.b16 %v1630
    %v3630 = vunpack.c.l.b16 %v1631
    %v3631 = vunpack.c.l.b16 %v1632
    %v3632 = vunpack.c.h.b16 %v1632
    %v3633 = vunpack.c.l.b16 %v1633
    %v3634 = vunpack.c.h.b16 %v1633
    %v3635 = vunpack.c.l.b16 %v1634
    %v3636 = vunpack.c.l.b16 %v1635
    %v3637 = vunpack.c.h.b16 %v1635
    %v3638 = vunpack.c.l.b16 %v1636
    %v3639 = vunpack.c.h.b16 %v1636
    %v3640 = vunpack.c.l.b16 %v1637
    %v3641 = vunpack.c.l.b16 %v1638
    %v3642 = vunpack.c.h.b16 %v1638
    %v3643 = vunpack.c.l.b16 %v1639
    %v3644 = vunpack.c.h.b16 %v1639
    %v3645 = vunpack.c.l.b16 %v1640
    %v3646 = vunpack.c.l.b16 %v1641
    %v3647 = vunpack.c.h.b16 %v1641
    %v3648 = vunpack.c.l.b16 %v1642
    %v3649 = vunpack.c.h.b16 %v1642
    %v3650 = vunpack.c.l.b16 %v1643
    %v3651 = vunpack.c.l.b16 %v1644
    %v3652 = vunpack.c.h.b16 %v1644
    %v3653 = vunpack.c.l.b16 %v1645
    %v3654 = vunpack.c.h.b16 %v1645
    %v3655 = vunpack.c.l.b16 %v1646
    %v3656 = vunpack.c.l.b16 %v1647
    %v3657 = vunpack.c.h.b16 %v1647
    %v3658 = vunpack.c.l.b16 %v1648
    %v3659 = vunpack.c.h.b16 %v1648
    %v3660 = vunpack.c.l.b16 %v1649
    %v3661 = vunpack.c.l.b16 %v1650
    %v3662 = vunpack.c.h.b16 %v1650
    %v3663 = vunpack.c.l.b16 %v1651
    %v3664 = vunpack.c.h.b16 %v1651
    %v3665 = vunpack.c.l.b16 %v1652
    %v3666 = vunpack.c.l.b16 %v1653
    %v3667 = vunpack.c.h.b16 %v1653
    %v3668 = vunpack.c.l.b16 %v1654
    %v3669 = vunpack.c.h.b16 %v1654
    %v3670 = vunpack.c.l.b16 %v1655
    %v3671 = vunpack.c.l.b16 %v1656
    %v3672 = vunpack.c.h.b16 %v1656
    %v3673 = vunpack.c.l.b16 %v1657
    %v3674 = vunpack.c.h.b16 %v1657
    %v3675 = vunpack.c.l.b16 %v1658
    %v3676 = vunpack.c.l.b16 %v1659
    %v3677 = vunpack.c.h.b16 %v1659
    %v3678 = vunpack.c.l.b16 %v1660
    %v3679 = vunpack.c.h.b16 %v1660
    %v3680 = vunpack.c.l.b16 %v1661
    %v3681 = vunpack.c.l.b16 %v1662
    %v3682 = vunpack.c.h.b16 %v1662
    %v3683 = vunpack.c.l.b16 %v1663
    %v3684 = vunpack.c.h.b16 %v1663
    %v3685 = vunpack.c.l.b16 %v1664
    %v3686 = vunpack.c.l.b16 %v1665
    %v3687 = vunpack.c.h.b16 %v1665
    %v3688 = vunpack.c.l.b16 %v1666
    %v3689 = vunpack.c.h.b16 %v1666
    %v3690 = vunpack.c.l.b16 %v1667
    %v3691 = vunpack.c.l.b16 %v1668
    %v3692 = vunpack.c.h.b16 %v1668
    %v3693 = vunpack.c.l.b16 %v1669
    %v3694 = vunpack.c.h.b16 %v1669
    %v3695 = vunpack.c.l.b16 %v1670
    %v3696 = vunpack.c.l.b16 %v1671
    %v3697 = vunpack.c.h.b16 %v1671
    %v3698 = vunpack.c.l.b16 %v1672
    %v3699 = vunpack.c.h.b16 %v1672
    %v3700 = vunpack.c.l.b16 %v1673
    %v3701 = vpack.c.b16 %v2456, %v2451
    %v3702 = vpack.c.b16 %v2457, %v2452
    %v3703 = vpack.c.b16 %v2458, %v2453
    %v3704 = vpack.c.b16 %v2459, %v2454
    %v3705 = vpack.c.b16 %v2460, %v2455
    %v3706 = vpack.c.b16 %v2466, %v2461
    %v3707 = vpack.c.b16 %v2467, %v2462
    %v3708 = vpack.c.b16 %v2468, %v2463
    %v3709 = vpack.c.b16 %v2469, %v2464
    %v3710 = vpack.c.b16 %v2470, %v2465
    %v3711 = vpack.c.b16 %v2476, %v2471
    %v3712 = vpack.c.b16 %v2477, %v2472
    %v3713 = vpack.c.b16 %v2478, %v2473
    %v3714 = vpack.c.b16 %v2479, %v2474
    %v3715 = vpack.c.b16 %v2480, %v2475
    %v3716 = vpack.c.b16 %v2486, %v2481
    %v3717 = vpack.c.b16 %v2487, %v2482
    %v3718 = vpack.c.b16 %v2488, %v2483
    %v3719 = vpack.c.b16 %v2489, %v2484
    %v3720 = vpack.c.b16 %v2490, %v2485
    %v3721 = vpack.c.b16 %v2496, %v2491
    %v3722 = vpack.c.b16 %v2497, %v2492
    %v3723 = vpack.c.b16 %v2498, %v2493
    %v3724 = vpack.c.b16 %v2499, %v2494
    %v3725 = vpack.c.b16 %v2500, %v2495
    %v3726 = vpack.c.b16 %v2506, %v2501
    %v3727 = vpack.c.b16 %v2507, %v2502
    %v3728 = vpack.c.b16 %v2508, %v2503
    %v3729 = vpack.c.b16 %v2509, %v2504
    %v3730 = vpack.c.b16 %v2510, %v2505
    %v3731 = vpack.c.b16 %v2516, %v2511
    %v3732 = vpack.c.b16 %v2517, %v2512
    %v3733 = vpack.c.b16 %v2518, %v2513
    %v3734 = vpack.c.b16 %v2519, %v2514
    %v3735 = vpack.c.b16 %v2520, %v2515
    %v3736 = vpack.c.b16 %v2526, %v2521
    %v3737 = vpack.c.b16 %v2527, %v2522
    %v3738 = vpack.c.b16 %v2528, %v2523
    %v3739 = vpack.c.b16 %v2529, %v2524
    %v3740 = vpack.c.b16 %v2530, %v2525
    %v3741 = vpack.c.b16 %v2536, %v2531
    %v3742 = vpack.c.b16 %v2537, %v2532
    %v3743 = vpack.c.b16 %v2538, %v2533
    %v3744 = vpack.c.b16 %v2539, %v2534
    %v3745 = vpack.c.b16 %v2540, %v2535
    %v3746 = vpack.c.b16 %v2546, %v2541
    %v3747 = vpack.c.b16 %v2547, %v2542
    %v3748 = vpack.c.b16 %v2548, %v2543
    %v3749 = vpack.c.b16 %v2549, %v2544
    %v3750 = vpack.c.b16 %v2550, %v2545
    %v3751 = vpack.c.b16 %v2556, %v2551
    %v3752 = vpack.c.b16 %v2557, %v2552
    %v3753 = vpack.c.b16 %v2558, %v2553
    %v3754 = vpack.c.b16 %v2559, %v2554
    %v3755 = vpack.c.b16 %v2560, %v2555
    %v3756 = vpack.c.b16 %v2566, %v2561
    %v3757 = vpack.c.b16 %v2567, %v2562
    %v3758 = vpack.c.b16 %v2568, %v2563
    %v3759 = vpack.c.b16 %v2569, %v2564
    %v3760 = vpack.c.b16 %v2570, %v2565
    %v3761 = vpack.c.b16 %v2576, %v2571
    %v3762 = vpack.c.b16 %v2577, %v2572
    %v3763 = vpack.c.b16 %v2578, %v2573
    %v3764 = vpack.c.b16 %v2579, %v2574
    %v3765 = vpack.c.b16 %v2580, %v2575
    %v3766 = vpack.c.b16 %v2586, %v2581
    %v3767 = vpack.c.b16 %v2587, %v2582
    %v3768 = vpack.c.b16 %v2588, %v2583
    %v3769 = vpack.c.b16 %v2589, %v2584
    %v3770 = vpack.c.b16 %v2590, %v2585
    %v3771 = vpack.c.b16 %v2596, %v2591
    %v3772 = vpack.c.b16 %v2597, %v2592
    %v3773 = vpack.c.b16 %v2598, %v2593
    %v3774 = vpack.c.b16 %v2599, %v2594
    %v3775 = vpack.c.b16 %v2600, %v2595
    %v3776 = vpack.c.b16 %v2606, %v2601
    %v3777 = vpack.c.b16 %v2607, %v2602
    %v3778 = vpack.c.b16 %v2608, %v2603
    %v3779 = vpack.c.b16 %v2609, %v2604
    %v3780 = vpack.c.b16 %v2610, %v2605
    %v3781 = vpack.c.b16 %v2616, %v2611
    %v3782 = vpack.c.b16 %v2617, %v2612
    %v3783 = vpack.c.b16 %v2618, %v2613
    %v3784 = vpack.c.b16 %v2619, %v2614
    %v3785 = vpack.c.b16 %v2620, %v2615
    %v3786 = vpack.c.b16 %v2626, %v2621
    %v3787 = vpack.c.b16 %v2627, %v2622
    %v3788 = vpack.c.b16 %v2628, %v2623
    %v3789 = vpack.c.b16 %v2629, %v2624
    %v3790 = vpack.c.b16 %v2630, %v2625
    %v3791 = vpack.c.b16 %v2636, %v2631
    %v3792 = vpack.c.b16 %v2637, %v2632
    %v3793 = vpack.c.b16 %v2638, %v2633
    %v3794 = vpack.c.b16 %v2639, %v2634
    %v3795 = vpack.c.b16 %v2640, %v2635
    %v3796 = vpack.c.b16 %v2646, %v2641
    %v3797 = vpack.c.b16 %v2647, %v2642
    %v3798 = vpack.c.b16 %v2648, %v2643
    %v3799 = vpack.c.b16 %v2649, %v2644
    %v3800 = vpack.c.b16 %v2650, %v2645
    %v3801 = vpack.c.b16 %v2656, %v2651
    %v3802 = vpack.c.b16 %v2657, %v2652
    %v3803 = vpack.c.b16 %v2658, %v2653
    %v3804 = vpack.c.b16 %v2659, %v2654
    %v3805 = vpack.c.b16 %v2660, %v2655
    %v3806 = vpack.c.b16 %v2666, %v2661
    %v3807 = vpack.c.b16 %v2667, %v2662
    %v3808 = vpack.c.b16 %v2668, %v2663
    %v3809 = vpack.c.b16 %v2669, %v2664
    %v3810 = vpack.c.b16 %v2670, %v2665
    %v3811 = vpack.c.b16 %v2676, %v2671
    %v3812 = vpack.c.b16 %v2677, %v2672
    %v3813 = vpack.c.b16 %v2678, %v2673
    %v3814 = vpack.c.b16 %v2679, %v2674
    %v3815 = vpack.c.b16 %v2680, %v2675
    %v3816 = vpack.c.b16 %v2686, %v2681
    %v3817 = vpack.c.b16 %v2687, %v2682
    %v3818 = vpack.c.b16 %v2688, %v2683
    %v3819 = vpack.c.b16 %v2689, %v2684
    %v3820 = vpack.c.b16 %v2690, %v2685
    %v3821 = vpack.c.b16 %v2696, %v2691
    %v3822 = vpack.c.b16 %v2697, %v2692
    %v3823 = vpack.c.b16 %v2698, %v2693
    %v3824 = vpack.c.b16 %v2699, %v2694
    %v3825 = vpack.c.b16 %v2700, %v2695
    %v3826 = vpack.c.b16 %v2706, %v2701
    %v3827 = vpack.c.b16 %v2707, %v2702
    %v3828 = vpack.c.b16 %v2708, %v2703
    %v3829 = vpack.c.b16 %v2709, %v2704
    %v3830 = vpack.c.b16 %v2710, %v2705
    %v3831 = vpack.c.b16 %v2716, %v2711
    %v3832 = vpack.c.b16 %v2717, %v2712
    %v3833 = vpack.c.b16 %v2718, %v2713
    %v3834 = vpack.c.b16 %v2719, %v2714
    %v3835 = vpack.c.b16 %v2720, %v2715
    %v3836 = vpack.c.b16 %v2726, %v2721
    %v3837 = vpack.c.b16 %v2727, %v2722
    %v3838 = vpack.c.b16 %v2728, %v2723
    %v3839 = vpack.c.b16 %v2729, %v2724
    %v3840 = vpack.c.b16 %v2730, %v2725
    %v3841 = vpack.c.b16 %v2736, %v2731
    %v3842 = vpack.c.b16 %v2737, %v2732
    %v3843 = vpack.c.b16 %v2738, %v2733
    %v3844 = vpack.c.b16 %v2739, %v2734
    %v3845 = vpack.c.b16 %v2740, %v2735
    %v3846 = vpack.c.b16 %v2746, %v2741
    %v3847 = vpack.c.b16 %v2747, %v2742
    %v3848 = vpack.c.b16 %v2748, %v2743
    %v3849 = vpack.c.b16 %v2749, %v2744
    %v3850 = vpack.c.b16 %v2750, %v2745
    %v3851 = vpack.c.b16 %v2756, %v2751
    %v3852 = vpack.c.b16 %v2757, %v2752
    %v3853 = vpack.c.b16 %v2758, %v2753
    %v3854 = vpack.c.b16 %v2759, %v2754
    %v3855 = vpack.c.b16 %v2760, %v2755
    %v3856 = vpack.c.b16 %v2766, %v2761
    %v3857 = vpack.c.b16 %v2767, %v2762
    %v3858 = vpack.c.b16 %v2768, %v2763
    %v3859 = vpack.c.b16 %v2769, %v2764
    %v3860 = vpack.c.b16 %v2770, %v2765
    %v3861 = vpack.c.b16 %v2776, %v2771
    %v3862 = vpack.c.b16 %v2777, %v2772
    %v3863 = vpack.c.b16 %v2778, %v2773
    %v3864 = vpack.c.b16 %v2779, %v2774
    %v3865 = vpack.c.b16 %v2780, %v2775
    %v3866 = vpack.c.b16 %v2786, %v2781
    %v3867 = vpack.c.b16 %v2787, %v2782
    %v3868 = vpack.c.b16 %v2788, %v2783
    %v3869 = vpack.c.b16 %v2789, %v2784
    %v3870 = vpack.c.b16 %v2790, %v2785
    %v3871 = vpack.c.b16 %v2796, %v2791
    %v3872 = vpack.c.b16 %v2797, %v2792
    %v3873 = vpack.c.b16 %v2798, %v2793
    %v3874 = vpack.c.b16 %v2799, %v2794
    %v3875 = vpack.c.b16 %v2800, %v2795
    %v3876 = vpack.c.b16 %v2806, %v2801
    %v3877 = vpack.c.b16 %v2807, %v2802
    %v3878 = vpack.c.b16 %v2808, %v2803
    %v3879 = vpack.c.b16 %v2809, %v2804
    %v3880 = vpack.c.b16 %v2810, %v2805
    %v3881 = vpack.c.b16 %v2816, %v2811
    %v3882 = vpack.c.b16 %v2817, %v2812
    %v3883 = vpack.c.b16 %v2818, %v2813
    %v3884 = vpack.c.b16 %v2819, %v2814
    %v3885 = vpack.c.b16 %v2820, %v2815
    %v3886 = vpack.c.b16 %v2826, %v2821
    %v3887 = vpack.c.b16 %v2827, %v2822
    %v3888 = vpack.c.b16 %v2828, %v2823
    %v3889 = vpack.c.b16 %v2829, %v2824
    %v3890 = vpack.c.b16 %v2830, %v2825
    %v3891 = vpack.c.b16 %v2836, %v2831
    %v3892 = vpack.c.b16 %v2837, %v2832
    %v3893 = vpack.c.b16 %v2838, %v2833
    %v3894 = vpack.c.b16 %v2839, %v2834
    %v3895 = vpack.c.b16 %v2840, %v2835
    %v3896 = vpack.c.b16 %v2846, %v2841
    %v3897 = vpack.c.b16 %v2847, %v2842
    %v3898 = vpack.c.b16 %v2848, %v2843
    %v3899 = vpack.c.b16 %v2849, %v2844
    %v3900 = vpack.c.b16 %v2850, %v2845
    %v3901 = vpack.c.b16 %v2856, %v2851
    %v3902 = vpack.c.b16 %v2857, %v2852
    %v3903 = vpack.c.b16 %v2858, %v2853
    %v3904 = vpack.c.b16 %v2859, %v2854
    %v3905 = vpack.c.b16 %v2860, %v2855
    %v3906 = vpack.c.b16 %v2866, %v2861
    %v3907 = vpack.c.b16 %v2867, %v2862
    %v3908 = vpack.c.b16 %v2868, %v2863
    %v3909 = vpack.c.b16 %v2869, %v2864
    %v3910 = vpack.c.b16 %v2870, %v2865
    %v3911 = vpack.c.b16 %v2876, %v2871
    %v3912 = vpack.c.b16 %v2877, %v2872
    %v3913 = vpack.c.b16 %v2878, %v2873
    %v3914 = vpack.c.b16 %v2879, %v2874
    %v3915 = vpack.c.b16 %v2880, %v2875
    %v3916 = vpack.c.b16 %v2886, %v2881
    %v3917 = vpack.c.b16 %v2887, %v2882
    %v3918 = vpack.c.b16 %v2888, %v2883
    %v3919 = vpack.c.b16 %v2889, %v2884
    %v3920 = vpack.c.b16 %v2890, %v2885
    %v3921 = vpack.c.b16 %v2896, %v2891
    %v3922 = vpack.c.b16 %v2897, %v2892
    %v3923 = vpack.c.b16 %v2898, %v2893
    %v3924 = vpack.c.b16 %v2899, %v2894
    %v3925 = vpack.c.b16 %v2900, %v2895
    %v3926 = vpack.c.b16 %v2906, %v2901
    %v3927 = vpack.c.b16 %v2907, %v2902
    %v3928 = vpack.c.b16 %v2908, %v2903
    %v3929 = vpack.c.b16 %v2909, %v2904
    %v3930 = vpack.c.b16 %v2910, %v2905
    %v3931 = vpack.c.b16 %v2916, %v2911
    %v3932 = vpack.c.b16 %v2917, %v2912
    %v3933 = vpack.c.b16 %v2918, %v2913
    %v3934 = vpack.c.b16 %v2919, %v2914
    %v3935 = vpack.c.b16 %v2920, %v2915
    %v3936 = vpack.c.b16 %v2926, %v2921
    %v3937 = vpack.c.b16 %v2927, %v2922
    %v3938 = vpack.c.b16 %v2928, %v2923
    %v3939 = vpack.c.b16 %v2929, %v2924
    %v3940 = vpack.c.b16 %v2930, %v2925
    %v3941 = vpack.c.b16 %v2936, %v2931
    %v3942 = vpack.c.b16 %v2937, %v2932
    %v3943 = vpack.c.b16 %v2938, %v2933
    %v3944 = vpack.c.b16 %v2939, %v2934
    %v3945 = vpack.c.b16 %v2940, %v2935
    %v3946 = vpack.c.b16 %v2946, %v2941
    %v3947 = vpack.c.b16 %v2947, %v2942
    %v3948 = vpack.c.b16 %v2948, %v2943
    %v3949 = vpack.c.b16 %v2949, %v2944
    %v3950 = vpack.c.b16 %v2950, %v2945
    %v3951 = vpack.c.b16 %v2956, %v2951
    %v3952 = vpack.c.b16 %v2957, %v2952
    %v3953 = vpack.c.b16 %v2958, %v2953
    %v3954 = vpack.c.b16 %v2959, %v2954
    %v3955 = vpack.c.b16 %v2960, %v2955
    %v3956 = vpack.c.b16 %v2966, %v2961
    %v3957 = vpack.c.b16 %v2967, %v2962
    %v3958 = vpack.c.b16 %v2968, %v2963
    %v3959 = vpack.c.b16 %v2969, %v2964
    %v3960 = vpack.c.b16 %v2970, %v2965
    %v3961 = vpack.c.b16 %v2976, %v2971
    %v3962 = vpack.c.b16 %v2977, %v2972
    %v3963 = vpack.c.b16 %v2978, %v2973
    %v3964 = vpack.c.b16 %v2979, %v2974
    %v3965 = vpack.c.b16 %v2980, %v2975
    %v3966 = vpack.c.b16 %v2986, %v2981
    %v3967 = vpack.c.b16 %v2987, %v2982
    %v3968 = vpack.c.b16 %v2988, %v2983
    %v3969 = vpack.c.b16 %v2989, %v2984
    %v3970 = vpack.c.b16 %v2990, %v2985
    %v3971 = vpack.c.b16 %v2996, %v2991
    %v3972 = vpack.c.b16 %v2997, %v2992
    %v3973 = vpack.c.b16 %v2998, %v2993
    %v3974 = vpack.c.b16 %v2999, %v2994
    %v3975 = vpack.c.b16 %v3000, %v2995
    %v3976 = vpack.c.b16 %v3006, %v3001
    %v3977 = vpack.c.b16 %v3007, %v3002
    %v3978 = vpack.c.b16 %v3008, %v3003
    %v3979 = vpack.c.b16 %v3009, %v3004
    %v3980 = vpack.c.b16 %v3010, %v3005
    %v3981 = vpack.c.b16 %v3016, %v3011
    %v3982 = vpack.c.b16 %v3017, %v3012
    %v3983 = vpack.c.b16 %v3018, %v3013
    %v3984 = vpack.c.b16 %v3019, %v3014
    %v3985 = vpack.c.b16 %v3020, %v3015
    %v3986 = vpack.c.b16 %v3026, %v3021
    %v3987 = vpack.c.b16 %v3027, %v3022
    %v3988 = vpack.c.b16 %v3028, %v3023
    %v3989 = vpack.c.b16 %v3029, %v3024
    %v3990 = vpack.c.b16 %v3030, %v3025
    %v3991 = vpack.c.b16 %v3036, %v3031
    %v3992 = vpack.c.b16 %v3037, %v3032
    %v3993 = vpack.c.b16 %v3038, %v3033
    %v3994 = vpack.c.b16 %v3039, %v3034
    %v3995 = vpack.c.b16 %v3040, %v3035
    %v3996 = vpack.c.b16 %v3046, %v3041
    %v3997 = vpack.c.b16 %v3047, %v3042
    %v3998 = vpack.c.b16 %v3048, %v3043
    %v3999 = vpack.c.b16 %v3049, %v3044
    %v4000 = vpack.c.b16 %v3050, %v3045
    %v4001 = vpack.c.b16 %v3056, %v3051
    %v4002 = vpack.c.b16 %v3057, %v3052
    %v4003 = vpack.c.b16 %v3058, %v3053
    %v4004 = vpack.c.b16 %v3059, %v3054
    %v4005 = vpack.c.b16 %v3060, %v3055
    %v4006 = vpack.c.b16 %v3066, %v3061
    %v4007 = vpack.c.b16 %v3067, %v3062
    %v4008 = vpack.c.b16 %v3068, %v3063
    %v4009 = vpack.c.b16 %v3069, %v3064
    %v4010 = vpack.c.b16 %v3070, %v3065
    %v4011 = vpack.c.b16 %v3076, %v3071
    %v4012 = vpack.c.b16 %v3077, %v3072
    %v4013 = vpack.c.b16 %v3078, %v3073
    %v4014 = vpack.c.b16 %v3079, %v3074
    %v4015 = vpack.c.b16 %v3080, %v3075
    %v4016 = vpack.c.b16 %v3086, %v3081
    %v4017 = vpack.c.b16 %v3087, %v3082
    %v4018 = vpack.c.b16 %v3088, %v3083
    %v4019 = vpack.c.b16 %v3089, %v3084
    %v4020 = vpack.c.b16 %v3090, %v3085
    %v4021 = vpack.c.b16 %v3096, %v3091
    %v4022 = vpack.c.b16 %v3097, %v3092
    %v4023 = vpack.c.b16 %v3098, %v3093
    %v4024 = vpack.c.b16 %v3099, %v3094
    %v4025 = vpack.c.b16 %v3100, %v3095
    %v4026 = vpack.c.b16 %v3106, %v3101
    %v4027 = vpack.c.b16 %v3107, %v3102
    %v4028 = vpack.c.b16 %v3108, %v3103
    %v4029 = vpack.c.b16 %v3109, %v3104
    %v4030 = vpack.c.b16 %v3110, %v3105
    %v4031 = vpack.c.b16 %v3116, %v3111
    %v4032 = vpack.c.b16 %v3117, %v3112
    %v4033 = vpack.c.b16 %v3118, %v3113
    %v4034 = vpack.c.b16 %v3119, %v3114
    %v4035 = vpack.c.b16 %v3120, %v3115
    %v4036 = vpack.c.b16 %v3126, %v3121
    %v4037 = vpack.c.b16 %v3127, %v3122
    %v4038 = vpack.c.b16 %v3128, %v3123
    %v4039 = vpack.c.b16 %v3129, %v3124
    %v4040 = vpack.c.b16 %v3130, %v3125
    %v4041 = vpack.c.b16 %v3136, %v3131
    %v4042 = vpack.c.b16 %v3137, %v3132
    %v4043 = vpack.c.b16 %v3138, %v3133
    %v4044 = vpack.c.b16 %v3139, %v3134
    %v4045 = vpack.c.b16 %v3140, %v3135
    %v4046 = vpack.c.b16 %v3146, %v3141
    %v4047 = vpack.c.b16 %v3147, %v3142
    %v4048 = vpack.c.b16 %v3148, %v3143
    %v4049 = vpack.c.b16 %v3149, %v3144
    %v4050 = vpack.c.b16 %v3150, %v3145
    %v4051 = vpack.c.b16 %v3156, %v3151
    %v4052 = vpack.c.b16 %v3157, %v3152
    %v4053 = vpack.c.b16 %v3158, %v3153
    %v4054 = vpack.c.b16 %v3159, %v3154
    %v4055 = vpack.c.b16 %v3160, %v3155
    %v4056 = vpack.c.b16 %v3166, %v3161
    %v4057 = vpack.c.b16 %v3167, %v3162
    %v4058 = vpack.c.b16 %v3168, %v3163
    %v4059 = vpack.c.b16 %v3169, %v3164
    %v4060 = vpack.c.b16 %v3170, %v3165
    %v4061 = vpack.c.b16 %v3176, %v3171
    %v4062 = vpack.c.b16 %v3177, %v3172
    %v4063 = vpack.c.b16 %v3178, %v3173
    %v4064 = vpack.c.b16 %v3179, %v3174
    %v4065 = vpack.c.b16 %v3180, %v3175
    %v4066 = vpack.c.b16 %v3186, %v3181
    %v4067 = vpack.c.b16 %v3187, %v3182
    %v4068 = vpack.c.b16 %v3188, %v3183
    %v4069 = vpack.c.b16 %v3189, %v3184
    %v4070 = vpack.c.b16 %v3190, %v3185
    %v4071 = vpack.c.b16 %v3196, %v3191
    %v4072 = vpack.c.b16 %v3197, %v3192
    %v4073 = vpack.c.b16 %v3198, %v3193
    %v4074 = vpack.c.b16 %v3199, %v3194
    %v4075 = vpack.c.b16 %v3200, %v3195
    %v4076 = vpack.c.b16 %v3206, %v3201
    %v4077 = vpack.c.b16 %v3207, %v3202
    %v4078 = vpack.c.b16 %v3208, %v3203
    %v4079 = vpack.c.b16 %v3209, %v3204
    %v4080 = vpack.c.b16 %v3210, %v3205
    %v4081 = vpack.c.b16 %v3216, %v3211
    %v4082 = vpack.c.b16 %v3217, %v3212
    %v4083 = vpack.c.b16 %v3218, %v3213
    %v4084 = vpack.c.b16 %v3219, %v3214
    %v4085 = vpack.c.b16 %v3220, %v3215
    %v4086 = vpack.c.b16 %v3226, %v3221
    %v4087 = vpack.c.b16 %v3227, %v3222
    %v4088 = vpack.c.b16 %v3228, %v3223
    %v4089 = vpack.c.b16 %v3229, %v3224
    %v4090 = vpack.c.b16 %v3230, %v3225
    %v4091 = vpack.c.b16 %v3236, %v3231
    %v4092 = vpack.c.b16 %v3237, %v3232
    %v4093 = vpack.c.b16 %v3238, %v3233
    %v4094 = vpack.c.b16 %v3239, %v3234
    %v4095 = vpack.c.b16 %v3240, %v3235
    %v4096 = vpack.c.b16 %v3246, %v3241
    %v4097 = vpack.c.b16 %v3247, %v3242
    %v4098 = vpack.c.b16 %v3248, %v3243
    %v4099 = vpack.c.b16 %v3249, %v3244
    %v4100 = vpack.c.b16 %v3250, %v3245
    %v4101 = vpack.c.b16 %v3256, %v3251
    %v4102 = vpack.c.b16 %v3257, %v3252
    %v4103 = vpack.c.b16 %v3258, %v3253
    %v4104 = vpack.c.b16 %v3259, %v3254
    %v4105 = vpack.c.b16 %v3260, %v3255
    %v4106 = vpack.c.b16 %v3266, %v3261
    %v4107 = vpack.c.b16 %v3267, %v3262
    %v4108 = vpack.c.b16 %v3268, %v3263
    %v4109 = vpack.c.b16 %v3269, %v3264
    %v4110 = vpack.c.b16 %v3270, %v3265
    %v4111 = vpack.c.b16 %v3276, %v3271
    %v4112 = vpack.c.b16 %v3277, %v3272
    %v4113 = vpack.c.b16 %v3278, %v3273
    %v4114 = vpack.c.b16 %v3279, %v3274
    %v4115 = vpack.c.b16 %v3280, %v3275
    %v4116 = vpack.c.b16 %v3286, %v3281
    %v4117 = vpack.c.b16 %v3287, %v3282
    %v4118 = vpack.c.b16 %v3288, %v3283
    %v4119 = vpack.c.b16 %v3289, %v3284
    %v4120 = vpack.c.b16 %v3290, %v3285
    %v4121 = vpack.c.b16 %v3296, %v3291
    %v4122 = vpack.c.b16 %v3297, %v3292
    %v4123 = vpack.c.b16 %v3298, %v3293
    %v4124 = vpack.c.b16 %v3299, %v3294
    %v4125 = vpack.c.b16 %v3300, %v3295
    %v4126 = vpack.c.b16 %v3306, %v3301
    %v4127 = vpack.c.b16 %v3307, %v3302
    %v4128 = vpack.c.b16 %v3308, %v3303
    %v4129 = vpack.c.b16 %v3309, %v3304
    %v4130 = vpack.c.b16 %v3310, %v3305
    %v4131 = vpack.c.b16 %v3316, %v3311
    %v4132 = vpack.c.b16 %v3317, %v3312
    %v4133 = vpack.c.b16 %v3318, %v3313
    %v4134 = vpack.c.b16 %v3319, %v3314
    %v4135 = vpack.c.b16 %v3320, %v3315
    %v4136 = vpack.c.b16 %v3326, %v3321
    %v4137 = vpack.c.b16 %v3327, %v3322
    %v4138 = vpack.c.b16 %v3328, %v3323
    %v4139 = vpack.c.b16 %v3329, %v3324
    %v4140 = vpack.c.b16 %v3330, %v3325
    %v4141 = vpack.c.b16 %v3336, %v3331
    %v4142 = vpack.c.b16 %v3337, %v3332
    %v4143 = vpack.c.b16 %v3338, %v3333
    %v4144 = vpack.c.b16 %v3339, %v3334
    %v4145 = vpack.c.b16 %v3340, %v3335
    %v4146 = vpack.c.b16 %v3346, %v3341
    %v4147 = vpack.c.b16 %v3347, %v3342
    %v4148 = vpack.c.b16 %v3348, %v3343
    %v4149 = vpack.c.b16 %v3349, %v3344
    %v4150 = vpack.c.b16 %v3350, %v3345
    %v4151 = vpack.c.b16 %v3356, %v3351
    %v4152 = vpack.c.b16 %v3357, %v3352
    %v4153 = vpack.c.b16 %v3358, %v3353
    %v4154 = vpack.c.b16 %v3359, %v3354
    %v4155 = vpack.c.b16 %v3360, %v3355
    %v4156 = vpack.c.b16 %v3366, %v3361
    %v4157 = vpack.c.b16 %v3367, %v3362
    %v4158 = vpack.c.b16 %v3368, %v3363
    %v4159 = vpack.c.b16 %v3369, %v3364
    %v4160 = vpack.c.b16 %v3370, %v3365
    %v4161 = vpack.c.b16 %v3376, %v3371
    %v4162 = vpack.c.b16 %v3377, %v3372
    %v4163 = vpack.c.b16 %v3378, %v3373
    %v4164 = vpack.c.b16 %v3379, %v3374
    %v4165 = vpack.c.b16 %v3380, %v3375
    %v4166 = vpack.c.b16 %v3386, %v3381
    %v4167 = vpack.c.b16 %v3387, %v3382
    %v4168 = vpack.c.b16 %v3388, %v3383
    %v4169 = vpack.c.b16 %v3389, %v3384
    %v4170 = vpack.c.b16 %v3390, %v3385
    %v4171 = vpack.c.b16 %v3396, %v3391
    %v4172 = vpack.c.b16 %v3397, %v3392
    %v4173 = vpack.c.b16 %v3398, %v3393
    %v4174 = vpack.c.b16 %v3399, %v3394
    %v4175 = vpack.c.b16 %v3400, %v3395
    %v4176 = vpack.c.b16 %v3406, %v3401
    %v4177 = vpack.c.b16 %v3407, %v3402
    %v4178 = vpack.c.b16 %v3408, %v3403
    %v4179 = vpack.c.b16 %v3409, %v3404
    %v4180 = vpack.c.b16 %v3410, %v3405
    %v4181 = vpack.c.b16 %v3416, %v3411
    %v4182 = vpack.c.b16 %v3417, %v3412
    %v4183 = vpack.c.b16 %v3418, %v3413
    %v4184 = vpack.c.b16 %v3419, %v3414
    %v4185 = vpack.c.b16 %v3420, %v3415
    %v4186 = vpack.c.b16 %v3426, %v3421
    %v4187 = vpack.c.b16 %v3427, %v3422
    %v4188 = vpack.c.b16 %v3428, %v3423
    %v4189 = vpack.c.b16 %v3429, %v3424
    %v4190 = vpack.c.b16 %v3430, %v3425
    %v4191 = vpack.c.b16 %v3436, %v3431
    %v4192 = vpack.c.b16 %v3437, %v3432
    %v4193 = vpack.c.b16 %v3438, %v3433
    %v4194 = vpack.c.b16 %v3439, %v3434
    %v4195 = vpack.c.b16 %v3440, %v3435
    %v4196 = vpack.c.b16 %v3446, %v3441
    %v4197 = vpack.c.b16 %v3447, %v3442
    %v4198 = vpack.c.b16 %v3448, %v3443
    %v4199 = vpack.c.b16 %v3449, %v3444
    %v4200 = vpack.c.b16 %v3450, %v3445
    %v4201 = vpack.c.b16 %v3456, %v3451
    %v4202 = vpack.c.b16 %v3457, %v3452
    %v4203 = vpack.c.b16 %v3458, %v3453
    %v4204 = vpack.c.b16 %v3459, %v3454
    %v4205 = vpack.c.b16 %v3460, %v3455
    %v4206 = vpack.c.b16 %v3466, %v3461
    %v4207 = vpack.c.b16 %v3467, %v3462
    %v4208 = vpack.c.b16 %v3468, %v3463
    %v4209 = vpack.c.b16 %v3469, %v3464
    %v4210 = vpack.c.b16 %v3470, %v3465
    %v4211 = vpack.c.b16 %v3476, %v3471
    %v4212 = vpack.c.b16 %v3477, %v3472
    %v4213 = vpack.c.b16 %v3478, %v3473
    %v4214 = vpack.c.b16 %v3479, %v3474
    %v4215 = vpack.c.b16 %v3480, %v3475
    %v4216 = vpack.c.b16 %v3486, %v3481
    %v4217 = vpack.c.b16 %v3487, %v3482
    %v4218 = vpack.c.b16 %v3488, %v3483
    %v4219 = vpack.c.b16 %v3489, %v3484
    %v4220 = vpack.c.b16 %v3490, %v3485
    %v4221 = vpack.c.b16 %v3496, %v3491
    %v4222 = vpack.c.b16 %v3497, %v3492
    %v4223 = vpack.c.b16 %v3498, %v3493
    %v4224 = vpack.c.b16 %v3499, %v3494
    %v4225 = vpack.c.b16 %v3500, %v3495
    %v4226 = vpack.c.b16 %v3506, %v3501
    %v4227 = vpack.c.b16 %v3507, %v3502
    %v4228 = vpack.c.b16 %v3508, %v3503
    %v4229 = vpack.c.b16 %v3509, %v3504
    %v4230 = vpack.c.b16 %v3510, %v3505
    %v4231 = vpack.c.b16 %v3516, %v3511
    %v4232 = vpack.c.b16 %v3517, %v3512
    %v4233 = vpack.c.b16 %v3518, %v3513
    %v4234 = vpack.c.b16 %v3519, %v3514
    %v4235 = vpack.c.b16 %v3520, %v3515
    %v4236 = vpack.c.b16 %v3526, %v3521
    %v4237 = vpack.c.b16 %v3527, %v3522
    %v4238 = vpack.c.b16 %v3528, %v3523
    %v4239 = vpack.c.b16 %v3529, %v3524
    %v4240 = vpack.c.b16 %v3530, %v3525
    %v4241 = vpack.c.b16 %v3536, %v3531
    %v4242 = vpack.c.b16 %v3537, %v3532
    %v4243 = vpack.c.b16 %v3538, %v3533
    %v4244 = vpack.c.b16 %v3539, %v3534
    %v4245 = vpack.c.b16 %v3540, %v3535
    %v4246 = vpack.c.b16 %v3546, %v3541
    %v4247 = vpack.c.b16 %v3547, %v3542
    %v4248 = vpack.c.b16 %v3548, %v3543
    %v4249 = vpack.c.b16 %v3549, %v3544
    %v4250 = vpack.c.b16 %v3550, %v3545
    %v4251 = vpack.c.b16 %v3556, %v3551
    %v4252 = vpack.c.b16 %v3557, %v3552
    %v4253 = vpack.c.b16 %v3558, %v3553
    %v4254 = vpack.c.b16 %v3559, %v3554
    %v4255 = vpack.c.b16 %v3560, %v3555
    %v4256 = vpack.c.b16 %v3566, %v3561
    %v4257 = vpack.c.b16 %v3567, %v3562
    %v4258 = vpack.c.b16 %v3568, %v3563
    %v4259 = vpack.c.b16 %v3569, %v3564
    %v4260 = vpack.c.b16 %v3570, %v3565
    %v4261 = vpack.c.b16 %v3576, %v3571
    %v4262 = vpack.c.b16 %v3577, %v3572
    %v4263 = vpack.c.b16 %v3578, %v3573
    %v4264 = vpack.c.b16 %v3579, %v3574
    %v4265 = vpack.c.b16 %v3580, %v3575
    %v4266 = vpack.c.b16 %v3586, %v3581
    %v4267 = vpack.c.b16 %v3587, %v3582
    %v4268 = vpack.c.b16 %v3588, %v3583
    %v4269 = vpack.c.b16 %v3589, %v3584
    %v4270 = vpack.c.b16 %v3590, %v3585
    %v4271 = vpack.c.b16 %v3596, %v3591
    %v4272 = vpack.c.b16 %v3597, %v3592
    %v4273 = vpack.c.b16 %v3598, %v3593
    %v4274 = vpack.c.b16 %v3599, %v3594
    %v4275 = vpack.c.b16 %v3600, %v3595
    %v4276 = vpack.c.b16 %v3606, %v3601
    %v4277 = vpack.c.b16 %v3607, %v3602
    %v4278 = vpack.c.b16 %v3608, %v3603
    %v4279 = vpack.c.b16 %v3609, %v3604
    %v4280 = vpack.c.b16 %v3610, %v3605
    %v4281 = vpack.c.b16 %v3616, %v3611
    %v4282 = vpack.c.b16 %v3617, %v3612
    %v4283 = vpack.c.b16 %v3618, %v3613
    %v4284 = vpack.c.b16 %v3619, %v3614
    %v4285 = vpack.c.b16 %v3620, %v3615
    %v4286 = vpack.c.b16 %v3626, %v3621
    %v4287 = vpack.c.b16 %v3627, %v3622
    %v4288 = vpack.c.b16 %v3628, %v3623
    %v4289 = vpack.c.b16 %v3629, %v3624
    %v4290 = vpack.c.b16 %v3630, %v3625
    %v4291 = vpack.c.b16 %v3636, %v3631
    %v4292 = vpack.c.b16 %v3637, %v3632
    %v4293 = vpack.c.b16 %v3638, %v3633
    %v4294 = vpack.c.b16 %v3639, %v3634
    %v4295 = vpack.c.b16 %v3640, %v3635
    %v4296 = vpack.c.b16 %v3646, %v3641
    %v4297 = vpack.c.b16 %v3647, %v3642
    %v4298 = vpack.c.b16 %v3648, %v3643
    %v4299 = vpack.c.b16 %v3649, %v3644
    %v4300 = vpack.c.b16 %v3650, %v3645
    %v4301 = vpack.c.b16 %v3656, %v3651
    %v4302 = vpack.c.b16 %v3657, %v3652
    %v4303 = vpack.c.b16 %v3658, %v3653
    %v4304 = vpack.c.b16 %v3659, %v3654
    %v4305 = vpack.c.b16 %v3660, %v3655
    %v4306 = vpack.c.b16 %v3666, %v3661
    %v4307 = vpack.c.b16 %v3667, %v3662
    %v4308 = vpack.c.b16 %v3668, %v3663
    %v4309 = vpack.c.b16 %v3669, %v3664
    %v4310 = vpack.c.b16 %v3670, %v3665
    %v4311 = vpack.c.b16 %v3676, %v3671
    %v4312 = vpack.c.b16 %v3677, %v3672
    %v4313 = vpack.c.b16 %v3678, %v3673
    %v4314 = vpack.c.b16 %v3679, %v3674
    %v4315 = vpack.c.b16 %v3680, %v3675
    %v4316 = vpack.c.b16 %v3686, %v3681
    %v4317 = vpack.c.b16 %v3687, %v3682
    %v4318 = vpack.c.b16 %v3688, %v3683
    %v4319 = vpack.c.b16 %v3689, %v3684
    %v4320 = vpack.c.b16 %v3690, %v3685
    %v4321 = vpack.c.b16 %v3696, %v3691
    %v4322 = vpack.c.b16 %v3697, %v3692
    %v4323 = vpack.c.b16 %v3698, %v3693
    %v4324 = vpack.c.b16 %v3699, %v3694
    %v4325 = vpack.c.b16 %v3700, %v3695
    %vm4951 = vcmask 654336
    %v4953 = vsel %vm4951, %v923, 0
    %4955 = vmatprep.subr.bf16.mxu0 %v3702
    %4956 = vmatpush1.bf16.msra.mxu0 %v3701
    %4957 = vmatprep.subr.bf16.mxu0 %v3707
    %4958 = vmatpush1.bf16.msra.mxu0 %v3706
    %4959 = vmatprep.subr.bf16.mxu0 %v3712
    %4960 = vmatpush1.bf16.msra.mxu0 %v3711
    %4961 = vmatprep.subr.bf16.mxu0 %v3717
    %4962 = vmatpush1.bf16.msra.mxu0 %v3716
    %4963 = vmatprep.subr.bf16.mxu0 %v3722
    %4964 = vmatpush1.bf16.msra.mxu0 %v3721
    %4965 = vmatprep.subr.bf16.mxu0 %v3727
    %4966 = vmatpush1.bf16.msra.mxu0 %v3726
    %4967 = vmatprep.subr.bf16.mxu0 %v3732
    %4968 = vmatpush1.bf16.msra.mxu0 %v3731
    %4969 = vmatprep.subr.bf16.mxu0 %v3737
    %4970 = vmatpush1.bf16.msra.mxu0 %v3736
    %4971 = vmatprep.subr.bf16.mxu0 %v3742
    %4972 = vmatpush1.bf16.msra.mxu0 %v3741
    %4973 = vmatprep.subr.bf16.mxu0 %v3747
    %4974 = vmatpush1.bf16.msra.mxu0 %v3746
    %4975 = vmatprep.subr.bf16.mxu0 %v3752
    %4976 = vmatpush1.bf16.msra.mxu0 %v3751
    %4977 = vmatprep.subr.bf16.mxu0 %v3757
    %4978 = vmatpush1.bf16.msra.mxu0 %v3756
    %4979 = vmatprep.subr.bf16.mxu0 %v3762
    %4980 = vmatpush1.bf16.msra.mxu0 %v3761
    %4981 = vmatprep.subr.bf16.mxu0 %v3767
    %4982 = vmatpush1.bf16.msra.mxu0 %v3766
    %4983 = vmatprep.subr.bf16.mxu0 %v3772
    %4984 = vmatpush1.bf16.msra.mxu0 %v3771
    %4985 = vmatprep.subr.bf16.mxu0 %v3777
    %4986 = vmatpush1.bf16.msra.mxu0 %v3776
    %4987 = vmatprep.mubr.bf16.mxu0 %v909
    %4988 = vmatmul.mubr.bf16.gmra.mrb[0].mxu0 %v908
    %v4989 = vpop.f32.mrb[0].mxu0
    %v4990 = vadd.f32 %v1679, %v4989
    %v4991 = vpop.f32.mrb[0].mxu0
    %v4992 = vadd.f32 %v1683, %v4991
    %v4993 = vpop.f32.mrb[0].mxu0
    %v4994 = vpop.f32.mrb[0].mxu0
    %4995 = vdwg.mxu0
    %4996 = vmatprep.subr.bf16.mxu0 %v3782
    %4997 = vmatpush1.bf16.msra.mxu0 %v3781
    %4998 = vmatprep.subr.bf16.mxu0 %v3787
    %4999 = vmatpush1.bf16.msra.mxu0 %v3786
    %5000 = vmatprep.subr.bf16.mxu0 %v3792
    %5001 = vmatpush1.bf16.msra.mxu0 %v3791
    %5002 = vmatprep.subr.bf16.mxu0 %v3797
    %5003 = vmatpush1.bf16.msra.mxu0 %v3796
    %5004 = vmatprep.subr.bf16.mxu0 %v3802
    %5005 = vmatpush1.bf16.msra.mxu0 %v3801
    %5006 = vmatprep.subr.bf16.mxu0 %v3807
    %5007 = vmatpush1.bf16.msra.mxu0 %v3806
    %5008 = vmatprep.subr.bf16.mxu0 %v3812
    %5009 = vmatpush1.bf16.msra.mxu0 %v3811
    %5010 = vmatprep.subr.bf16.mxu0 %v3817
    %5011 = vmatpush1.bf16.msra.mxu0 %v3816
    %5012 = vmatprep.subr.bf16.mxu0 %v3822
    %5013 = vmatpush1.bf16.msra.mxu0 %v3821
    %5014 = vmatprep.subr.bf16.mxu0 %v3827
    %5015 = vmatpush1.bf16.msra.mxu0 %v3826
    %5016 = vmatprep.subr.bf16.mxu0 %v3832
    %5017 = vmatpush1.bf16.msra.mxu0 %v3831
    %5018 = vmatprep.subr.bf16.mxu0 %v3837
    %5019 = vmatpush1.bf16.msra.mxu0 %v3836
    %5020 = vmatprep.subr.bf16.mxu0 %v3842
    %5021 = vmatpush1.bf16.msra.mxu0 %v3841
    %5022 = vmatprep.subr.bf16.mxu0 %v3847
    %5023 = vmatpush1.bf16.msra.mxu0 %v3846
    %5024 = vmatprep.subr.bf16.mxu0 %v3852
    %5025 = vmatpush1.bf16.msra.mxu0 %v3851
    %5026 = vmatprep.subr.bf16.mxu0 %v3857
    %5027 = vmatpush1.bf16.msra.mxu0 %v3856
    %5028 = vmatprep.mubr.bf16.mxu0 %v911
    %5029 = vmatmul.mubr.bf16.gmra.mrb[0].mxu0 %v910
    %v5030 = vpop.f32.mrb[0].mxu0
    %v5031 = vadd.f32 %v4990, %v5030
    %v5032 = vpop.f32.mrb[0].mxu0
    %v5033 = vadd.f32 %v4992, %v5032
    %v5034 = vpop.f32.mrb[0].mxu0
    %v5035 = vpop.f32.mrb[0].mxu0
    %5036 = vdwg.mxu0
    %5037 = vmatprep.subr.bf16.mxu0 %v3862
    %5038 = vmatpush1.bf16.msra.mxu0 %v3861
    %5039 = vmatprep.subr.bf16.mxu0 %v3867
    %5040 = vmatpush1.bf16.msra.mxu0 %v3866
    %5041 = vmatprep.subr.bf16.mxu0 %v3872
    %5042 = vmatpush1.bf16.msra.mxu0 %v3871
    %5043 = vmatprep.subr.bf16.mxu0 %v3877
    %5044 = vmatpush1.bf16.msra.mxu0 %v3876
    %5045 = vmatprep.subr.bf16.mxu0 %v3882
    %5046 = vmatpush1.bf16.msra.mxu0 %v3881
    %5047 = vmatprep.subr.bf16.mxu0 %v3887
    %5048 = vmatpush1.bf16.msra.mxu0 %v3886
    %5049 = vmatprep.subr.bf16.mxu0 %v3892
    %5050 = vmatpush1.bf16.msra.mxu0 %v3891
    %5051 = vmatprep.subr.bf16.mxu0 %v3897
    %5052 = vmatpush1.bf16.msra.mxu0 %v3896
    %5053 = vmatprep.subr.bf16.mxu0 %v3902
    %5054 = vmatpush1.bf16.msra.mxu0 %v3901
    %5055 = vmatprep.subr.bf16.mxu0 %v3907
    %5056 = vmatpush1.bf16.msra.mxu0 %v3906
    %5057 = vmatprep.subr.bf16.mxu0 %v3912
    %5058 = vmatpush1.bf16.msra.mxu0 %v3911
    %5059 = vmatprep.subr.bf16.mxu0 %v3917
    %5060 = vmatpush1.bf16.msra.mxu0 %v3916
    %5061 = vmatprep.subr.bf16.mxu0 %v3922
    %5062 = vmatpush1.bf16.msra.mxu0 %v3921
    %5063 = vmatprep.subr.bf16.mxu0 %v3927
    %5064 = vmatpush1.bf16.msra.mxu0 %v3926
    %5065 = vmatprep.subr.bf16.mxu0 %v3932
    %5066 = vmatpush1.bf16.msra.mxu0 %v3931
    %5067 = vmatprep.subr.bf16.mxu0 %v3937
    %5068 = vmatpush1.bf16.msra.mxu0 %v3936
    %5069 = vmatprep.mubr.bf16.mxu0 %v913
    %5070 = vmatmul.mubr.bf16.gmra.mrb[0].mxu0 %v912
    %v5071 = vpop.f32.mrb[0].mxu0
    %v5072 = vadd.f32 %v5031, %v5071
    %v5073 = vpop.f32.mrb[0].mxu0
    %v5074 = vadd.f32 %v5033, %v5073
    %v5075 = vpop.f32.mrb[0].mxu0
    %v5076 = vpop.f32.mrb[0].mxu0
    %5077 = vdwg.mxu0
    %5078 = vmatprep.subr.bf16.mxu0 %v3942
    %5079 = vmatpush1.bf16.msra.mxu0 %v3941
    %5080 = vmatprep.subr.bf16.mxu0 %v3947
    %5081 = vmatpush1.bf16.msra.mxu0 %v3946
    %5082 = vmatprep.subr.bf16.mxu0 %v3952
    %5083 = vmatpush1.bf16.msra.mxu0 %v3951
    %5084 = vmatprep.subr.bf16.mxu0 %v3957
    %5085 = vmatpush1.bf16.msra.mxu0 %v3956
    %5086 = vmatprep.subr.bf16.mxu0 %v3962
    %5087 = vmatpush1.bf16.msra.mxu0 %v3961
    %5088 = vmatprep.subr.bf16.mxu0 %v3967
    %5089 = vmatpush1.bf16.msra.mxu0 %v3966
    %5090 = vmatprep.subr.bf16.mxu0 %v3972
    %5091 = vmatpush1.bf16.msra.mxu0 %v3971
    %5092 = vmatprep.subr.bf16.mxu0 %v3977
    %5093 = vmatpush1.bf16.msra.mxu0 %v3976
    %5094 = vmatprep.subr.bf16.mxu0 %v3982
    %5095 = vmatpush1.bf16.msra.mxu0 %v3981
    %5096 = vmatprep.subr.bf16.mxu0 %v3987
    %5097 = vmatpush1.bf16.msra.mxu0 %v3986
    %5098 = vmatprep.subr.bf16.mxu0 %v3992
    %5099 = vmatpush1.bf16.msra.mxu0 %v3991
    %5100 = vmatprep.subr.bf16.mxu0 %v3997
    %5101 = vmatpush1.bf16.msra.mxu0 %v3996
    %5102 = vmatprep.subr.bf16.mxu0 %v4002
    %5103 = vmatpush1.bf16.msra.mxu0 %v4001
    %5104 = vmatprep.subr.bf16.mxu0 %v4007
    %5105 = vmatpush1.bf16.msra.mxu0 %v4006
    %5106 = vmatprep.subr.bf16.mxu0 %v4012
    %5107 = vmatpush1.bf16.msra.mxu0 %v4011
    %5108 = vmatprep.subr.bf16.mxu0 %v4017
    %5109 = vmatpush1.bf16.msra.mxu0 %v4016
    %5110 = vmatprep.mubr.bf16.mxu0 %v915
    %5111 = vmatmul.mubr.bf16.gmra.mrb[0].mxu0 %v914
    %v5112 = vpop.f32.mrb[0].mxu0
    %v5113 = vadd.f32 %v5072, %v5112
    %v5114 = vpop.f32.mrb[0].mxu0
    %v5115 = vadd.f32 %v5074, %v5114
    %v5116 = vpop.f32.mrb[0].mxu0
    %v5117 = vpop.f32.mrb[0].mxu0
    %5118 = vdwg.mxu0
    %5119 = vmatprep.subr.bf16.mxu0 %v4022
    %5120 = vmatpush1.bf16.msra.mxu0 %v4021
    %5121 = vmatprep.subr.bf16.mxu0 %v4027
    %5122 = vmatpush1.bf16.msra.mxu0 %v4026
    %5123 = vmatprep.subr.bf16.mxu0 %v4032
    %5124 = vmatpush1.bf16.msra.mxu0 %v4031
    %5125 = vmatprep.subr.bf16.mxu0 %v4037
    %5126 = vmatpush1.bf16.msra.mxu0 %v4036
    %5127 = vmatprep.subr.bf16.mxu0 %v4042
    %5128 = vmatpush1.bf16.msra.mxu0 %v4041
    %5129 = vmatprep.subr.bf16.mxu0 %v4047
    %5130 = vmatpush1.bf16.msra.mxu0 %v4046
    %5131 = vmatprep.subr.bf16.mxu0 %v4052
    %5132 = vmatpush1.bf16.msra.mxu0 %v4051
    %5133 = vmatprep.subr.bf16.mxu0 %v4057
    %5134 = vmatpush1.bf16.msra.mxu0 %v4056
    %5135 = vmatprep.subr.bf16.mxu0 %v4062
    %5136 = vmatpush1.bf16.msra.mxu0 %v4061
    %5137 = vmatprep.subr.bf16.mxu0 %v4067
    %5138 = vmatpush1.bf16.msra.mxu0 %v4066
    %5139 = vmatprep.subr.bf16.mxu0 %v4072
    %5140 = vmatpush1.bf16.msra.mxu0 %v4071
    %5141 = vmatprep.subr.bf16.mxu0 %v4077
    %5142 = vmatpush1.bf16.msra.mxu0 %v4076
    %5143 = vmatprep.subr.bf16.mxu0 %v4082
    %5144 = vmatpush1.bf16.msra.mxu0 %v4081
    %5145 = vmatprep.subr.bf16.mxu0 %v4087
    %5146 = vmatpush1.bf16.msra.mxu0 %v4086
    %5147 = vmatprep.subr.bf16.mxu0 %v4092
    %5148 = vmatpush1.bf16.msra.mxu0 %v4091
    %5149 = vmatprep.subr.bf16.mxu0 %v4097
    %5150 = vmatpush1.bf16.msra.mxu0 %v4096
    %5151 = vmatprep.mubr.bf16.mxu0 %v917
    %5152 = vmatmul.mubr.bf16.gmra.mrb[0].mxu0 %v916
    %v5153 = vpop.f32.mrb[0].mxu0
    %v5154 = vadd.f32 %v5113, %v5153
    %v5155 = vpop.f32.mrb[0].mxu0
    %v5156 = vadd.f32 %v5115, %v5155
    %v5157 = vpop.f32.mrb[0].mxu0
    %v5158 = vpop.f32.mrb[0].mxu0
    %5159 = vdwg.mxu0
    %5160 = vmatprep.subr.bf16.mxu0 %v4102
    %5161 = vmatpush1.bf16.msra.mxu0 %v4101
    %5162 = vmatprep.subr.bf16.mxu0 %v4107
    %5163 = vmatpush1.bf16.msra.mxu0 %v4106
    %5164 = vmatprep.subr.bf16.mxu0 %v4112
    %5165 = vmatpush1.bf16.msra.mxu0 %v4111
    %5166 = vmatprep.subr.bf16.mxu0 %v4117
    %5167 = vmatpush1.bf16.msra.mxu0 %v4116
    %5168 = vmatprep.subr.bf16.mxu0 %v4122
    %5169 = vmatpush1.bf16.msra.mxu0 %v4121
    %5170 = vmatprep.subr.bf16.mxu0 %v4127
    %5171 = vmatpush1.bf16.msra.mxu0 %v4126
    %5172 = vmatprep.subr.bf16.mxu0 %v4132
    %5173 = vmatpush1.bf16.msra.mxu0 %v4131
    %5174 = vmatprep.subr.bf16.mxu0 %v4137
    %5175 = vmatpush1.bf16.msra.mxu0 %v4136
    %5176 = vmatprep.subr.bf16.mxu0 %v4142
    %5177 = vmatpush1.bf16.msra.mxu0 %v4141
    %5178 = vmatprep.subr.bf16.mxu0 %v4147
    %5179 = vmatpush1.bf16.msra.mxu0 %v4146
    %5180 = vmatprep.subr.bf16.mxu0 %v4152
    %5181 = vmatpush1.bf16.msra.mxu0 %v4151
    %5182 = vmatprep.subr.bf16.mxu0 %v4157
    %5183 = vmatpush1.bf16.msra.mxu0 %v4156
    %5184 = vmatprep.subr.bf16.mxu0 %v4162
    %5185 = vmatpush1.bf16.msra.mxu0 %v4161
    %5186 = vmatprep.subr.bf16.mxu0 %v4167
    %5187 = vmatpush1.bf16.msra.mxu0 %v4166
    %5188 = vmatprep.subr.bf16.mxu0 %v4172
    %5189 = vmatpush1.bf16.msra.mxu0 %v4171
    %5190 = vmatprep.subr.bf16.mxu0 %v4177
    %5191 = vmatpush1.bf16.msra.mxu0 %v4176
    %5192 = vmatprep.mubr.bf16.mxu0 %v919
    %5193 = vmatmul.mubr.bf16.gmra.mrb[0].mxu0 %v918
    %v5194 = vpop.f32.mrb[0].mxu0
    %v5195 = vadd.f32 %v5154, %v5194
    %v5196 = vpop.f32.mrb[0].mxu0
    %v5197 = vadd.f32 %v5156, %v5196
    %v5198 = vpop.f32.mrb[0].mxu0
    %v5199 = vpop.f32.mrb[0].mxu0
    %5200 = vdwg.mxu0
    %5201 = vmatprep.subr.bf16.mxu0 %v4182
    %5202 = vmatpush1.bf16.msra.mxu0 %v4181
    %5203 = vmatprep.subr.bf16.mxu0 %v4187
    %5204 = vmatpush1.bf16.msra.mxu0 %v4186
    %5205 = vmatprep.subr.bf16.mxu0 %v4192
    %5206 = vmatpush1.bf16.msra.mxu0 %v4191
    %5207 = vmatprep.subr.bf16.mxu0 %v4197
    %5208 = vmatpush1.bf16.msra.mxu0 %v4196
    %5209 = vmatprep.subr.bf16.mxu0 %v4202
    %5210 = vmatpush1.bf16.msra.mxu0 %v4201
    %5211 = vmatprep.subr.bf16.mxu0 %v4207
    %5212 = vmatpush1.bf16.msra.mxu0 %v4206
    %5213 = vmatprep.subr.bf16.mxu0 %v4212
    %5214 = vmatpush1.bf16.msra.mxu0 %v4211
    %5215 = vmatprep.subr.bf16.mxu0 %v4217
    %5216 = vmatpush1.bf16.msra.mxu0 %v4216
    %5217 = vmatprep.subr.bf16.mxu0 %v4222
    %5218 = vmatpush1.bf16.msra.mxu0 %v4221
    %5219 = vmatprep.subr.bf16.mxu0 %v4227
    %5220 = vmatpush1.bf16.msra.mxu0 %v4226
    %5221 = vmatprep.subr.bf16.mxu0 %v4232
    %5222 = vmatpush1.bf16.msra.mxu0 %v4231
    %5223 = vmatprep.subr.bf16.mxu0 %v4237
    %5224 = vmatpush1.bf16.msra.mxu0 %v4236
    %5225 = vmatprep.subr.bf16.mxu0 %v4242
    %5226 = vmatpush1.bf16.msra.mxu0 %v4241
    %5227 = vmatprep.subr.bf16.mxu0 %v4247
    %5228 = vmatpush1.bf16.msra.mxu0 %v4246
    %5229 = vmatprep.subr.bf16.mxu0 %v4252
    %5230 = vmatpush1.bf16.msra.mxu0 %v4251
    %5231 = vmatprep.subr.bf16.mxu0 %v4257
    %5232 = vmatpush1.bf16.msra.mxu0 %v4256
    %5233 = vmatprep.mubr.bf16.mxu0 %v921
    %5234 = vmatmul.mubr.bf16.gmra.mrb[0].mxu0 %v920
    %v5235 = vpop.f32.mrb[0].mxu0
    %v5236 = vadd.f32 %v5195, %v5235
    %v5237 = vpop.f32.mrb[0].mxu0
    %v5238 = vadd.f32 %v5197, %v5237
    %v5239 = vpop.f32.mrb[0].mxu0
    %v5240 = vpop.f32.mrb[0].mxu0
    %5241 = vdwg.mxu0
    %5242 = vmatprep.subr.bf16.mxu0 %v4262
    %5243 = vmatpush1.bf16.msra.mxu0 %v4261
    %5244 = vmatprep.subr.bf16.mxu0 %v4267
    %5245 = vmatpush1.bf16.msra.mxu0 %v4266
    %5246 = vmatprep.subr.bf16.mxu0 %v4272
    %5247 = vmatpush1.bf16.msra.mxu0 %v4271
    %5248 = vmatprep.subr.bf16.mxu0 %v4277
    %5249 = vmatpush1.bf16.msra.mxu0 %v4276
    %5250 = vmatprep.subr.bf16.mxu0 %v4282
    %5251 = vmatpush1.bf16.msra.mxu0 %v4281
    %5252 = vmatprep.subr.bf16.mxu0 %v4287
    %5253 = vmatpush1.bf16.msra.mxu0 %v4286
    %5254 = vmatprep.subr.bf16.mxu0 %v4292
    %5255 = vmatpush1.bf16.msra.mxu0 %v4291
    %5256 = vmatprep.subr.bf16.mxu0 %v4297
    %5257 = vmatpush1.bf16.msra.mxu0 %v4296
    %5258 = vmatprep.subr.bf16.mxu0 %v4302
    %5259 = vmatpush1.bf16.msra.mxu0 %v4301
    %5260 = vmatprep.subr.bf16.mxu0 %v4307
    %5261 = vmatpush1.bf16.msra.mxu0 %v4306
    %5262 = vmatprep.subr.bf16.mxu0 %v4312
    %5263 = vmatpush1.bf16.msra.mxu0 %v4311
    %5264 = vmatprep.subr.bf16.mxu0 %v4317
    %5265 = vmatpush1.bf16.msra.mxu0 %v4316
    %5266 = vmatprep.subr.bf16.mxu0 %v4322
    %5267 = vmatpush1.bf16.msra.mxu0 %v4321
    %5268 = vmatprep.subr.bf16.mxu0 0
    %5269 = vmatpush1.bf16.msra.mxu0 0
    %5270 = vmatprep.subr.bf16.mxu0 0
    %5271 = vmatpush1.bf16.msra.mxu0 0
    %5272 = vmatprep.subr.bf16.mxu0 0
    %5273 = vmatpush1.bf16.msra.mxu0 0
    %5274 = vmatprep.mubr.bf16.mxu0 %v4953
    %5275 = vmatmul.mubr.bf16.gmra.mrb[0].mxu0 %v922
    %v5276 = vpop.f32.mrb[0].mxu0
    %v5277 = vadd.f32 %v5236, %v5276
    %v5278 = vpop.f32.mrb[0].mxu0
    %v5279 = vadd.f32 %v5238, %v5278
    %v5280 = vpop.f32.mrb[0].mxu0
    %v5281 = vpop.f32.mrb[0].mxu0
    %5282 = vdwg.mxu0
    %5283 = vmatprep.subr.bf16.mxu0 %v3704
    %5284 = vmatpush1.bf16.msra.mxu0 %v3703
    %5285 = vmatprep.subr.bf16.mxu0 %v3709
    %5286 = vmatpush1.bf16.msra.mxu0 %v3708
    %5287 = vmatprep.subr.bf16.mxu0 %v3714
    %5288 = vmatpush1.bf16.msra.mxu0 %v3713
    %5289 = vmatprep.subr.bf16.mxu0 %v3719
    %5290 = vmatpush1.bf16.msra.mxu0 %v3718
    %5291 = vmatprep.subr.bf16.mxu0 %v3724
    %5292 = vmatpush1.bf16.msra.mxu0 %v3723
    %5293 = vmatprep.subr.bf16.mxu0 %v3729
    %5294 = vmatpush1.bf16.msra.mxu0 %v3728
    %5295 = vmatprep.subr.bf16.mxu0 %v3734
    %5296 = vmatpush1.bf16.msra.mxu0 %v3733
    %5297 = vmatprep.subr.bf16.mxu0 %v3739
    %5298 = vmatpush1.bf16.msra.mxu0 %v3738
    %5299 = vmatprep.subr.bf16.mxu0 %v3744
    %5300 = vmatpush1.bf16.msra.mxu0 %v3743
    %5301 = vmatprep.subr.bf16.mxu0 %v3749
    %5302 = vmatpush1.bf16.msra.mxu0 %v3748
    %5303 = vmatprep.subr.bf16.mxu0 %v3754
    %5304 = vmatpush1.bf16.msra.mxu0 %v3753
    %5305 = vmatprep.subr.bf16.mxu0 %v3759
    %5306 = vmatpush1.bf16.msra.mxu0 %v3758
    %5307 = vmatprep.subr.bf16.mxu0 %v3764
    %5308 = vmatpush1.bf16.msra.mxu0 %v3763
    %5309 = vmatprep.subr.bf16.mxu0 %v3769
    %5310 = vmatpush1.bf16.msra.mxu0 %v3768
    %5311 = vmatprep.subr.bf16.mxu0 %v3774
    %5312 = vmatpush1.bf16.msra.mxu0 %v3773
    %5313 = vmatprep.subr.bf16.mxu0 %v3779
    %5314 = vmatpush1.bf16.msra.mxu0 %v3778
    %5315 = vmatprep.mubr.bf16.mxu0 %v909
    %5316 = vmatmul.mubr.bf16.gmra.mrb[0].mxu0 %v908
    %v5317 = vpop.f32.mrb[0].mxu0
    %v5318 = vadd.f32 %v1687, %v5317
    %v5319 = vpop.f32.mrb[0].mxu0
    %v5320 = vadd.f32 %v1691, %v5319
    %v5321 = vpop.f32.mrb[0].mxu0
    %v5322 = vpop.f32.mrb[0].mxu0
    %5323 = vdwg.mxu0
    %5324 = vmatprep.subr.bf16.mxu0 %v3784
    %5325 = vmatpush1.bf16.msra.mxu0 %v3783
    %5326 = vmatprep.subr.bf16.mxu0 %v3789
    %5327 = vmatpush1.bf16.msra.mxu0 %v3788
    %5328 = vmatprep.subr.bf16.mxu0 %v3794
    %5329 = vmatpush1.bf16.msra.mxu0 %v3793
    %5330 = vmatprep.subr.bf16.mxu0 %v3799
    %5331 = vmatpush1.bf16.msra.mxu0 %v3798
    %5332 = vmatprep.subr.bf16.mxu0 %v3804
    %5333 = vmatpush1.bf16.msra.mxu0 %v3803
    %5334 = vmatprep.subr.bf16.mxu0 %v3809
    %5335 = vmatpush1.bf16.msra.mxu0 %v3808
    %5336 = vmatprep.subr.bf16.mxu0 %v3814
    %5337 = vmatpush1.bf16.msra.mxu0 %v3813
    %5338 = vmatprep.subr.bf16.mxu0 %v3819
    %5339 = vmatpush1.bf16.msra.mxu0 %v3818
    %5340 = vmatprep.subr.bf16.mxu0 %v3824
    %5341 = vmatpush1.bf16.msra.mxu0 %v3823
    %5342 = vmatprep.subr.bf16.mxu0 %v3829
    %5343 = vmatpush1.bf16.msra.mxu0 %v3828
    %5344 = vmatprep.subr.bf16.mxu0 %v3834
    %5345 = vmatpush1.bf16.msra.mxu0 %v3833
    %5346 = vmatprep.subr.bf16.mxu0 %v3839
    %5347 = vmatpush1.bf16.msra.mxu0 %v3838
    %5348 = vmatprep.subr.bf16.mxu0 %v3844
    %5349 = vmatpush1.bf16.msra.mxu0 %v3843
    %5350 = vmatprep.subr.bf16.mxu0 %v3849
    %5351 = vmatpush1.bf16.msra.mxu0 %v3848
    %5352 = vmatprep.subr.bf16.mxu0 %v3854
    %5353 = vmatpush1.bf16.msra.mxu0 %v3853
    %5354 = vmatprep.subr.bf16.mxu0 %v3859
    %5355 = vmatpush1.bf16.msra.mxu0 %v3858
    %5356 = vmatprep.mubr.bf16.mxu0 %v911
    %5357 = vmatmul.mubr.bf16.gmra.mrb[0].mxu0 %v910
    %v5358 = vpop.f32.mrb[0].mxu0
    %v5359 = vadd.f32 %v5318, %v5358
    %v5360 = vpop.f32.mrb[0].mxu0
    %v5361 = vadd.f32 %v5320, %v5360
    %v5362 = vpop.f32.mrb[0].mxu0
    %v5363 = vpop.f32.mrb[0].mxu0
    %5364 = vdwg.mxu0
    %5365 = vmatprep.subr.bf16.mxu0 %v3864
    %5366 = vmatpush1.bf16.msra.mxu0 %v3863
    %5367 = vmatprep.subr.bf16.mxu0 %v3869
    %5368 = vmatpush1.bf16.msra.mxu0 %v3868
    %5369 = vmatprep.subr.bf16.mxu0 %v3874
    %5370 = vmatpush1.bf16.msra.mxu0 %v3873
    %5371 = vmatprep.subr.bf16.mxu0 %v3879
    %5372 = vmatpush1.bf16.msra.mxu0 %v3878
    %5373 = vmatprep.subr.bf16.mxu0 %v3884
    %5374 = vmatpush1.bf16.msra.mxu0 %v3883
    %5375 = vmatprep.subr.bf16.mxu0 %v3889
    %5376 = vmatpush1.bf16.msra.mxu0 %v3888
    %5377 = vmatprep.subr.bf16.mxu0 %v3894
    %5378 = vmatpush1.bf16.msra.mxu0 %v3893
    %5379 = vmatprep.subr.bf16.mxu0 %v3899
    %5380 = vmatpush1.bf16.msra.mxu0 %v3898
    %5381 = vmatprep.subr.bf16.mxu0 %v3904
    %5382 = vmatpush1.bf16.msra.mxu0 %v3903
    %5383 = vmatprep.subr.bf16.mxu0 %v3909
    %5384 = vmatpush1.bf16.msra.mxu0 %v3908
    %5385 = vmatprep.subr.bf16.mxu0 %v3914
    %5386 = vmatpush1.bf16.msra.mxu0 %v3913
    %5387 = vmatprep.subr.bf16.mxu0 %v3919
    %5388 = vmatpush1.bf16.msra.mxu0 %v3918
    %5389 = vmatprep.subr.bf16.mxu0 %v3924
    %5390 = vmatpush1.bf16.msra.mxu0 %v3923
    %5391 = vmatprep.subr.bf16.mxu0 %v3929
    %5392 = vmatpush1.bf16.msra.mxu0 %v3928
    %5393 = vmatprep.subr.bf16.mxu0 %v3934
    %5394 = vmatpush1.bf16.msra.mxu0 %v3933
    %5395 = vmatprep.subr.bf16.mxu0 %v3939
    %5396 = vmatpush1.bf16.msra.mxu0 %v3938
    %5397 = vmatprep.mubr.bf16.mxu0 %v913
    %5398 = vmatmul.mubr.bf16.gmra.mrb[0].mxu0 %v912
    %v5399 = vpop.f32.mrb[0].mxu0
    %v5400 = vadd.f32 %v5359, %v5399
    %v5401 = vpop.f32.mrb[0].mxu0
    %v5402 = vadd.f32 %v5361, %v5401
    %v5403 = vpop.f32.mrb[0].mxu0
    %v5404 = vpop.f32.mrb[0].mxu0
    %5405 = vdwg.mxu0
    %5406 = vmatprep.subr.bf16.mxu0 %v3944
    %5407 = vmatpush1.bf16.msra.mxu0 %v3943
    %5408 = vmatprep.subr.bf16.mxu0 %v3949
    %5409 = vmatpush1.bf16.msra.mxu0 %v3948
    %5410 = vmatprep.subr.bf16.mxu0 %v3954
    %5411 = vmatpush1.bf16.msra.mxu0 %v3953
    %5412 = vmatprep.subr.bf16.mxu0 %v3959
    %5413 = vmatpush1.bf16.msra.mxu0 %v3958
    %5414 = vmatprep.subr.bf16.mxu0 %v3964
    %5415 = vmatpush1.bf16.msra.mxu0 %v3963
    %5416 = vmatprep.subr.bf16.mxu0 %v3969
    %5417 = vmatpush1.bf16.msra.mxu0 %v3968
    %5418 = vmatprep.subr.bf16.mxu0 %v3974
    %5419 = vmatpush1.bf16.msra.mxu0 %v3973
    %5420 = vmatprep.subr.bf16.mxu0 %v3979
    %5421 = vmatpush1.bf16.msra.mxu0 %v3978
    %5422 = vmatprep.subr.bf16.mxu0 %v3984
    %5423 = vmatpush1.bf16.msra.mxu0 %v3983
    %5424 = vmatprep.subr.bf16.mxu0 %v3989
    %5425 = vmatpush1.bf16.msra.mxu0 %v3988
    %5426 = vmatprep.subr.bf16.mxu0 %v3994
    %5427 = vmatpush1.bf16.msra.mxu0 %v3993
    %5428 = vmatprep.subr.bf16.mxu0 %v3999
    %5429 = vmatpush1.bf16.msra.mxu0 %v3998
    %5430 = vmatprep.subr.bf16.mxu0 %v4004
    %5431 = vmatpush1.bf16.msra.mxu0 %v4003
    %5432 = vmatprep.subr.bf16.mxu0 %v4009
    %5433 = vmatpush1.bf16.msra.mxu0 %v4008
    %5434 = vmatprep.subr.bf16.mxu0 %v4014
    %5435 = vmatpush1.bf16.msra.mxu0 %v4013
    %5436 = vmatprep.subr.bf16.mxu0 %v4019
    %5437 = vmatpush1.bf16.msra.mxu0 %v4018
    %5438 = vmatprep.mubr.bf16.mxu0 %v915
    %5439 = vmatmul.mubr.bf16.gmra.mrb[0].mxu0 %v914
    %v5440 = vpop.f32.mrb[0].mxu0
    %v5441 = vadd.f32 %v5400, %v5440
    %v5442 = vpop.f32.mrb[0].mxu0
    %v5443 = vadd.f32 %v5402, %v5442
    %v5444 = vpop.f32.mrb[0].mxu0
    %v5445 = vpop.f32.mrb[0].mxu0
    %5446 = vdwg.mxu0
    %5447 = vmatprep.subr.bf16.mxu0 %v4024
    %5448 = vmatpush1.bf16.msra.mxu0 %v4023
    %5449 = vmatprep.subr.bf16.mxu0 %v4029
    %5450 = vmatpush1.bf16.msra.mxu0 %v4028
    %5451 = vmatprep.subr.bf16.mxu0 %v4034
    %5452 = vmatpush1.bf16.msra.mxu0 %v4033
    %5453 = vmatprep.subr.bf16.mxu0 %v4039
    %5454 = vmatpush1.bf16.msra.mxu0 %v4038
    %5455 = vmatprep.subr.bf16.mxu0 %v4044
    %5456 = vmatpush1.bf16.msra.mxu0 %v4043
    %5457 = vmatprep.subr.bf16.mxu0 %v4049
    %5458 = vmatpush1.bf16.msra.mxu0 %v4048
    %5459 = vmatprep.subr.bf16.mxu0 %v4054
    %5460 = vmatpush1.bf16.msra.mxu0 %v4053
    %5461 = vmatprep.subr.bf16.mxu0 %v4059
    %5462 = vmatpush1.bf16.msra.mxu0 %v4058
    %5463 = vmatprep.subr.bf16.mxu0 %v4064
    %5464 = vmatpush1.bf16.msra.mxu0 %v4063
    %5465 = vmatprep.subr.bf16.mxu0 %v4069
    %5466 = vmatpush1.bf16.msra.mxu0 %v4068
    %5467 = vmatprep.subr.bf16.mxu0 %v4074
    %5468 = vmatpush1.bf16.msra.mxu0 %v4073
    %5469 = vmatprep.subr.bf16.mxu0 %v4079
    %5470 = vmatpush1.bf16.msra.mxu0 %v4078
    %5471 = vmatprep.subr.bf16.mxu0 %v4084
    %5472 = vmatpush1.bf16.msra.mxu0 %v4083
    %5473 = vmatprep.subr.bf16.mxu0 %v4089
    %5474 = vmatpush1.bf16.msra.mxu0 %v4088
    %5475 = vmatprep.subr.bf16.mxu0 %v4094
    %5476 = vmatpush1.bf16.msra.mxu0 %v4093
    %5477 = vmatprep.subr.bf16.mxu0 %v4099
    %5478 = vmatpush1.bf16.msra.mxu0 %v4098
    %5479 = vmatprep.mubr.bf16.mxu0 %v917
    %5480 = vmatmul.mubr.bf16.gmra.mrb[0].mxu0 %v916
    %v5481 = vpop.f32.mrb[0].mxu0
    %v5482 = vadd.f32 %v5441, %v5481
    %v5483 = vpop.f32.mrb[0].mxu0
    %v5484 = vadd.f32 %v5443, %v5483
    %v5485 = vpop.f32.mrb[0].mxu0
    %v5486 = vpop.f32.mrb[0].mxu0
    %5487 = vdwg.mxu0
    %5488 = vmatprep.subr.bf16.mxu0 %v4104
    %5489 = vmatpush1.bf16.msra.mxu0 %v4103
    %5490 = vmatprep.subr.bf16.mxu0 %v4109
    %5491 = vmatpush1.bf16.msra.mxu0 %v4108
    %5492 = vmatprep.subr.bf16.mxu0 %v4114
    %5493 = vmatpush1.bf16.msra.mxu0 %v4113
    %5494 = vmatprep.subr.bf16.mxu0 %v4119
    %5495 = vmatpush1.bf16.msra.mxu0 %v4118
    %5496 = vmatprep.subr.bf16.mxu0 %v4124
    %5497 = vmatpush1.bf16.msra.mxu0 %v4123
    %5498 = vmatprep.subr.bf16.mxu0 %v4129
    %5499 = vmatpush1.bf16.msra.mxu0 %v4128
    %5500 = vmatprep.subr.bf16.mxu0 %v4134
    %5501 = vmatpush1.bf16.msra.mxu0 %v4133
    %5502 = vmatprep.subr.bf16.mxu0 %v4139
    %5503 = vmatpush1.bf16.msra.mxu0 %v4138
    %5504 = vmatprep.subr.bf16.mxu0 %v4144
    %5505 = vmatpush1.bf16.msra.mxu0 %v4143
    %5506 = vmatprep.subr.bf16.mxu0 %v4149
    %5507 = vmatpush1.bf16.msra.mxu0 %v4148
    %5508 = vmatprep.subr.bf16.mxu0 %v4154
    %5509 = vmatpush1.bf16.msra.mxu0 %v4153
    %5510 = vmatprep.subr.bf16.mxu0 %v4159
    %5511 = vmatpush1.bf16.msra.mxu0 %v4158
    %5512 = vmatprep.subr.bf16.mxu0 %v4164
    %5513 = vmatpush1.bf16.msra.mxu0 %v4163
    %5514 = vmatprep.subr.bf16.mxu0 %v4169
    %5515 = vmatpush1.bf16.msra.mxu0 %v4168
    %5516 = vmatprep.subr.bf16.mxu0 %v4174
    %5517 = vmatpush1.bf16.msra.mxu0 %v4173
    %5518 = vmatprep.subr.bf16.mxu0 %v4179
    %5519 = vmatpush1.bf16.msra.mxu0 %v4178
    %5520 = vmatprep.mubr.bf16.mxu0 %v919
    %5521 = vmatmul.mubr.bf16.gmra.mrb[0].mxu0 %v918
    %v5522 = vpop.f32.mrb[0].mxu0
    %v5523 = vadd.f32 %v5482, %v5522
    %v5524 = vpop.f32.mrb[0].mxu0
    %v5525 = vadd.f32 %v5484, %v5524
    %v5526 = vpop.f32.mrb[0].mxu0
    %v5527 = vpop.f32.mrb[0].mxu0
    %5528 = vdwg.mxu0
    %5529 = vmatprep.subr.bf16.mxu0 %v4184
    %5530 = vmatpush1.bf16.msra.mxu0 %v4183
    %5531 = vmatprep.subr.bf16.mxu0 %v4189
    %5532 = vmatpush1.bf16.msra.mxu0 %v4188
    %5533 = vmatprep.subr.bf16.mxu0 %v4194
    %5534 = vmatpush1.bf16.msra.mxu0 %v4193
    %5535 = vmatprep.subr.bf16.mxu0 %v4199
    %5536 = vmatpush1.bf16.msra.mxu0 %v4198
    %5537 = vmatprep.subr.bf16.mxu0 %v4204
    %5538 = vmatpush1.bf16.msra.mxu0 %v4203
    %5539 = vmatprep.subr.bf16.mxu0 %v4209
    %5540 = vmatpush1.bf16.msra.mxu0 %v4208
    %5541 = vmatprep.subr.bf16.mxu0 %v4214
    %5542 = vmatpush1.bf16.msra.mxu0 %v4213
    %5543 = vmatprep.subr.bf16.mxu0 %v4219
    %5544 = vmatpush1.bf16.msra.mxu0 %v4218
    %5545 = vmatprep.subr.bf16.mxu0 %v4224
    %5546 = vmatpush1.bf16.msra.mxu0 %v4223
    %5547 = vmatprep.subr.bf16.mxu0 %v4229
    %5548 = vmatpush1.bf16.msra.mxu0 %v4228
    %5549 = vmatprep.subr.bf16.mxu0 %v4234
    %5550 = vmatpush1.bf16.msra.mxu0 %v4233
    %5551 = vmatprep.subr.bf16.mxu0 %v4239
    %5552 = vmatpush1.bf16.msra.mxu0 %v4238
    %5553 = vmatprep.subr.bf16.mxu0 %v4244
    %5554 = vmatpush1.bf16.msra.mxu0 %v4243
    %5555 = vmatprep.subr.bf16.mxu0 %v4249
    %5556 = vmatpush1.bf16.msra.mxu0 %v4248
    %5557 = vmatprep.subr.bf16.mxu0 %v4254
    %5558 = vmatpush1.bf16.msra.mxu0 %v4253
    %5559 = vmatprep.subr.bf16.mxu0 %v4259
    %5560 = vmatpush1.bf16.msra.mxu0 %v4258
    %5561 = vmatprep.mubr.bf16.mxu0 %v921
    %5562 = vmatmul.mubr.bf16.gmra.mrb[0].mxu0 %v920
    %v5563 = vpop.f32.mrb[0].mxu0
    %v5564 = vadd.f32 %v5523, %v5563
    %v5565 = vpop.f32.mrb[0].mxu0
    %v5566 = vadd.f32 %v5525, %v5565
    %v5567 = vpop.f32.mrb[0].mxu0
    %v5568 = vpop.f32.mrb[0].mxu0
    %5569 = vdwg.mxu0
    %5570 = vmatprep.subr.bf16.mxu0 %v4264
    %5571 = vmatpush1.bf16.msra.mxu0 %v4263
    %5572 = vmatprep.subr.bf16.mxu0 %v4269
    %5573 = vmatpush1.bf16.msra.mxu0 %v4268
    %5574 = vmatprep.subr.bf16.mxu0 %v4274
    %5575 = vmatpush1.bf16.msra.mxu0 %v4273
    %5576 = vmatprep.subr.bf16.mxu0 %v4279
    %5577 = vmatpush1.bf16.msra.mxu0 %v4278
    %5578 = vmatprep.subr.bf16.mxu0 %v4284
    %5579 = vmatpush1.bf16.msra.mxu0 %v4283
    %5580 = vmatprep.subr.bf16.mxu0 %v4289
    %5581 = vmatpush1.bf16.msra.mxu0 %v4288
    %5582 = vmatprep.subr.bf16.mxu0 %v4294
    %5583 = vmatpush1.bf16.msra.mxu0 %v4293
    %5584 = vmatprep.subr.bf16.mxu0 %v4299
    %5585 = vmatpush1.bf16.msra.mxu0 %v4298
    %5586 = vmatprep.subr.bf16.mxu0 %v4304
    %5587 = vmatpush1.bf16.msra.mxu0 %v4303
    %5588 = vmatprep.subr.bf16.mxu0 %v4309
    %5589 = vmatpush1.bf16.msra.mxu0 %v4308
    %5590 = vmatprep.subr.bf16.mxu0 %v4314
    %5591 = vmatpush1.bf16.msra.mxu0 %v4313
    %5592 = vmatprep.subr.bf16.mxu0 %v4319
    %5593 = vmatpush1.bf16.msra.mxu0 %v4318
    %5594 = vmatprep.subr.bf16.mxu0 %v4324
    %5595 = vmatpush1.bf16.msra.mxu0 %v4323
    %5596 = vmatprep.subr.bf16.mxu0 0
    %5597 = vmatpush1.bf16.msra.mxu0 0
    %5598 = vmatprep.subr.bf16.mxu0 0
    %5599 = vmatpush1.bf16.msra.mxu0 0
    %5600 = vmatprep.subr.bf16.mxu0 0
    %5601 = vmatpush1.bf16.msra.mxu0 0
    %5602 = vmatprep.mubr.bf16.mxu0 %v4953
    %5603 = vmatmul.mubr.bf16.gmra.mrb[0].mxu0 %v922
    %v5604 = vpop.f32.mrb[0].mxu0
    %v5605 = vadd.f32 %v5564, %v5604
    %v5606 = vpop.f32.mrb[0].mxu0
    %v5607 = vadd.f32 %v5566, %v5606
    %v5608 = vpop.f32.mrb[0].mxu0
    %v5609 = vpop.f32.mrb[0].mxu0
    %5610 = vdwg.mxu0
    %5611 = vmatprep.subr.bf16.mxu0 0
    %5612 = vmatpush1.bf16.msra.mxu0 %v3705
    %5613 = vmatprep.subr.bf16.mxu0 0
    %5614 = vmatpush1.bf16.msra.mxu0 %v3710
    %5615 = vmatprep.subr.bf16.mxu0 0
    %5616 = vmatpush1.bf16.msra.mxu0 %v3715
    %5617 = vmatprep.subr.bf16.mxu0 0
    %5618 = vmatpush1.bf16.msra.mxu0 %v3720
    %5619 = vmatprep.subr.bf16.mxu0 0
    %5620 = vmatpush1.bf16.msra.mxu0 %v3725
    %5621 = vmatprep.subr.bf16.mxu0 0
    %5622 = vmatpush1.bf16.msra.mxu0 %v3730
    %5623 = vmatprep.subr.bf16.mxu0 0
    %5624 = vmatpush1.bf16.msra.mxu0 %v3735
    %5625 = vmatprep.subr.bf16.mxu0 0
    %5626 = vmatpush1.bf16.msra.mxu0 %v3740
    %5627 = vmatprep.subr.bf16.mxu0 0
    %5628 = vmatpush1.bf16.msra.mxu0 %v3745
    %5629 = vmatprep.subr.bf16.mxu0 0
    %5630 = vmatpush1.bf16.msra.mxu0 %v3750
    %5631 = vmatprep.subr.bf16.mxu0 0
    %5632 = vmatpush1.bf16.msra.mxu0 %v3755
    %5633 = vmatprep.subr.bf16.mxu0 0
    %5634 = vmatpush1.bf16.msra.mxu0 %v3760
    %5635 = vmatprep.subr.bf16.mxu0 0
    %5636 = vmatpush1.bf16.msra.mxu0 %v3765
    %5637 = vmatprep.subr.bf16.mxu0 0
    %5638 = vmatpush1.bf16.msra.mxu0 %v3770
    %5639 = vmatprep.subr.bf16.mxu0 0
    %5640 = vmatpush1.bf16.msra.mxu0 %v3775
    %5641 = vmatprep.subr.bf16.mxu0 0
    %5642 = vmatpush1.bf16.msra.mxu0 %v3780
    %5643 = vmatprep.mubr.bf16.mxu0 %v909
    %5644 = vmatmul.mubr.bf16.gmra.mrb[0].mxu0 %v908
    %v5645 = vpop.f32.mrb[0].mxu0
    %v5646 = vadd.f32 %v1695, %v5645
    %v5647 = vpop.f32.mrb[0].mxu0
    %v5648 = vpop.f32.mrb[0].mxu0
    %v5649 = vpop.f32.mrb[0].mxu0
    %5650 = vdwg.mxu0
    %5651 = vmatprep.subr.bf16.mxu0 0
    %5652 = vmatpush1.bf16.msra.mxu0 %v3785
    %5653 = vmatprep.subr.bf16.mxu0 0
    %5654 = vmatpush1.bf16.msra.mxu0 %v3790
    %5655 = vmatprep.subr.bf16.mxu0 0
    %5656 = vmatpush1.bf16.msra.mxu0 %v3795
    %5657 = vmatprep.subr.bf16.mxu0 0
    %5658 = vmatpush1.bf16.msra.mxu0 %v3800
    %5659 = vmatprep.subr.bf16.mxu0 0
    %5660 = vmatpush1.bf16.msra.mxu0 %v3805
    %5661 = vmatprep.subr.bf16.mxu0 0
    %5662 = vmatpush1.bf16.msra.mxu0 %v3810
    %5663 = vmatprep.subr.bf16.mxu0 0
    %5664 = vmatpush1.bf16.msra.mxu0 %v3815
    %5665 = vmatprep.subr.bf16.mxu0 0
    %5666 = vmatpush1.bf16.msra.mxu0 %v3820
    %5667 = vmatprep.subr.bf16.mxu0 0
    %5668 = vmatpush1.bf16.msra.mxu0 %v3825
    %5669 = vmatprep.subr.bf16.mxu0 0
    %5670 = vmatpush1.bf16.msra.mxu0 %v3830
    %5671 = vmatprep.subr.bf16.mxu0 0
    %5672 = vmatpush1.bf16.msra.mxu0 %v3835
    %5673 = vmatprep.subr.bf16.mxu0 0
    %5674 = vmatpush1.bf16.msra.mxu0 %v3840
    %5675 = vmatprep.subr.bf16.mxu0 0
    %5676 = vmatpush1.bf16.msra.mxu0 %v3845
    %5677 = vmatprep.subr.bf16.mxu0 0
    %5678 = vmatpush1.bf16.msra.mxu0 %v3850
    %5679 = vmatprep.subr.bf16.mxu0 0
    %5680 = vmatpush1.bf16.msra.mxu0 %v3855
    %5681 = vmatprep.subr.bf16.mxu0 0
    %5682 = vmatpush1.bf16.msra.mxu0 %v3860
    %5683 = vmatprep.mubr.bf16.mxu0 %v911
    %5684 = vmatmul.mubr.bf16.gmra.mrb[0].mxu0 %v910
    %v5685 = vpop.f32.mrb[0].mxu0
    %v5686 = vadd.f32 %v5646, %v5685
    %v5687 = vpop.f32.mrb[0].mxu0
    %v5688 = vpop.f32.mrb[0].mxu0
    %v5689 = vpop.f32.mrb[0].mxu0
    %5690 = vdwg.mxu0
    %5691 = vmatprep.subr.bf16.mxu0 0
    %5692 = vmatpush1.bf16.msra.mxu0 %v3865
    %5693 = vmatprep.subr.bf16.mxu0 0
    %5694 = vmatpush1.bf16.msra.mxu0 %v3870
    %5695 = vmatprep.subr.bf16.mxu0 0
    %5696 = vmatpush1.bf16.msra.mxu0 %v3875
    %5697 = vmatprep.subr.bf16.mxu0 0
    %5698 = vmatpush1.bf16.msra.mxu0 %v3880
    %5699 = vmatprep.subr.bf16.mxu0 0
    %5700 = vmatpush1.bf16.msra.mxu0 %v3885
    %5701 = vmatprep.subr.bf16.mxu0 0
    %5702 = vmatpush1.bf16.msra.mxu0 %v3890
    %5703 = vmatprep.subr.bf16.mxu0 0
    %5704 = vmatpush1.bf16.msra.mxu0 %v3895
    %5705 = vmatprep.subr.bf16.mxu0 0
    %5706 = vmatpush1.bf16.msra.mxu0 %v3900
    %5707 = vmatprep.subr.bf16.mxu0 0
    %5708 = vmatpush1.bf16.msra.mxu0 %v3905
    %5709 = vmatprep.subr.bf16.mxu0 0
    %5710 = vmatpush1.bf16.msra.mxu0 %v3910
    %5711 = vmatprep.subr.bf16.mxu0 0
    %5712 = vmatpush1.bf16.msra.mxu0 %v3915
    %5713 = vmatprep.subr.bf16.mxu0 0
    %5714 = vmatpush1.bf16.msra.mxu0 %v3920
    %5715 = vmatprep.subr.bf16.mxu0 0
    %5716 = vmatpush1.bf16.msra.mxu0 %v3925
    %5717 = vmatprep.subr.bf16.mxu0 0
    %5718 = vmatpush1.bf16.msra.mxu0 %v3930
    %5719 = vmatprep.subr.bf16.mxu0 0
    %5720 = vmatpush1.bf16.msra.mxu0 %v3935
    %5721 = vmatprep.subr.bf16.mxu0 0
    %5722 = vmatpush1.bf16.msra.mxu0 %v3940
    %5723 = vmatprep.mubr.bf16.mxu0 %v913
    %5724 = vmatmul.mubr.bf16.gmra.mrb[0].mxu0 %v912
    %v5725 = vpop.f32.mrb[0].mxu0
    %v5726 = vadd.f32 %v5686, %v5725
    %v5727 = vpop.f32.mrb[0].mxu0
    %v5728 = vpop.f32.mrb[0].mxu0
    %v5729 = vpop.f32.mrb[0].mxu0
    %5730 = vdwg.mxu0
    %5731 = vmatprep.subr.bf16.mxu0 0
    %5732 = vmatpush1.bf16.msra.mxu0 %v3945
    %5733 = vmatprep.subr.bf16.mxu0 0
    %5734 = vmatpush1.bf16.msra.mxu0 %v3950
    %5735 = vmatprep.subr.bf16.mxu0 0
    %5736 = vmatpush1.bf16.msra.mxu0 %v3955
    %5737 = vmatprep.subr.bf16.mxu0 0
    %5738 = vmatpush1.bf16.msra.mxu0 %v3960
    %5739 = vmatprep.subr.bf16.mxu0 0
    %5740 = vmatpush1.bf16.msra.mxu0 %v3965
    %5741 = vmatprep.subr.bf16.mxu0 0
    %5742 = vmatpush1.bf16.msra.mxu0 %v3970
    %5743 = vmatprep.subr.bf16.mxu0 0
    %5744 = vmatpush1.bf16.msra.mxu0 %v3975
    %5745 = vmatprep.subr.bf16.mxu0 0
    %5746 = vmatpush1.bf16.msra.mxu0 %v3980
    %5747 = vmatprep.subr.bf16.mxu0 0
    %5748 = vmatpush1.bf16.msra.mxu0 %v3985
    %5749 = vmatprep.subr.bf16.mxu0 0
    %5750 = vmatpush1.bf16.msra.mxu0 %v3990
    %5751 = vmatprep.subr.bf16.mxu0 0
    %5752 = vmatpush1.bf16.msra.mxu0 %v3995
    %5753 = vmatprep.subr.bf16.mxu0 0
    %5754 = vmatpush1.bf16.msra.mxu0 %v4000
    %5755 = vmatprep.subr.bf16.mxu0 0
    %5756 = vmatpush1.bf16.msra.mxu0 %v4005
    %5757 = vmatprep.subr.bf16.mxu0 0
    %5758 = vmatpush1.bf16.msra.mxu0 %v4010
    %5759 = vmatprep.subr.bf16.mxu0 0
    %5760 = vmatpush1.bf16.msra.mxu0 %v4015
    %5761 = vmatprep.subr.bf16.mxu0 0
    %5762 = vmatpush1.bf16.msra.mxu0 %v4020
    %5763 = vmatprep.mubr.bf16.mxu0 %v915
    %5764 = vmatmul.mubr.bf16.gmra.mrb[0].mxu0 %v914
    %v5765 = vpop.f32.mrb[0].mxu0
    %v5766 = vadd.f32 %v5726, %v5765
    %v5767 = vpop.f32.mrb[0].mxu0
    %v5768 = vpop.f32.mrb[0].mxu0
    %v5769 = vpop.f32.mrb[0].mxu0
    %5770 = vdwg.mxu0
    %5771 = vmatprep.subr.bf16.mxu0 0
    %5772 = vmatpush1.bf16.msra.mxu0 %v4025
    %5773 = vmatprep.subr.bf16.mxu0 0
    %5774 = vmatpush1.bf16.msra.mxu0 %v4030
    %5775 = vmatprep.subr.bf16.mxu0 0
    %5776 = vmatpush1.bf16.msra.mxu0 %v4035
    %5777 = vmatprep.subr.bf16.mxu0 0
    %5778 = vmatpush1.bf16.msra.mxu0 %v4040
    %5779 = vmatprep.subr.bf16.mxu0 0
    %5780 = vmatpush1.bf16.msra.mxu0 %v4045
    %5781 = vmatprep.subr.bf16.mxu0 0
    %5782 = vmatpush1.bf16.msra.mxu0 %v4050
    %5783 = vmatprep.subr.bf16.mxu0 0
    %5784 = vmatpush1.bf16.msra.mxu0 %v4055
    %5785 = vmatprep.subr.bf16.mxu0 0
    %5786 = vmatpush1.bf16.msra.mxu0 %v4060
    %5787 = vmatprep.subr.bf16.mxu0 0
    %5788 = vmatpush1.bf16.msra.mxu0 %v4065
    %5789 = vmatprep.subr.bf16.mxu0 0
    %5790 = vmatpush1.bf16.msra.mxu0 %v4070
    %5791 = vmatprep.subr.bf16.mxu0 0
    %5792 = vmatpush1.bf16.msra.mxu0 %v4075
    %5793 = vmatprep.subr.bf16.mxu0 0
    %5794 = vmatpush1.bf16.msra.mxu0 %v4080
    %5795 = vmatprep.subr.bf16.mxu0 0
    %5796 = vmatpush1.bf16.msra.mxu0 %v4085
    %5797 = vmatprep.subr.bf16.mxu0 0
    %5798 = vmatpush1.bf16.msra.mxu0 %v4090
    %5799 = vmatprep.subr.bf16.mxu0 0
    %5800 = vmatpush1.bf16.msra.mxu0 %v4095
    %5801 = vmatprep.subr.bf16.mxu0 0
    %5802 = vmatpush1.bf16.msra.mxu0 %v4100
    %5803 = vmatprep.mubr.bf16.mxu0 %v917
    %5804 = vmatmul.mubr.bf16.gmra.mrb[0].mxu0 %v916
    %v5805 = vpop.f32.mrb[0].mxu0
    %v5806 = vadd.f32 %v5766, %v5805
    %v5807 = vpop.f32.mrb[0].mxu0
    %v5808 = vpop.f32.mrb[0].mxu0
    %v5809 = vpop.f32.mrb[0].mxu0
    %5810 = vdwg.mxu0
    %5811 = vmatprep.subr.bf16.mxu0 0
    %5812 = vmatpush1.bf16.msra.mxu0 %v4105
    %5813 = vmatprep.subr.bf16.mxu0 0
    %5814 = vmatpush1.bf16.msra.mxu0 %v4110
    %5815 = vmatprep.subr.bf16.mxu0 0
    %5816 = vmatpush1.bf16.msra.mxu0 %v4115
    %5817 = vmatprep.subr.bf16.mxu0 0
    %5818 = vmatpush1.bf16.msra.mxu0 %v4120
    %5819 = vmatprep.subr.bf16.mxu0 0
    %5820 = vmatpush1.bf16.msra.mxu0 %v4125
    %5821 = vmatprep.subr.bf16.mxu0 0
    %5822 = vmatpush1.bf16.msra.mxu0 %v4130
    %5823 = vmatprep.subr.bf16.mxu0 0
    %5824 = vmatpush1.bf16.msra.mxu0 %v4135
    %5825 = vmatprep.subr.bf16.mxu0 0
    %5826 = vmatpush1.bf16.msra.mxu0 %v4140
    %5827 = vmatprep.subr.bf16.mxu0 0
    %5828 = vmatpush1.bf16.msra.mxu0 %v4145
    %5829 = vmatprep.subr.bf16.mxu0 0
    %5830 = vmatpush1.bf16.msra.mxu0 %v4150
    %5831 = vmatprep.subr.bf16.mxu0 0
    %5832 = vmatpush1.bf16.msra.mxu0 %v4155
    %5833 = vmatprep.subr.bf16.mxu0 0
    %5834 = vmatpush1.bf16.msra.mxu0 %v4160
    %5835 = vmatprep.subr.bf16.mxu0 0
    %5836 = vmatpush1.bf16.msra.mxu0 %v4165
    %5837 = vmatprep.subr.bf16.mxu0 0
    %5838 = vmatpush1.bf16.msra.mxu0 %v4170
    %5839 = vmatprep.subr.bf16.mxu0 0
    %5840 = vmatpush1.bf16.msra.mxu0 %v4175
    %5841 = vmatprep.subr.bf16.mxu0 0
    %5842 = vmatpush1.bf16.msra.mxu0 %v4180
    %5843 = vmatprep.mubr.bf16.mxu0 %v919
    %5844 = vmatmul.mubr.bf16.gmra.mrb[0].mxu0 %v918
    %v5845 = vpop.f32.mrb[0].mxu0
    %v5846 = vadd.f32 %v5806, %v5845
    %v5847 = vpop.f32.mrb[0].mxu0
    %v5848 = vpop.f32.mrb[0].mxu0
    %v5849 = vpop.f32.mrb[0].mxu0
    %5850 = vdwg.mxu0
    %5851 = vmatprep.subr.bf16.mxu0 0
    %5852 = vmatpush1.bf16.msra.mxu0 %v4185
    %5853 = vmatprep.subr.bf16.mxu0 0
    %5854 = vmatpush1.bf16.msra.mxu0 %v4190
    %5855 = vmatprep.subr.bf16.mxu0 0
    %5856 = vmatpush1.bf16.msra.mxu0 %v4195
    %5857 = vmatprep.subr.bf16.mxu0 0
    %5858 = vmatpush1.bf16.msra.mxu0 %v4200
    %5859 = vmatprep.subr.bf16.mxu0 0
    %5860 = vmatpush1.bf16.msra.mxu0 %v4205
    %5861 = vmatprep.subr.bf16.mxu0 0
    %5862 = vmatpush1.bf16.msra.mxu0 %v4210
    %5863 = vmatprep.subr.bf16.mxu0 0
    %5864 = vmatpush1.bf16.msra.mxu0 %v4215
    %5865 = vmatprep.subr.bf16.mxu0 0
    %5866 = vmatpush1.bf16.msra.mxu0 %v4220
    %5867 = vmatprep.subr.bf16.mxu0 0
    %5868 = vmatpush1.bf16.msra.mxu0 %v4225
    %5869 = vmatprep.subr.bf16.mxu0 0
    %5870 = vmatpush1.bf16.msra.mxu0 %v4230
    %5871 = vmatprep.subr.bf16.mxu0 0
    %5872 = vmatpush1.bf16.msra.mxu0 %v4235
    %5873 = vmatprep.subr.bf16.mxu0 0
    %5874 = vmatpush1.bf16.msra.mxu0 %v4240
    %5875 = vmatprep.subr.bf16.mxu0 0
    %5876 = vmatpush1.bf16.msra.mxu0 %v4245
    %5877 = vmatprep.subr.bf16.mxu0 0
    %5878 = vmatpush1.bf16.msra.mxu0 %v4250
    %5879 = vmatprep.subr.bf16.mxu0 0
    %5880 = vmatpush1.bf16.msra.mxu0 %v4255
    %5881 = vmatprep.subr.bf16.mxu0 0
    %5882 = vmatpush1.bf16.msra.mxu0 %v4260
    %5883 = vmatprep.mubr.bf16.mxu0 %v921
    %5884 = vmatmul.mubr.bf16.gmra.mrb[0].mxu0 %v920
    %v5885 = vpop.f32.mrb[0].mxu0
    %v5886 = vadd.f32 %v5846, %v5885
    %v5887 = vpop.f32.mrb[0].mxu0
    %v5888 = vpop.f32.mrb[0].mxu0
    %v5889 = vpop.f32.mrb[0].mxu0
    %5890 = vdwg.mxu0
    %5891 = vmatprep.subr.bf16.mxu0 0
    %5892 = vmatpush1.bf16.msra.mxu0 %v4265
    %5893 = vmatprep.subr.bf16.mxu0 0
    %5894 = vmatpush1.bf16.msra.mxu0 %v4270
    %5895 = vmatprep.subr.bf16.mxu0 0
    %5896 = vmatpush1.bf16.msra.mxu0 %v4275
    %5897 = vmatprep.subr.bf16.mxu0 0
    %5898 = vmatpush1.bf16.msra.mxu0 %v4280
    %5899 = vmatprep.subr.bf16.mxu0 0
    %5900 = vmatpush1.bf16.msra.mxu0 %v4285
    %5901 = vmatprep.subr.bf16.mxu0 0
    %5902 = vmatpush1.bf16.msra.mxu0 %v4290
    %5903 = vmatprep.subr.bf16.mxu0 0
    %5904 = vmatpush1.bf16.msra.mxu0 %v4295
    %5905 = vmatprep.subr.bf16.mxu0 0
    %5906 = vmatpush1.bf16.msra.mxu0 %v4300
    %5907 = vmatprep.subr.bf16.mxu0 0
    %5908 = vmatpush1.bf16.msra.mxu0 %v4305
    %5909 = vmatprep.subr.bf16.mxu0 0
    %5910 = vmatpush1.bf16.msra.mxu0 %v4310
    %5911 = vmatprep.subr.bf16.mxu0 0
    %5912 = vmatpush1.bf16.msra.mxu0 %v4315
    %5913 = vmatprep.subr.bf16.mxu0 0
    %5914 = vmatpush1.bf16.msra.mxu0 %v4320
    %5915 = vmatprep.subr.bf16.mxu0 0
    %5916 = vmatpush1.bf16.msra.mxu0 %v4325
    %5917 = vmatprep.subr.bf16.mxu0 0
    %5918 = vmatpush1.bf16.msra.mxu0 0
    %5919 = vmatprep.subr.bf16.mxu0 0
    %5920 = vmatpush1.bf16.msra.mxu0 0
    %5921 = vmatprep.subr.bf16.mxu0 0
    %5922 = vmatpush1.bf16.msra.mxu0 0
    %5923 = vmatprep.mubr.bf16.mxu0 %v4953
    %5924 = vmatmul.mubr.bf16.gmra.mrb[0].mxu0 %v922
    %v5925 = vpop.f32.mrb[0].mxu0
    %v5926 = vadd.f32 %v5886, %v5925
    %v5927 = vpop.f32.mrb[0].mxu0
    %v5928 = vpop.f32.mrb[0].mxu0
    %v5929 = vpop.f32.mrb[0].mxu0
    %5930 = vdwg.mxu0
    %v5931 = vld [vmem:[%s8] sm:$0x1f]
    %v5933 = vlaneseq
    %v5934 = vshrl.u32 %v5933, 7
    %v5935 = vsub.s32 0, %v5934
    %v5936 = vrot.slane %v5931, %v5935
    %v5937 = vlaneseq
    %v5938 = vshrl.u32 %v5937, 7
    %v5939 = vsub.s32 1, %v5938
    %v5940 = vrot.slane %v5931, %v5939
    %v5941 = vlaneseq
    %v5942 = vshrl.u32 %v5941, 7
    %v5943 = vsub.s32 2, %v5942
    %v5944 = vrot.slane %v5931, %v5943
    %v5945 = vlaneseq
    %v5946 = vshrl.u32 %v5945, 7
    %v5947 = vsub.s32 3, %v5946
    %v5948 = vrot.slane %v5931, %v5947
    %v5949 = vlaneseq
    %v5950 = vshrl.u32 %v5949, 7
    %v5951 = vsub.s32 4, %v5950
    %v5952 = vrot.slane %v5931, %v5951
    %v5958 = vmul.f32 %v5277, %v5936
    %v5959 = vmul.f32 %v5279, %v5940
    %v5960 = vmul.f32 %v5605, %v5944
    %v5961 = vmul.f32 %v5607, %v5948
    %v5962 = vmul.f32 %v5926, %v5952
    %v5963 = vld [vmem:[%s9] sm:$0x1f]
    %v5965 = vlaneseq
    %v5966 = vshrl.u32 %v5965, 7
    %v5967 = vsub.s32 0, %v5966
    %v5968 = vrot.slane %v5963, %v5967
    %v5969 = vlaneseq
    %v5970 = vshrl.u32 %v5969, 7
    %v5971 = vsub.s32 1, %v5970
    %v5972 = vrot.slane %v5963, %v5971
    %v5973 = vlaneseq
    %v5974 = vshrl.u32 %v5973, 7
    %v5975 = vsub.s32 2, %v5974
    %v5976 = vrot.slane %v5963, %v5975
    %v5977 = vlaneseq
    %v5978 = vshrl.u32 %v5977, 7
    %v5979 = vsub.s32 3, %v5978
    %v5980 = vrot.slane %v5963, %v5979
    %v5981 = vlaneseq
    %v5982 = vshrl.u32 %v5981, 7
    %v5983 = vsub.s32 4, %v5982
    %v5984 = vrot.slane %v5963, %v5983
    %v5990 = vadd.f32 %v5958, %v5968
    %v5991 = vadd.f32 %v5959, %v5972
    %v5992 = vadd.f32 %v5960, %v5976
    %v5993 = vadd.f32 %v5961, %v5980
    %v5994 = vadd.f32 %v5962, %v5984
    %v5995 = vmax.f32 %v5990, 0.0
    %v5996 = vmax.f32 %v5991, 0.0
    %v5997 = vmax.f32 %v5992, 0.0
    %v5998 = vmax.f32 %v5993, 0.0
    %v5999 = vmax.f32 %v5994, 0.0
    %v6000 = vpack.c.bf16 %v5995, %v5995
    %v6001 = vpack.c.bf16 %v5996, %v5996
    %v6002 = vpack.c.bf16 %v5997, %v5997
    %v6003 = vpack.c.bf16 %v5998, %v5998
    %v6004 = vpack.c.bf16 %v5999, %v5999
    %v6005 = vld [vmem:[%s10] sm:$0xf]
    %v6006 = vld [vmem:[%s10 + $0x4] sm:$0xf]
    %v6007 = vld [vmem:[%s10 + $0x8] sm:$0xf]
    %v6008 = vld [vmem:[%s10 + $0xc] sm:$0xf]
    %v6009 = vld [vmem:[%s10 + $0x10] sm:$0xf]
    %v6010 = vld [vmem:[%s10 + $0x14] sm:$0xf]
    %v6011 = vld [vmem:[%s10 + $0x18] sm:$0xf]
    %v6012 = vld [vmem:[%s10 + $0x1c] sm:$0xf]
    %v6013 = vld [vmem:[%s10 + $0x20] sm:$0xf]
    %v6014 = vld [vmem:[%s10 + $0x24] sm:$0xf]
    %v6015 = vld [vmem:[%s10 + $0x28] sm:$0xf]
    %v6016 = vld [vmem:[%s10 + $0x2c] sm:$0xf]
    %v6017 = vld [vmem:[%s10 + $0x30] sm:$0xf]
    %v6018 = vld [vmem:[%s10 + $0x34] sm:$0xf]
    %v6019 = vld [vmem:[%s10 + $0x38] sm:$0xf]
    %v6020 = vld [vmem:[%s10 + $0x3c] sm:$0xf]
    %v6021 = vld [vmem:[%s10 + $0x40] sm:$0xf]
    %v6022 = vld [vmem:[%s10 + $0x44] sm:$0xf]
    %v6023 = vld [vmem:[%s10 + $0x48] sm:$0xf]
    %v6024 = vld [vmem:[%s10 + $0x4c] sm:$0xf]
    %v6025 = vld [vmem:[%s10 + $0x50] sm:$0xf]
    %v6026 = vld [vmem:[%s10 + $0x54] sm:$0xf]
    %v6027 = vld [vmem:[%s10 + $0x58] sm:$0xf]
    %v6028 = vld [vmem:[%s10 + $0x5c] sm:$0xf]
    %v6029 = vld [vmem:[%s10 + $0x60] sm:$0xf]
    %v6030 = vld [vmem:[%s10 + $0x64] sm:$0xf]
    %v6031 = vld [vmem:[%s10 + $0x68] sm:$0xf]
    %v6032 = vld [vmem:[%s10 + $0x6c] sm:$0xf]
    %v6033 = vld [vmem:[%s10 + $0x70] sm:$0xf]
    %v6034 = vld [vmem:[%s10 + $0x74] sm:$0xf]
    %v6035 = vld [vmem:[%s10 + $0x78] sm:$0xf]
    %v6036 = vld [vmem:[%s10 + $0x7c] sm:$0xf]
    %v6037 = vld [vmem:[%s10 + $0x80] sm:$0xf]
    %v6038 = vld [vmem:[%s10 + $0x84] sm:$0xf]
    %v6039 = vld [vmem:[%s10 + $0x88] sm:$0xf]
    %v6040 = vld [vmem:[%s10 + $0x8c] sm:$0xf]
    %v6041 = vld [vmem:[%s10 + $0x90] sm:$0xf]
    %v6042 = vld [vmem:[%s10 + $0x94] sm:$0xf]
    %v6043 = vld [vmem:[%s10 + $0x98] sm:$0xf]
    %v6044 = vld [vmem:[%s10 + $0x9c] sm:$0xf]
    %v6045 = vld [vmem:[%s10 + $0xa0] sm:$0xf]
    %v6046 = vld [vmem:[%s10 + $0xa4] sm:$0xf]
    %v6047 = vld [vmem:[%s10 + $0xa8] sm:$0xf]
    %v6048 = vld [vmem:[%s10 + $0xac] sm:$0xf]
    %v6049 = vld [vmem:[%s10 + $0xb0] sm:$0xf]
    %v6050 = vld [vmem:[%s10 + $0xb4] sm:$0xf]
    %v6051 = vld [vmem:[%s10 + $0xb8] sm:$0xf]
    %v6052 = vld [vmem:[%s10 + $0xbc] sm:$0xf]
    %v6053 = vld [vmem:[%s10 + $0xc0] sm:$0xf]
    %v6054 = vld [vmem:[%s10 + $0xc4] sm:$0xf]
    %v6055 = vld [vmem:[%s10 + $0xc8] sm:$0xf]
    %v6056 = vld [vmem:[%s10 + $0xcc] sm:$0xf]
    %v6057 = vld [vmem:[%s10 + $0xd0] sm:$0xf]
    %v6058 = vld [vmem:[%s10 + $0xd4] sm:$0xf]
    %v6059 = vld [vmem:[%s10 + $0xd8] sm:$0xf]
    %v6060 = vld [vmem:[%s10 + $0xdc] sm:$0xf]
    %v6061 = vld [vmem:[%s10 + $0xe0] sm:$0xf]
    %v6062 = vld [vmem:[%s10 + $0xe4] sm:$0xf]
    %v6063 = vld [vmem:[%s10 + $0xe8] sm:$0xf]
    %v6064 = vld [vmem:[%s10 + $0xec] sm:$0xf]
    %v6065 = vld [vmem:[%s10 + $0xf0] sm:$0xf]
    %v6066 = vld [vmem:[%s10 + $0xf4] sm:$0xf]
    %v6067 = vld [vmem:[%s10 + $0xf8] sm:$0xf]
    %v6068 = vld [vmem:[%s10 + $0xfc] sm:$0xf]
    %v6069 = vld [vmem:[%s10 + $0x100] sm:$0xf]
    %v6070 = vld [vmem:[%s10 + $0x104] sm:$0xf]
    %v6071 = vld [vmem:[%s10 + $0x108] sm:$0xf]
    %v6072 = vld [vmem:[%s10 + $0x10c] sm:$0xf]
    %v6073 = vld [vmem:[%s10 + $0x110] sm:$0xf]
    %v6074 = vld [vmem:[%s10 + $0x114] sm:$0xf]
    %v6075 = vld [vmem:[%s10 + $0x118] sm:$0xf]
    %v6076 = vld [vmem:[%s10 + $0x11c] sm:$0xf]
    %v6077 = vld [vmem:[%s10 + $0x120] sm:$0xf]
    %v6078 = vld [vmem:[%s10 + $0x124] sm:$0xf]
    %v6079 = vld [vmem:[%s10 + $0x128] sm:$0xf]
    %v6080 = vld [vmem:[%s11] sm:$0x1]
    %v6082 = vlaneseq
    %v6083 = vshrl.u32 %v6082, 7
    %v6084 = vsub.s32 0, %v6083
    %v6085 = vrot.slane %v6080, %v6084
    %v6162 = vunpack.c.l.b16 %v6005
    %v6163 = vunpack.c.l.b16 %v6006
    %v6164 = vunpack.c.l.b16 %v6007
    %v6165 = vunpack.c.l.b16 %v6008
    %v6166 = vunpack.c.l.b16 %v6009
    %v6167 = vunpack.c.l.b16 %v6010
    %v6168 = vunpack.c.l.b16 %v6011
    %v6169 = vunpack.c.l.b16 %v6012
    %v6170 = vunpack.c.l.b16 %v6013
    %v6171 = vunpack.c.l.b16 %v6014
    %v6172 = vunpack.c.l.b16 %v6015
    %v6173 = vunpack.c.l.b16 %v6016
    %v6174 = vunpack.c.l.b16 %v6017
    %v6175 = vunpack.c.l.b16 %v6018
    %v6176 = vunpack.c.l.b16 %v6019
    %v6177 = vunpack.c.l.b16 %v6020
    %v6178 = vunpack.c.l.b16 %v6021
    %v6179 = vunpack.c.l.b16 %v6022
    %v6180 = vunpack.c.l.b16 %v6023
    %v6181 = vunpack.c.l.b16 %v6024
    %v6182 = vunpack.c.l.b16 %v6025
    %v6183 = vunpack.c.l.b16 %v6026
    %v6184 = vunpack.c.l.b16 %v6027
    %v6185 = vunpack.c.l.b16 %v6028
    %v6186 = vunpack.c.l.b16 %v6029
    %v6187 = vunpack.c.l.b16 %v6030
    %v6188 = vunpack.c.l.b16 %v6031
    %v6189 = vunpack.c.l.b16 %v6032
    %v6190 = vunpack.c.l.b16 %v6033
    %v6191 = vunpack.c.l.b16 %v6034
    %v6192 = vunpack.c.l.b16 %v6035
    %v6193 = vunpack.c.l.b16 %v6036
    %v6194 = vunpack.c.l.b16 %v6037
    %v6195 = vunpack.c.l.b16 %v6038
    %v6196 = vunpack.c.l.b16 %v6039
    %v6197 = vunpack.c.l.b16 %v6040
    %v6198 = vunpack.c.l.b16 %v6041
    %v6199 = vunpack.c.l.b16 %v6042
    %v6200 = vunpack.c.l.b16 %v6043
    %v6201 = vunpack.c.l.b16 %v6044
    %v6202 = vunpack.c.l.b16 %v6045
    %v6203 = vunpack.c.l.b16 %v6046
    %v6204 = vunpack.c.l.b16 %v6047
    %v6205 = vunpack.c.l.b16 %v6048
    %v6206 = vunpack.c.l.b16 %v6049
    %v6207 = vunpack.c.l.b16 %v6050
    %v6208 = vunpack.c.l.b16 %v6051
    %v6209 = vunpack.c.l.b16 %v6052
    %v6210 = vunpack.c.l.b16 %v6053
    %v6211 = vunpack.c.l.b16 %v6054
    %v6212 = vunpack.c.l.b16 %v6055
    %v6213 = vunpack.c.l.b16 %v6056
    %v6214 = vunpack.c.l.b16 %v6057
    %v6215 = vunpack.c.l.b16 %v6058
    %v6216 = vunpack.c.l.b16 %v6059
    %v6217 = vunpack.c.l.b16 %v6060
    %v6218 = vunpack.c.l.b16 %v6061
    %v6219 = vunpack.c.l.b16 %v6062
    %v6220 = vunpack.c.l.b16 %v6063
    %v6221 = vunpack.c.l.b16 %v6064
    %v6222 = vunpack.c.l.b16 %v6065
    %v6223 = vunpack.c.l.b16 %v6066
    %v6224 = vunpack.c.l.b16 %v6067
    %v6225 = vunpack.c.l.b16 %v6068
    %v6226 = vunpack.c.l.b16 %v6069
    %v6227 = vunpack.c.l.b16 %v6070
    %v6228 = vunpack.c.l.b16 %v6071
    %v6229 = vunpack.c.l.b16 %v6072
    %v6230 = vunpack.c.l.b16 %v6073
    %v6231 = vunpack.c.l.b16 %v6074
    %v6232 = vunpack.c.l.b16 %v6075
    %v6233 = vunpack.c.l.b16 %v6076
    %v6234 = vunpack.c.l.b16 %v6077
    %v6235 = vunpack.c.l.b16 %v6078
    %v6236 = vunpack.c.l.b16 %v6079
    %v6237 = vpack.c.b16 %v6163, %v6162
    %v6238 = vpack.c.b16 %v6165, %v6164
    %v6239 = vpack.c.b16 %v6167, %v6166
    %v6240 = vpack.c.b16 %v6169, %v6168
    %v6241 = vpack.c.b16 %v6171, %v6170
    %v6242 = vpack.c.b16 %v6173, %v6172
    %v6243 = vpack.c.b16 %v6175, %v6174
    %v6244 = vpack.c.b16 %v6177, %v6176
    %v6245 = vpack.c.b16 %v6179, %v6178
    %v6246 = vpack.c.b16 %v6181, %v6180
    %v6247 = vpack.c.b16 %v6183, %v6182
    %v6248 = vpack.c.b16 %v6185, %v6184
    %v6249 = vpack.c.b16 %v6187, %v6186
    %v6250 = vpack.c.b16 %v6189, %v6188
    %v6251 = vpack.c.b16 %v6191, %v6190
    %v6252 = vpack.c.b16 %v6193, %v6192
    %v6253 = vpack.c.b16 %v6195, %v6194
    %v6254 = vpack.c.b16 %v6197, %v6196
    %v6255 = vpack.c.b16 %v6199, %v6198
    %v6256 = vpack.c.b16 %v6201, %v6200
    %v6257 = vpack.c.b16 %v6203, %v6202
    %v6258 = vpack.c.b16 %v6205, %v6204
    %v6259 = vpack.c.b16 %v6207, %v6206
    %v6260 = vpack.c.b16 %v6209, %v6208
    %v6261 = vpack.c.b16 %v6211, %v6210
    %v6262 = vpack.c.b16 %v6213, %v6212
    %v6263 = vpack.c.b16 %v6215, %v6214
    %v6264 = vpack.c.b16 %v6217, %v6216
    %v6265 = vpack.c.b16 %v6219, %v6218
    %v6266 = vpack.c.b16 %v6221, %v6220
    %v6267 = vpack.c.b16 %v6223, %v6222
    %v6268 = vpack.c.b16 %v6225, %v6224
    %v6269 = vpack.c.b16 %v6227, %v6226
    %v6270 = vpack.c.b16 %v6229, %v6228
    %v6271 = vpack.c.b16 %v6231, %v6230
    %v6272 = vpack.c.b16 %v6233, %v6232
    %v6273 = vpack.c.b16 %v6235, %v6234
    %v6274 = vpack.c.b16 %v6236, %v6236
    %vm6312 = vcmask 719872
    %v6314 = vsel %vm6312, %v6004, 0
    %vm6316 = vcmask 1043456
    %v6318 = vsel %vm6316, %v6274, 0
    %6320 = vmatprep.subr.bf16.mxu0 0
    %6321 = vmatpush1.bf16.msra.mxu0 %v6237
    %6322 = vmatprep.subr.bf16.mxu0 0
    %6323 = vmatpush1.bf16.msra.mxu0 %v6238
    %6324 = vmatprep.subr.bf16.mxu0 0
    %6325 = vmatpush1.bf16.msra.mxu0 %v6239
    %6326 = vmatprep.subr.bf16.mxu0 0
    %6327 = vmatpush1.bf16.msra.mxu0 %v6240
    %6328 = vmatprep.subr.bf16.mxu0 0
    %6329 = vmatpush1.bf16.msra.mxu0 %v6241
    %6330 = vmatprep.subr.bf16.mxu0 0
    %6331 = vmatpush1.bf16.msra.mxu0 %v6242
    %6332 = vmatprep.subr.bf16.mxu0 0
    %6333 = vmatpush1.bf16.msra.mxu0 %v6243
    %6334 = vmatprep.subr.bf16.mxu0 0
    %6335 = vmatpush1.bf16.msra.mxu0 %v6244
    %6336 = vmatprep.subr.bf16.mxu0 0
    %6337 = vmatpush1.bf16.msra.mxu0 %v6245
    %6338 = vmatprep.subr.bf16.mxu0 0
    %6339 = vmatpush1.bf16.msra.mxu0 %v6246
    %6340 = vmatprep.subr.bf16.mxu0 0
    %6341 = vmatpush1.bf16.msra.mxu0 %v6247
    %6342 = vmatprep.subr.bf16.mxu0 0
    %6343 = vmatpush1.bf16.msra.mxu0 %v6248
    %6344 = vmatprep.subr.bf16.mxu0 0
    %6345 = vmatpush1.bf16.msra.mxu0 %v6249
    %6346 = vmatprep.subr.bf16.mxu0 0
    %6347 = vmatpush1.bf16.msra.mxu0 %v6250
    %6348 = vmatprep.subr.bf16.mxu0 0
    %6349 = vmatpush1.bf16.msra.mxu0 %v6251
    %6350 = vmatprep.subr.bf16.mxu0 0
    %6351 = vmatpush1.bf16.msra.mxu0 %v6252
    %6352 = vmatprep.mubr.bf16.mxu0 %v6001
    %6353 = vmatmul.mubr.bf16.gmra.mrb[0].mxu0 %v6000
    %v6354 = vpop.f32.mrb[0].mxu0
    %v6355 = vadd.f32 %v6085, %v6354
    %v6356 = vpop.f32.mrb[0].mxu0
    %v6357 = vpop.f32.mrb[0].mxu0
    %v6358 = vpop.f32.mrb[0].mxu0
    %6359 = vdwg.mxu0
    %6360 = vmatprep.subr.bf16.mxu0 0
    %6361 = vmatpush1.bf16.msra.mxu0 %v6253
    %6362 = vmatprep.subr.bf16.mxu0 0
    %6363 = vmatpush1.bf16.msra.mxu0 %v6254
    %6364 = vmatprep.subr.bf16.mxu0 0
    %6365 = vmatpush1.bf16.msra.mxu0 %v6255
    %6366 = vmatprep.subr.bf16.mxu0 0
    %6367 = vmatpush1.bf16.msra.mxu0 %v6256
    %6368 = vmatprep.subr.bf16.mxu0 0
    %6369 = vmatpush1.bf16.msra.mxu0 %v6257
    %6370 = vmatprep.subr.bf16.mxu0 0
    %6371 = vmatpush1.bf16.msra.mxu0 %v6258
    %6372 = vmatprep.subr.bf16.mxu0 0
    %6373 = vmatpush1.bf16.msra.mxu0 %v6259
    %6374 = vmatprep.subr.bf16.mxu0 0
    %6375 = vmatpush1.bf16.msra.mxu0 %v6260
    %6376 = vmatprep.subr.bf16.mxu0 0
    %6377 = vmatpush1.bf16.msra.mxu0 %v6261
    %6378 = vmatprep.subr.bf16.mxu0 0
    %6379 = vmatpush1.bf16.msra.mxu0 %v6262
    %6380 = vmatprep.subr.bf16.mxu0 0
    %6381 = vmatpush1.bf16.msra.mxu0 %v6263
    %6382 = vmatprep.subr.bf16.mxu0 0
    %6383 = vmatpush1.bf16.msra.mxu0 %v6264
    %6384 = vmatprep.subr.bf16.mxu0 0
    %6385 = vmatpush1.bf16.msra.mxu0 %v6265
    %6386 = vmatprep.subr.bf16.mxu0 0
    %6387 = vmatpush1.bf16.msra.mxu0 %v6266
    %6388 = vmatprep.subr.bf16.mxu0 0
    %6389 = vmatpush1.bf16.msra.mxu0 %v6267
    %6390 = vmatprep.subr.bf16.mxu0 0
    %6391 = vmatpush1.bf16.msra.mxu0 %v6268
    %6392 = vmatprep.mubr.bf16.mxu0 %v6003
    %6393 = vmatmul.mubr.bf16.gmra.mrb[0].mxu0 %v6002
    %v6394 = vpop.f32.mrb[0].mxu0
    %v6395 = vadd.f32 %v6355, %v6394
    %v6396 = vpop.f32.mrb[0].mxu0
    %v6397 = vpop.f32.mrb[0].mxu0
    %v6398 = vpop.f32.mrb[0].mxu0
    %6399 = vdwg.mxu0
    %6400 = vmatprep.subr.bf16.mxu0 0
    %6401 = vmatpush1.bf16.msra.mxu0 %v6269
    %6402 = vmatprep.subr.bf16.mxu0 0
    %6403 = vmatpush1.bf16.msra.mxu0 %v6270
    %6404 = vmatprep.subr.bf16.mxu0 0
    %6405 = vmatpush1.bf16.msra.mxu0 %v6271
    %6406 = vmatprep.subr.bf16.mxu0 0
    %6407 = vmatpush1.bf16.msra.mxu0 %v6272
    %6408 = vmatprep.subr.bf16.mxu0 0
    %6409 = vmatpush1.bf16.msra.mxu0 %v6273
    %6410 = vmatprep.subr.bf16.mxu0 0
    %6411 = vmatpush1.bf16.msra.mxu0 %v6318
    %6412 = vmatprep.subr.bf16.mxu0 0
    %6413 = vmatpush1.bf16.msra.mxu0 0
    %6414 = vmatprep.subr.bf16.mxu0 0
    %6415 = vmatpush1.bf16.msra.mxu0 0
    %6416 = vmatprep.subr.bf16.mxu0 0
    %6417 = vmatpush1.bf16.msra.mxu0 0
    %6418 = vmatprep.subr.bf16.mxu0 0
    %6419 = vmatpush1.bf16.msra.mxu0 0
    %6420 = vmatprep.subr.bf16.mxu0 0
    %6421 = vmatpush1.bf16.msra.mxu0 0
    %6422 = vmatprep.subr.bf16.mxu0 0
    %6423 = vmatpush1.bf16.msra.mxu0 0
    %6424 = vmatprep.subr.bf16.mxu0 0
    %6425 = vmatpush1.bf16.msra.mxu0 0
    %6426 = vmatprep.subr.bf16.mxu0 0
    %6427 = vmatpush1.bf16.msra.mxu0 0
    %6428 = vmatprep.subr.bf16.mxu0 0
    %6429 = vmatpush1.bf16.msra.mxu0 0
    %6430 = vmatprep.subr.bf16.mxu0 0
    %6431 = vmatpush1.bf16.msra.mxu0 0
    %6432 = vmatprep.mubr.bf16.mxu0 0
    %6433 = vmatmul.mubr.bf16.gmra.mrb[0].mxu0 %v6314
    %v6434 = vpop.f32.mrb[0].mxu0
    %v6435 = vadd.f32 %v6395, %v6434
    %v6436 = vpop.f32.mrb[0].mxu0
    %v6437 = vpop.f32.mrb[0].mxu0
    %v6438 = vpop.f32.mrb[0].mxu0
    %6439 = vdwg.mxu0
    %v6440 = vmax.f32 %v6435, 0.0
    %v6441 = vld [vmem:[%s12] sm:$0xf]
    %v6442 = vld [vmem:[%s12 + $0x4] sm:$0xf]
    %v6443 = vld [vmem:[%s12 + $0x8] sm:$0x1]
    %v6444 = vld [vmem:[%s1] sm:$0xff]
    %v6445 = vld [vmem:[%s1 + $0x8] sm:$0xff]
    %v6446 = vld [vmem:[%s1 + $0x10] sm:$0x11]
    %v6447 = vld [vmem:[%s1 + $0x18] sm:$0x11]
    %v6448 = vld [vmem:[%s13] sm:$0xff]
    %v6449 = vld [vmem:[%s13 + $0x8] sm:$0xff]
    %v6450 = vld [vmem:[%s13 + $0x10] sm:$0x3]
    %6452 = vset.pattern.permute.xlu0 0
    %6453 = vperm.xlu0 %6452, %v6448
    %v6454 = vpop.permute.xlu0 %6453
    %6457 = vset.pattern.permute.xlu0 0
    %6458 = vperm.xlu0 %6457, %v6449
    %v6459 = vpop.permute.xlu0 %6458
    %6462 = vset.pattern.permute.xlu0 0
    %6463 = vperm.xlu0 %6462, %v6450
    %v6464 = vpop.permute.xlu0 %6463
    %v6469 = vunpack.c.l.b16 %v6441
    %v6470 = vunpack.c.l.b16 %v6442
    %v6471 = vunpack.c.l.b16 %v6443
    %v6472 = vpack.c.b16 %v6470, %v6469
    %v6473 = vpack.c.b16 %v6471, %v6471
    %v6478 = vunpack.c.l.b16 %v6444
    %v6479 = vunpack.c.h.b16 %v6444
    %v6480 = vunpack.c.l.b16 %v6445
    %v6481 = vunpack.c.h.b16 %v6445
    %v6482 = vunpack.c.l.b16 %v6446
    %v6483 = vunpack.c.h.b16 %v6446
    %v6484 = vunpack.c.l.b16 %v6447
    %v6485 = vunpack.c.h.b16 %v6447
    %v6486 = vpack.c.b16 %v6482, %v6478
    %v6487 = vpack.c.b16 %v6483, %v6479
    %v6488 = vpack.c.b16 %v6484, %v6480
    %v6489 = vpack.c.b16 %v6485, %v6481
    %vm6490 = vcmask 72704
    %v6492 = vsel %vm6490, %v6472, 0
    %v6495 = vsel %vm6490, %v6473, 0
    %vm6497 = vcmask 1044480
    %v6498 = vsel %vm6316, 4294967295, 65535
    %v6499 = vsel %vm6497, %v6498, 0
    %v6501 = vand.u32 %v6486, %v6499
    %v6504 = vand.u32 %v6487, %v6499
    %v6507 = vand.u32 %v6488, %v6499
    %v6510 = vand.u32 %v6489, %v6499
    %6512 = vmatprep.subr.bf16.mxu0 %v6504
    %6513 = vmatpush1.bf16.msra.mxu0 %v6501
    %6514 = vmatprep.subr.bf16.mxu0 0
    %6515 = vmatpush1.bf16.msra.mxu0 0
    %6516 = vmatprep.subr.bf16.mxu0 0
    %6517 = vmatpush1.bf16.msra.mxu0 0
    %6518 = vmatprep.subr.bf16.mxu0 0
    %6519 = vmatpush1.bf16.msra.mxu0 0
    %6520 = vmatprep.subr.bf16.mxu0 0
    %6521 = vmatpush1.bf16.msra.mxu0 0
    %6522 = vmatprep.subr.bf16.mxu0 0
    %6523 = vmatpush1.bf16.msra.mxu0 0
    %6524 = vmatprep.subr.bf16.mxu0 0
    %6525 = vmatpush1.bf16.msra.mxu0 0
    %6526 = vmatprep.subr.bf16.mxu0 0
    %6527 = vmatpush1.bf16.msra.mxu0 0
    %6528 = vmatprep.subr.bf16.mxu0 0
    %6529 = vmatpush1.bf16.msra.mxu0 0
    %6530 = vmatprep.subr.bf16.mxu0 0
    %6531 = vmatpush1.bf16.msra.mxu0 0
    %6532 = vmatprep.subr.bf16.mxu0 0
    %6533 = vmatpush1.bf16.msra.mxu0 0
    %6534 = vmatprep.subr.bf16.mxu0 0
    %6535 = vmatpush1.bf16.msra.mxu0 0
    %6536 = vmatprep.subr.bf16.mxu0 0
    %6537 = vmatpush1.bf16.msra.mxu0 0
    %6538 = vmatprep.subr.bf16.mxu0 0
    %6539 = vmatpush1.bf16.msra.mxu0 0
    %6540 = vmatprep.subr.bf16.mxu0 0
    %6541 = vmatpush1.bf16.msra.mxu0 0
    %6542 = vmatprep.subr.bf16.mxu0 0
    %6543 = vmatpush1.bf16.msra.mxu0 0
    %6544 = vmatprep.mubr.bf16.mxu0 0
    %6545 = vmatmul.mubr.bf16.gmra.mrb[0].mxu0 %v6492
    %v6546 = vpop.f32.mrb[0].mxu0
    %v6547 = vadd.f32 %v6454, %v6546
    %v6548 = vpop.f32.mrb[0].mxu0
    %v6549 = vadd.f32 %v6454, %v6548
    %v6550 = vpop.f32.mrb[0].mxu0
    %v6551 = vadd.f32 %v6459, %v6550
    %v6552 = vpop.f32.mrb[0].mxu0
    %v6553 = vadd.f32 %v6459, %v6552
    %6554 = vmatprep.mubr.bf16.mxu0 0
    %6555 = vmatmul.mubr.bf16.gmra.mrb[0].mxu0 %v6495
    %v6556 = vpop.f32.mrb[0].mxu0
    %v6557 = vadd.f32 %v6464, %v6556
    %v6558 = vpop.f32.mrb[0].mxu0
    %v6559 = vadd.f32 %v6464, %v6558
    %v6560 = vpop.f32.mrb[0].mxu0
    %v6561 = vpop.f32.mrb[0].mxu0
    %6562 = vdwg.mxu0
    %6563 = vmatprep.subr.bf16.mxu0 %v6510
    %6564 = vmatpush1.bf16.msra.mxu0 %v6507
    %6565 = vmatprep.subr.bf16.mxu0 0
    %6566 = vmatpush1.bf16.msra.mxu0 0
    %6567 = vmatprep.subr.bf16.mxu0 0
    %6568 = vmatpush1.bf16.msra.mxu0 0
    %6569 = vmatprep.subr.bf16.mxu0 0
    %6570 = vmatpush1.bf16.msra.mxu0 0
    %6571 = vmatprep.subr.bf16.mxu0 0
    %6572 = vmatpush1.bf16.msra.mxu0 0
    %6573 = vmatprep.subr.bf16.mxu0 0
    %6574 = vmatpush1.bf16.msra.mxu0 0
    %6575 = vmatprep.subr.bf16.mxu0 0
    %6576 = vmatpush1.bf16.msra.mxu0 0
    %6577 = vmatprep.subr.bf16.mxu0 0
    %6578 = vmatpush1.bf16.msra.mxu0 0
    %6579 = vmatprep.subr.bf16.mxu0 0
    %6580 = vmatpush1.bf16.msra.mxu0 0
    %6581 = vmatprep.subr.bf16.mxu0 0
    %6582 = vmatpush1.bf16.msra.mxu0 0
    %6583 = vmatprep.subr.bf16.mxu0 0
    %6584 = vmatpush1.bf16.msra.mxu0 0
    %6585 = vmatprep.subr.bf16.mxu0 0
    %6586 = vmatpush1.bf16.msra.mxu0 0
    %6587 = vmatprep.subr.bf16.mxu0 0
    %6588 = vmatpush1.bf16.msra.mxu0 0
    %6589 = vmatprep.subr.bf16.mxu0 0
    %6590 = vmatpush1.bf16.msra.mxu0 0
    %6591 = vmatprep.subr.bf16.mxu0 0
    %6592 = vmatpush1.bf16.msra.mxu0 0
    %6593 = vmatprep.subr.bf16.mxu0 0
    %6594 = vmatpush1.bf16.msra.mxu0 0
    %6595 = vmatprep.mubr.bf16.mxu0 0
    %6596 = vmatmul.mubr.bf16.gmra.mrb[0].mxu0 %v6492
    %v6597 = vpop.f32.mrb[0].mxu0
    %v6598 = vadd.f32 %v6454, %v6597
    %v6599 = vpop.f32.mrb[0].mxu0
    %v6600 = vadd.f32 %v6454, %v6599
    %v6601 = vpop.f32.mrb[0].mxu0
    %v6602 = vadd.f32 %v6459, %v6601
    %v6603 = vpop.f32.mrb[0].mxu0
    %v6604 = vadd.f32 %v6459, %v6603
    %6605 = vmatprep.mubr.bf16.mxu0 0
    %6606 = vmatmul.mubr.bf16.gmra.mrb[0].mxu0 %v6495
    %v6607 = vpop.f32.mrb[0].mxu0
    %v6608 = vadd.f32 %v6464, %v6607
    %v6609 = vpop.f32.mrb[0].mxu0
    %v6610 = vadd.f32 %v6464, %v6609
    %v6611 = vpop.f32.mrb[0].mxu0
    %v6612 = vpop.f32.mrb[0].mxu0
    %6613 = vdwg.mxu0
    %v6614 = vmax.f32 %v6547, 0.0
    %v6615 = vmax.f32 %v6549, 0.0
    %v6616 = vmax.f32 %v6598, 0.0
    %v6617 = vmax.f32 %v6600, 0.0
    %v6618 = vmax.f32 %v6551, 0.0
    %v6619 = vmax.f32 %v6553, 0.0
    %v6620 = vmax.f32 %v6602, 0.0
    %v6621 = vmax.f32 %v6604, 0.0
    %v6622 = vmax.f32 %v6557, 0.0
    %v6623 = vmax.f32 %v6559, 0.0
    %v6624 = vmax.f32 %v6608, 0.0
    %v6625 = vmax.f32 %v6610, 0.0
    %v6626 = vld [vmem:[%s14] sm:$0xff]
    %v6627 = vld [vmem:[%s14 + $0x8] sm:$0xff]
    %v6628 = vld [vmem:[%s14 + $0x10] sm:$0x3]
    %6630 = vset.pattern.permute.xlu0 0
    %6631 = vperm.xlu0 %6630, %v6626
    %v6632 = vpop.permute.xlu0 %6631
    %6635 = vset.pattern.permute.xlu0 0
    %6636 = vperm.xlu0 %6635, %v6627
    %v6637 = vpop.permute.xlu0 %6636
    %6640 = vset.pattern.permute.xlu0 0
    %6641 = vperm.xlu0 %6640, %v6628
    %v6642 = vpop.permute.xlu0 %6641
    %v6644 = vmul.f32 %v6614, %v6632
    %v6645 = vmul.f32 %v6615, %v6632
    %v6646 = vmul.f32 %v6616, %v6632
    %v6647 = vmul.f32 %v6617, %v6632
    %v6648 = vmul.f32 %v6618, %v6637
    %v6649 = vmul.f32 %v6619, %v6637
    %v6650 = vmul.f32 %v6620, %v6637
    %v6651 = vmul.f32 %v6621, %v6637
    %v6652 = vmul.f32 %v6622, %v6642
    %v6653 = vmul.f32 %v6623, %v6642
    %v6654 = vmul.f32 %v6624, %v6642
    %v6655 = vmul.f32 %v6625, %v6642
    %v6656 = vld [vmem:[%s15] sm:$0xff]
    %v6657 = vld [vmem:[%s15 + $0x8] sm:$0xff]
    %v6658 = vld [vmem:[%s15 + $0x10] sm:$0x3]
    %6660 = vset.pattern.permute.xlu0 0
    %6661 = vperm.xlu0 %6660, %v6656
    %v6662 = vpop.permute.xlu0 %6661
    %6665 = vset.pattern.permute.xlu0 0
    %6666 = vperm.xlu0 %6665, %v6657
    %v6667 = vpop.permute.xlu0 %6666
    %6670 = vset.pattern.permute.xlu0 0
    %6671 = vperm.xlu0 %6670, %v6658
    %v6672 = vpop.permute.xlu0 %6671
    %v6674 = vadd.f32 %v6644, %v6662
    %v6675 = vadd.f32 %v6645, %v6662
    %v6676 = vadd.f32 %v6646, %v6662
    %v6677 = vadd.f32 %v6647, %v6662
    %v6678 = vadd.f32 %v6648, %v6667
    %v6679 = vadd.f32 %v6649, %v6667
    %v6680 = vadd.f32 %v6650, %v6667
    %v6681 = vadd.f32 %v6651, %v6667
    %v6682 = vadd.f32 %v6652, %v6672
    %v6683 = vadd.f32 %v6653, %v6672
    %v6684 = vadd.f32 %v6654, %v6672
    %v6685 = vadd.f32 %v6655, %v6672
    %s6686 = scalar_lea.vmem %s1, 32
    %v6687 = vld [vmem:[%s6686] sm:$0xff]
    %v6688 = vld [vmem:[%s6686 + $0x8] sm:$0xff]
    %v6689 = vld [vmem:[%s6686 + $0x10] sm:$0x11]
    %v6690 = vld [vmem:[%s6686 + $0x18] sm:$0x11]
    %v6695 = vunpack.c.l.b16 %v6687
    %v6696 = vunpack.c.h.b16 %v6687
    %v6697 = vunpack.c.l.b16 %v6688
    %v6698 = vunpack.c.h.b16 %v6688
    %v6699 = vunpack.c.l.b16 %v6689
    %v6700 = vunpack.c.h.b16 %v6689
    %v6701 = vunpack.c.l.b16 %v6690
    %v6702 = vunpack.c.h.b16 %v6690
    %v6703 = vpack.c.b16 %v6699, %v6695
    %v6704 = vpack.c.b16 %v6700, %v6696
    %v6705 = vpack.c.b16 %v6701, %v6697
    %v6706 = vpack.c.b16 %v6702, %v6698
    %v6708 = vand.u32 %v6703, %v6499
    %v6711 = vand.u32 %v6704, %v6499
    %v6714 = vand.u32 %v6705, %v6499
    %v6717 = vand.u32 %v6706, %v6499
    %6719 = vmatprep.subr.bf16.mxu0 %v6711
    %6720 = vmatpush1.bf16.msra.mxu0 %v6708
    %6721 = vmatprep.subr.bf16.mxu0 0
    %6722 = vmatpush1.bf16.msra.mxu0 0
    %6723 = vmatprep.subr.bf16.mxu0 0
    %6724 = vmatpush1.bf16.msra.mxu0 0
    %6725 = vmatprep.subr.bf16.mxu0 0
    %6726 = vmatpush1.bf16.msra.mxu0 0
    %6727 = vmatprep.subr.bf16.mxu0 0
    %6728 = vmatpush1.bf16.msra.mxu0 0
    %6729 = vmatprep.subr.bf16.mxu0 0
    %6730 = vmatpush1.bf16.msra.mxu0 0
    %6731 = vmatprep.subr.bf16.mxu0 0
    %6732 = vmatpush1.bf16.msra.mxu0 0
    %6733 = vmatprep.subr.bf16.mxu0 0
    %6734 = vmatpush1.bf16.msra.mxu0 0
    %6735 = vmatprep.subr.bf16.mxu0 0
    %6736 = vmatpush1.bf16.msra.mxu0 0
    %6737 = vmatprep.subr.bf16.mxu0 0
    %6738 = vmatpush1.bf16.msra.mxu0 0
    %6739 = vmatprep.subr.bf16.mxu0 0
    %6740 = vmatpush1.bf16.msra.mxu0 0
    %6741 = vmatprep.subr.bf16.mxu0 0
    %6742 = vmatpush1.bf16.msra.mxu0 0
    %6743 = vmatprep.subr.bf16.mxu0 0
    %6744 = vmatpush1.bf16.msra.mxu0 0
    %6745 = vmatprep.subr.bf16.mxu0 0
    %6746 = vmatpush1.bf16.msra.mxu0 0
    %6747 = vmatprep.subr.bf16.mxu0 0
    %6748 = vmatpush1.bf16.msra.mxu0 0
    %6749 = vmatprep.subr.bf16.mxu0 0
    %6750 = vmatpush1.bf16.msra.mxu0 0
    %6751 = vmatprep.mubr.bf16.mxu0 0
    %6752 = vmatmul.mubr.bf16.gmra.mrb[0].mxu0 %v6492
    %v6753 = vpop.f32.mrb[0].mxu0
    %v6754 = vadd.f32 %v6454, %v6753
    %v6755 = vpop.f32.mrb[0].mxu0
    %v6756 = vadd.f32 %v6454, %v6755
    %v6757 = vpop.f32.mrb[0].mxu0
    %v6758 = vadd.f32 %v6459, %v6757
    %v6759 = vpop.f32.mrb[0].mxu0
    %v6760 = vadd.f32 %v6459, %v6759
    %6761 = vmatprep.mubr.bf16.mxu0 0
    %6762 = vmatmul.mubr.bf16.gmra.mrb[0].mxu0 %v6495
    %v6763 = vpop.f32.mrb[0].mxu0
    %v6764 = vadd.f32 %v6464, %v6763
    %v6765 = vpop.f32.mrb[0].mxu0
    %v6766 = vadd.f32 %v6464, %v6765
    %v6767 = vpop.f32.mrb[0].mxu0
    %v6768 = vpop.f32.mrb[0].mxu0
    %6769 = vdwg.mxu0
    %6770 = vmatprep.subr.bf16.mxu0 %v6717
    %6771 = vmatpush1.bf16.msra.mxu0 %v6714
    %6772 = vmatprep.subr.bf16.mxu0 0
    %6773 = vmatpush1.bf16.msra.mxu0 0
    %6774 = vmatprep.subr.bf16.mxu0 0
    %6775 = vmatpush1.bf16.msra.mxu0 0
    %6776 = vmatprep.subr.bf16.mxu0 0
    %6777 = vmatpush1.bf16.msra.mxu0 0
    %6778 = vmatprep.subr.bf16.mxu0 0
    %6779 = vmatpush1.bf16.msra.mxu0 0
    %6780 = vmatprep.subr.bf16.mxu0 0
    %6781 = vmatpush1.bf16.msra.mxu0 0
    %6782 = vmatprep.subr.bf16.mxu0 0
    %6783 = vmatpush1.bf16.msra.mxu0 0
    %6784 = vmatprep.subr.bf16.mxu0 0
    %6785 = vmatpush1.bf16.msra.mxu0 0
    %6786 = vmatprep.subr.bf16.mxu0 0
    %6787 = vmatpush1.bf16.msra.mxu0 0
    %6788 = vmatprep.subr.bf16.mxu0 0
    %6789 = vmatpush1.bf16.msra.mxu0 0
    %6790 = vmatprep.subr.bf16.mxu0 0
    %6791 = vmatpush1.bf16.msra.mxu0 0
    %6792 = vmatprep.subr.bf16.mxu0 0
    %6793 = vmatpush1.bf16.msra.mxu0 0
    %6794 = vmatprep.subr.bf16.mxu0 0
    %6795 = vmatpush1.bf16.msra.mxu0 0
    %6796 = vmatprep.subr.bf16.mxu0 0
    %6797 = vmatpush1.bf16.msra.mxu0 0
    %6798 = vmatprep.subr.bf16.mxu0 0
    %6799 = vmatpush1.bf16.msra.mxu0 0
    %6800 = vmatprep.subr.bf16.mxu0 0
    %6801 = vmatpush1.bf16.msra.mxu0 0
    %6802 = vmatprep.mubr.bf16.mxu0 0
    %6803 = vmatmul.mubr.bf16.gmra.mrb[0].mxu0 %v6492
    %v6804 = vpop.f32.mrb[0].mxu0
    %v6805 = vadd.f32 %v6454, %v6804
    %v6806 = vpop.f32.mrb[0].mxu0
    %v6807 = vadd.f32 %v6454, %v6806
    %v6808 = vpop.f32.mrb[0].mxu0
    %v6809 = vadd.f32 %v6459, %v6808
    %v6810 = vpop.f32.mrb[0].mxu0
    %v6811 = vadd.f32 %v6459, %v6810
    %6812 = vmatprep.mubr.bf16.mxu0 0
    %6813 = vmatmul.mubr.bf16.gmra.mrb[0].mxu0 %v6495
    %v6814 = vpop.f32.mrb[0].mxu0
    %v6815 = vadd.f32 %v6464, %v6814
    %v6816 = vpop.f32.mrb[0].mxu0
    %v6817 = vadd.f32 %v6464, %v6816
    %v6818 = vpop.f32.mrb[0].mxu0
    %v6819 = vpop.f32.mrb[0].mxu0
    %6820 = vdwg.mxu0
    %v6821 = vmax.f32 %v6754, 0.0
    %v6822 = vmax.f32 %v6756, 0.0
    %v6823 = vmax.f32 %v6805, 0.0
    %v6824 = vmax.f32 %v6807, 0.0
    %v6825 = vmax.f32 %v6758, 0.0
    %v6826 = vmax.f32 %v6760, 0.0
    %v6827 = vmax.f32 %v6809, 0.0
    %v6828 = vmax.f32 %v6811, 0.0
    %v6829 = vmax.f32 %v6764, 0.0
    %v6830 = vmax.f32 %v6766, 0.0
    %v6831 = vmax.f32 %v6815, 0.0
    %v6832 = vmax.f32 %v6817, 0.0
    %v6833 = vmul.f32 %v6821, %v6632
    %v6834 = vmul.f32 %v6822, %v6632
    %v6835 = vmul.f32 %v6823, %v6632
    %v6836 = vmul.f32 %v6824, %v6632
    %v6837 = vmul.f32 %v6825, %v6637
    %v6838 = vmul.f32 %v6826, %v6637
    %v6839 = vmul.f32 %v6827, %v6637
    %v6840 = vmul.f32 %v6828, %v6637
    %v6841 = vmul.f32 %v6829, %v6642
    %v6842 = vmul.f32 %v6830, %v6642
    %v6843 = vmul.f32 %v6831, %v6642
    %v6844 = vmul.f32 %v6832, %v6642
    %v6845 = vadd.f32 %v6833, %v6662
    %v6846 = vadd.f32 %v6834, %v6662
    %v6847 = vadd.f32 %v6835, %v6662
    %v6848 = vadd.f32 %v6836, %v6662
    %v6849 = vadd.f32 %v6837, %v6667
    %v6850 = vadd.f32 %v6838, %v6667
    %v6851 = vadd.f32 %v6839, %v6667
    %v6852 = vadd.f32 %v6840, %v6667
    %v6853 = vadd.f32 %v6841, %v6672
    %v6854 = vadd.f32 %v6842, %v6672
    %v6855 = vadd.f32 %v6843, %v6672
    %v6856 = vadd.f32 %v6844, %v6672
    %v6857 = vmax.f32 %v6674, %v6845
    %v6858 = vmax.f32 %v6675, %v6846
    %v6859 = vmax.f32 %v6676, %v6847
    %v6860 = vmax.f32 %v6677, %v6848
    %v6861 = vmax.f32 %v6678, %v6849
    %v6862 = vmax.f32 %v6679, %v6850
    %v6863 = vmax.f32 %v6680, %v6851
    %v6864 = vmax.f32 %v6681, %v6852
    %v6865 = vmax.f32 %v6682, %v6853
    %v6866 = vmax.f32 %v6683, %v6854
    %v6867 = vmax.f32 %v6684, %v6855
    %v6868 = vmax.f32 %v6685, %v6856
    %s6869 = scalar_lea.vmem %s1, 64
    %v6870 = vld [vmem:[%s6869] sm:$0xff]
    %v6871 = vld [vmem:[%s6869 + $0x8] sm:$0xff]
    %v6872 = vld [vmem:[%s6869 + $0x10] sm:$0x11]
    %v6873 = vld [vmem:[%s6869 + $0x18] sm:$0x11]
    %v6878 = vunpack.c.l.b16 %v6870
    %v6879 = vunpack.c.h.b16 %v6870
    %v6880 = vunpack.c.l.b16 %v6871
    %v6881 = vunpack.c.h.b16 %v6871
    %v6882 = vunpack.c.l.b16 %v6872
    %v6883 = vunpack.c.h.b16 %v6872
    %v6884 = vunpack.c.l.b16 %v6873
    %v6885 = vunpack.c.h.b16 %v6873
    %v6886 = vpack.c.b16 %v6882, %v6878
    %v6887 = vpack.c.b16 %v6883, %v6879
    %v6888 = vpack.c.b16 %v6884, %v6880
    %v6889 = vpack.c.b16 %v6885, %v6881
    %v6891 = vand.u32 %v6886, %v6499
    %v6894 = vand.u32 %v6887, %v6499
    %v6897 = vand.u32 %v6888, %v6499
    %v6900 = vand.u32 %v6889, %v6499
    %6902 = vmatprep.subr.bf16.mxu0 %v6894
    %6903 = vmatpush1.bf16.msra.mxu0 %v6891
    %6904 = vmatprep.subr.bf16.mxu0 0
    %6905 = vmatpush1.bf16.msra.mxu0 0
    %6906 = vmatprep.subr.bf16.mxu0 0
    %6907 = vmatpush1.bf16.msra.mxu0 0
    %6908 = vmatprep.subr.bf16.mxu0 0
    %6909 = vmatpush1.bf16.msra.mxu0 0
    %6910 = vmatprep.subr.bf16.mxu0 0
    %6911 = vmatpush1.bf16.msra.mxu0 0
    %6912 = vmatprep.subr.bf16.mxu0 0
    %6913 = vmatpush1.bf16.msra.mxu0 0
    %6914 = vmatprep.subr.bf16.mxu0 0
    %6915 = vmatpush1.bf16.msra.mxu0 0
    %6916 = vmatprep.subr.bf16.mxu0 0
    %6917 = vmatpush1.bf16.msra.mxu0 0
    %6918 = vmatprep.subr.bf16.mxu0 0
    %6919 = vmatpush1.bf16.msra.mxu0 0
    %6920 = vmatprep.subr.bf16.mxu0 0
    %6921 = vmatpush1.bf16.msra.mxu0 0
    %6922 = vmatprep.subr.bf16.mxu0 0
    %6923 = vmatpush1.bf16.msra.mxu0 0
    %6924 = vmatprep.subr.bf16.mxu0 0
    %6925 = vmatpush1.bf16.msra.mxu0 0
    %6926 = vmatprep.subr.bf16.mxu0 0
    %6927 = vmatpush1.bf16.msra.mxu0 0
    %6928 = vmatprep.subr.bf16.mxu0 0
    %6929 = vmatpush1.bf16.msra.mxu0 0
    %6930 = vmatprep.subr.bf16.mxu0 0
    %6931 = vmatpush1.bf16.msra.mxu0 0
    %6932 = vmatprep.subr.bf16.mxu0 0
    %6933 = vmatpush1.bf16.msra.mxu0 0
    %6934 = vmatprep.mubr.bf16.mxu0 0
    %6935 = vmatmul.mubr.bf16.gmra.mrb[0].mxu0 %v6492
    %v6936 = vpop.f32.mrb[0].mxu0
    %v6937 = vadd.f32 %v6454, %v6936
    %v6938 = vpop.f32.mrb[0].mxu0
    %v6939 = vadd.f32 %v6454, %v6938
    %v6940 = vpop.f32.mrb[0].mxu0
    %v6941 = vadd.f32 %v6459, %v6940
    %v6942 = vpop.f32.mrb[0].mxu0
    %v6943 = vadd.f32 %v6459, %v6942
    %6944 = vmatprep.mubr.bf16.mxu0 0
    %6945 = vmatmul.mubr.bf16.gmra.mrb[0].mxu0 %v6495
    %v6946 = vpop.f32.mrb[0].mxu0
    %v6947 = vadd.f32 %v6464, %v6946
    %v6948 = vpop.f32.mrb[0].mxu0
    %v6949 = vadd.f32 %v6464, %v6948
    %v6950 = vpop.f32.mrb[0].mxu0
    %v6951 = vpop.f32.mrb[0].mxu0
    %6952 = vdwg.mxu0
    %6953 = vmatprep.subr.bf16.mxu0 %v6900
    %6954 = vmatpush1.bf16.msra.mxu0 %v6897
    %6955 = vmatprep.subr.bf16.mxu0 0
    %6956 = vmatpush1.bf16.msra.mxu0 0
    %6957 = vmatprep.subr.bf16.mxu0 0
    %6958 = vmatpush1.bf16.msra.mxu0 0
    %6959 = vmatprep.subr.bf16.mxu0 0
    %6960 = vmatpush1.bf16.msra.mxu0 0
    %6961 = vmatprep.subr.bf16.mxu0 0
    %6962 = vmatpush1.bf16.msra.mxu0 0
    %6963 = vmatprep.subr.bf16.mxu0 0
    %6964 = vmatpush1.bf16.msra.mxu0 0
    %6965 = vmatprep.subr.bf16.mxu0 0
    %6966 = vmatpush1.bf16.msra.mxu0 0
    %6967 = vmatprep.subr.bf16.mxu0 0
    %6968 = vmatpush1.bf16.msra.mxu0 0
    %6969 = vmatprep.subr.bf16.mxu0 0
    %6970 = vmatpush1.bf16.msra.mxu0 0
    %6971 = vmatprep.subr.bf16.mxu0 0
    %6972 = vmatpush1.bf16.msra.mxu0 0
    %6973 = vmatprep.subr.bf16.mxu0 0
    %6974 = vmatpush1.bf16.msra.mxu0 0
    %6975 = vmatprep.subr.bf16.mxu0 0
    %6976 = vmatpush1.bf16.msra.mxu0 0
    %6977 = vmatprep.subr.bf16.mxu0 0
    %6978 = vmatpush1.bf16.msra.mxu0 0
    %6979 = vmatprep.subr.bf16.mxu0 0
    %6980 = vmatpush1.bf16.msra.mxu0 0
    %6981 = vmatprep.subr.bf16.mxu0 0
    %6982 = vmatpush1.bf16.msra.mxu0 0
    %6983 = vmatprep.subr.bf16.mxu0 0
    %6984 = vmatpush1.bf16.msra.mxu0 0
    %6985 = vmatprep.mubr.bf16.mxu0 0
    %6986 = vmatmul.mubr.bf16.gmra.mrb[0].mxu0 %v6492
    %v6987 = vpop.f32.mrb[0].mxu0
    %v6988 = vadd.f32 %v6454, %v6987
    %v6989 = vpop.f32.mrb[0].mxu0
    %v6990 = vadd.f32 %v6454, %v6989
    %v6991 = vpop.f32.mrb[0].mxu0
    %v6992 = vadd.f32 %v6459, %v6991
    %v6993 = vpop.f32.mrb[0].mxu0
    %v6994 = vadd.f32 %v6459, %v6993
    %6995 = vmatprep.mubr.bf16.mxu0 0
    %6996 = vmatmul.mubr.bf16.gmra.mrb[0].mxu0 %v6495
    %v6997 = vpop.f32.mrb[0].mxu0
    %v6998 = vadd.f32 %v6464, %v6997
    %v6999 = vpop.f32.mrb[0].mxu0
    %v7000 = vadd.f32 %v6464, %v6999
    %v7001 = vpop.f32.mrb[0].mxu0
    %v7002 = vpop.f32.mrb[0].mxu0
    %7003 = vdwg.mxu0
    %v7004 = vmax.f32 %v6937, 0.0
    %v7005 = vmax.f32 %v6939, 0.0
    %v7006 = vmax.f32 %v6988, 0.0
    %v7007 = vmax.f32 %v6990, 0.0
    %v7008 = vmax.f32 %v6941, 0.0
    %v7009 = vmax.f32 %v6943, 0.0
    %v7010 = vmax.f32 %v6992, 0.0
    %v7011 = vmax.f32 %v6994, 0.0
    %v7012 = vmax.f32 %v6947, 0.0
    %v7013 = vmax.f32 %v6949, 0.0
    %v7014 = vmax.f32 %v6998, 0.0
    %v7015 = vmax.f32 %v7000, 0.0
    %v7016 = vmul.f32 %v7004, %v6632
    %v7017 = vmul.f32 %v7005, %v6632
    %v7018 = vmul.f32 %v7006, %v6632
    %v7019 = vmul.f32 %v7007, %v6632
    %v7020 = vmul.f32 %v7008, %v6637
    %v7021 = vmul.f32 %v7009, %v6637
    %v7022 = vmul.f32 %v7010, %v6637
    %v7023 = vmul.f32 %v7011, %v6637
    %v7024 = vmul.f32 %v7012, %v6642
    %v7025 = vmul.f32 %v7013, %v6642
    %v7026 = vmul.f32 %v7014, %v6642
    %v7027 = vmul.f32 %v7015, %v6642
    %v7028 = vadd.f32 %v7016, %v6662
    %v7029 = vadd.f32 %v7017, %v6662
    %v7030 = vadd.f32 %v7018, %v6662
    %v7031 = vadd.f32 %v7019, %v6662
    %v7032 = vadd.f32 %v7020, %v6667
    %v7033 = vadd.f32 %v7021, %v6667
    %v7034 = vadd.f32 %v7022, %v6667
    %v7035 = vadd.f32 %v7023, %v6667
    %v7036 = vadd.f32 %v7024, %v6672
    %v7037 = vadd.f32 %v7025, %v6672
    %v7038 = vadd.f32 %v7026, %v6672
    %v7039 = vadd.f32 %v7027, %v6672
    %v7040 = vmax.f32 %v6857, %v7028
    %v7041 = vmax.f32 %v6858, %v7029
    %v7042 = vmax.f32 %v6859, %v7030
    %v7043 = vmax.f32 %v6860, %v7031
    %v7044 = vmax.f32 %v6861, %v7032
    %v7045 = vmax.f32 %v6862, %v7033
    %v7046 = vmax.f32 %v6863, %v7034
    %v7047 = vmax.f32 %v6864, %v7035
    %v7048 = vmax.f32 %v6865, %v7036
    %v7049 = vmax.f32 %v6866, %v7037
    %v7050 = vmax.f32 %v6867, %v7038
    %v7051 = vmax.f32 %v6868, %v7039
    %s7052 = scalar_lea.vmem %s1, 96
    %v7053 = vld [vmem:[%s7052] sm:$0xff]
    %v7054 = vld [vmem:[%s7052 + $0x8] sm:$0xff]
    %v7055 = vld [vmem:[%s7052 + $0x10] sm:$0x11]
    %v7056 = vld [vmem:[%s7052 + $0x18] sm:$0x11]
    %v7061 = vunpack.c.l.b16 %v7053
    %v7062 = vunpack.c.h.b16 %v7053
    %v7063 = vunpack.c.l.b16 %v7054
    %v7064 = vunpack.c.h.b16 %v7054
    %v7065 = vunpack.c.l.b16 %v7055
    %v7066 = vunpack.c.h.b16 %v7055
    %v7067 = vunpack.c.l.b16 %v7056
    %v7068 = vunpack.c.h.b16 %v7056
    %v7069 = vpack.c.b16 %v7065, %v7061
    %v7070 = vpack.c.b16 %v7066, %v7062
    %v7071 = vpack.c.b16 %v7067, %v7063
    %v7072 = vpack.c.b16 %v7068, %v7064
    %v7074 = vand.u32 %v7069, %v6499
    %v7077 = vand.u32 %v7070, %v6499
    %v7080 = vand.u32 %v7071, %v6499
    %v7083 = vand.u32 %v7072, %v6499
    %7085 = vmatprep.subr.bf16.mxu0 %v7077
    %7086 = vmatpush1.bf16.msra.mxu0 %v7074
    %7087 = vmatprep.subr.bf16.mxu0 0
    %7088 = vmatpush1.bf16.msra.mxu0 0
    %7089 = vmatprep.subr.bf16.mxu0 0
    %7090 = vmatpush1.bf16.msra.mxu0 0
    %7091 = vmatprep.subr.bf16.mxu0 0
    %7092 = vmatpush1.bf16.msra.mxu0 0
    %7093 = vmatprep.subr.bf16.mxu0 0
    %7094 = vmatpush1.bf16.msra.mxu0 0
    %7095 = vmatprep.subr.bf16.mxu0 0
    %7096 = vmatpush1.bf16.msra.mxu0 0
    %7097 = vmatprep.subr.bf16.mxu0 0
    %7098 = vmatpush1.bf16.msra.mxu0 0
    %7099 = vmatprep.subr.bf16.mxu0 0
    %7100 = vmatpush1.bf16.msra.mxu0 0
    %7101 = vmatprep.subr.bf16.mxu0 0
    %7102 = vmatpush1.bf16.msra.mxu0 0
    %7103 = vmatprep.subr.bf16.mxu0 0
    %7104 = vmatpush1.bf16.msra.mxu0 0
    %7105 = vmatprep.subr.bf16.mxu0 0
    %7106 = vmatpush1.bf16.msra.mxu0 0
    %7107 = vmatprep.subr.bf16.mxu0 0
    %7108 = vmatpush1.bf16.msra.mxu0 0
    %7109 = vmatprep.subr.bf16.mxu0 0
    %7110 = vmatpush1.bf16.msra.mxu0 0
    %7111 = vmatprep.subr.bf16.mxu0 0
    %7112 = vmatpush1.bf16.msra.mxu0 0
    %7113 = vmatprep.subr.bf16.mxu0 0
    %7114 = vmatpush1.bf16.msra.mxu0 0
    %7115 = vmatprep.subr.bf16.mxu0 0
    %7116 = vmatpush1.bf16.msra.mxu0 0
    %7117 = vmatprep.mubr.bf16.mxu0 0
    %7118 = vmatmul.mubr.bf16.gmra.mrb[0].mxu0 %v6492
    %v7119 = vpop.f32.mrb[0].mxu0
    %v7120 = vadd.f32 %v6454, %v7119
    %v7121 = vpop.f32.mrb[0].mxu0
    %v7122 = vadd.f32 %v6454, %v7121
    %v7123 = vpop.f32.mrb[0].mxu0
    %v7124 = vadd.f32 %v6459, %v7123
    %v7125 = vpop.f32.mrb[0].mxu0
    %v7126 = vadd.f32 %v6459, %v7125
    %7127 = vmatprep.mubr.bf16.mxu0 0
    %7128 = vmatmul.mubr.bf16.gmra.mrb[0].mxu0 %v6495
    %v7129 = vpop.f32.mrb[0].mxu0
    %v7130 = vadd.f32 %v6464, %v7129
    %v7131 = vpop.f32.mrb[0].mxu0
    %v7132 = vadd.f32 %v6464, %v7131
    %v7133 = vpop.f32.mrb[0].mxu0
    %v7134 = vpop.f32.mrb[0].mxu0
    %7135 = vdwg.mxu0
    %7136 = vmatprep.subr.bf16.mxu0 %v7083
    %7137 = vmatpush1.bf16.msra.mxu0 %v7080
    %7138 = vmatprep.subr.bf16.mxu0 0
    %7139 = vmatpush1.bf16.msra.mxu0 0
    %7140 = vmatprep.subr.bf16.mxu0 0
    %7141 = vmatpush1.bf16.msra.mxu0 0
    %7142 = vmatprep.subr.bf16.mxu0 0
    %7143 = vmatpush1.bf16.msra.mxu0 0
    %7144 = vmatprep.subr.bf16.mxu0 0
    %7145 = vmatpush1.bf16.msra.mxu0 0
    %7146 = vmatprep.subr.bf16.mxu0 0
    %7147 = vmatpush1.bf16.msra.mxu0 0
    %7148 = vmatprep.subr.bf16.mxu0 0
    %7149 = vmatpush1.bf16.msra.mxu0 0
    %7150 = vmatprep.subr.bf16.mxu0 0
    %7151 = vmatpush1.bf16.msra.mxu0 0
    %7152 = vmatprep.subr.bf16.mxu0 0
    %7153 = vmatpush1.bf16.msra.mxu0 0
    %7154 = vmatprep.subr.bf16.mxu0 0
    %7155 = vmatpush1.bf16.msra.mxu0 0
    %7156 = vmatprep.subr.bf16.mxu0 0
    %7157 = vmatpush1.bf16.msra.mxu0 0
    %7158 = vmatprep.subr.bf16.mxu0 0
    %7159 = vmatpush1.bf16.msra.mxu0 0
    %7160 = vmatprep.subr.bf16.mxu0 0
    %7161 = vmatpush1.bf16.msra.mxu0 0
    %7162 = vmatprep.subr.bf16.mxu0 0
    %7163 = vmatpush1.bf16.msra.mxu0 0
    %7164 = vmatprep.subr.bf16.mxu0 0
    %7165 = vmatpush1.bf16.msra.mxu0 0
    %7166 = vmatprep.subr.bf16.mxu0 0
    %7167 = vmatpush1.bf16.msra.mxu0 0
    %7168 = vmatprep.mubr.bf16.mxu0 0
    %7169 = vmatmul.mubr.bf16.gmra.mrb[0].mxu0 %v6492
    %v7170 = vpop.f32.mrb[0].mxu0
    %v7171 = vadd.f32 %v6454, %v7170
    %v7172 = vpop.f32.mrb[0].mxu0
    %v7173 = vadd.f32 %v6454, %v7172
    %v7174 = vpop.f32.mrb[0].mxu0
    %v7175 = vadd.f32 %v6459, %v7174
    %v7176 = vpop.f32.mrb[0].mxu0
    %v7177 = vadd.f32 %v6459, %v7176
    %7178 = vmatprep.mubr.bf16.mxu0 0
    %7179 = vmatmul.mubr.bf16.gmra.mrb[0].mxu0 %v6495
    %v7180 = vpop.f32.mrb[0].mxu0
    %v7181 = vadd.f32 %v6464, %v7180
    %v7182 = vpop.f32.mrb[0].mxu0
    %v7183 = vadd.f32 %v6464, %v7182
    %v7184 = vpop.f32.mrb[0].mxu0
    %v7185 = vpop.f32.mrb[0].mxu0
    %7186 = vdwg.mxu0
    %v7187 = vmax.f32 %v7120, 0.0
    %v7188 = vmax.f32 %v7122, 0.0
    %v7189 = vmax.f32 %v7171, 0.0
    %v7190 = vmax.f32 %v7173, 0.0
    %v7191 = vmax.f32 %v7124, 0.0
    %v7192 = vmax.f32 %v7126, 0.0
    %v7193 = vmax.f32 %v7175, 0.0
    %v7194 = vmax.f32 %v7177, 0.0
    %v7195 = vmax.f32 %v7130, 0.0
    %v7196 = vmax.f32 %v7132, 0.0
    %v7197 = vmax.f32 %v7181, 0.0
    %v7198 = vmax.f32 %v7183, 0.0
    %v7199 = vmul.f32 %v7187, %v6632
    %v7200 = vmul.f32 %v7188, %v6632
    %v7201 = vmul.f32 %v7189, %v6632
    %v7202 = vmul.f32 %v7190, %v6632
    %v7203 = vmul.f32 %v7191, %v6637
    %v7204 = vmul.f32 %v7192, %v6637
    %v7205 = vmul.f32 %v7193, %v6637
    %v7206 = vmul.f32 %v7194, %v6637
    %v7207 = vmul.f32 %v7195, %v6642
    %v7208 = vmul.f32 %v7196, %v6642
    %v7209 = vmul.f32 %v7197, %v6642
    %v7210 = vmul.f32 %v7198, %v6642
    %v7211 = vadd.f32 %v7199, %v6662
    %v7212 = vadd.f32 %v7200, %v6662
    %v7213 = vadd.f32 %v7201, %v6662
    %v7214 = vadd.f32 %v7202, %v6662
    %v7215 = vadd.f32 %v7203, %v6667
    %v7216 = vadd.f32 %v7204, %v6667
    %v7217 = vadd.f32 %v7205, %v6667
    %v7218 = vadd.f32 %v7206, %v6667
    %v7219 = vadd.f32 %v7207, %v6672
    %v7220 = vadd.f32 %v7208, %v6672
    %v7221 = vadd.f32 %v7209, %v6672
    %v7222 = vadd.f32 %v7210, %v6672
    %v7223 = vmax.f32 %v7040, %v7211
    %v7224 = vmax.f32 %v7041, %v7212
    %v7225 = vmax.f32 %v7042, %v7213
    %v7226 = vmax.f32 %v7043, %v7214
    %v7227 = vmax.f32 %v7044, %v7215
    %v7228 = vmax.f32 %v7045, %v7216
    %v7229 = vmax.f32 %v7046, %v7217
    %v7230 = vmax.f32 %v7047, %v7218
    %v7231 = vmax.f32 %v7048, %v7219
    %v7232 = vmax.f32 %v7049, %v7220
    %v7233 = vmax.f32 %v7050, %v7221
    %v7234 = vmax.f32 %v7051, %v7222
    %vm7241 = vcmask 1041408
    %v7242 = vrot.slane %v7225, 6
    %v7243 = vrot.slane %v7226, 6
    %v7244 = vrot.slane %v7229, 6
    %v7245 = vsel %vm7241, %v7242, %v7244
    %v7246 = vrot.slane %v7230, 6
    %v7247 = vsel %vm7241, %v7243, %v7246
    %v7248 = vrot.slane %v7233, 6
    %v7249 = vsel %vm7241, %v7244, %v7248
    %v7250 = vrot.slane %v7234, 6
    %v7251 = vsel %vm7241, %v7246, %v7250
    %v7258 = vsel %vm7241, %v7231, %v7242
    %v7259 = vsel %vm7241, %v7232, %v7243
    %v7260 = vpack.c.bf16 %v7227, %v7223
    %v7261 = vpack.c.bf16 %v7228, %v7224
    %v7262 = vpack.c.bf16 %v7245, %v7258
    %v7263 = vpack.c.bf16 %v7247, %v7259
    %v7264 = vpack.c.bf16 %v7249, %v7249
    %v7265 = vpack.c.bf16 %v7251, %v7251
    %v7266 = vld [vmem:[%s16] sm:$0xff]
    %v7267 = vld [vmem:[%s16 + $0x8] sm:$0xff]
    %v7268 = vld [vmem:[%s16 + $0x10] sm:$0xff]
    %v7269 = vld [vmem:[%s16 + $0x18] sm:$0xff]
    %v7270 = vld [vmem:[%s16 + $0x20] sm:$0xff]
    %v7271 = vld [vmem:[%s16 + $0x28] sm:$0xff]
    %v7272 = vld [vmem:[%s16 + $0x30] sm:$0xff]
    %v7273 = vld [vmem:[%s16 + $0x38] sm:$0xf]
    %v7274 = vld [vmem:[%s16 + $0x3c] sm:$0xff]
    %v7275 = vld [vmem:[%s16 + $0x44] sm:$0xff]
    %v7276 = vld [vmem:[%s16 + $0x4c] sm:$0xff]
    %v7277 = vld [vmem:[%s16 + $0x54] sm:$0xff]
    %v7278 = vld [vmem:[%s16 + $0x5c] sm:$0xff]
    %v7279 = vld [vmem:[%s16 + $0x64] sm:$0xff]
    %v7280 = vld [vmem:[%s16 + $0x6c] sm:$0xff]
    %v7281 = vld [vmem:[%s16 + $0x74] sm:$0xf]
    %v7282 = vld [vmem:[%s16 + $0x78] sm:$0xff]
    %v7283 = vld [vmem:[%s16 + $0x80] sm:$0xff]
    %v7284 = vld [vmem:[%s16 + $0x88] sm:$0xff]
    %v7285 = vld [vmem:[%s16 + $0x90] sm:$0xff]
    %v7286 = vld [vmem:[%s16 + $0x98] sm:$0xff]
    %v7287 = vld [vmem:[%s16 + $0xa0] sm:$0xff]
    %v7288 = vld [vmem:[%s16 + $0xa8] sm:$0xff]
    %v7289 = vld [vmem:[%s16 + $0xb0] sm:$0xf]
    %v7290 = vld [vmem:[%s16 + $0xb4] sm:$0xff]
    %v7291 = vld [vmem:[%s16 + $0xbc] sm:$0xff]
    %v7292 = vld [vmem:[%s16 + $0xc4] sm:$0xff]
    %v7293 = vld [vmem:[%s16 + $0xcc] sm:$0xff]
    %v7294 = vld [vmem:[%s16 + $0xd4] sm:$0xff]
    %v7295 = vld [vmem:[%s16 + $0xdc] sm:$0xff]
    %v7296 = vld [vmem:[%s16 + $0xe4] sm:$0xff]
    %v7297 = vld [vmem:[%s16 + $0xec] sm:$0xf]
    %v7298 = vld [vmem:[%s16 + $0xf0] sm:$0xff]
    %v7299 = vld [vmem:[%s16 + $0xf8] sm:$0xff]
    %v7300 = vld [vmem:[%s16 + $0x100] sm:$0xff]
    %v7301 = vld [vmem:[%s16 + $0x108] sm:$0xff]
    %v7302 = vld [vmem:[%s16 + $0x110] sm:$0xff]
    %v7303 = vld [vmem:[%s16 + $0x118] sm:$0xff]
    %v7304 = vld [vmem:[%s16 + $0x120] sm:$0xff]
    %v7305 = vld [vmem:[%s16 + $0x128] sm:$0xf]
    %v7306 = vld [vmem:[%s16 + $0x12c] sm:$0xff]
    %v7307 = vld [vmem:[%s16 + $0x134] sm:$0xff]
    %v7308 = vld [vmem:[%s16 + $0x13c] sm:$0xff]
    %v7309 = vld [vmem:[%s16 + $0x144] sm:$0xff]
    %v7310 = vld [vmem:[%s16 + $0x14c] sm:$0xff]
    %v7311 = vld [vmem:[%s16 + $0x154] sm:$0xff]
    %v7312 = vld [vmem:[%s16 + $0x15c] sm:$0xff]
    %v7313 = vld [vmem:[%s16 + $0x164] sm:$0xf]
    %v7314 = vld [vmem:[%s16 + $0x168] sm:$0xff]
    %v7315 = vld [vmem:[%s16 + $0x170] sm:$0xff]
    %v7316 = vld [vmem:[%s16 + $0x178] sm:$0xff]
    %v7317 = vld [vmem:[%s16 + $0x180] sm:$0xff]
    %v7318 = vld [vmem:[%s16 + $0x188] sm:$0xff]
    %v7319 = vld [vmem:[%s16 + $0x190] sm:$0xff]
    %v7320 = vld [vmem:[%s16 + $0x198] sm:$0xff]
    %v7321 = vld [vmem:[%s16 + $0x1a0] sm:$0xf]
    %v7322 = vld [vmem:[%s16 + $0x1a4] sm:$0xff]
    %v7323 = vld [vmem:[%s16 + $0x1ac] sm:$0xff]
    %v7324 = vld [vmem:[%s16 + $0x1b4] sm:$0xff]
    %v7325 = vld [vmem:[%s16 + $0x1bc] sm:$0xff]
    %v7326 = vld [vmem:[%s16 + $0x1c4] sm:$0xff]
    %v7327 = vld [vmem:[%s16 + $0x1cc] sm:$0xff]
    %v7328 = vld [vmem:[%s16 + $0x1d4] sm:$0xff]
    %v7329 = vld [vmem:[%s16 + $0x1dc] sm:$0xf]
    %v7330 = vld [vmem:[%s16 + $0x1e0] sm:$0xff]
    %v7331 = vld [vmem:[%s16 + $0x1e8] sm:$0xff]
    %v7332 = vld [vmem:[%s16 + $0x1f0] sm:$0xff]
    %v7333 = vld [vmem:[%s16 + $0x1f8] sm:$0xff]
    %v7334 = vld [vmem:[%s16 + $0x200] sm:$0xff]
    %v7335 = vld [vmem:[%s16 + $0x208] sm:$0xff]
    %v7336 = vld [vmem:[%s16 + $0x210] sm:$0xff]
    %v7337 = vld [vmem:[%s16 + $0x218] sm:$0xf]
    %v7338 = vld [vmem:[%s16 + $0x21c] sm:$0xff]
    %v7339 = vld [vmem:[%s16 + $0x224] sm:$0xff]
    %v7340 = vld [vmem:[%s16 + $0x22c] sm:$0xff]
    %v7341 = vld [vmem:[%s16 + $0x234] sm:$0xff]
    %v7342 = vld [vmem:[%s16 + $0x23c] sm:$0xff]
    %v7343 = vld [vmem:[%s16 + $0x244] sm:$0xff]
    %v7344 = vld [vmem:[%s16 + $0x24c] sm:$0xff]
    %v7345 = vld [vmem:[%s16 + $0x254] sm:$0xf]
    %v7346 = vld [vmem:[%s16 + $0x258] sm:$0xff]
    %v7347 = vld [vmem:[%s16 + $0x260] sm:$0xff]
    %v7348 = vld [vmem:[%s16 + $0x268] sm:$0xff]
    %v7349 = vld [vmem:[%s16 + $0x270] sm:$0xff]
    %v7350 = vld [vmem:[%s16 + $0x278] sm:$0xff]
    %v7351 = vld [vmem:[%s16 + $0x280] sm:$0xff]
    %v7352 = vld [vmem:[%s16 + $0x288] sm:$0xff]
    %v7353 = vld [vmem:[%s16 + $0x290] sm:$0xf]
    %v7354 = vld [vmem:[%s16 + $0x294] sm:$0xff]
    %v7355 = vld [vmem:[%s16 + $0x29c] sm:$0xff]
    %v7356 = vld [vmem:[%s16 + $0x2a4] sm:$0xff]
    %v7357 = vld [vmem:[%s16 + $0x2ac] sm:$0xff]
    %v7358 = vld [vmem:[%s16 + $0x2b4] sm:$0xff]
    %v7359 = vld [vmem:[%s16 + $0x2bc] sm:$0xff]
    %v7360 = vld [vmem:[%s16 + $0x2c4] sm:$0xff]
    %v7361 = vld [vmem:[%s16 + $0x2cc] sm:$0xf]
    %v7362 = vld [vmem:[%s16 + $0x2d0] sm:$0xff]
    %v7363 = vld [vmem:[%s16 + $0x2d8] sm:$0xff]
    %v7364 = vld [vmem:[%s16 + $0x2e0] sm:$0xff]
    %v7365 = vld [vmem:[%s16 + $0x2e8] sm:$0xff]
    %v7366 = vld [vmem:[%s16 + $0x2f0] sm:$0xff]
    %v7367 = vld [vmem:[%s16 + $0x2f8] sm:$0xff]
    %v7368 = vld [vmem:[%s16 + $0x300] sm:$0xff]
    %v7369 = vld [vmem:[%s16 + $0x308] sm:$0xf]
    %v7370 = vld [vmem:[%s16 + $0x30c] sm:$0xff]
    %v7371 = vld [vmem:[%s16 + $0x314] sm:$0xff]
    %v7372 = vld [vmem:[%s16 + $0x31c] sm:$0xff]
    %v7373 = vld [vmem:[%s16 + $0x324] sm:$0xff]
    %v7374 = vld [vmem:[%s16 + $0x32c] sm:$0xff]
    %v7375 = vld [vmem:[%s16 + $0x334] sm:$0xff]
    %v7376 = vld [vmem:[%s16 + $0x33c] sm:$0xff]
    %v7377 = vld [vmem:[%s16 + $0x344] sm:$0xf]
    %v7378 = vld [vmem:[%s16 + $0x348] sm:$0xff]
    %v7379 = vld [vmem:[%s16 + $0x350] sm:$0xff]
    %v7380 = vld [vmem:[%s16 + $0x358] sm:$0xff]
    %v7381 = vld [vmem:[%s16 + $0x360] sm:$0xff]
    %v7382 = vld [vmem:[%s16 + $0x368] sm:$0xff]
    %v7383 = vld [vmem:[%s16 + $0x370] sm:$0xff]
    %v7384 = vld [vmem:[%s16 + $0x378] sm:$0xff]
    %v7385 = vld [vmem:[%s16 + $0x380] sm:$0xf]
    %v7386 = vld [vmem:[%s16 + $0x384] sm:$0xff]
    %v7387 = vld [vmem:[%s16 + $0x38c] sm:$0xff]
    %v7388 = vld [vmem:[%s16 + $0x394] sm:$0xff]
    %v7389 = vld [vmem:[%s16 + $0x39c] sm:$0xff]
    %v7390 = vld [vmem:[%s16 + $0x3a4] sm:$0xff]
    %v7391 = vld [vmem:[%s16 + $0x3ac] sm:$0xff]
    %v7392 = vld [vmem:[%s16 + $0x3b4] sm:$0xff]
    %v7393 = vld [vmem:[%s16 + $0x3bc] sm:$0xf]
    %v7394 = vld [vmem:[%s16 + $0x3c0] sm:$0xff]
    %v7395 = vld [vmem:[%s16 + $0x3c8] sm:$0xff]
    %v7396 = vld [vmem:[%s16 + $0x3d0] sm:$0xff]
    %v7397 = vld [vmem:[%s16 + $0x3d8] sm:$0xff]
    %v7398 = vld [vmem:[%s16 + $0x3e0] sm:$0xff]
    %v7399 = vld [vmem:[%s16 + $0x3e8] sm:$0xff]
    %v7400 = vld [vmem:[%s16 + $0x3f0] sm:$0xff]
    %v7401 = vld [vmem:[%s16 + $0x3f8] sm:$0xf]
    %v7402 = vld [vmem:[%s16 + $0x3fc] sm:$0xff]
    %v7403 = vld [vmem:[%s16 + $0x404] sm:$0xff]
    %v7404 = vld [vmem:[%s16 + $0x40c] sm:$0xff]
    %v7405 = vld [vmem:[%s16 + $0x414] sm:$0xff]
    %v7406 = vld [vmem:[%s16 + $0x41c] sm:$0xff]
    %v7407 = vld [vmem:[%s16 + $0x424] sm:$0xff]
    %v7408 = vld [vmem:[%s16 + $0x42c] sm:$0xff]
    %v7409 = vld [vmem:[%s16 + $0x434] sm:$0xf]
    %v7410 = vld [vmem:[%s16 + $0x438] sm:$0xff]
    %v7411 = vld [vmem:[%s16 + $0x440] sm:$0xff]
    %v7412 = vld [vmem:[%s16 + $0x448] sm:$0xff]
    %v7413 = vld [vmem:[%s16 + $0x450] sm:$0xff]
    %v7414 = vld [vmem:[%s16 + $0x458] sm:$0xff]
    %v7415 = vld [vmem:[%s16 + $0x460] sm:$0xff]
    %v7416 = vld [vmem:[%s16 + $0x468] sm:$0xff]
    %v7417 = vld [vmem:[%s16 + $0x470] sm:$0xf]
    %v7418 = vld [vmem:[%s16 + $0x474] sm:$0xff]
    %v7419 = vld [vmem:[%s16 + $0x47c] sm:$0xff]
    %v7420 = vld [vmem:[%s16 + $0x484] sm:$0xff]
    %v7421 = vld [vmem:[%s16 + $0x48c] sm:$0xff]
    %v7422 = vld [vmem:[%s16 + $0x494] sm:$0xff]
    %v7423 = vld [vmem:[%s16 + $0x49c] sm:$0xff]
    %v7424 = vld [vmem:[%s16 + $0x4a4] sm:$0xff]
    %v7425 = vld [vmem:[%s16 + $0x4ac] sm:$0xf]
    %v7426 = vld [vmem:[%s16 + $0x4b0] sm:$0xff]
    %v7427 = vld [vmem:[%s16 + $0x4b8] sm:$0xff]
    %v7428 = vld [vmem:[%s16 + $0x4c0] sm:$0xff]
    %v7429 = vld [vmem:[%s16 + $0x4c8] sm:$0xff]
    %v7430 = vld [vmem:[%s16 + $0x4d0] sm:$0xff]
    %v7431 = vld [vmem:[%s16 + $0x4d8] sm:$0xff]
    %v7432 = vld [vmem:[%s16 + $0x4e0] sm:$0xff]
    %v7433 = vld [vmem:[%s16 + $0x4e8] sm:$0xf]
    %v7434 = vld [vmem:[%s16 + $0x4ec] sm:$0xff]
    %v7435 = vld [vmem:[%s16 + $0x4f4] sm:$0xff]
    %v7436 = vld [vmem:[%s16 + $0x4fc] sm:$0xff]
    %v7437 = vld [vmem:[%s16 + $0x504] sm:$0xff]
    %v7438 = vld [vmem:[%s16 + $0x50c] sm:$0xff]
    %v7439 = vld [vmem:[%s16 + $0x514] sm:$0xff]
    %v7440 = vld [vmem:[%s16 + $0x51c] sm:$0xff]
    %v7441 = vld [vmem:[%s16 + $0x524] sm:$0xf]
    %v7442 = vld [vmem:[%s16 + $0x528] sm:$0xff]
    %v7443 = vld [vmem:[%s16 + $0x530] sm:$0xff]
    %v7444 = vld [vmem:[%s16 + $0x538] sm:$0xff]
    %v7445 = vld [vmem:[%s16 + $0x540] sm:$0xff]
    %v7446 = vld [vmem:[%s16 + $0x548] sm:$0xff]
    %v7447 = vld [vmem:[%s16 + $0x550] sm:$0xff]
    %v7448 = vld [vmem:[%s16 + $0x558] sm:$0xff]
    %v7449 = vld [vmem:[%s16 + $0x560] sm:$0xf]
    %v7450 = vld [vmem:[%s16 + $0x564] sm:$0xff]
    %v7451 = vld [vmem:[%s16 + $0x56c] sm:$0xff]
    %v7452 = vld [vmem:[%s16 + $0x574] sm:$0xff]
    %v7453 = vld [vmem:[%s16 + $0x57c] sm:$0xff]
    %v7454 = vld [vmem:[%s16 + $0x584] sm:$0xff]
    %v7455 = vld [vmem:[%s16 + $0x58c] sm:$0xff]
    %v7456 = vld [vmem:[%s16 + $0x594] sm:$0xff]
    %v7457 = vld [vmem:[%s16 + $0x59c] sm:$0xf]
    %v7458 = vld [vmem:[%s16 + $0x5a0] sm:$0xff]
    %v7459 = vld [vmem:[%s16 + $0x5a8] sm:$0xff]
    %v7460 = vld [vmem:[%s16 + $0x5b0] sm:$0xff]
    %v7461 = vld [vmem:[%s16 + $0x5b8] sm:$0xff]
    %v7462 = vld [vmem:[%s16 + $0x5c0] sm:$0xff]
    %v7463 = vld [vmem:[%s16 + $0x5c8] sm:$0xff]
    %v7464 = vld [vmem:[%s16 + $0x5d0] sm:$0xff]
    %v7465 = vld [vmem:[%s16 + $0x5d8] sm:$0xf]
    %v7466 = vld [vmem:[%s16 + $0x5dc] sm:$0xff]
    %v7467 = vld [vmem:[%s16 + $0x5e4] sm:$0xff]
    %v7468 = vld [vmem:[%s16 + $0x5ec] sm:$0xff]
    %v7469 = vld [vmem:[%s16 + $0x5f4] sm:$0xff]
    %v7470 = vld [vmem:[%s16 + $0x5fc] sm:$0xff]
    %v7471 = vld [vmem:[%s16 + $0x604] sm:$0xff]
    %v7472 = vld [vmem:[%s16 + $0x60c] sm:$0xff]
    %v7473 = vld [vmem:[%s16 + $0x614] sm:$0xf]
    %v7474 = vld [vmem:[%s16 + $0x618] sm:$0xff]
    %v7475 = vld [vmem:[%s16 + $0x620] sm:$0xff]
    %v7476 = vld [vmem:[%s16 + $0x628] sm:$0xff]
    %v7477 = vld [vmem:[%s16 + $0x630] sm:$0xff]
    %v7478 = vld [vmem:[%s16 + $0x638] sm:$0xff]
    %v7479 = vld [vmem:[%s16 + $0x640] sm:$0xff]
    %v7480 = vld [vmem:[%s16 + $0x648] sm:$0xff]
    %v7481 = vld [vmem:[%s16 + $0x650] sm:$0xf]
    %v7482 = vld [vmem:[%s16 + $0x654] sm:$0xff]
    %v7483 = vld [vmem:[%s16 + $0x65c] sm:$0xff]
    %v7484 = vld [vmem:[%s16 + $0x664] sm:$0xff]
    %v7485 = vld [vmem:[%s16 + $0x66c] sm:$0xff]
    %v7486 = vld [vmem:[%s16 + $0x674] sm:$0xff]
    %v7487 = vld [vmem:[%s16 + $0x67c] sm:$0xff]
    %v7488 = vld [vmem:[%s16 + $0x684] sm:$0xff]
    %v7489 = vld [vmem:[%s16 + $0x68c] sm:$0xf]
    %v7490 = vld [vmem:[%s16 + $0x690] sm:$0xff]
    %v7491 = vld [vmem:[%s16 + $0x698] sm:$0xff]
    %v7492 = vld [vmem:[%s16 + $0x6a0] sm:$0xff]
    %v7493 = vld [vmem:[%s16 + $0x6a8] sm:$0xff]
    %v7494 = vld [vmem:[%s16 + $0x6b0] sm:$0xff]
    %v7495 = vld [vmem:[%s16 + $0x6b8] sm:$0xff]
    %v7496 = vld [vmem:[%s16 + $0x6c0] sm:$0xff]
    %v7497 = vld [vmem:[%s16 + $0x6c8] sm:$0xf]
    %v7498 = vld [vmem:[%s16 + $0x6cc] sm:$0xff]
    %v7499 = vld [vmem:[%s16 + $0x6d4] sm:$0xff]
    %v7500 = vld [vmem:[%s16 + $0x6dc] sm:$0xff]
    %v7501 = vld [vmem:[%s16 + $0x6e4] sm:$0xff]
    %v7502 = vld [vmem:[%s16 + $0x6ec] sm:$0xff]
    %v7503 = vld [vmem:[%s16 + $0x6f4] sm:$0xff]
    %v7504 = vld [vmem:[%s16 + $0x6fc] sm:$0xff]
    %v7505 = vld [vmem:[%s16 + $0x704] sm:$0xf]
    %v7506 = vld [vmem:[%s16 + $0x708] sm:$0xff]
    %v7507 = vld [vmem:[%s16 + $0x710] sm:$0xff]
    %v7508 = vld [vmem:[%s16 + $0x718] sm:$0xff]
    %v7509 = vld [vmem:[%s16 + $0x720] sm:$0xff]
    %v7510 = vld [vmem:[%s16 + $0x728] sm:$0xff]
    %v7511 = vld [vmem:[%s16 + $0x730] sm:$0xff]
    %v7512 = vld [vmem:[%s16 + $0x738] sm:$0xff]
    %v7513 = vld [vmem:[%s16 + $0x740] sm:$0xf]
    %v7514 = vld [vmem:[%s16 + $0x744] sm:$0xff]
    %v7515 = vld [vmem:[%s16 + $0x74c] sm:$0xff]
    %v7516 = vld [vmem:[%s16 + $0x754] sm:$0xff]
    %v7517 = vld [vmem:[%s16 + $0x75c] sm:$0xff]
    %v7518 = vld [vmem:[%s16 + $0x764] sm:$0xff]
    %v7519 = vld [vmem:[%s16 + $0x76c] sm:$0xff]
    %v7520 = vld [vmem:[%s16 + $0x774] sm:$0xff]
    %v7521 = vld [vmem:[%s16 + $0x77c] sm:$0xf]
    %v7778 = vunpack.c.l.b16 %v7266
    %v7779 = vunpack.c.h.b16 %v7266
    %v7780 = vunpack.c.l.b16 %v7267
    %v7781 = vunpack.c.h.b16 %v7267
    %v7782 = vunpack.c.l.b16 %v7268
    %v7783 = vunpack.c.h.b16 %v7268
    %v7784 = vunpack.c.l.b16 %v7269
    %v7785 = vunpack.c.h.b16 %v7269
    %v7786 = vunpack.c.l.b16 %v7270
    %v7787 = vunpack.c.h.b16 %v7270
    %v7788 = vunpack.c.l.b16 %v7271
    %v7789 = vunpack.c.h.b16 %v7271
    %v7790 = vunpack.c.l.b16 %v7272
    %v7791 = vunpack.c.h.b16 %v7272
    %v7792 = vunpack.c.l.b16 %v7273
    %v7793 = vunpack.c.l.b16 %v7274
    %v7794 = vunpack.c.h.b16 %v7274
    %v7795 = vunpack.c.l.b16 %v7275
    %v7796 = vunpack.c.h.b16 %v7275
    %v7797 = vunpack.c.l.b16 %v7276
    %v7798 = vunpack.c.h.b16 %v7276
    %v7799 = vunpack.c.l.b16 %v7277
    %v7800 = vunpack.c.h.b16 %v7277
    %v7801 = vunpack.c.l.b16 %v7278
    %v7802 = vunpack.c.h.b16 %v7278
    %v7803 = vunpack.c.l.b16 %v7279
    %v7804 = vunpack.c.h.b16 %v7279
    %v7805 = vunpack.c.l.b16 %v7280
    %v7806 = vunpack.c.h.b16 %v7280
    %v7807 = vunpack.c.l.b16 %v7281
    %v7808 = vunpack.c.l.b16 %v7282
    %v7809 = vunpack.c.h.b16 %v7282
    %v7810 = vunpack.c.l.b16 %v7283
    %v7811 = vunpack.c.h.b16 %v7283
    %v7812 = vunpack.c.l.b16 %v7284
    %v7813 = vunpack.c.h.b16 %v7284
    %v7814 = vunpack.c.l.b16 %v7285
    %v7815 = vunpack.c.h.b16 %v7285
    %v7816 = vunpack.c.l.b16 %v7286
    %v7817 = vunpack.c.h.b16 %v7286
    %v7818 = vunpack.c.l.b16 %v7287
    %v7819 = vunpack.c.h.b16 %v7287
    %v7820 = vunpack.c.l.b16 %v7288
    %v7821 = vunpack.c.h.b16 %v7288
    %v7822 = vunpack.c.l.b16 %v7289
    %v7823 = vunpack.c.l.b16 %v7290
    %v7824 = vunpack.c.h.b16 %v7290
    %v7825 = vunpack.c.l.b16 %v7291
    %v7826 = vunpack.c.h.b16 %v7291
    %v7827 = vunpack.c.l.b16 %v7292
    %v7828 = vunpack.c.h.b16 %v7292
    %v7829 = vunpack.c.l.b16 %v7293
    %v7830 = vunpack.c.h.b16 %v7293
    %v7831 = vunpack.c.l.b16 %v7294
    %v7832 = vunpack.c.h.b16 %v7294
    %v7833 = vunpack.c.l.b16 %v7295
    %v7834 = vunpack.c.h.b16 %v7295
    %v7835 = vunpack.c.l.b16 %v7296
    %v7836 = vunpack.c.h.b16 %v7296
    %v7837 = vunpack.c.l.b16 %v7297
    %v7838 = vunpack.c.l.b16 %v7298
    %v7839 = vunpack.c.h.b16 %v7298
    %v7840 = vunpack.c.l.b16 %v7299
    %v7841 = vunpack.c.h.b16 %v7299
    %v7842 = vunpack.c.l.b16 %v7300
    %v7843 = vunpack.c.h.b16 %v7300
    %v7844 = vunpack.c.l.b16 %v7301
    %v7845 = vunpack.c.h.b16 %v7301
    %v7846 = vunpack.c.l.b16 %v7302
    %v7847 = vunpack.c.h.b16 %v7302
    %v7848 = vunpack.c.l.b16 %v7303
    %v7849 = vunpack.c.h.b16 %v7303
    %v7850 = vunpack.c.l.b16 %v7304
    %v7851 = vunpack.c.h.b16 %v7304
    %v7852 = vunpack.c.l.b16 %v7305
    %v7853 = vunpack.c.l.b16 %v7306
    %v7854 = vunpack.c.h.b16 %v7306
    %v7855 = vunpack.c.l.b16 %v7307
    %v7856 = vunpack.c.h.b16 %v7307
    %v7857 = vunpack.c.l.b16 %v7308
    %v7858 = vunpack.c.h.b16 %v7308
    %v7859 = vunpack.c.l.b16 %v7309
    %v7860 = vunpack.c.h.b16 %v7309
    %v7861 = vunpack.c.l.b16 %v7310
    %v7862 = vunpack.c.h.b16 %v7310
    %v7863 = vunpack.c.l.b16 %v7311
    %v7864 = vunpack.c.h.b16 %v7311
    %v7865 = vunpack.c.l.b16 %v7312
    %v7866 = vunpack.c.h.b16 %v7312
    %v7867 = vunpack.c.l.b16 %v7313
    %v7868 = vunpack.c.l.b16 %v7314
    %v7869 = vunpack.c.h.b16 %v7314
    %v7870 = vunpack.c.l.b16 %v7315
    %v7871 = vunpack.c.h.b16 %v7315
    %v7872 = vunpack.c.l.b16 %v7316
    %v7873 = vunpack.c.h.b16 %v7316
    %v7874 = vunpack.c.l.b16 %v7317
    %v7875 = vunpack.c.h.b16 %v7317
    %v7876 = vunpack.c.l.b16 %v7318
    %v7877 = vunpack.c.h.b16 %v7318
    %v7878 = vunpack.c.l.b16 %v7319
    %v7879 = vunpack.c.h.b16 %v7319
    %v7880 = vunpack.c.l.b16 %v7320
    %v7881 = vunpack.c.h.b16 %v7320
    %v7882 = vunpack.c.l.b16 %v7321
    %v7883 = vunpack.c.l.b16 %v7322
    %v7884 = vunpack.c.h.b16 %v7322
    %v7885 = vunpack.c.l.b16 %v7323
    %v7886 = vunpack.c.h.b16 %v7323
    %v7887 = vunpack.c.l.b16 %v7324
    %v7888 = vunpack.c.h.b16 %v7324
    %v7889 = vunpack.c.l.b16 %v7325
    %v7890 = vunpack.c.h.b16 %v7325
    %v7891 = vunpack.c.l.b16 %v7326
    %v7892 = vunpack.c.h.b16 %v7326
    %v7893 = vunpack.c.l.b16 %v7327
    %v7894 = vunpack.c.h.b16 %v7327
    %v7895 = vunpack.c.l.b16 %v7328
    %v7896 = vunpack.c.h.b16 %v7328
    %v7897 = vunpack.c.l.b16 %v7329
    %v7898 = vunpack.c.l.b16 %v7330
    %v7899 = vunpack.c.h.b16 %v7330
    %v7900 = vunpack.c.l.b16 %v7331
    %v7901 = vunpack.c.h.b16 %v7331
    %v7902 = vunpack.c.l.b16 %v7332
    %v7903 = vunpack.c.h.b16 %v7332
    %v7904 = vunpack.c.l.b16 %v7333
    %v7905 = vunpack.c.h.b16 %v7333
    %v7906 = vunpack.c.l.b16 %v7334
    %v7907 = vunpack.c.h.b16 %v7334
    %v7908 = vunpack.c.l.b16 %v7335
    %v7909 = vunpack.c.h.b16 %v7335
    %v7910 = vunpack.c.l.b16 %v7336
    %v7911 = vunpack.c.h.b16 %v7336
    %v7912 = vunpack.c.l.b16 %v7337
    %v7913 = vunpack.c.l.b16 %v7338
    %v7914 = vunpack.c.h.b16 %v7338
    %v7915 = vunpack.c.l.b16 %v7339
    %v7916 = vunpack.c.h.b16 %v7339
    %v7917 = vunpack.c.l.b16 %v7340
    %v7918 = vunpack.c.h.b16 %v7340
    %v7919 = vunpack.c.l.b16 %v7341
    %v7920 = vunpack.c.h.b16 %v7341
    %v7921 = vunpack.c.l.b16 %v7342
    %v7922 = vunpack.c.h.b16 %v7342
    %v7923 = vunpack.c.l.b16 %v7343
    %v7924 = vunpack.c.h.b16 %v7343
    %v7925 = vunpack.c.l.b16 %v7344
    %v7926 = vunpack.c.h.b16 %v7344
    %v7927 = vunpack.c.l.b16 %v7345
    %v7928 = vunpack.c.l.b16 %v7346
    %v7929 = vunpack.c.h.b16 %v7346
    %v7930 = vunpack.c.l.b16 %v7347
    %v7931 = vunpack.c.h.b16 %v7347
    %v7932 = vunpack.c.l.b16 %v7348
    %v7933 = vunpack.c.h.b16 %v7348
    %v7934 = vunpack.c.l.b16 %v7349
    %v7935 = vunpack.c.h.b16 %v7349
    %v7936 = vunpack.c.l.b16 %v7350
    %v7937 = vunpack.c.h.b16 %v7350
    %v7938 = vunpack.c.l.b16 %v7351
    %v7939 = vunpack.c.h.b16 %v7351
    %v7940 = vunpack.c.l.b16 %v7352
    %v7941 = vunpack.c.h.b16 %v7352
    %v7942 = vunpack.c.l.b16 %v7353
    %v7943 = vunpack.c.l.b16 %v7354
    %v7944 = vunpack.c.h.b16 %v7354
    %v7945 = vunpack.c.l.b16 %v7355
    %v7946 = vunpack.c.h.b16 %v7355
    %v7947 = vunpack.c.l.b16 %v7356
    %v7948 = vunpack.c.h.b16 %v7356
    %v7949 = vunpack.c.l.b16 %v7357
    %v7950 = vunpack.c.h.b16 %v7357
    %v7951 = vunpack.c.l.b16 %v7358
    %v7952 = vunpack.c.h.b16 %v7358
    %v7953 = vunpack.c.l.b16 %v7359
    %v7954 = vunpack.c.h.b16 %v7359
    %v7955 = vunpack.c.l.b16 %v7360
    %v7956 = vunpack.c.h.b16 %v7360
    %v7957 = vunpack.c.l.b16 %v7361
    %v7958 = vunpack.c.l.b16 %v7362
    %v7959 = vunpack.c.h.b16 %v7362
    %v7960 = vunpack.c.l.b16 %v7363
    %v7961 = vunpack.c.h.b16 %v7363
    %v7962 = vunpack.c.l.b16 %v7364
    %v7963 = vunpack.c.h.b16 %v7364
    %v7964 = vunpack.c.l.b16 %v7365
    %v7965 = vunpack.c.h.b16 %v7365
    %v7966 = vunpack.c.l.b16 %v7366
    %v7967 = vunpack.c.h.b16 %v7366
    %v7968 = vunpack.c.l.b16 %v7367
    %v7969 = vunpack.c.h.b16 %v7367
    %v7970 = vunpack.c.l.b16 %v7368
    %v7971 = vunpack.c.h.b16 %v7368
    %v7972 = vunpack.c.l.b16 %v7369
    %v7973 = vunpack.c.l.b16 %v7370
    %v7974 = vunpack.c.h.b16 %v7370
    %v7975 = vunpack.c.l.b16 %v7371
    %v7976 = vunpack.c.h.b16 %v7371
    %v7977 = vunpack.c.l.b16 %v7372
    %v7978 = vunpack.c.h.b16 %v7372
    %v7979 = vunpack.c.l.b16 %v7373
    %v7980 = vunpack.c.h.b16 %v7373
    %v7981 = vunpack.c.l.b16 %v7374
    %v7982 = vunpack.c.h.b16 %v7374
    %v7983 = vunpack.c.l.b16 %v7375
    %v7984 = vunpack.c.h.b16 %v7375
    %v7985 = vunpack.c.l.b16 %v7376
    %v7986 = vunpack.c.h.b16 %v7376
    %v7987 = vunpack.c.l.b16 %v7377
    %v7988 = vunpack.c.l.b16 %v7378
    %v7989 = vunpack.c.h.b16 %v7378
    %v7990 = vunpack.c.l.b16 %v7379
    %v7991 = vunpack.c.h.b16 %v7379
    %v7992 = vunpack.c.l.b16 %v7380
    %v7993 = vunpack.c.h.b16 %v7380
    %v7994 = vunpack.c.l.b16 %v7381
    %v7995 = vunpack.c.h.b16 %v7381
    %v7996 = vunpack.c.l.b16 %v7382
    %v7997 = vunpack.c.h.b16 %v7382
    %v7998 = vunpack.c.l.b16 %v7383
    %v7999 = vunpack.c.h.b16 %v7383
    %v8000 = vunpack.c.l.b16 %v7384
    %v8001 = vunpack.c.h.b16 %v7384
    %v8002 = vunpack.c.l.b16 %v7385
    %v8003 = vunpack.c.l.b16 %v7386
    %v8004 = vunpack.c.h.b16 %v7386
    %v8005 = vunpack.c.l.b16 %v7387
    %v8006 = vunpack.c.h.b16 %v7387
    %v8007 = vunpack.c.l.b16 %v7388
    %v8008 = vunpack.c.h.b16 %v7388
    %v8009 = vunpack.c.l.b16 %v7389
    %v8010 = vunpack.c.h.b16 %v7389
    %v8011 = vunpack.c.l.b16 %v7390
    %v8012 = vunpack.c.h.b16 %v7390
    %v8013 = vunpack.c.l.b16 %v7391
    %v8014 = vunpack.c.h.b16 %v7391
    %v8015 = vunpack.c.l.b16 %v7392
    %v8016 = vunpack.c.h.b16 %v7392
    %v8017 = vunpack.c.l.b16 %v7393
    %v8018 = vunpack.c.l.b16 %v7394
    %v8019 = vunpack.c.h.b16 %v7394
    %v8020 = vunpack.c.l.b16 %v7395
    %v8021 = vunpack.c.h.b16 %v7395
    %v8022 = vunpack.c.l.b16 %v7396
    %v8023 = vunpack.c.h.b16 %v7396
    %v8024 = vunpack.c.l.b16 %v7397
    %v8025 = vunpack.c.h.b16 %v7397
    %v8026 = vunpack.c.l.b16 %v7398
    %v8027 = vunpack.c.h.b16 %v7398
    %v8028 = vunpack.c.l.b16 %v7399
    %v8029 = vunpack.c.h.b16 %v7399
    %v8030 = vunpack.c.l.b16 %v7400
    %v8031 = vunpack.c.h.b16 %v7400
    %v8032 = vunpack.c.l.b16 %v7401
    %v8033 = vunpack.c.l.b16 %v7402
    %v8034 = vunpack.c.h.b16 %v7402
    %v8035 = vunpack.c.l.b16 %v7403
    %v8036 = vunpack.c.h.b16 %v7403
    %v8037 = vunpack.c.l.b16 %v7404
    %v8038 = vunpack.c.h.b16 %v7404
    %v8039 = vunpack.c.l.b16 %v7405
    %v8040 = vunpack.c.h.b16 %v7405
    %v8041 = vunpack.c.l.b16 %v7406
    %v8042 = vunpack.c.h.b16 %v7406
    %v8043 = vunpack.c.l.b16 %v7407
    %v8044 = vunpack.c.h.b16 %v7407
    %v8045 = vunpack.c.l.b16 %v7408
    %v8046 = vunpack.c.h.b16 %v7408
    %v8047 = vunpack.c.l.b16 %v7409
    %v8048 = vunpack.c.l.b16 %v7410
    %v8049 = vunpack.c.h.b16 %v7410
    %v8050 = vunpack.c.l.b16 %v7411
    %v8051 = vunpack.c.h.b16 %v7411
    %v8052 = vunpack.c.l.b16 %v7412
    %v8053 = vunpack.c.h.b16 %v7412
    %v8054 = vunpack.c.l.b16 %v7413
    %v8055 = vunpack.c.h.b16 %v7413
    %v8056 = vunpack.c.l.b16 %v7414
    %v8057 = vunpack.c.h.b16 %v7414
    %v8058 = vunpack.c.l.b16 %v7415
    %v8059 = vunpack.c.h.b16 %v7415
    %v8060 = vunpack.c.l.b16 %v7416
    %v8061 = vunpack.c.h.b16 %v7416
    %v8062 = vunpack.c.l.b16 %v7417
    %v8063 = vunpack.c.l.b16 %v7418
    %v8064 = vunpack.c.h.b16 %v7418
    %v8065 = vunpack.c.l.b16 %v7419
    %v8066 = vunpack.c.h.b16 %v7419
    %v8067 = vunpack.c.l.b16 %v7420
    %v8068 = vunpack.c.h.b16 %v7420
    %v8069 = vunpack.c.l.b16 %v7421
    %v8070 = vunpack.c.h.b16 %v7421
    %v8071 = vunpack.c.l.b16 %v7422
    %v8072 = vunpack.c.h.b16 %v7422
    %v8073 = vunpack.c.l.b16 %v7423
    %v8074 = vunpack.c.h.b16 %v7423
    %v8075 = vunpack.c.l.b16 %v7424
    %v8076 = vunpack.c.h.b16 %v7424
    %v8077 = vunpack.c.l.b16 %v7425
    %v8078 = vunpack.c.l.b16 %v7426
    %v8079 = vunpack.c.h.b16 %v7426
    %v8080 = vunpack.c.l.b16 %v7427
    %v8081 = vunpack.c.h.b16 %v7427
    %v8082 = vunpack.c.l.b16 %v7428
    %v8083 = vunpack.c.h.b16 %v7428
    %v8084 = vunpack.c.l.b16 %v7429
    %v8085 = vunpack.c.h.b16 %v7429
    %v8086 = vunpack.c.l.b16 %v7430
    %v8087 = vunpack.c.h.b16 %v7430
    %v8088 = vunpack.c.l.b16 %v7431
    %v8089 = vunpack.c.h.b16 %v7431
    %v8090 = vunpack.c.l.b16 %v7432
    %v8091 = vunpack.c.h.b16 %v7432
    %v8092 = vunpack.c.l.b16 %v7433
    %v8093 = vunpack.c.l.b16 %v7434
    %v8094 = vunpack.c.h.b16 %v7434
    %v8095 = vunpack.c.l.b16 %v7435
    %v8096 = vunpack.c.h.b16 %v7435
    %v8097 = vunpack.c.l.b16 %v7436
    %v8098 = vunpack.c.h.b16 %v7436
    %v8099 = vunpack.c.l.b16 %v7437
    %v8100 = vunpack.c.h.b16 %v7437
    %v8101 = vunpack.c.l.b16 %v7438
    %v8102 = vunpack.c.h.b16 %v7438
    %v8103 = vunpack.c.l.b16 %v7439
    %v8104 = vunpack.c.h.b16 %v7439
    %v8105 = vunpack.c.l.b16 %v7440
    %v8106 = vunpack.c.h.b16 %v7440
    %v8107 = vunpack.c.l.b16 %v7441
    %v8108 = vunpack.c.l.b16 %v7442
    %v8109 = vunpack.c.h.b16 %v7442
    %v8110 = vunpack.c.l.b16 %v7443
    %v8111 = vunpack.c.h.b16 %v7443
    %v8112 = vunpack.c.l.b16 %v7444
    %v8113 = vunpack.c.h.b16 %v7444
    %v8114 = vunpack.c.l.b16 %v7445
    %v8115 = vunpack.c.h.b16 %v7445
    %v8116 = vunpack.c.l.b16 %v7446
    %v8117 = vunpack.c.h.b16 %v7446
    %v8118 = vunpack.c.l.b16 %v7447
    %v8119 = vunpack.c.h.b16 %v7447
    %v8120 = vunpack.c.l.b16 %v7448
    %v8121 = vunpack.c.h.b16 %v7448
    %v8122 = vunpack.c.l.b16 %v7449
    %v8123 = vunpack.c.l.b16 %v7450
    %v8124 = vunpack.c.h.b16 %v7450
    %v8125 = vunpack.c.l.b16 %v7451
    %v8126 = vunpack.c.h.b16 %v7451
    %v8127 = vunpack.c.l.b16 %v7452
    %v8128 = vunpack.c.h.b16 %v7452
    %v8129 = vunpack.c.l.b16 %v7453
    %v8130 = vunpack.c.h.b16 %v7453
    %v8131 = vunpack.c.l.b16 %v7454
    %v8132 = vunpack.c.h.b16 %v7454
    %v8133 = vunpack.c.l.b16 %v7455
    %v8134 = vunpack.c.h.b16 %v7455
    %v8135 = vunpack.c.l.b16 %v7456
    %v8136 = vunpack.c.h.b16 %v7456
    %v8137 = vunpack.c.l.b16 %v7457
    %v8138 = vunpack.c.l.b16 %v7458
    %v8139 = vunpack.c.h.b16 %v7458
    %v8140 = vunpack.c.l.b16 %v7459
    %v8141 = vunpack.c.h.b16 %v7459
    %v8142 = vunpack.c.l.b16 %v7460
    %v8143 = vunpack.c.h.b16 %v7460
    %v8144 = vunpack.c.l.b16 %v7461
    %v8145 = vunpack.c.h.b16 %v7461
    %v8146 = vunpack.c.l.b16 %v7462
    %v8147 = vunpack.c.h.b16 %v7462
    %v8148 = vunpack.c.l.b16 %v7463
    %v8149 = vunpack.c.h.b16 %v7463
    %v8150 = vunpack.c.l.b16 %v7464
    %v8151 = vunpack.c.h.b16 %v7464
    %v8152 = vunpack.c.l.b16 %v7465
    %v8153 = vunpack.c.l.b16 %v7466
    %v8154 = vunpack.c.h.b16 %v7466
    %v8155 = vunpack.c.l.b16 %v7467
    %v8156 = vunpack.c.h.b16 %v7467
    %v8157 = vunpack.c.l.b16 %v7468
    %v8158 = vunpack.c.h.b16 %v7468
    %v8159 = vunpack.c.l.b16 %v7469
    %v8160 = vunpack.c.h.b16 %v7469
    %v8161 = vunpack.c.l.b16 %v7470
    %v8162 = vunpack.c.h.b16 %v7470
    %v8163 = vunpack.c.l.b16 %v7471
    %v8164 = vunpack.c.h.b16 %v7471
    %v8165 = vunpack.c.l.b16 %v7472
    %v8166 = vunpack.c.h.b16 %v7472
    %v8167 = vunpack.c.l.b16 %v7473
    %v8168 = vunpack.c.l.b16 %v7474
    %v8169 = vunpack.c.h.b16 %v7474
    %v8170 = vunpack.c.l.b16 %v7475
    %v8171 = vunpack.c.h.b16 %v7475
    %v8172 = vunpack.c.l.b16 %v7476
    %v8173 = vunpack.c.h.b16 %v7476
    %v8174 = vunpack.c.l.b16 %v7477
    %v8175 = vunpack.c.h.b16 %v7477
    %v8176 = vunpack.c.l.b16 %v7478
    %v8177 = vunpack.c.h.b16 %v7478
    %v8178 = vunpack.c.l.b16 %v7479
    %v8179 = vunpack.c.h.b16 %v7479
    %v8180 = vunpack.c.l.b16 %v7480
    %v8181 = vunpack.c.h.b16 %v7480
    %v8182 = vunpack.c.l.b16 %v7481
    %v8183 = vunpack.c.l.b16 %v7482
    %v8184 = vunpack.c.h.b16 %v7482
    %v8185 = vunpack.c.l.b16 %v7483
    %v8186 = vunpack.c.h.b16 %v7483
    %v8187 = vunpack.c.l.b16 %v7484
    %v8188 = vunpack.c.h.b16 %v7484
    %v8189 = vunpack.c.l.b16 %v7485
    %v8190 = vunpack.c.h.b16 %v7485
    %v8191 = vunpack.c.l.b16 %v7486
    %v8192 = vunpack.c.h.b16 %v7486
    %v8193 = vunpack.c.l.b16 %v7487
    %v8194 = vunpack.c.h.b16 %v7487
    %v8195 = vunpack.c.l.b16 %v7488
    %v8196 = vunpack.c.h.b16 %v7488
    %v8197 = vunpack.c.l.b16 %v7489
    %v8198 = vunpack.c.l.b16 %v7490
    %v8199 = vunpack.c.h.b16 %v7490
    %v8200 = vunpack.c.l.b16 %v7491
    %v8201 = vunpack.c.h.b16 %v7491
    %v8202 = vunpack.c.l.b16 %v7492
    %v8203 = vunpack.c.h.b16 %v7492
    %v8204 = vunpack.c.l.b16 %v7493
    %v8205 = vunpack.c.h.b16 %v7493
    %v8206 = vunpack.c.l.b16 %v7494
    %v8207 = vunpack.c.h.b16 %v7494
    %v8208 = vunpack.c.l.b16 %v7495
    %v8209 = vunpack.c.h.b16 %v7495
    %v8210 = vunpack.c.l.b16 %v7496
    %v8211 = vunpack.c.h.b16 %v7496
    %v8212 = vunpack.c.l.b16 %v7497
    %v8213 = vunpack.c.l.b16 %v7498
    %v8214 = vunpack.c.h.b16 %v7498
    %v8215 = vunpack.c.l.b16 %v7499
    %v8216 = vunpack.c.h.b16 %v7499
    %v8217 = vunpack.c.l.b16 %v7500
    %v8218 = vunpack.c.h.b16 %v7500
    %v8219 = vunpack.c.l.b16 %v7501
    %v8220 = vunpack.c.h.b16 %v7501
    %v8221 = vunpack.c.l.b16 %v7502
    %v8222 = vunpack.c.h.b16 %v7502
    %v8223 = vunpack.c.l.b16 %v7503
    %v8224 = vunpack.c.h.b16 %v7503
    %v8225 = vunpack.c.l.b16 %v7504
    %v8226 = vunpack.c.h.b16 %v7504
    %v8227 = vunpack.c.l.b16 %v7505
    %v8228 = vunpack.c.l.b16 %v7506
    %v8229 = vunpack.c.h.b16 %v7506
    %v8230 = vunpack.c.l.b16 %v7507
    %v8231 = vunpack.c.h.b16 %v7507
    %v8232 = vunpack.c.l.b16 %v7508
    %v8233 = vunpack.c.h.b16 %v7508
    %v8234 = vunpack.c.l.b16 %v7509
    %v8235 = vunpack.c.h.b16 %v7509
    %v8236 = vunpack.c.l.b16 %v7510
    %v8237 = vunpack.c.h.b16 %v7510
    %v8238 = vunpack.c.l.b16 %v7511
    %v8239 = vunpack.c.h.b16 %v7511
    %v8240 = vunpack.c.l.b16 %v7512
    %v8241 = vunpack.c.h.b16 %v7512
    %v8242 = vunpack.c.l.b16 %v7513
    %v8243 = vunpack.c.l.b16 %v7514
    %v8244 = vunpack.c.h.b16 %v7514
    %v8245 = vunpack.c.l.b16 %v7515
    %v8246 = vunpack.c.h.b16 %v7515
    %v8247 = vunpack.c.l.b16 %v7516
    %v8248 = vunpack.c.h.b16 %v7516
    %v8249 = vunpack.c.l.b16 %v7517
    %v8250 = vunpack.c.h.b16 %v7517
    %v8251 = vunpack.c.l.b16 %v7518
    %v8252 = vunpack.c.h.b16 %v7518
    %v8253 = vunpack.c.l.b16 %v7519
    %v8254 = vunpack.c.h.b16 %v7519
    %v8255 = vunpack.c.l.b16 %v7520
    %v8256 = vunpack.c.h.b16 %v7520
    %v8257 = vunpack.c.l.b16 %v7521
    %v8258 = vpack.c.b16 %v7793, %v7778
    %v8259 = vpack.c.b16 %v7794, %v7779
    %v8260 = vpack.c.b16 %v7795, %v7780
    %v8261 = vpack.c.b16 %v7796, %v7781
    %v8262 = vpack.c.b16 %v7797, %v7782
    %v8263 = vpack.c.b16 %v7798, %v7783
    %v8264 = vpack.c.b16 %v7799, %v7784
    %v8265 = vpack.c.b16 %v7800, %v7785
    %v8266 = vpack.c.b16 %v7801, %v7786
    %v8267 = vpack.c.b16 %v7802, %v7787
    %v8268 = vpack.c.b16 %v7803, %v7788
    %v8269 = vpack.c.b16 %v7804, %v7789
    %v8270 = vpack.c.b16 %v7805, %v7790
    %v8271 = vpack.c.b16 %v7806, %v7791
    %v8272 = vpack.c.b16 %v7807, %v7792
    %v8273 = vpack.c.b16 %v7823, %v7808
    %v8274 = vpack.c.b16 %v7824, %v7809
    %v8275 = vpack.c.b16 %v7825, %v7810
    %v8276 = vpack.c.b16 %v7826, %v7811
    %v8277 = vpack.c.b16 %v7827, %v7812
    %v8278 = vpack.c.b16 %v7828, %v7813
    %v8279 = vpack.c.b16 %v7829, %v7814
    %v8280 = vpack.c.b16 %v7830, %v7815
    %v8281 = vpack.c.b16 %v7831, %v7816
    %v8282 = vpack.c.b16 %v7832, %v7817
    %v8283 = vpack.c.b16 %v7833, %v7818
    %v8284 = vpack.c.b16 %v7834, %v7819
    %v8285 = vpack.c.b16 %v7835, %v7820
    %v8286 = vpack.c.b16 %v7836, %v7821
    %v8287 = vpack.c.b16 %v7837, %v7822
    %v8288 = vpack.c.b16 %v7853, %v7838
    %v8289 = vpack.c.b16 %v7854, %v7839
    %v8290 = vpack.c.b16 %v7855, %v7840
    %v8291 = vpack.c.b16 %v7856, %v7841
    %v8292 = vpack.c.b16 %v7857, %v7842
    %v8293 = vpack.c.b16 %v7858, %v7843
    %v8294 = vpack.c.b16 %v7859, %v7844
    %v8295 = vpack.c.b16 %v7860, %v7845
    %v8296 = vpack.c.b16 %v7861, %v7846
    %v8297 = vpack.c.b16 %v7862, %v7847
    %v8298 = vpack.c.b16 %v7863, %v7848
    %v8299 = vpack.c.b16 %v7864, %v7849
    %v8300 = vpack.c.b16 %v7865, %v7850
    %v8301 = vpack.c.b16 %v7866, %v7851
    %v8302 = vpack.c.b16 %v7867, %v7852
    %v8303 = vpack.c.b16 %v7883, %v7868
    %v8304 = vpack.c.b16 %v7884, %v7869
    %v8305 = vpack.c.b16 %v7885, %v7870
    %v8306 = vpack.c.b16 %v7886, %v7871
    %v8307 = vpack.c.b16 %v7887, %v7872
    %v8308 = vpack.c.b16 %v7888, %v7873
    %v8309 = vpack.c.b16 %v7889, %v7874
    %v8310 = vpack.c.b16 %v7890, %v7875
    %v8311 = vpack.c.b16 %v7891, %v7876
    %v8312 = vpack.c.b16 %v7892, %v7877
    %v8313 = vpack.c.b16 %v7893, %v7878
    %v8314 = vpack.c.b16 %v7894, %v7879
    %v8315 = vpack.c.b16 %v7895, %v7880
    %v8316 = vpack.c.b16 %v7896, %v7881
    %v8317 = vpack.c.b16 %v7897, %v7882
    %v8318 = vpack.c.b16 %v7913, %v7898
    %v8319 = vpack.c.b16 %v7914, %v7899
    %v8320 = vpack.c.b16 %v7915, %v7900
    %v8321 = vpack.c.b16 %v7916, %v7901
    %v8322 = vpack.c.b16 %v7917, %v7902
    %v8323 = vpack.c.b16 %v7918, %v7903
    %v8324 = vpack.c.b16 %v7919, %v7904
    %v8325 = vpack.c.b16 %v7920, %v7905
    %v8326 = vpack.c.b16 %v7921, %v7906
    %v8327 = vpack.c.b16 %v7922, %v7907
    %v8328 = vpack.c.b16 %v7923, %v7908
    %v8329 = vpack.c.b16 %v7924, %v7909
    %v8330 = vpack.c.b16 %v7925, %v7910
    %v8331 = vpack.c.b16 %v7926, %v7911
    %v8332 = vpack.c.b16 %v7927, %v7912
    %v8333 = vpack.c.b16 %v7943, %v7928
    %v8334 = vpack.c.b16 %v7944, %v7929
    %v8335 = vpack.c.b16 %v7945, %v7930
    %v8336 = vpack.c.b16 %v7946, %v7931
    %v8337 = vpack.c.b16 %v7947, %v7932
    %v8338 = vpack.c.b16 %v7948, %v7933
    %v8339 = vpack.c.b16 %v7949, %v7934
    %v8340 = vpack.c.b16 %v7950, %v7935
    %v8341 = vpack.c.b16 %v7951, %v7936
    %v8342 = vpack.c.b16 %v7952, %v7937
    %v8343 = vpack.c.b16 %v7953, %v7938
    %v8344 = vpack.c.b16 %v7954, %v7939
    %v8345 = vpack.c.b16 %v7955, %v7940
    %v8346 = vpack.c.b16 %v7956, %v7941
    %v8347 = vpack.c.b16 %v7957, %v7942
    %v8348 = vpack.c.b16 %v7973, %v7958
    %v8349 = vpack.c.b16 %v7974, %v7959
    %v8350 = vpack.c.b16 %v7975, %v7960
    %v8351 = vpack.c.b16 %v7976, %v7961
    %v8352 = vpack.c.b16 %v7977, %v7962
    %v8353 = vpack.c.b16 %v7978, %v7963
    %v8354 = vpack.c.b16 %v7979, %v7964
    %v8355 = vpack.c.b16 %v7980, %v7965
    %v8356 = vpack.c.b16 %v7981, %v7966
    %v8357 = vpack.c.b16 %v7982, %v7967
    %v8358 = vpack.c.b16 %v7983, %v7968
    %v8359 = vpack.c.b16 %v7984, %v7969
    %v8360 = vpack.c.b16 %v7985, %v7970
    %v8361 = vpack.c.b16 %v7986, %v7971
    %v8362 = vpack.c.b16 %v7987, %v7972
    %v8363 = vpack.c.b16 %v8003, %v7988
    %v8364 = vpack.c.b16 %v8004, %v7989
    %v8365 = vpack.c.b16 %v8005, %v7990
    %v8366 = vpack.c.b16 %v8006, %v7991
    %v8367 = vpack.c.b16 %v8007, %v7992
    %v8368 = vpack.c.b16 %v8008, %v7993
    %v8369 = vpack.c.b16 %v8009, %v7994
    %v8370 = vpack.c.b16 %v8010, %v7995
    %v8371 = vpack.c.b16 %v8011, %v7996
    %v8372 = vpack.c.b16 %v8012, %v7997
    %v8373 = vpack.c.b16 %v8013, %v7998
    %v8374 = vpack.c.b16 %v8014, %v7999
    %v8375 = vpack.c.b16 %v8015, %v8000
    %v8376 = vpack.c.b16 %v8016, %v8001
    %v8377 = vpack.c.b16 %v8017, %v8002
    %v8378 = vpack.c.b16 %v8033, %v8018
    %v8379 = vpack.c.b16 %v8034, %v8019
    %v8380 = vpack.c.b16 %v8035, %v8020
    %v8381 = vpack.c.b16 %v8036, %v8021
    %v8382 = vpack.c.b16 %v8037, %v8022
    %v8383 = vpack.c.b16 %v8038, %v8023
    %v8384 = vpack.c.b16 %v8039, %v8024
    %v8385 = vpack.c.b16 %v8040, %v8025
    %v8386 = vpack.c.b16 %v8041, %v8026
    %v8387 = vpack.c.b16 %v8042, %v8027
    %v8388 = vpack.c.b16 %v8043, %v8028
    %v8389 = vpack.c.b16 %v8044, %v8029
    %v8390 = vpack.c.b16 %v8045, %v8030
    %v8391 = vpack.c.b16 %v8046, %v8031
    %v8392 = vpack.c.b16 %v8047, %v8032
    %v8393 = vpack.c.b16 %v8063, %v8048
    %v8394 = vpack.c.b16 %v8064, %v8049
    %v8395 = vpack.c.b16 %v8065, %v8050
    %v8396 = vpack.c.b16 %v8066, %v8051
    %v8397 = vpack.c.b16 %v8067, %v8052
    %v8398 = vpack.c.b16 %v8068, %v8053
    %v8399 = vpack.c.b16 %v8069, %v8054
    %v8400 = vpack.c.b16 %v8070, %v8055
    %v8401 = vpack.c.b16 %v8071, %v8056
    %v8402 = vpack.c.b16 %v8072, %v8057
    %v8403 = vpack.c.b16 %v8073, %v8058
    %v8404 = vpack.c.b16 %v8074, %v8059
    %v8405 = vpack.c.b16 %v8075, %v8060
    %v8406 = vpack.c.b16 %v8076, %v8061
    %v8407 = vpack.c.b16 %v8077, %v8062
    %v8408 = vpack.c.b16 %v8093, %v8078
    %v8409 = vpack.c.b16 %v8094, %v8079
    %v8410 = vpack.c.b16 %v8095, %v8080
    %v8411 = vpack.c.b16 %v8096, %v8081
    %v8412 = vpack.c.b16 %v8097, %v8082
    %v8413 = vpack.c.b16 %v8098, %v8083
    %v8414 = vpack.c.b16 %v8099, %v8084
    %v8415 = vpack.c.b16 %v8100, %v8085
    %v8416 = vpack.c.b16 %v8101, %v8086
    %v8417 = vpack.c.b16 %v8102, %v8087
    %v8418 = vpack.c.b16 %v8103, %v8088
    %v8419 = vpack.c.b16 %v8104, %v8089
    %v8420 = vpack.c.b16 %v8105, %v8090
    %v8421 = vpack.c.b16 %v8106, %v8091
    %v8422 = vpack.c.b16 %v8107, %v8092
    %v8423 = vpack.c.b16 %v8123, %v8108
    %v8424 = vpack.c.b16 %v8124, %v8109
    %v8425 = vpack.c.b16 %v8125, %v8110
    %v8426 = vpack.c.b16 %v8126, %v8111
    %v8427 = vpack.c.b16 %v8127, %v8112
    %v8428 = vpack.c.b16 %v8128, %v8113
    %v8429 = vpack.c.b16 %v8129, %v8114
    %v8430 = vpack.c.b16 %v8130, %v8115
    %v8431 = vpack.c.b16 %v8131, %v8116
    %v8432 = vpack.c.b16 %v8132, %v8117
    %v8433 = vpack.c.b16 %v8133, %v8118
    %v8434 = vpack.c.b16 %v8134, %v8119
    %v8435 = vpack.c.b16 %v8135, %v8120
    %v8436 = vpack.c.b16 %v8136, %v8121
    %v8437 = vpack.c.b16 %v8137, %v8122
    %v8438 = vpack.c.b16 %v8153, %v8138
    %v8439 = vpack.c.b16 %v8154, %v8139
    %v8440 = vpack.c.b16 %v8155, %v8140
    %v8441 = vpack.c.b16 %v8156, %v8141
    %v8442 = vpack.c.b16 %v8157, %v8142
    %v8443 = vpack.c.b16 %v8158, %v8143
    %v8444 = vpack.c.b16 %v8159, %v8144
    %v8445 = vpack.c.b16 %v8160, %v8145
    %v8446 = vpack.c.b16 %v8161, %v8146
    %v8447 = vpack.c.b16 %v8162, %v8147
    %v8448 = vpack.c.b16 %v8163, %v8148
    %v8449 = vpack.c.b16 %v8164, %v8149
    %v8450 = vpack.c.b16 %v8165, %v8150
    %v8451 = vpack.c.b16 %v8166, %v8151
    %v8452 = vpack.c.b16 %v8167, %v8152
    %v8453 = vpack.c.b16 %v8183, %v8168
    %v8454 = vpack.c.b16 %v8184, %v8169
    %v8455 = vpack.c.b16 %v8185, %v8170
    %v8456 = vpack.c.b16 %v8186, %v8171
    %v8457 = vpack.c.b16 %v8187, %v8172
    %v8458 = vpack.c.b16 %v8188, %v8173
    %v8459 = vpack.c.b16 %v8189, %v8174
    %v8460 = vpack.c.b16 %v8190, %v8175
    %v8461 = vpack.c.b16 %v8191, %v8176
    %v8462 = vpack.c.b16 %v8192, %v8177
    %v8463 = vpack.c.b16 %v8193, %v8178
    %v8464 = vpack.c.b16 %v8194, %v8179
    %v8465 = vpack.c.b16 %v8195, %v8180
    %v8466 = vpack.c.b16 %v8196, %v8181
    %v8467 = vpack.c.b16 %v8197, %v8182
    %v8468 = vpack.c.b16 %v8213, %v8198
    %v8469 = vpack.c.b16 %v8214, %v8199
    %v8470 = vpack.c.b16 %v8215, %v8200
    %v8471 = vpack.c.b16 %v8216, %v8201
    %v8472 = vpack.c.b16 %v8217, %v8202
    %v8473 = vpack.c.b16 %v8218, %v8203
    %v8474 = vpack.c.b16 %v8219, %v8204
    %v8475 = vpack.c.b16 %v8220, %v8205
    %v8476 = vpack.c.b16 %v8221, %v8206
    %v8477 = vpack.c.b16 %v8222, %v8207
    %v8478 = vpack.c.b16 %v8223, %v8208
    %v8479 = vpack.c.b16 %v8224, %v8209
    %v8480 = vpack.c.b16 %v8225, %v8210
    %v8481 = vpack.c.b16 %v8226, %v8211
    %v8482 = vpack.c.b16 %v8227, %v8212
    %v8483 = vpack.c.b16 %v8243, %v8228
    %v8484 = vpack.c.b16 %v8244, %v8229
    %v8485 = vpack.c.b16 %v8245, %v8230
    %v8486 = vpack.c.b16 %v8246, %v8231
    %v8487 = vpack.c.b16 %v8247, %v8232
    %v8488 = vpack.c.b16 %v8248, %v8233
    %v8489 = vpack.c.b16 %v8249, %v8234
    %v8490 = vpack.c.b16 %v8250, %v8235
    %v8491 = vpack.c.b16 %v8251, %v8236
    %v8492 = vpack.c.b16 %v8252, %v8237
    %v8493 = vpack.c.b16 %v8253, %v8238
    %v8494 = vpack.c.b16 %v8254, %v8239
    %v8495 = vpack.c.b16 %v8255, %v8240
    %v8496 = vpack.c.b16 %v8256, %v8241
    %v8497 = vpack.c.b16 %v8257, %v8242
    %8738 = vmatprep.subr.bf16.mxu0 %v8259
    %8739 = vmatpush1.bf16.msra.mxu0 %v8258
    %8740 = vmatprep.subr.bf16.mxu0 %v8274
    %8741 = vmatpush1.bf16.msra.mxu0 %v8273
    %8742 = vmatprep.subr.bf16.mxu0 %v8289
    %8743 = vmatpush1.bf16.msra.mxu0 %v8288
    %8744 = vmatprep.subr.bf16.mxu0 %v8304
    %8745 = vmatpush1.bf16.msra.mxu0 %v8303
    %8746 = vmatprep.subr.bf16.mxu0 %v8319
    %8747 = vmatpush1.bf16.msra.mxu0 %v8318
    %8748 = vmatprep.subr.bf16.mxu0 %v8334
    %8749 = vmatpush1.bf16.msra.mxu0 %v8333
    %8750 = vmatprep.subr.bf16.mxu0 %v8349
    %8751 = vmatpush1.bf16.msra.mxu0 %v8348
    %8752 = vmatprep.subr.bf16.mxu0 %v8364
    %8753 = vmatpush1.bf16.msra.mxu0 %v8363
    %8754 = vmatprep.subr.bf16.mxu0 %v8379
    %8755 = vmatpush1.bf16.msra.mxu0 %v8378
    %8756 = vmatprep.subr.bf16.mxu0 %v8394
    %8757 = vmatpush1.bf16.msra.mxu0 %v8393
    %8758 = vmatprep.subr.bf16.mxu0 %v8409
    %8759 = vmatpush1.bf16.msra.mxu0 %v8408
    %8760 = vmatprep.subr.bf16.mxu0 %v8424
    %8761 = vmatpush1.bf16.msra.mxu0 %v8423
    %8762 = vmatprep.subr.bf16.mxu0 %v8439
    %8763 = vmatpush1.bf16.msra.mxu0 %v8438
    %8764 = vmatprep.subr.bf16.mxu0 %v8454
    %8765 = vmatpush1.bf16.msra.mxu0 %v8453
    %8766 = vmatprep.subr.bf16.mxu0 %v8469
    %8767 = vmatpush1.bf16.msra.mxu0 %v8468
    %8768 = vmatprep.subr.bf16.mxu0 %v8484
    %8769 = vmatpush1.bf16.msra.mxu0 %v8483
    %8770 = vmatprep.mubr.bf16.mxu0 %v7261
    %8771 = vmatmul.mubr.bf16.gmra.mrb[0].mxu0 %v7260
    %v8772 = vpop.f32.mrb[0].mxu0
    %v8773 = vadd.f32 0.0, %v8772
    %v8774 = vpop.f32.mrb[0].mxu0
    %v8775 = vadd.f32 0.0, %v8774
    %v8776 = vpop.f32.mrb[0].mxu0
    %v8777 = vpop.f32.mrb[0].mxu0
    %8778 = vmatprep.mubr.bf16.mxu0 %v7263
    %8779 = vmatmul.mubr.bf16.gmra.mrb[0].mxu0 %v7262
    %v8780 = vpop.f32.mrb[0].mxu0
    %v8781 = vadd.f32 0.0, %v8780
    %v8782 = vpop.f32.mrb[0].mxu0
    %v8783 = vadd.f32 0.0, %v8782
    %v8784 = vpop.f32.mrb[0].mxu0
    %v8785 = vpop.f32.mrb[0].mxu0
    %8786 = vmatprep.mubr.bf16.mxu0 %v7265
    %8787 = vmatmul.mubr.bf16.gmra.mrb[0].mxu0 %v7264
    %v8788 = vpop.f32.mrb[0].mxu0
    %v8789 = vpop.f32.mrb[0].mxu0
    %v8790 = vpop.f32.mrb[0].mxu0
    %v8791 = vpop.f32.mrb[0].mxu0
    %8792 = vdwg.mxu0
    %8793 = vmatprep.subr.bf16.mxu0 %v8261
    %8794 = vmatpush1.bf16.msra.mxu0 %v8260
    %8795 = vmatprep.subr.bf16.mxu0 %v8276
    %8796 = vmatpush1.bf16.msra.mxu0 %v8275
    %8797 = vmatprep.subr.bf16.mxu0 %v8291
    %8798 = vmatpush1.bf16.msra.mxu0 %v8290
    %8799 = vmatprep.subr.bf16.mxu0 %v8306
    %8800 = vmatpush1.bf16.msra.mxu0 %v8305
    %8801 = vmatprep.subr.bf16.mxu0 %v8321
    %8802 = vmatpush1.bf16.msra.mxu0 %v8320
    %8803 = vmatprep.subr.bf16.mxu0 %v8336
    %8804 = vmatpush1.bf16.msra.mxu0 %v8335
    %8805 = vmatprep.subr.bf16.mxu0 %v8351
    %8806 = vmatpush1.bf16.msra.mxu0 %v8350
    %8807 = vmatprep.subr.bf16.mxu0 %v8366
    %8808 = vmatpush1.bf16.msra.mxu0 %v8365
    %8809 = vmatprep.subr.bf16.mxu0 %v8381
    %8810 = vmatpush1.bf16.msra.mxu0 %v8380
    %8811 = vmatprep.subr.bf16.mxu0 %v8396
    %8812 = vmatpush1.bf16.msra.mxu0 %v8395
    %8813 = vmatprep.subr.bf16.mxu0 %v8411
    %8814 = vmatpush1.bf16.msra.mxu0 %v8410
    %8815 = vmatprep.subr.bf16.mxu0 %v8426
    %8816 = vmatpush1.bf16.msra.mxu0 %v8425
    %8817 = vmatprep.subr.bf16.mxu0 %v8441
    %8818 = vmatpush1.bf16.msra.mxu0 %v8440
    %8819 = vmatprep.subr.bf16.mxu0 %v8456
    %8820 = vmatpush1.bf16.msra.mxu0 %v8455
    %8821 = vmatprep.subr.bf16.mxu0 %v8471
    %8822 = vmatpush1.bf16.msra.mxu0 %v8470
    %8823 = vmatprep.subr.bf16.mxu0 %v8486
    %8824 = vmatpush1.bf16.msra.mxu0 %v8485
    %8825 = vmatprep.mubr.bf16.mxu0 %v7261
    %8826 = vmatmul.mubr.bf16.gmra.mrb[0].mxu0 %v7260
    %v8827 = vpop.f32.mrb[0].mxu0
    %v8828 = vadd.f32 0.0, %v8827
    %v8829 = vpop.f32.mrb[0].mxu0
    %v8830 = vadd.f32 0.0, %v8829
    %v8831 = vpop.f32.mrb[0].mxu0
    %v8832 = vpop.f32.mrb[0].mxu0
    %8833 = vmatprep.mubr.bf16.mxu0 %v7263
    %8834 = vmatmul.mubr.bf16.gmra.mrb[0].mxu0 %v7262
    %v8835 = vpop.f32.mrb[0].mxu0
    %v8836 = vadd.f32 0.0, %v8835
    %v8837 = vpop.f32.mrb[0].mxu0
    %v8838 = vadd.f32 0.0, %v8837
    %v8839 = vpop.f32.mrb[0].mxu0
    %v8840 = vpop.f32.mrb[0].mxu0
    %8841 = vmatprep.mubr.bf16.mxu0 %v7265
    %8842 = vmatmul.mubr.bf16.gmra.mrb[0].mxu0 %v7264
    %v8843 = vpop.f32.mrb[0].mxu0
    %v8844 = vpop.f32.mrb[0].mxu0
    %v8845 = vpop.f32.mrb[0].mxu0
    %v8846 = vpop.f32.mrb[0].mxu0
    %8847 = vdwg.mxu0
    %8848 = vmatprep.subr.bf16.mxu0 %v8263
    %8849 = vmatpush1.bf16.msra.mxu0 %v8262
    %8850 = vmatprep.subr.bf16.mxu0 %v8278
    %8851 = vmatpush1.bf16.msra.mxu0 %v8277
    %8852 = vmatprep.subr.bf16.mxu0 %v8293
    %8853 = vmatpush1.bf16.msra.mxu0 %v8292
    %8854 = vmatprep.subr.bf16.mxu0 %v8308
    %8855 = vmatpush1.bf16.msra.mxu0 %v8307
    %8856 = vmatprep.subr.bf16.mxu0 %v8323
    %8857 = vmatpush1.bf16.msra.mxu0 %v8322
    %8858 = vmatprep.subr.bf16.mxu0 %v8338
    %8859 = vmatpush1.bf16.msra.mxu0 %v8337
    %8860 = vmatprep.subr.bf16.mxu0 %v8353
    %8861 = vmatpush1.bf16.msra.mxu0 %v8352
    %8862 = vmatprep.subr.bf16.mxu0 %v8368
    %8863 = vmatpush1.bf16.msra.mxu0 %v8367
    %8864 = vmatprep.subr.bf16.mxu0 %v8383
    %8865 = vmatpush1.bf16.msra.mxu0 %v8382
    %8866 = vmatprep.subr.bf16.mxu0 %v8398
    %8867 = vmatpush1.bf16.msra.mxu0 %v8397
    %8868 = vmatprep.subr.bf16.mxu0 %v8413
    %8869 = vmatpush1.bf16.msra.mxu0 %v8412
    %8870 = vmatprep.subr.bf16.mxu0 %v8428
    %8871 = vmatpush1.bf16.msra.mxu0 %v8427
    %8872 = vmatprep.subr.bf16.mxu0 %v8443
    %8873 = vmatpush1.bf16.msra.mxu0 %v8442
    %8874 = vmatprep.subr.bf16.mxu0 %v8458
    %8875 = vmatpush1.bf16.msra.mxu0 %v8457
    %8876 = vmatprep.subr.bf16.mxu0 %v8473
    %8877 = vmatpush1.bf16.msra.mxu0 %v8472
    %8878 = vmatprep.subr.bf16.mxu0 %v8488
    %8879 = vmatpush1.bf16.msra.mxu0 %v8487
    %8880 = vmatprep.mubr.bf16.mxu0 %v7261
    %8881 = vmatmul.mubr.bf16.gmra.mrb[0].mxu0 %v7260
    %v8882 = vpop.f32.mrb[0].mxu0
    %v8883 = vadd.f32 0.0, %v8882
    %v8884 = vpop.f32.mrb[0].mxu0
    %v8885 = vadd.f32 0.0, %v8884
    %v8886 = vpop.f32.mrb[0].mxu0
    %v8887 = vpop.f32.mrb[0].mxu0
    %8888 = vmatprep.mubr.bf16.mxu0 %v7263
    %8889 = vmatmul.mubr.bf16.gmra.mrb[0].mxu0 %v7262
    %v8890 = vpop.f32.mrb[0].mxu0
    %v8891 = vadd.f32 0.0, %v8890
    %v8892 = vpop.f32.mrb[0].mxu0
    %v8893 = vpop.f32.mrb[0].mxu0
    %v8894 = vadd.f32 0.0, %v8893
    %v8895 = vpop.f32.mrb[0].mxu0
    %v8896 = vadd.f32 0.0, %v8895
    %8897 = vmatprep.mubr.bf16.mxu0 %v7265
    %8898 = vmatmul.mubr.bf16.gmra.mrb[0].mxu0 %v7264
    %v8899 = vpop.f32.mrb[0].mxu0
    %v8900 = vpop.f32.mrb[0].mxu0
    %v8901 = vpop.f32.mrb[0].mxu0
    %v8902 = vpop.f32.mrb[0].mxu0
    %8903 = vdwg.mxu0
    %8904 = vmatprep.subr.bf16.mxu0 %v8265
    %8905 = vmatpush1.bf16.msra.mxu0 %v8264
    %8906 = vmatprep.subr.bf16.mxu0 %v8280
    %8907 = vmatpush1.bf16.msra.mxu0 %v8279
    %8908 = vmatprep.subr.bf16.mxu0 %v8295
    %8909 = vmatpush1.bf16.msra.mxu0 %v8294
    %8910 = vmatprep.subr.bf16.mxu0 %v8310
    %8911 = vmatpush1.bf16.msra.mxu0 %v8309
    %8912 = vmatprep.subr.bf16.mxu0 %v8325
    %8913 = vmatpush1.bf16.msra.mxu0 %v8324
    %8914 = vmatprep.subr.bf16.mxu0 %v8340
    %8915 = vmatpush1.bf16.msra.mxu0 %v8339
    %8916 = vmatprep.subr.bf16.mxu0 %v8355
    %8917 = vmatpush1.bf16.msra.mxu0 %v8354
    %8918 = vmatprep.subr.bf16.mxu0 %v8370
    %8919 = vmatpush1.bf16.msra.mxu0 %v8369
    %8920 = vmatprep.subr.bf16.mxu0 %v8385
    %8921 = vmatpush1.bf16.msra.mxu0 %v8384
    %8922 = vmatprep.subr.bf16.mxu0 %v8400
    %8923 = vmatpush1.bf16.msra.mxu0 %v8399
    %8924 = vmatprep.subr.bf16.mxu0 %v8415
    %8925 = vmatpush1.bf16.msra.mxu0 %v8414
    %8926 = vmatprep.subr.bf16.mxu0 %v8430
    %8927 = vmatpush1.bf16.msra.mxu0 %v8429
    %8928 = vmatprep.subr.bf16.mxu0 %v8445
    %8929 = vmatpush1.bf16.msra.mxu0 %v8444
    %8930 = vmatprep.subr.bf16.mxu0 %v8460
    %8931 = vmatpush1.bf16.msra.mxu0 %v8459
    %8932 = vmatprep.subr.bf16.mxu0 %v8475
    %8933 = vmatpush1.bf16.msra.mxu0 %v8474
    %8934 = vmatprep.subr.bf16.mxu0 %v8490
    %8935 = vmatpush1.bf16.msra.mxu0 %v8489
    %8936 = vmatprep.mubr.bf16.mxu0 %v7261
    %8937 = vmatmul.mubr.bf16.gmra.mrb[0].mxu0 %v7260
    %v8938 = vpop.f32.mrb[0].mxu0
    %v8939 = vadd.f32 0.0, %v8938
    %v8940 = vpop.f32.mrb[0].mxu0
    %v8941 = vpop.f32.mrb[0].mxu0
    %v8942 = vadd.f32 0.0, %v8941
    %v8943 = vpop.f32.mrb[0].mxu0
    %v8944 = vadd.f32 0.0, %v8943
    %8945 = vmatprep.mubr.bf16.mxu0 %v7263
    %8946 = vmatmul.mubr.bf16.gmra.mrb[0].mxu0 %v7262
    %v8947 = vpop.f32.mrb[0].mxu0
    %v8948 = vpop.f32.mrb[0].mxu0
    %v8949 = vpop.f32.mrb[0].mxu0
    %v8950 = vadd.f32 0.0, %v8949
    %v8951 = vpop.f32.mrb[0].mxu0
    %v8952 = vadd.f32 0.0, %v8951
    %8953 = vmatprep.mubr.bf16.mxu0 %v7265
    %8954 = vmatmul.mubr.bf16.gmra.mrb[0].mxu0 %v7264
    %v8955 = vpop.f32.mrb[0].mxu0
    %v8956 = vpop.f32.mrb[0].mxu0
    %v8957 = vpop.f32.mrb[0].mxu0
    %v8958 = vpop.f32.mrb[0].mxu0
    %8959 = vdwg.mxu0
    %8960 = vmatprep.subr.bf16.mxu0 %v8267
    %8961 = vmatpush1.bf16.msra.mxu0 %v8266
    %8962 = vmatprep.subr.bf16.mxu0 %v8282
    %8963 = vmatpush1.bf16.msra.mxu0 %v8281
    %8964 = vmatprep.subr.bf16.mxu0 %v8297
    %8965 = vmatpush1.bf16.msra.mxu0 %v8296
    %8966 = vmatprep.subr.bf16.mxu0 %v8312
    %8967 = vmatpush1.bf16.msra.mxu0 %v8311
    %8968 = vmatprep.subr.bf16.mxu0 %v8327
    %8969 = vmatpush1.bf16.msra.mxu0 %v8326
    %8970 = vmatprep.subr.bf16.mxu0 %v8342
    %8971 = vmatpush1.bf16.msra.mxu0 %v8341
    %8972 = vmatprep.subr.bf16.mxu0 %v8357
    %8973 = vmatpush1.bf16.msra.mxu0 %v8356
    %8974 = vmatprep.subr.bf16.mxu0 %v8372
    %8975 = vmatpush1.bf16.msra.mxu0 %v8371
    %8976 = vmatprep.subr.bf16.mxu0 %v8387
    %8977 = vmatpush1.bf16.msra.mxu0 %v8386
    %8978 = vmatprep.subr.bf16.mxu0 %v8402
    %8979 = vmatpush1.bf16.msra.mxu0 %v8401
    %8980 = vmatprep.subr.bf16.mxu0 %v8417
    %8981 = vmatpush1.bf16.msra.mxu0 %v8416
    %8982 = vmatprep.subr.bf16.mxu0 %v8432
    %8983 = vmatpush1.bf16.msra.mxu0 %v8431
    %8984 = vmatprep.subr.bf16.mxu0 %v8447
    %8985 = vmatpush1.bf16.msra.mxu0 %v8446
    %8986 = vmatprep.subr.bf16.mxu0 %v8462
    %8987 = vmatpush1.bf16.msra.mxu0 %v8461
    %8988 = vmatprep.subr.bf16.mxu0 %v8477
    %8989 = vmatpush1.bf16.msra.mxu0 %v8476
    %8990 = vmatprep.subr.bf16.mxu0 %v8492
    %8991 = vmatpush1.bf16.msra.mxu0 %v8491
    %8992 = vmatprep.mubr.bf16.mxu0 %v7261
    %8993 = vmatmul.mubr.bf16.gmra.mrb[0].mxu0 %v7260
    %v8994 = vpop.f32.mrb[0].mxu0
    %v8995 = vpop.f32.mrb[0].mxu0
    %v8996 = vpop.f32.mrb[0].mxu0
    %v8997 = vadd.f32 0.0, %v8996
    %v8998 = vpop.f32.mrb[0].mxu0
    %v8999 = vadd.f32 0.0, %v8998
    %9000 = vmatprep.mubr.bf16.mxu0 %v7263
    %9001 = vmatmul.mubr.bf16.gmra.mrb[0].mxu0 %v7262
    %v9002 = vpop.f32.mrb[0].mxu0
    %v9003 = vpop.f32.mrb[0].mxu0
    %v9004 = vpop.f32.mrb[0].mxu0
    %v9005 = vadd.f32 0.0, %v9004
    %v9006 = vpop.f32.mrb[0].mxu0
    %v9007 = vadd.f32 0.0, %v9006
    %9008 = vmatprep.mubr.bf16.mxu0 %v7265
    %9009 = vmatmul.mubr.bf16.gmra.mrb[0].mxu0 %v7264
    %v9010 = vpop.f32.mrb[0].mxu0
    %v9011 = vpop.f32.mrb[0].mxu0
    %v9012 = vpop.f32.mrb[0].mxu0
    %v9013 = vpop.f32.mrb[0].mxu0
    %9014 = vdwg.mxu0
    %9015 = vmatprep.subr.bf16.mxu0 %v8269
    %9016 = vmatpush1.bf16.msra.mxu0 %v8268
    %9017 = vmatprep.subr.bf16.mxu0 %v8284
    %9018 = vmatpush1.bf16.msra.mxu0 %v8283
    %9019 = vmatprep.subr.bf16.mxu0 %v8299
    %9020 = vmatpush1.bf16.msra.mxu0 %v8298
    %9021 = vmatprep.subr.bf16.mxu0 %v8314
    %9022 = vmatpush1.bf16.msra.mxu0 %v8313
    %9023 = vmatprep.subr.bf16.mxu0 %v8329
    %9024 = vmatpush1.bf16.msra.mxu0 %v8328
    %9025 = vmatprep.subr.bf16.mxu0 %v8344
    %9026 = vmatpush1.bf16.msra.mxu0 %v8343
    %9027 = vmatprep.subr.bf16.mxu0 %v8359
    %9028 = vmatpush1.bf16.msra.mxu0 %v8358
    %9029 = vmatprep.subr.bf16.mxu0 %v8374
    %9030 = vmatpush1.bf16.msra.mxu0 %v8373
    %9031 = vmatprep.subr.bf16.mxu0 %v8389
    %9032 = vmatpush1.bf16.msra.mxu0 %v8388
    %9033 = vmatprep.subr.bf16.mxu0 %v8404
    %9034 = vmatpush1.bf16.msra.mxu0 %v8403
    %9035 = vmatprep.subr.bf16.mxu0 %v8419
    %9036 = vmatpush1.bf16.msra.mxu0 %v8418
    %9037 = vmatprep.subr.bf16.mxu0 %v8434
    %9038 = vmatpush1.bf16.msra.mxu0 %v8433
    %9039 = vmatprep.subr.bf16.mxu0 %v8449
    %9040 = vmatpush1.bf16.msra.mxu0 %v8448
    %9041 = vmatprep.subr.bf16.mxu0 %v8464
    %9042 = vmatpush1.bf16.msra.mxu0 %v8463
    %9043 = vmatprep.subr.bf16.mxu0 %v8479
    %9044 = vmatpush1.bf16.msra.mxu0 %v8478
    %9045 = vmatprep.subr.bf16.mxu0 %v8494
    %9046 = vmatpush1.bf16.msra.mxu0 %v8493
    %9047 = vmatprep.mubr.bf16.mxu0 %v7261
    %9048 = vmatmul.mubr.bf16.gmra.mrb[0].mxu0 %v7260
    %v9049 = vpop.f32.mrb[0].mxu0
    %v9050 = vpop.f32.mrb[0].mxu0
    %v9051 = vpop.f32.mrb[0].mxu0
    %v9052 = vadd.f32 0.0, %v9051
    %v9053 = vpop.f32.mrb[0].mxu0
    %v9054 = vadd.f32 0.0, %v9053
    %9055 = vmatprep.mubr.bf16.mxu0 %v7263
    %9056 = vmatmul.mubr.bf16.gmra.mrb[0].mxu0 %v7262
    %v9057 = vpop.f32.mrb[0].mxu0
    %v9058 = vpop.f32.mrb[0].mxu0
    %v9059 = vpop.f32.mrb[0].mxu0
    %v9060 = vadd.f32 0.0, %v9059
    %v9061 = vpop.f32.mrb[0].mxu0
    %9062 = vmatprep.mubr.bf16.mxu0 %v7265
    %9063 = vmatmul.mubr.bf16.gmra.mrb[0].mxu0 %v7264
    %v9064 = vpop.f32.mrb[0].mxu0
    %v9065 = vadd.f32 0.0, %v9064
    %v9066 = vpop.f32.mrb[0].mxu0
    %v9067 = vadd.f32 0.0, %v9066
    %v9068 = vpop.f32.mrb[0].mxu0
    %v9069 = vpop.f32.mrb[0].mxu0
    %9070 = vdwg.mxu0
    %9071 = vmatprep.subr.bf16.mxu0 %v8271
    %9072 = vmatpush1.bf16.msra.mxu0 %v8270
    %9073 = vmatprep.subr.bf16.mxu0 %v8286
    %9074 = vmatpush1.bf16.msra.mxu0 %v8285
    %9075 = vmatprep.subr.bf16.mxu0 %v8301
    %9076 = vmatpush1.bf16.msra.mxu0 %v8300
    %9077 = vmatprep.subr.bf16.mxu0 %v8316
    %9078 = vmatpush1.bf16.msra.mxu0 %v8315
    %9079 = vmatprep.subr.bf16.mxu0 %v8331
    %9080 = vmatpush1.bf16.msra.mxu0 %v8330
    %9081 = vmatprep.subr.bf16.mxu0 %v8346
    %9082 = vmatpush1.bf16.msra.mxu0 %v8345
    %9083 = vmatprep.subr.bf16.mxu0 %v8361
    %9084 = vmatpush1.bf16.msra.mxu0 %v8360
    %9085 = vmatprep.subr.bf16.mxu0 %v8376
    %9086 = vmatpush1.bf16.msra.mxu0 %v8375
    %9087 = vmatprep.subr.bf16.mxu0 %v8391
    %9088 = vmatpush1.bf16.msra.mxu0 %v8390
    %9089 = vmatprep.subr.bf16.mxu0 %v8406
    %9090 = vmatpush1.bf16.msra.mxu0 %v8405
    %9091 = vmatprep.subr.bf16.mxu0 %v8421
    %9092 = vmatpush1.bf16.msra.mxu0 %v8420
    %9093 = vmatprep.subr.bf16.mxu0 %v8436
    %9094 = vmatpush1.bf16.msra.mxu0 %v8435
    %9095 = vmatprep.subr.bf16.mxu0 %v8451
    %9096 = vmatpush1.bf16.msra.mxu0 %v8450
    %9097 = vmatprep.subr.bf16.mxu0 %v8466
    %9098 = vmatpush1.bf16.msra.mxu0 %v8465
    %9099 = vmatprep.subr.bf16.mxu0 %v8481
    %9100 = vmatpush1.bf16.msra.mxu0 %v8480
    %9101 = vmatprep.subr.bf16.mxu0 %v8496
    %9102 = vmatpush1.bf16.msra.mxu0 %v8495
    %9103 = vmatprep.mubr.bf16.mxu0 %v7261
    %9104 = vmatmul.mubr.bf16.gmra.mrb[0].mxu0 %v7260
    %v9105 = vpop.f32.mrb[0].mxu0
    %v9106 = vpop.f32.mrb[0].mxu0
    %v9107 = vpop.f32.mrb[0].mxu0
    %v9108 = vadd.f32 0.0, %v9107
    %v9109 = vpop.f32.mrb[0].mxu0
    %9110 = vmatprep.mubr.bf16.mxu0 %v7263
    %9111 = vmatmul.mubr.bf16.gmra.mrb[0].mxu0 %v7262
    %v9112 = vpop.f32.mrb[0].mxu0
    %v9113 = vadd.f32 0.0, %v9112
    %v9114 = vpop.f32.mrb[0].mxu0
    %v9115 = vadd.f32 0.0, %v9114
    %v9116 = vpop.f32.mrb[0].mxu0
    %v9117 = vpop.f32.mrb[0].mxu0
    %9118 = vmatprep.mubr.bf16.mxu0 %v7265
    %9119 = vmatmul.mubr.bf16.gmra.mrb[0].mxu0 %v7264
    %v9120 = vpop.f32.mrb[0].mxu0
    %v9121 = vadd.f32 0.0, %v9120
    %v9122 = vpop.f32.mrb[0].mxu0
    %v9123 = vadd.f32 0.0, %v9122
    %v9124 = vpop.f32.mrb[0].mxu0
    %v9125 = vpop.f32.mrb[0].mxu0
    %9126 = vdwg.mxu0
    %9127 = vmatprep.subr.bf16.mxu0 0
    %9128 = vmatpush1.bf16.msra.mxu0 %v8272
    %9129 = vmatprep.subr.bf16.mxu0 0
    %9130 = vmatpush1.bf16.msra.mxu0 %v8287
    %9131 = vmatprep.subr.bf16.mxu0 0
    %9132 = vmatpush1.bf16.msra.mxu0 %v8302
    %9133 = vmatprep.subr.bf16.mxu0 0
    %9134 = vmatpush1.bf16.msra.mxu0 %v8317
    %9135 = vmatprep.subr.bf16.mxu0 0
    %9136 = vmatpush1.bf16.msra.mxu0 %v8332
    %9137 = vmatprep.subr.bf16.mxu0 0
    %9138 = vmatpush1.bf16.msra.mxu0 %v8347
    %9139 = vmatprep.subr.bf16.mxu0 0
    %9140 = vmatpush1.bf16.msra.mxu0 %v8362
    %9141 = vmatprep.subr.bf16.mxu0 0
    %9142 = vmatpush1.bf16.msra.mxu0 %v8377
    %9143 = vmatprep.subr.bf16.mxu0 0
    %9144 = vmatpush1.bf16.msra.mxu0 %v8392
    %9145 = vmatprep.subr.bf16.mxu0 0
    %9146 = vmatpush1.bf16.msra.mxu0 %v8407
    %9147 = vmatprep.subr.bf16.mxu0 0
    %9148 = vmatpush1.bf16.msra.mxu0 %v8422
    %9149 = vmatprep.subr.bf16.mxu0 0
    %9150 = vmatpush1.bf16.msra.mxu0 %v8437
    %9151 = vmatprep.subr.bf16.mxu0 0
    %9152 = vmatpush1.bf16.msra.mxu0 %v8452
    %9153 = vmatprep.subr.bf16.mxu0 0
    %9154 = vmatpush1.bf16.msra.mxu0 %v8467
    %9155 = vmatprep.subr.bf16.mxu0 0
    %9156 = vmatpush1.bf16.msra.mxu0 %v8482
    %9157 = vmatprep.subr.bf16.mxu0 0
    %9158 = vmatpush1.bf16.msra.mxu0 %v8497
    %9159 = vmatprep.mubr.bf16.mxu0 %v7261
    %9160 = vmatmul.mubr.bf16.gmra.mrb[0].mxu0 %v7260
    %v9161 = vpop.f32.mrb[0].mxu0
    %v9162 = vpop.f32.mrb[0].mxu0
    %v9163 = vpop.f32.mrb[0].mxu0
    %v9164 = vpop.f32.mrb[0].mxu0
    %9165 = vmatprep.mubr.bf16.mxu0 %v7263
    %9166 = vmatmul.mubr.bf16.gmra.mrb[0].mxu0 %v7262
    %v9167 = vpop.f32.mrb[0].mxu0
    %v9168 = vadd.f32 0.0, %v9167
    %v9169 = vpop.f32.mrb[0].mxu0
    %v9170 = vpop.f32.mrb[0].mxu0
    %v9171 = vpop.f32.mrb[0].mxu0
    %9172 = vmatprep.mubr.bf16.mxu0 %v7265
    %9173 = vmatmul.mubr.bf16.gmra.mrb[0].mxu0 %v7264
    %v9174 = vpop.f32.mrb[0].mxu0
    %v9175 = vadd.f32 0.0, %v9174
    %v9176 = vpop.f32.mrb[0].mxu0
    %v9177 = vpop.f32.mrb[0].mxu0
    %v9178 = vpop.f32.mrb[0].mxu0
    %9179 = vdwg.mxu0
    %v9182 = vrot.slane %v8773, 1
    %v9183 = vrot.slane %v8775, 1
    %9184 = vrot.lane.b32.xlu0 %v9182, 28
    %v9185 = vpop.permute.xlu0 %9184
    %9186 = vrot.lane.b32.xlu0 %v9183, 28
    %v9187 = vpop.permute.xlu0 %9186
    %vm9188 = vcmask 228352
    %v9189 = vsel %vm9188, %v9185, %v9187
    %v9191 = vadd.f32 %v8773, %v9189
    %v9193 = vrot.slane %v8775, 2
    %v9194 = vrot.slane %v8828, 2
    %9195 = vrot.lane.b32.xlu0 %v9193, 56
    %v9196 = vpop.permute.xlu0 %9195
    %9197 = vrot.lane.b32.xlu0 %v9194, 56
    %v9198 = vpop.permute.xlu0 %9197
    %vm9199 = vcmask 457728
    %v9200 = vsel %vm9199, %v9196, %v9198
    %v9202 = vadd.f32 %v9191, %v9200
    %v9204 = vrot.slane %v8828, 3
    %v9205 = vrot.slane %v8830, 3
    %9206 = vrot.lane.b32.xlu0 %v9204, 84
    %v9207 = vpop.permute.xlu0 %9206
    %9208 = vrot.lane.b32.xlu0 %v9205, 84
    %v9209 = vpop.permute.xlu0 %9208
    %vm9210 = vcmask 687104
    %v9211 = vsel %vm9210, %v9207, %v9209
    %v9213 = vadd.f32 %v9202, %v9211
    %v9214 = vrot.slane %v8830, 4
    %9215 = vrot.lane.b32.xlu0 %v9214, 112
    %v9216 = vpop.permute.xlu0 %9215
    %v9218 = vadd.f32 %v9213, %v9216
    %v9220 = vrot.slane %v8830, 5
    %v9221 = vrot.slane %v8883, 5
    %9222 = vrot.lane.b32.xlu0 %v9220, 12
    %v9223 = vpop.permute.xlu0 %9222
    %9224 = vrot.lane.b32.xlu0 %v9221, 12
    %v9225 = vpop.permute.xlu0 %9224
    %vm9226 = vcmask 97280
    %v9227 = vsel %vm9226, %v9223, %v9225
    %v9229 = vadd.f32 %v9218, %v9227
    %v9231 = vrot.slane %v8883, 6
    %v9232 = vrot.slane %v8885, 6
    %9233 = vrot.lane.b32.xlu0 %v9231, 40
    %v9234 = vpop.permute.xlu0 %9233
    %9235 = vrot.lane.b32.xlu0 %v9232, 40
    %v9236 = vpop.permute.xlu0 %9235
    %vm9237 = vcmask 326656
    %v9238 = vsel %vm9237, %v9234, %v9236
    %v9240 = vadd.f32 %v9229, %v9238
    %v9242 = vrot.slane %v8885, 7
    %v9243 = vrot.slane %v8939, 7
    %9244 = vrot.lane.b32.xlu0 %v9242, 68
    %v9245 = vpop.permute.xlu0 %9244
    %9246 = vrot.lane.b32.xlu0 %v9243, 68
    %v9247 = vpop.permute.xlu0 %9246
    %vm9248 = vcmask 556032
    %v9249 = vsel %vm9248, %v9245, %v9247
    %v9251 = vadd.f32 %v9240, %v9249
    %9254 = vrot.lane.b32.xlu0 %v8942, 96
    %v9255 = vpop.permute.xlu0 %9254
    %9256 = vrot.lane.b32.xlu0 %v8944, 96
    %v9257 = vpop.permute.xlu0 %9256
    %vm9258 = vcmask 785408
    %v9259 = vsel %vm9258, %v9255, %v9257
    %v9261 = vadd.f32 %v9251, %v9259
    %v9262 = vrot.slane %v8944, 1
    %9263 = vrot.lane.b32.xlu0 %v9262, 124
    %v9264 = vpop.permute.xlu0 %9263
    %v9266 = vadd.f32 %v9261, %v9264
    %v9268 = vrot.slane %v8944, 2
    %v9269 = vrot.slane %v8997, 2
    %9270 = vrot.lane.b32.xlu0 %v9268, 24
    %v9271 = vpop.permute.xlu0 %9270
    %9272 = vrot.lane.b32.xlu0 %v9269, 24
    %v9273 = vpop.permute.xlu0 %9272
    %vm9274 = vcmask 195584
    %v9275 = vsel %vm9274, %v9271, %v9273
    %v9277 = vadd.f32 %v9266, %v9275
    %v9279 = vrot.slane %v8997, 3
    %v9280 = vrot.slane %v8999, 3
    %9281 = vrot.lane.b32.xlu0 %v9279, 52
    %v9282 = vpop.permute.xlu0 %9281
    %9283 = vrot.lane.b32.xlu0 %v9280, 52
    %v9284 = vpop.permute.xlu0 %9283
    %vm9285 = vcmask 424960
    %v9286 = vsel %vm9285, %v9282, %v9284
    %v9288 = vadd.f32 %v9277, %v9286
    %v9290 = vrot.slane %v8999, 4
    %v9291 = vrot.slane %v9052, 4
    %9292 = vrot.lane.b32.xlu0 %v9290, 80
    %v9293 = vpop.permute.xlu0 %9292
    %9294 = vrot.lane.b32.xlu0 %v9291, 80
    %v9295 = vpop.permute.xlu0 %9294
    %v9296 = vsel %vm4951, %v9293, %v9295
    %v9298 = vadd.f32 %v9288, %v9296
    %v9299 = vrot.slane %v9052, 5
    %9300 = vrot.lane.b32.xlu0 %v9299, 108
    %v9301 = vpop.permute.xlu0 %9300
    %v9303 = vadd.f32 %v9298, %v9301
    %v9305 = vrot.slane %v9052, 6
    %v9306 = vrot.slane %v9054, 6
    %9307 = vrot.lane.b32.xlu0 %v9305, 8
    %v9308 = vpop.permute.xlu0 %9307
    %9309 = vrot.lane.b32.xlu0 %v9306, 8
    %v9310 = vpop.permute.xlu0 %9309
    %vm9311 = vcmask 64512
    %v9312 = vsel %vm9311, %v9308, %v9310
    %v9314 = vadd.f32 %v9303, %v9312
    %v9316 = vrot.slane %v9054, 7
    %v9317 = vrot.slane %v9108, 7
    %9318 = vrot.lane.b32.xlu0 %v9316, 36
    %v9319 = vpop.permute.xlu0 %9318
    %9320 = vrot.lane.b32.xlu0 %v9317, 36
    %v9321 = vpop.permute.xlu0 %9320
    %vm9322 = vcmask 293888
    %v9323 = vsel %vm9322, %v9319, %v9321
    %v9325 = vadd.f32 %v9314, %v9323
    %9328 = vrot.lane.b32.xlu0 %v9113, 64
    %v9329 = vpop.permute.xlu0 %9328
    %9330 = vrot.lane.b32.xlu0 %v9115, 64
    %v9331 = vpop.permute.xlu0 %9330
    %vm9332 = vcmask 523264
    %v9333 = vsel %vm9332, %v9329, %v9331
    %v9335 = vadd.f32 %v9325, %v9333
    %v9337 = vrot.slane %v9115, 1
    %v9338 = vrot.slane %v9168, 1
    %9339 = vrot.lane.b32.xlu0 %v9337, 92
    %v9340 = vpop.permute.xlu0 %9339
    %9341 = vrot.lane.b32.xlu0 %v9338, 92
    %v9342 = vpop.permute.xlu0 %9341
    %vm9343 = vcmask 752640
    %v9344 = vsel %vm9343, %v9340, %v9342
    %v9346 = vadd.f32 %v9335, %v9344
    %v9349 = vrot.slane %v8781, 1
    %v9350 = vrot.slane %v8783, 1
    %9351 = vrot.lane.b32.xlu0 %v9349, 28
    %v9352 = vpop.permute.xlu0 %9351
    %9353 = vrot.lane.b32.xlu0 %v9350, 28
    %v9354 = vpop.permute.xlu0 %9353
    %v9355 = vsel %vm9188, %v9352, %v9354
    %v9357 = vadd.f32 %v8781, %v9355
    %v9359 = vrot.slane %v8783, 2
    %v9360 = vrot.slane %v8836, 2
    %9361 = vrot.lane.b32.xlu0 %v9359, 56
    %v9362 = vpop.permute.xlu0 %9361
    %9363 = vrot.lane.b32.xlu0 %v9360, 56
    %v9364 = vpop.permute.xlu0 %9363
    %v9365 = vsel %vm9199, %v9362, %v9364
    %v9367 = vadd.f32 %v9357, %v9365
    %v9369 = vrot.slane %v8836, 3
    %v9370 = vrot.slane %v8838, 3
    %9371 = vrot.lane.b32.xlu0 %v9369, 84
    %v9372 = vpop.permute.xlu0 %9371
    %9373 = vrot.lane.b32.xlu0 %v9370, 84
    %v9374 = vpop.permute.xlu0 %9373
    %v9375 = vsel %vm9210, %v9372, %v9374
    %v9377 = vadd.f32 %v9367, %v9375
    %v9378 = vrot.slane %v8838, 4
    %9379 = vrot.lane.b32.xlu0 %v9378, 112
    %v9380 = vpop.permute.xlu0 %9379
    %v9382 = vadd.f32 %v9377, %v9380
    %v9384 = vrot.slane %v8838, 5
    %v9385 = vrot.slane %v8891, 5
    %9386 = vrot.lane.b32.xlu0 %v9384, 12
    %v9387 = vpop.permute.xlu0 %9386
    %9388 = vrot.lane.b32.xlu0 %v9385, 12
    %v9389 = vpop.permute.xlu0 %9388
    %v9390 = vsel %vm9226, %v9387, %v9389
    %v9392 = vadd.f32 %v9382, %v9390
    %v9395 = vrot.slane %v8894, 6
    %v9396 = vrot.slane %v8896, 6
    %9397 = vrot.lane.b32.xlu0 %v9395, 40
    %v9398 = vpop.permute.xlu0 %9397
    %9399 = vrot.lane.b32.xlu0 %v9396, 40
    %v9400 = vpop.permute.xlu0 %9399
    %v9401 = vsel %vm9237, %v9398, %v9400
    %v9403 = vadd.f32 %v9392, %v9401
    %v9405 = vrot.slane %v8896, 7
    %v9406 = vrot.slane %v8950, 7
    %9407 = vrot.lane.b32.xlu0 %v9405, 68
    %v9408 = vpop.permute.xlu0 %9407
    %9409 = vrot.lane.b32.xlu0 %v9406, 68
    %v9410 = vpop.permute.xlu0 %9409
    %v9411 = vsel %vm9248, %v9408, %v9410
    %v9413 = vadd.f32 %v9403, %v9411
    %9415 = vrot.lane.b32.xlu0 %v8950, 96
    %v9416 = vpop.permute.xlu0 %9415
    %9417 = vrot.lane.b32.xlu0 %v8952, 96
    %v9418 = vpop.permute.xlu0 %9417
    %v9419 = vsel %vm9258, %v9416, %v9418
    %v9421 = vadd.f32 %v9413, %v9419
    %v9422 = vrot.slane %v8952, 1
    %9423 = vrot.lane.b32.xlu0 %v9422, 124
    %v9424 = vpop.permute.xlu0 %9423
    %v9426 = vadd.f32 %v9421, %v9424
    %v9428 = vrot.slane %v8952, 2
    %v9429 = vrot.slane %v9005, 2
    %9430 = vrot.lane.b32.xlu0 %v9428, 24
    %v9431 = vpop.permute.xlu0 %9430
    %9432 = vrot.lane.b32.xlu0 %v9429, 24
    %v9433 = vpop.permute.xlu0 %9432
    %v9434 = vsel %vm9274, %v9431, %v9433
    %v9436 = vadd.f32 %v9426, %v9434
    %v9438 = vrot.slane %v9005, 3
    %v9439 = vrot.slane %v9007, 3
    %9440 = vrot.lane.b32.xlu0 %v9438, 52
    %v9441 = vpop.permute.xlu0 %9440
    %9442 = vrot.lane.b32.xlu0 %v9439, 52
    %v9443 = vpop.permute.xlu0 %9442
    %v9444 = vsel %vm9285, %v9441, %v9443
    %v9446 = vadd.f32 %v9436, %v9444
    %v9448 = vrot.slane %v9007, 4
    %v9449 = vrot.slane %v9060, 4
    %9450 = vrot.lane.b32.xlu0 %v9448, 80
    %v9451 = vpop.permute.xlu0 %9450
    %9452 = vrot.lane.b32.xlu0 %v9449, 80
    %v9453 = vpop.permute.xlu0 %9452
    %v9454 = vsel %vm4951, %v9451, %v9453
    %v9456 = vadd.f32 %v9446, %v9454
    %v9457 = vrot.slane %v9060, 5
    %9458 = vrot.lane.b32.xlu0 %v9457, 108
    %v9459 = vpop.permute.xlu0 %9458
    %v9461 = vadd.f32 %v9456, %v9459
    %v9464 = vrot.slane %v9065, 6
    %v9465 = vrot.slane %v9067, 6
    %9466 = vrot.lane.b32.xlu0 %v9464, 8
    %v9467 = vpop.permute.xlu0 %9466
    %9468 = vrot.lane.b32.xlu0 %v9465, 8
    %v9469 = vpop.permute.xlu0 %9468
    %v9470 = vsel %vm9311, %v9467, %v9469
    %v9472 = vadd.f32 %v9461, %v9470
    %v9474 = vrot.slane %v9067, 7
    %v9475 = vrot.slane %v9121, 7
    %9476 = vrot.lane.b32.xlu0 %v9474, 36
    %v9477 = vpop.permute.xlu0 %9476
    %9478 = vrot.lane.b32.xlu0 %v9475, 36
    %v9479 = vpop.permute.xlu0 %9478
    %v9480 = vsel %vm9322, %v9477, %v9479
    %v9482 = vadd.f32 %v9472, %v9480
    %9484 = vrot.lane.b32.xlu0 %v9121, 64
    %v9485 = vpop.permute.xlu0 %9484
    %9486 = vrot.lane.b32.xlu0 %v9123, 64
    %v9487 = vpop.permute.xlu0 %9486
    %v9488 = vsel %vm9332, %v9485, %v9487
    %v9490 = vadd.f32 %v9482, %v9488
    %v9492 = vrot.slane %v9123, 1
    %v9493 = vrot.slane %v9175, 1
    %9494 = vrot.lane.b32.xlu0 %v9492, 92
    %v9495 = vpop.permute.xlu0 %9494
    %9496 = vrot.lane.b32.xlu0 %v9493, 92
    %v9497 = vpop.permute.xlu0 %9496
    %v9498 = vsel %vm9343, %v9495, %v9497
    %v9500 = vadd.f32 %v9490, %v9498
    %v9502 = vrot.slane %v9500, 1
    %vm9504 = vcmask 1040384
    %v9505 = vsel %vm9504, %v9346, %v9502
    %v9506 = vld [vmem:[%s17] sm:$0x1]
    %v9508 = vlaneseq
    %v9509 = vshrl.u32 %v9508, 7
    %v9510 = vsub.s32 0, %v9509
    %v9511 = vrot.slane %v9506, %v9510
    %v9513 = vadd.f32 %v9505, %v9511
    %v9514 = vmax.f32 %v9513, 0.0
    %v9515 = vpack.c.bf16 %v6440, %v6440
    %v9516 = vld [vmem:[%s18] sm:$0xff]
    %v9517 = vld [vmem:[%s18 + $0x8] sm:$0xff]
    %v9518 = vld [vmem:[%s18 + $0x10] sm:$0xf]
    %v9519 = vld [vmem:[%s18 + $0x14] sm:$0xff]
    %v9520 = vld [vmem:[%s18 + $0x1c] sm:$0xff]
    %v9521 = vld [vmem:[%s18 + $0x24] sm:$0xf]
    %v9522 = vld [vmem:[%s18 + $0x28] sm:$0xff]
    %v9523 = vld [vmem:[%s18 + $0x30] sm:$0xff]
    %v9524 = vld [vmem:[%s18 + $0x38] sm:$0xf]
    %v9525 = vld [vmem:[%s18 + $0x3c] sm:$0xff]
    %v9526 = vld [vmem:[%s18 + $0x44] sm:$0xff]
    %v9527 = vld [vmem:[%s18 + $0x4c] sm:$0xf]
    %v9528 = vld [vmem:[%s18 + $0x50] sm:$0xff]
    %v9529 = vld [vmem:[%s18 + $0x58] sm:$0xff]
    %v9530 = vld [vmem:[%s18 + $0x60] sm:$0xf]
    %v9531 = vld [vmem:[%s18 + $0x64] sm:$0xff]
    %v9532 = vld [vmem:[%s18 + $0x6c] sm:$0xff]
    %v9533 = vld [vmem:[%s18 + $0x74] sm:$0xf]
    %v9534 = vld [vmem:[%s18 + $0x78] sm:$0xff]
    %v9535 = vld [vmem:[%s18 + $0x80] sm:$0xff]
    %v9536 = vld [vmem:[%s18 + $0x88] sm:$0xf]
    %v9537 = vld [vmem:[%s18 + $0x8c] sm:$0xff]
    %v9538 = vld [vmem:[%s18 + $0x94] sm:$0xff]
    %v9539 = vld [vmem:[%s18 + $0x9c] sm:$0xf]
    %v9540 = vld [vmem:[%s18 + $0xa0] sm:$0xff]
    %v9541 = vld [vmem:[%s18 + $0xa8] sm:$0xff]
    %v9542 = vld [vmem:[%s18 + $0xb0] sm:$0xf]
    %v9543 = vld [vmem:[%s18 + $0xb4] sm:$0xff]
    %v9544 = vld [vmem:[%s18 + $0xbc] sm:$0xff]
    %v9545 = vld [vmem:[%s18 + $0xc4] sm:$0xf]
    %v9546 = vld [vmem:[%s18 + $0xc8] sm:$0xff]
    %v9547 = vld [vmem:[%s18 + $0xd0] sm:$0xff]
    %v9548 = vld [vmem:[%s18 + $0xd8] sm:$0xf]
    %v9549 = vld [vmem:[%s18 + $0xdc] sm:$0xff]
    %v9550 = vld [vmem:[%s18 + $0xe4] sm:$0xff]
    %v9551 = vld [vmem:[%s18 + $0xec] sm:$0xf]
    %v9552 = vld [vmem:[%s18 + $0xf0] sm:$0x33]
    %v9553 = vld [vmem:[%s18 + $0xf8] sm:$0x33]
    %v9554 = vld [vmem:[%s18 + $0x100] sm:$0x3]
    %v9555 = vpack.c.bf16 %v9514, %v9514
    %v9556 = vld [vmem:[%s19] sm:$0xff]
    %v9557 = vld [vmem:[%s19 + $0x8] sm:$0xff]
    %v9558 = vld [vmem:[%s19 + $0x10] sm:$0xf]
    %v9559 = vld [vmem:[%s19 + $0x14] sm:$0xff]
    %v9560 = vld [vmem:[%s19 + $0x1c] sm:$0xff]
    %v9561 = vld [vmem:[%s19 + $0x24] sm:$0xf]
    %v9562 = vld [vmem:[%s19 + $0x28] sm:$0xff]
    %v9563 = vld [vmem:[%s19 + $0x30] sm:$0xff]
    %v9564 = vld [vmem:[%s19 + $0x38] sm:$0xf]
    %v9565 = vld [vmem:[%s19 + $0x3c] sm:$0xff]
    %v9566 = vld [vmem:[%s19 + $0x44] sm:$0xff]
    %v9567 = vld [vmem:[%s19 + $0x4c] sm:$0xf]
    %v9568 = vld [vmem:[%s19 + $0x50] sm:$0xff]
    %v9569 = vld [vmem:[%s19 + $0x58] sm:$0xff]
    %v9570 = vld [vmem:[%s19 + $0x60] sm:$0xf]
    %v9571 = vld [vmem:[%s19 + $0x64] sm:$0xff]
    %v9572 = vld [vmem:[%s19 + $0x6c] sm:$0xff]
    %v9573 = vld [vmem:[%s19 + $0x74] sm:$0xf]
    %v9574 = vld [vmem:[%s19 + $0x78] sm:$0xff]
    %v9575 = vld [vmem:[%s19 + $0x80] sm:$0xff]
    %v9576 = vld [vmem:[%s19 + $0x88] sm:$0xf]
    %v9577 = vld [vmem:[%s19 + $0x8c] sm:$0xff]
    %v9578 = vld [vmem:[%s19 + $0x94] sm:$0xff]
    %v9579 = vld [vmem:[%s19 + $0x9c] sm:$0xf]
    %v9580 = vld [vmem:[%s19 + $0xa0] sm:$0xff]
    %v9581 = vld [vmem:[%s19 + $0xa8] sm:$0xff]
    %v9582 = vld [vmem:[%s19 + $0xb0] sm:$0xf]
    %v9583 = vld [vmem:[%s19 + $0xb4] sm:$0xff]
    %v9584 = vld [vmem:[%s19 + $0xbc] sm:$0xff]
    %v9585 = vld [vmem:[%s19 + $0xc4] sm:$0xf]
    %v9586 = vld [vmem:[%s19 + $0xc8] sm:$0xff]
    %v9587 = vld [vmem:[%s19 + $0xd0] sm:$0xff]
    %v9588 = vld [vmem:[%s19 + $0xd8] sm:$0xf]
    %v9589 = vld [vmem:[%s19 + $0xdc] sm:$0xff]
    %v9590 = vld [vmem:[%s19 + $0xe4] sm:$0xff]
    %v9591 = vld [vmem:[%s19 + $0xec] sm:$0xf]
    %v9592 = vld [vmem:[%s19 + $0xf0] sm:$0x33]
    %v9593 = vld [vmem:[%s19 + $0xf8] sm:$0x33]
    %v9594 = vld [vmem:[%s19 + $0x100] sm:$0x3]
    %v9634 = vunpack.c.l.b16 %v9556
    %v9635 = vunpack.c.h.b16 %v9556
    %v9636 = vunpack.c.l.b16 %v9557
    %v9637 = vunpack.c.h.b16 %v9557
    %v9638 = vunpack.c.l.b16 %v9558
    %v9639 = vunpack.c.l.b16 %v9559
    %v9640 = vunpack.c.h.b16 %v9559
    %v9641 = vunpack.c.l.b16 %v9560
    %v9642 = vunpack.c.h.b16 %v9560
    %v9643 = vunpack.c.l.b16 %v9561
    %v9644 = vunpack.c.l.b16 %v9562
    %v9645 = vunpack.c.h.b16 %v9562
    %v9646 = vunpack.c.l.b16 %v9563
    %v9647 = vunpack.c.h.b16 %v9563
    %v9648 = vunpack.c.l.b16 %v9564
    %v9649 = vunpack.c.l.b16 %v9565
    %v9650 = vunpack.c.h.b16 %v9565
    %v9651 = vunpack.c.l.b16 %v9566
    %v9652 = vunpack.c.h.b16 %v9566
    %v9653 = vunpack.c.l.b16 %v9567
    %v9654 = vunpack.c.l.b16 %v9568
    %v9655 = vunpack.c.h.b16 %v9568
    %v9656 = vunpack.c.l.b16 %v9569
    %v9657 = vunpack.c.h.b16 %v9569
    %v9658 = vunpack.c.l.b16 %v9570
    %v9659 = vunpack.c.l.b16 %v9571
    %v9660 = vunpack.c.h.b16 %v9571
    %v9661 = vunpack.c.l.b16 %v9572
    %v9662 = vunpack.c.h.b16 %v9572
    %v9663 = vunpack.c.l.b16 %v9573
    %v9664 = vunpack.c.l.b16 %v9574
    %v9665 = vunpack.c.h.b16 %v9574
    %v9666 = vunpack.c.l.b16 %v9575
    %v9667 = vunpack.c.h.b16 %v9575
    %v9668 = vunpack.c.l.b16 %v9576
    %v9669 = vunpack.c.l.b16 %v9577
    %v9670 = vunpack.c.h.b16 %v9577
    %v9671 = vunpack.c.l.b16 %v9578
    %v9672 = vunpack.c.h.b16 %v9578
    %v9673 = vunpack.c.l.b16 %v9579
    %v9674 = vunpack.c.l.b16 %v9580
    %v9675 = vunpack.c.h.b16 %v9580
    %v9676 = vunpack.c.l.b16 %v9581
    %v9677 = vunpack.c.h.b16 %v9581
    %v9678 = vunpack.c.l.b16 %v9582
    %v9679 = vunpack.c.l.b16 %v9583
    %v9680 = vunpack.c.h.b16 %v9583
    %v9681 = vunpack.c.l.b16 %v9584
    %v9682 = vunpack.c.h.b16 %v9584
    %v9683 = vunpack.c.l.b16 %v9585
    %v9684 = vunpack.c.l.b16 %v9586
    %v9685 = vunpack.c.h.b16 %v9586
    %v9686 = vunpack.c.l.b16 %v9587
    %v9687 = vunpack.c.h.b16 %v9587
    %v9688 = vunpack.c.l.b16 %v9588
    %v9689 = vunpack.c.l.b16 %v9589
    %v9690 = vunpack.c.h.b16 %v9589
    %v9691 = vunpack.c.l.b16 %v9590
    %v9692 = vunpack.c.h.b16 %v9590
    %v9693 = vunpack.c.l.b16 %v9591
    %v9694 = vunpack.c.l.b16 %v9592
    %v9695 = vunpack.c.h.b16 %v9592
    %v9696 = vunpack.c.l.b16 %v9593
    %v9697 = vunpack.c.h.b16 %v9593
    %v9698 = vunpack.c.l.b16 %v9594
    %v9699 = vpack.c.b16 %v9639, %v9634
    %v9700 = vpack.c.b16 %v9640, %v9635
    %v9701 = vpack.c.b16 %v9641, %v9636
    %v9702 = vpack.c.b16 %v9642, %v9637
    %v9703 = vpack.c.b16 %v9643, %v9638
    %v9704 = vpack.c.b16 %v9649, %v9644
    %v9705 = vpack.c.b16 %v9650, %v9645
    %v9706 = vpack.c.b16 %v9651, %v9646
    %v9707 = vpack.c.b16 %v9652, %v9647
    %v9708 = vpack.c.b16 %v9653, %v9648
    %v9709 = vpack.c.b16 %v9659, %v9654
    %v9710 = vpack.c.b16 %v9660, %v9655
    %v9711 = vpack.c.b16 %v9661, %v9656
    %v9712 = vpack.c.b16 %v9662, %v9657
    %v9713 = vpack.c.b16 %v9663, %v9658
    %v9714 = vpack.c.b16 %v9669, %v9664
    %v9715 = vpack.c.b16 %v9670, %v9665
    %v9716 = vpack.c.b16 %v9671, %v9666
    %v9717 = vpack.c.b16 %v9672, %v9667
    %v9718 = vpack.c.b16 %v9673, %v9668
    %v9719 = vpack.c.b16 %v9679, %v9674
    %v9720 = vpack.c.b16 %v9680, %v9675
    %v9721 = vpack.c.b16 %v9681, %v9676
    %v9722 = vpack.c.b16 %v9682, %v9677
    %v9723 = vpack.c.b16 %v9683, %v9678
    %v9724 = vpack.c.b16 %v9689, %v9684
    %v9725 = vpack.c.b16 %v9690, %v9685
    %v9726 = vpack.c.b16 %v9691, %v9686
    %v9727 = vpack.c.b16 %v9692, %v9687
    %v9728 = vpack.c.b16 %v9693, %v9688
    %v9729 = vpack.c.b16 %v9694, %v9694
    %v9730 = vpack.c.b16 %v9695, %v9695
    %v9731 = vpack.c.b16 %v9696, %v9696
    %v9732 = vpack.c.b16 %v9697, %v9697
    %v9733 = vpack.c.b16 %v9698, %v9698
    %vm9764 = vcmask 818176
    %v9766 = vsel %vm9764, %v9555, 0
    %v9769 = vsel %vm7241, %v9729, 0
    %v9772 = vsel %vm7241, %v9730, 0
    %v9775 = vsel %vm7241, %v9731, 0
    %v9778 = vsel %vm7241, %v9732, 0
    %v9781 = vsel %vm7241, %v9733, 0
    %9783 = vmatprep.subr.bf16.mxu0 %v9700
    %9784 = vmatpush1.bf16.msra.mxu0 %v9699
    %9785 = vmatprep.subr.bf16.mxu0 %v9705
    %9786 = vmatpush1.bf16.msra.mxu0 %v9704
    %9787 = vmatprep.subr.bf16.mxu0 %v9710
    %9788 = vmatpush1.bf16.msra.mxu0 %v9709
    %9789 = vmatprep.subr.bf16.mxu0 %v9715
    %9790 = vmatpush1.bf16.msra.mxu0 %v9714
    %9791 = vmatprep.subr.bf16.mxu0 %v9720
    %9792 = vmatpush1.bf16.msra.mxu0 %v9719
    %9793 = vmatprep.subr.bf16.mxu0 %v9725
    %9794 = vmatpush1.bf16.msra.mxu0 %v9724
    %9795 = vmatprep.subr.bf16.mxu0 %v9772
    %9796 = vmatpush1.bf16.msra.mxu0 %v9769
    %9797 = vmatprep.subr.bf16.mxu0 0
    %9798 = vmatpush1.bf16.msra.mxu0 0
    %9799 = vmatprep.subr.bf16.mxu0 0
    %9800 = vmatpush1.bf16.msra.mxu0 0
    %9801 = vmatprep.subr.bf16.mxu0 0
    %9802 = vmatpush1.bf16.msra.mxu0 0
    %9803 = vmatprep.subr.bf16.mxu0 0
    %9804 = vmatpush1.bf16.msra.mxu0 0
    %9805 = vmatprep.subr.bf16.mxu0 0
    %9806 = vmatpush1.bf16.msra.mxu0 0
    %9807 = vmatprep.subr.bf16.mxu0 0
    %9808 = vmatpush1.bf16.msra.mxu0 0
    %9809 = vmatprep.subr.bf16.mxu0 0
    %9810 = vmatpush1.bf16.msra.mxu0 0
    %9811 = vmatprep.subr.bf16.mxu0 0
    %9812 = vmatpush1.bf16.msra.mxu0 0
    %9813 = vmatprep.subr.bf16.mxu0 0
    %9814 = vmatpush1.bf16.msra.mxu0 0
    %9815 = vmatprep.mubr.bf16.mxu0 0
    %9816 = vmatmul.mubr.bf16.gmra.mrb[0].mxu0 %v9766
    %v9817 = vpop.f32.mrb[0].mxu0
    %v9818 = vadd.f32 0.0, %v9817
    %v9819 = vpop.f32.mrb[0].mxu0
    %v9820 = vadd.f32 0.0, %v9819
    %v9821 = vpop.f32.mrb[0].mxu0
    %v9822 = vpop.f32.mrb[0].mxu0
    %9823 = vdwg.mxu0
    %9824 = vmatprep.subr.bf16.mxu0 %v9702
    %9825 = vmatpush1.bf16.msra.mxu0 %v9701
    %9826 = vmatprep.subr.bf16.mxu0 %v9707
    %9827 = vmatpush1.bf16.msra.mxu0 %v9706
    %9828 = vmatprep.subr.bf16.mxu0 %v9712
    %9829 = vmatpush1.bf16.msra.mxu0 %v9711
    %9830 = vmatprep.subr.bf16.mxu0 %v9717
    %9831 = vmatpush1.bf16.msra.mxu0 %v9716
    %9832 = vmatprep.subr.bf16.mxu0 %v9722
    %9833 = vmatpush1.bf16.msra.mxu0 %v9721
    %9834 = vmatprep.subr.bf16.mxu0 %v9727
    %9835 = vmatpush1.bf16.msra.mxu0 %v9726
    %9836 = vmatprep.subr.bf16.mxu0 %v9778
    %9837 = vmatpush1.bf16.msra.mxu0 %v9775
    %9838 = vmatprep.subr.bf16.mxu0 0
    %9839 = vmatpush1.bf16.msra.mxu0 0
    %9840 = vmatprep.subr.bf16.mxu0 0
    %9841 = vmatpush1.bf16.msra.mxu0 0
    %9842 = vmatprep.subr.bf16.mxu0 0
    %9843 = vmatpush1.bf16.msra.mxu0 0
    %9844 = vmatprep.subr.bf16.mxu0 0
    %9845 = vmatpush1.bf16.msra.mxu0 0
    %9846 = vmatprep.subr.bf16.mxu0 0
    %9847 = vmatpush1.bf16.msra.mxu0 0
    %9848 = vmatprep.subr.bf16.mxu0 0
    %9849 = vmatpush1.bf16.msra.mxu0 0
    %9850 = vmatprep.subr.bf16.mxu0 0
    %9851 = vmatpush1.bf16.msra.mxu0 0
    %9852 = vmatprep.subr.bf16.mxu0 0
    %9853 = vmatpush1.bf16.msra.mxu0 0
    %9854 = vmatprep.subr.bf16.mxu0 0
    %9855 = vmatpush1.bf16.msra.mxu0 0
    %9856 = vmatprep.mubr.bf16.mxu0 0
    %9857 = vmatmul.mubr.bf16.gmra.mrb[0].mxu0 %v9766
    %v9858 = vpop.f32.mrb[0].mxu0
    %v9859 = vadd.f32 0.0, %v9858
    %v9860 = vpop.f32.mrb[0].mxu0
    %v9861 = vadd.f32 0.0, %v9860
    %v9862 = vpop.f32.mrb[0].mxu0
    %v9863 = vpop.f32.mrb[0].mxu0
    %9864 = vdwg.mxu0
    %9865 = vmatprep.subr.bf16.mxu0 0
    %9866 = vmatpush1.bf16.msra.mxu0 %v9703
    %9867 = vmatprep.subr.bf16.mxu0 0
    %9868 = vmatpush1.bf16.msra.mxu0 %v9708
    %9869 = vmatprep.subr.bf16.mxu0 0
    %9870 = vmatpush1.bf16.msra.mxu0 %v9713
    %9871 = vmatprep.subr.bf16.mxu0 0
    %9872 = vmatpush1.bf16.msra.mxu0 %v9718
    %9873 = vmatprep.subr.bf16.mxu0 0
    %9874 = vmatpush1.bf16.msra.mxu0 %v9723
    %9875 = vmatprep.subr.bf16.mxu0 0
    %9876 = vmatpush1.bf16.msra.mxu0 %v9728
    %9877 = vmatprep.subr.bf16.mxu0 0
    %9878 = vmatpush1.bf16.msra.mxu0 %v9781
    %9879 = vmatprep.subr.bf16.mxu0 0
    %9880 = vmatpush1.bf16.msra.mxu0 0
    %9881 = vmatprep.subr.bf16.mxu0 0
    %9882 = vmatpush1.bf16.msra.mxu0 0
    %9883 = vmatprep.subr.bf16.mxu0 0
    %9884 = vmatpush1.bf16.msra.mxu0 0
    %9885 = vmatprep.subr.bf16.mxu0 0
    %9886 = vmatpush1.bf16.msra.mxu0 0
    %9887 = vmatprep.subr.bf16.mxu0 0
    %9888 = vmatpush1.bf16.msra.mxu0 0
    %9889 = vmatprep.subr.bf16.mxu0 0
    %9890 = vmatpush1.bf16.msra.mxu0 0
    %9891 = vmatprep.subr.bf16.mxu0 0
    %9892 = vmatpush1.bf16.msra.mxu0 0
    %9893 = vmatprep.subr.bf16.mxu0 0
    %9894 = vmatpush1.bf16.msra.mxu0 0
    %9895 = vmatprep.subr.bf16.mxu0 0
    %9896 = vmatpush1.bf16.msra.mxu0 0
    %9897 = vmatprep.mubr.bf16.mxu0 0
    %9898 = vmatmul.mubr.bf16.gmra.mrb[0].mxu0 %v9766
    %v9899 = vpop.f32.mrb[0].mxu0
    %v9900 = vadd.f32 0.0, %v9899
    %v9901 = vpop.f32.mrb[0].mxu0
    %v9902 = vpop.f32.mrb[0].mxu0
    %v9903 = vpop.f32.mrb[0].mxu0
    %9904 = vdwg.mxu0
    %v9944 = vunpack.c.l.b16 %v9516
    %v9945 = vunpack.c.h.b16 %v9516
    %v9946 = vunpack.c.l.b16 %v9517
    %v9947 = vunpack.c.h.b16 %v9517
    %v9948 = vunpack.c.l.b16 %v9518
    %v9949 = vunpack.c.l.b16 %v9519
    %v9950 = vunpack.c.h.b16 %v9519
    %v9951 = vunpack.c.l.b16 %v9520
    %v9952 = vunpack.c.h.b16 %v9520
    %v9953 = vunpack.c.l.b16 %v9521
    %v9954 = vunpack.c.l.b16 %v9522
    %v9955 = vunpack.c.h.b16 %v9522
    %v9956 = vunpack.c.l.b16 %v9523
    %v9957 = vunpack.c.h.b16 %v9523
    %v9958 = vunpack.c.l.b16 %v9524
    %v9959 = vunpack.c.l.b16 %v9525
    %v9960 = vunpack.c.h.b16 %v9525
    %v9961 = vunpack.c.l.b16 %v9526
    %v9962 = vunpack.c.h.b16 %v9526
    %v9963 = vunpack.c.l.b16 %v9527
    %v9964 = vunpack.c.l.b16 %v9528
    %v9965 = vunpack.c.h.b16 %v9528
    %v9966 = vunpack.c.l.b16 %v9529
    %v9967 = vunpack.c.h.b16 %v9529
    %v9968 = vunpack.c.l.b16 %v9530
    %v9969 = vunpack.c.l.b16 %v9531
    %v9970 = vunpack.c.h.b16 %v9531
    %v9971 = vunpack.c.l.b16 %v9532
    %v9972 = vunpack.c.h.b16 %v9532
    %v9973 = vunpack.c.l.b16 %v9533
    %v9974 = vunpack.c.l.b16 %v9534
    %v9975 = vunpack.c.h.b16 %v9534
    %v9976 = vunpack.c.l.b16 %v9535
    %v9977 = vunpack.c.h.b16 %v9535
    %v9978 = vunpack.c.l.b16 %v9536
    %v9979 = vunpack.c.l.b16 %v9537
    %v9980 = vunpack.c.h.b16 %v9537
    %v9981 = vunpack.c.l.b16 %v9538
    %v9982 = vunpack.c.h.b16 %v9538
    %v9983 = vunpack.c.l.b16 %v9539
    %v9984 = vunpack.c.l.b16 %v9540
    %v9985 = vunpack.c.h.b16 %v9540
    %v9986 = vunpack.c.l.b16 %v9541
    %v9987 = vunpack.c.h.b16 %v9541
    %v9988 = vunpack.c.l.b16 %v9542
    %v9989 = vunpack.c.l.b16 %v9543
    %v9990 = vunpack.c.h.b16 %v9543
    %v9991 = vunpack.c.l.b16 %v9544
    %v9992 = vunpack.c.h.b16 %v9544
    %v9993 = vunpack.c.l.b16 %v9545
    %v9994 = vunpack.c.l.b16 %v9546
    %v9995 = vunpack.c.h.b16 %v9546
    %v9996 = vunpack.c.l.b16 %v9547
    %v9997 = vunpack.c.h.b16 %v9547
    %v9998 = vunpack.c.l.b16 %v9548
    %v9999 = vunpack.c.l.b16 %v9549
    %v10000 = vunpack.c.h.b16 %v9549
    %v10001 = vunpack.c.l.b16 %v9550
    %v10002 = vunpack.c.h.b16 %v9550
    %v10003 = vunpack.c.l.b16 %v9551
    %v10004 = vunpack.c.l.b16 %v9552
    %v10005 = vunpack.c.h.b16 %v9552
    %v10006 = vunpack.c.l.b16 %v9553
    %v10007 = vunpack.c.h.b16 %v9553
    %v10008 = vunpack.c.l.b16 %v9554
    %v10009 = vpack.c.b16 %v9949, %v9944
    %v10010 = vpack.c.b16 %v9950, %v9945
    %v10011 = vpack.c.b16 %v9951, %v9946
    %v10012 = vpack.c.b16 %v9952, %v9947
    %v10013 = vpack.c.b16 %v9953, %v9948
    %v10014 = vpack.c.b16 %v9959, %v9954
    %v10015 = vpack.c.b16 %v9960, %v9955
    %v10016 = vpack.c.b16 %v9961, %v9956
    %v10017 = vpack.c.b16 %v9962, %v9957
    %v10018 = vpack.c.b16 %v9963, %v9958
    %v10019 = vpack.c.b16 %v9969, %v9964
    %v10020 = vpack.c.b16 %v9970, %v9965
    %v10021 = vpack.c.b16 %v9971, %v9966
    %v10022 = vpack.c.b16 %v9972, %v9967
    %v10023 = vpack.c.b16 %v9973, %v9968
    %v10024 = vpack.c.b16 %v9979, %v9974
    %v10025 = vpack.c.b16 %v9980, %v9975
    %v10026 = vpack.c.b16 %v9981, %v9976
    %v10027 = vpack.c.b16 %v9982, %v9977
    %v10028 = vpack.c.b16 %v9983, %v9978
    %v10029 = vpack.c.b16 %v9989, %v9984
    %v10030 = vpack.c.b16 %v9990, %v9985
    %v10031 = vpack.c.b16 %v9991, %v9986
    %v10032 = vpack.c.b16 %v9992, %v9987
    %v10033 = vpack.c.b16 %v9993, %v9988
    %v10034 = vpack.c.b16 %v9999, %v9994
    %v10035 = vpack.c.b16 %v10000, %v9995
    %v10036 = vpack.c.b16 %v10001, %v9996
    %v10037 = vpack.c.b16 %v10002, %v9997
    %v10038 = vpack.c.b16 %v10003, %v9998
    %v10039 = vpack.c.b16 %v10004, %v10004
    %v10040 = vpack.c.b16 %v10005, %v10005
    %v10041 = vpack.c.b16 %v10006, %v10006
    %v10042 = vpack.c.b16 %v10007, %v10007
    %v10043 = vpack.c.b16 %v10008, %v10008
    %v10075 = vsel %vm9764, %v9515, 0
    %v10078 = vsel %vm7241, %v10039, 0
    %v10081 = vsel %vm7241, %v10040, 0
    %v10084 = vsel %vm7241, %v10041, 0
    %v10087 = vsel %vm7241, %v10042, 0
    %v10090 = vsel %vm7241, %v10043, 0
    %10092 = vmatprep.subr.bf16.mxu0 %v10010
    %10093 = vmatpush1.bf16.msra.mxu0 %v10009
    %10094 = vmatprep.subr.bf16.mxu0 %v10015
    %10095 = vmatpush1.bf16.msra.mxu0 %v10014
    %10096 = vmatprep.subr.bf16.mxu0 %v10020
    %10097 = vmatpush1.bf16.msra.mxu0 %v10019
    %10098 = vmatprep.subr.bf16.mxu0 %v10025
    %10099 = vmatpush1.bf16.msra.mxu0 %v10024
    %10100 = vmatprep.subr.bf16.mxu0 %v10030
    %10101 = vmatpush1.bf16.msra.mxu0 %v10029
    %10102 = vmatprep.subr.bf16.mxu0 %v10035
    %10103 = vmatpush1.bf16.msra.mxu0 %v10034
    %10104 = vmatprep.subr.bf16.mxu0 %v10081
    %10105 = vmatpush1.bf16.msra.mxu0 %v10078
    %10106 = vmatprep.subr.bf16.mxu0 0
    %10107 = vmatpush1.bf16.msra.mxu0 0
    %10108 = vmatprep.subr.bf16.mxu0 0
    %10109 = vmatpush1.bf16.msra.mxu0 0
    %10110 = vmatprep.subr.bf16.mxu0 0
    %10111 = vmatpush1.bf16.msra.mxu0 0
    %10112 = vmatprep.subr.bf16.mxu0 0
    %10113 = vmatpush1.bf16.msra.mxu0 0
    %10114 = vmatprep.subr.bf16.mxu0 0
    %10115 = vmatpush1.bf16.msra.mxu0 0
    %10116 = vmatprep.subr.bf16.mxu0 0
    %10117 = vmatpush1.bf16.msra.mxu0 0
    %10118 = vmatprep.subr.bf16.mxu0 0
    %10119 = vmatpush1.bf16.msra.mxu0 0
    %10120 = vmatprep.subr.bf16.mxu0 0
    %10121 = vmatpush1.bf16.msra.mxu0 0
    %10122 = vmatprep.subr.bf16.mxu0 0
    %10123 = vmatpush1.bf16.msra.mxu0 0
    %10124 = vmatprep.mubr.bf16.mxu0 0
    %10125 = vmatmul.mubr.bf16.gmra.mrb[0].mxu0 %v10075
    %v10126 = vpop.f32.mrb[0].mxu0
    %v10127 = vadd.f32 %v9818, %v10126
    %v10128 = vpop.f32.mrb[0].mxu0
    %v10129 = vadd.f32 %v9820, %v10128
    %v10130 = vpop.f32.mrb[0].mxu0
    %v10131 = vpop.f32.mrb[0].mxu0
    %10132 = vdwg.mxu0
    %10133 = vmatprep.subr.bf16.mxu0 %v10012
    %10134 = vmatpush1.bf16.msra.mxu0 %v10011
    %10135 = vmatprep.subr.bf16.mxu0 %v10017
    %10136 = vmatpush1.bf16.msra.mxu0 %v10016
    %10137 = vmatprep.subr.bf16.mxu0 %v10022
    %10138 = vmatpush1.bf16.msra.mxu0 %v10021
    %10139 = vmatprep.subr.bf16.mxu0 %v10027
    %10140 = vmatpush1.bf16.msra.mxu0 %v10026
    %10141 = vmatprep.subr.bf16.mxu0 %v10032
    %10142 = vmatpush1.bf16.msra.mxu0 %v10031
    %10143 = vmatprep.subr.bf16.mxu0 %v10037
    %10144 = vmatpush1.bf16.msra.mxu0 %v10036
    %10145 = vmatprep.subr.bf16.mxu0 %v10087
    %10146 = vmatpush1.bf16.msra.mxu0 %v10084
    %10147 = vmatprep.subr.bf16.mxu0 0
    %10148 = vmatpush1.bf16.msra.mxu0 0
    %10149 = vmatprep.subr.bf16.mxu0 0
    %10150 = vmatpush1.bf16.msra.mxu0 0
    %10151 = vmatprep.subr.bf16.mxu0 0
    %10152 = vmatpush1.bf16.msra.mxu0 0
    %10153 = vmatprep.subr.bf16.mxu0 0
    %10154 = vmatpush1.bf16.msra.mxu0 0
    %10155 = vmatprep.subr.bf16.mxu0 0
    %10156 = vmatpush1.bf16.msra.mxu0 0
    %10157 = vmatprep.subr.bf16.mxu0 0
    %10158 = vmatpush1.bf16.msra.mxu0 0
    %10159 = vmatprep.subr.bf16.mxu0 0
    %10160 = vmatpush1.bf16.msra.mxu0 0
    %10161 = vmatprep.subr.bf16.mxu0 0
    %10162 = vmatpush1.bf16.msra.mxu0 0
    %10163 = vmatprep.subr.bf16.mxu0 0
    %10164 = vmatpush1.bf16.msra.mxu0 0
    %10165 = vmatprep.mubr.bf16.mxu0 0
    %10166 = vmatmul.mubr.bf16.gmra.mrb[0].mxu0 %v10075
    %v10167 = vpop.f32.mrb[0].mxu0
    %v10168 = vadd.f32 %v9859, %v10167
    %v10169 = vpop.f32.mrb[0].mxu0
    %v10170 = vadd.f32 %v9861, %v10169
    %v10171 = vpop.f32.mrb[0].mxu0
    %v10172 = vpop.f32.mrb[0].mxu0
    %10173 = vdwg.mxu0
    %10174 = vmatprep.subr.bf16.mxu0 0
    %10175 = vmatpush1.bf16.msra.mxu0 %v10013
    %10176 = vmatprep.subr.bf16.mxu0 0
    %10177 = vmatpush1.bf16.msra.mxu0 %v10018
    %10178 = vmatprep.subr.bf16.mxu0 0
    %10179 = vmatpush1.bf16.msra.mxu0 %v10023
    %10180 = vmatprep.subr.bf16.mxu0 0
    %10181 = vmatpush1.bf16.msra.mxu0 %v10028
    %10182 = vmatprep.subr.bf16.mxu0 0
    %10183 = vmatpush1.bf16.msra.mxu0 %v10033
    %10184 = vmatprep.subr.bf16.mxu0 0
    %10185 = vmatpush1.bf16.msra.mxu0 %v10038
    %10186 = vmatprep.subr.bf16.mxu0 0
    %10187 = vmatpush1.bf16.msra.mxu0 %v10090
    %10188 = vmatprep.subr.bf16.mxu0 0
    %10189 = vmatpush1.bf16.msra.mxu0 0
    %10190 = vmatprep.subr.bf16.mxu0 0
    %10191 = vmatpush1.bf16.msra.mxu0 0
    %10192 = vmatprep.subr.bf16.mxu0 0
    %10193 = vmatpush1.bf16.msra.mxu0 0
    %10194 = vmatprep.subr.bf16.mxu0 0
    %10195 = vmatpush1.bf16.msra.mxu0 0
    %10196 = vmatprep.subr.bf16.mxu0 0
    %10197 = vmatpush1.bf16.msra.mxu0 0
    %10198 = vmatprep.subr.bf16.mxu0 0
    %10199 = vmatpush1.bf16.msra.mxu0 0
    %10200 = vmatprep.subr.bf16.mxu0 0
    %10201 = vmatpush1.bf16.msra.mxu0 0
    %10202 = vmatprep.subr.bf16.mxu0 0
    %10203 = vmatpush1.bf16.msra.mxu0 0
    %10204 = vmatprep.subr.bf16.mxu0 0
    %10205 = vmatpush1.bf16.msra.mxu0 0
    %10206 = vmatprep.mubr.bf16.mxu0 0
    %10207 = vmatmul.mubr.bf16.gmra.mrb[0].mxu0 %v10075
    %v10208 = vpop.f32.mrb[0].mxu0
    %v10209 = vadd.f32 %v9900, %v10208
    %v10210 = vpop.f32.mrb[0].mxu0
    %v10211 = vpop.f32.mrb[0].mxu0
    %v10212 = vpop.f32.mrb[0].mxu0
    %10213 = vdwg.mxu0
    %v10214 = vld [vmem:[%s20] sm:$0x1f]
    %v10216 = vlaneseq
    %v10217 = vshrl.u32 %v10216, 7
    %v10218 = vsub.s32 0, %v10217
    %v10219 = vrot.slane %v10214, %v10218
    %v10220 = vlaneseq
    %v10221 = vshrl.u32 %v10220, 7
    %v10222 = vsub.s32 1, %v10221
    %v10223 = vrot.slane %v10214, %v10222
    %v10224 = vlaneseq
    %v10225 = vshrl.u32 %v10224, 7
    %v10226 = vsub.s32 2, %v10225
    %v10227 = vrot.slane %v10214, %v10226
    %v10228 = vlaneseq
    %v10229 = vshrl.u32 %v10228, 7
    %v10230 = vsub.s32 3, %v10229
    %v10231 = vrot.slane %v10214, %v10230
    %v10232 = vlaneseq
    %v10233 = vshrl.u32 %v10232, 7
    %v10234 = vsub.s32 4, %v10233
    %v10235 = vrot.slane %v10214, %v10234
    %v10241 = vadd.f32 %v10127, %v10219
    %v10242 = vadd.f32 %v10129, %v10223
    %v10243 = vadd.f32 %v10168, %v10227
    %v10244 = vadd.f32 %v10170, %v10231
    %v10245 = vadd.f32 %v10209, %v10235
    %v10246 = vmax.f32 %v10241, 0.0
    %v10247 = vmax.f32 %v10242, 0.0
    %v10248 = vmax.f32 %v10243, 0.0
    %v10249 = vmax.f32 %v10244, 0.0
    %v10250 = vmax.f32 %v10245, 0.0
    %v10251 = vpack.c.bf16 %v10246, %v10246
    %v10252 = vpack.c.bf16 %v10247, %v10247
    %v10253 = vpack.c.bf16 %v10248, %v10248
    %v10254 = vpack.c.bf16 %v10249, %v10249
    %v10255 = vpack.c.bf16 %v10250, %v10250
    %v10256 = vld [vmem:[%s21] sm:$0xff]
    %v10257 = vld [vmem:[%s21 + $0x8] sm:$0xff]
    %v10258 = vld [vmem:[%s21 + $0x10] sm:$0xff]
    %v10259 = vld [vmem:[%s21 + $0x18] sm:$0xff]
    %v10260 = vld [vmem:[%s21 + $0x20] sm:$0xff]
    %v10261 = vld [vmem:[%s21 + $0x28] sm:$0xff]
    %v10262 = vld [vmem:[%s21 + $0x30] sm:$0xff]
    %v10263 = vld [vmem:[%s21 + $0x38] sm:$0xff]
    %v10264 = vld [vmem:[%s21 + $0x40] sm:$0xff]
    %v10265 = vld [vmem:[%s21 + $0x48] sm:$0xff]
    %v10266 = vld [vmem:[%s21 + $0x50] sm:$0xff]
    %v10267 = vld [vmem:[%s21 + $0x58] sm:$0xff]
    %v10268 = vld [vmem:[%s21 + $0x60] sm:$0xff]
    %v10269 = vld [vmem:[%s21 + $0x68] sm:$0xff]
    %v10270 = vld [vmem:[%s21 + $0x70] sm:$0xff]
    %v10271 = vld [vmem:[%s21 + $0x78] sm:$0xff]
    %v10272 = vld [vmem:[%s21 + $0x80] sm:$0xff]
    %v10273 = vld [vmem:[%s21 + $0x88] sm:$0xff]
    %v10274 = vld [vmem:[%s21 + $0x90] sm:$0xff]
    %v10275 = vld [vmem:[%s21 + $0x98] sm:$0xff]
    %v10276 = vld [vmem:[%s21 + $0xa0] sm:$0xff]
    %v10277 = vld [vmem:[%s21 + $0xa8] sm:$0xff]
    %v10278 = vld [vmem:[%s21 + $0xb0] sm:$0xff]
    %v10279 = vld [vmem:[%s21 + $0xb8] sm:$0xff]
    %v10280 = vld [vmem:[%s21 + $0xc0] sm:$0xff]
    %v10281 = vld [vmem:[%s21 + $0xc8] sm:$0xff]
    %v10282 = vld [vmem:[%s21 + $0xd0] sm:$0xff]
    %v10283 = vld [vmem:[%s21 + $0xd8] sm:$0xff]
    %v10284 = vld [vmem:[%s21 + $0xe0] sm:$0xff]
    %v10285 = vld [vmem:[%s21 + $0xe8] sm:$0xff]
    %v10286 = vld [vmem:[%s21 + $0xf0] sm:$0xff]
    %v10287 = vld [vmem:[%s21 + $0xf8] sm:$0xff]
    %v10288 = vld [vmem:[%s21 + $0x100] sm:$0xff]
    %v10289 = vld [vmem:[%s21 + $0x108] sm:$0xff]
    %v10290 = vld [vmem:[%s21 + $0x110] sm:$0xff]
    %v10291 = vld [vmem:[%s21 + $0x118] sm:$0xff]
    %v10292 = vld [vmem:[%s21 + $0x120] sm:$0xff]
    %v10293 = vld [vmem:[%s21 + $0x128] sm:$0xff]
    %v10294 = vld [vmem:[%s21 + $0x130] sm:$0xff]
    %v10295 = vld [vmem:[%s21 + $0x138] sm:$0xff]
    %v10296 = vld [vmem:[%s21 + $0x140] sm:$0xff]
    %v10297 = vld [vmem:[%s21 + $0x148] sm:$0xff]
    %v10298 = vld [vmem:[%s21 + $0x150] sm:$0xff]
    %v10299 = vld [vmem:[%s21 + $0x158] sm:$0xff]
    %v10300 = vld [vmem:[%s21 + $0x160] sm:$0xff]
    %v10301 = vld [vmem:[%s21 + $0x168] sm:$0xff]
    %v10302 = vld [vmem:[%s21 + $0x170] sm:$0xff]
    %v10303 = vld [vmem:[%s21 + $0x178] sm:$0xff]
    %v10304 = vld [vmem:[%s21 + $0x180] sm:$0xff]
    %v10305 = vld [vmem:[%s21 + $0x188] sm:$0xff]
    %v10306 = vld [vmem:[%s21 + $0x190] sm:$0xff]
    %v10307 = vld [vmem:[%s21 + $0x198] sm:$0xff]
    %v10308 = vld [vmem:[%s21 + $0x1a0] sm:$0xff]
    %v10309 = vld [vmem:[%s21 + $0x1a8] sm:$0xff]
    %v10310 = vld [vmem:[%s21 + $0x1b0] sm:$0xff]
    %v10311 = vld [vmem:[%s21 + $0x1b8] sm:$0xff]
    %v10312 = vld [vmem:[%s21 + $0x1c0] sm:$0xff]
    %v10313 = vld [vmem:[%s21 + $0x1c8] sm:$0xff]
    %v10314 = vld [vmem:[%s21 + $0x1d0] sm:$0xff]
    %v10315 = vld [vmem:[%s21 + $0x1d8] sm:$0xff]
    %v10316 = vld [vmem:[%s21 + $0x1e0] sm:$0xff]
    %v10317 = vld [vmem:[%s21 + $0x1e8] sm:$0xff]
    %v10318 = vld [vmem:[%s21 + $0x1f0] sm:$0xff]
    %v10319 = vld [vmem:[%s21 + $0x1f8] sm:$0xff]
    %v10320 = vld [vmem:[%s21 + $0x200] sm:$0xff]
    %v10321 = vld [vmem:[%s21 + $0x208] sm:$0xff]
    %v10322 = vld [vmem:[%s21 + $0x210] sm:$0xff]
    %v10323 = vld [vmem:[%s21 + $0x218] sm:$0xff]
    %v10324 = vld [vmem:[%s21 + $0x220] sm:$0xff]
    %v10325 = vld [vmem:[%s21 + $0x228] sm:$0xff]
    %v10326 = vld [vmem:[%s21 + $0x230] sm:$0xff]
    %v10327 = vld [vmem:[%s21 + $0x238] sm:$0xff]
    %v10328 = vld [vmem:[%s21 + $0x240] sm:$0xff]
    %v10329 = vld [vmem:[%s21 + $0x248] sm:$0xff]
    %v10330 = vld [vmem:[%s21 + $0x250] sm:$0xff]
    %v10331 = vld [vmem:[%s21 + $0x258] sm:$0xff]
    %v10332 = vld [vmem:[%s21 + $0x260] sm:$0xff]
    %v10333 = vld [vmem:[%s21 + $0x268] sm:$0xff]
    %v10334 = vld [vmem:[%s21 + $0x270] sm:$0xff]
    %v10335 = vld [vmem:[%s21 + $0x278] sm:$0xff]
    %v10336 = vld [vmem:[%s21 + $0x280] sm:$0xff]
    %v10337 = vld [vmem:[%s21 + $0x288] sm:$0xff]
    %v10338 = vld [vmem:[%s21 + $0x290] sm:$0xff]
    %v10339 = vld [vmem:[%s21 + $0x298] sm:$0xff]
    %v10340 = vld [vmem:[%s21 + $0x2a0] sm:$0xff]
    %v10341 = vld [vmem:[%s21 + $0x2a8] sm:$0xff]
    %v10342 = vld [vmem:[%s21 + $0x2b0] sm:$0xff]
    %v10343 = vld [vmem:[%s21 + $0x2b8] sm:$0xff]
    %v10344 = vld [vmem:[%s21 + $0x2c0] sm:$0xff]
    %v10345 = vld [vmem:[%s21 + $0x2c8] sm:$0xff]
    %v10346 = vld [vmem:[%s21 + $0x2d0] sm:$0xff]
    %v10347 = vld [vmem:[%s21 + $0x2d8] sm:$0xff]
    %v10348 = vld [vmem:[%s21 + $0x2e0] sm:$0xff]
    %v10349 = vld [vmem:[%s21 + $0x2e8] sm:$0xff]
    %v10350 = vld [vmem:[%s21 + $0x2f0] sm:$0xff]
    %v10351 = vld [vmem:[%s21 + $0x2f8] sm:$0xff]
    %v10352 = vld [vmem:[%s21 + $0x300] sm:$0xff]
    %v10353 = vld [vmem:[%s21 + $0x308] sm:$0xff]
    %v10354 = vld [vmem:[%s21 + $0x310] sm:$0xff]
    %v10355 = vld [vmem:[%s21 + $0x318] sm:$0xff]
    %v10356 = vld [vmem:[%s21 + $0x320] sm:$0xff]
    %v10357 = vld [vmem:[%s21 + $0x328] sm:$0xff]
    %v10358 = vld [vmem:[%s21 + $0x330] sm:$0xff]
    %v10359 = vld [vmem:[%s21 + $0x338] sm:$0xff]
    %v10360 = vld [vmem:[%s21 + $0x340] sm:$0xff]
    %v10361 = vld [vmem:[%s21 + $0x348] sm:$0xff]
    %v10362 = vld [vmem:[%s21 + $0x350] sm:$0xff]
    %v10363 = vld [vmem:[%s21 + $0x358] sm:$0xff]
    %v10364 = vld [vmem:[%s21 + $0x360] sm:$0xff]
    %v10365 = vld [vmem:[%s21 + $0x368] sm:$0xff]
    %v10366 = vld [vmem:[%s21 + $0x370] sm:$0xff]
    %v10367 = vld [vmem:[%s21 + $0x378] sm:$0xff]
    %v10368 = vld [vmem:[%s21 + $0x380] sm:$0xff]
    %v10369 = vld [vmem:[%s21 + $0x388] sm:$0xff]
    %v10370 = vld [vmem:[%s21 + $0x390] sm:$0xff]
    %v10371 = vld [vmem:[%s21 + $0x398] sm:$0xff]
    %v10372 = vld [vmem:[%s21 + $0x3a0] sm:$0xff]
    %v10373 = vld [vmem:[%s21 + $0x3a8] sm:$0xff]
    %v10374 = vld [vmem:[%s21 + $0x3b0] sm:$0xff]
    %v10375 = vld [vmem:[%s21 + $0x3b8] sm:$0xff]
    %v10376 = vld [vmem:[%s21 + $0x3c0] sm:$0xff]
    %v10377 = vld [vmem:[%s21 + $0x3c8] sm:$0xff]
    %v10378 = vld [vmem:[%s21 + $0x3d0] sm:$0xff]
    %v10379 = vld [vmem:[%s21 + $0x3d8] sm:$0xff]
    %v10380 = vld [vmem:[%s21 + $0x3e0] sm:$0xff]
    %v10381 = vld [vmem:[%s21 + $0x3e8] sm:$0xff]
    %v10382 = vld [vmem:[%s21 + $0x3f0] sm:$0xff]
    %v10383 = vld [vmem:[%s21 + $0x3f8] sm:$0xff]
    %v10384 = vld [vmem:[%s21 + $0x400] sm:$0xff]
    %v10385 = vld [vmem:[%s21 + $0x408] sm:$0xff]
    %v10386 = vld [vmem:[%s21 + $0x410] sm:$0xff]
    %v10387 = vld [vmem:[%s21 + $0x418] sm:$0xff]
    %v10388 = vld [vmem:[%s21 + $0x420] sm:$0xff]
    %v10389 = vld [vmem:[%s21 + $0x428] sm:$0xff]
    %v10390 = vld [vmem:[%s21 + $0x430] sm:$0xff]
    %v10391 = vld [vmem:[%s21 + $0x438] sm:$0xff]
    %v10392 = vld [vmem:[%s21 + $0x440] sm:$0xff]
    %v10393 = vld [vmem:[%s21 + $0x448] sm:$0xff]
    %v10394 = vld [vmem:[%s21 + $0x450] sm:$0xff]
    %v10395 = vld [vmem:[%s21 + $0x458] sm:$0xff]
    %v10396 = vld [vmem:[%s21 + $0x460] sm:$0xff]
    %v10397 = vld [vmem:[%s21 + $0x468] sm:$0xff]
    %v10398 = vld [vmem:[%s21 + $0x470] sm:$0xff]
    %v10399 = vld [vmem:[%s21 + $0x478] sm:$0xff]
    %v10400 = vld [vmem:[%s21 + $0x480] sm:$0xff]
    %v10401 = vld [vmem:[%s21 + $0x488] sm:$0xff]
    %v10402 = vld [vmem:[%s21 + $0x490] sm:$0xff]
    %v10403 = vld [vmem:[%s21 + $0x498] sm:$0xff]
    %v10404 = vld [vmem:[%s21 + $0x4a0] sm:$0xff]
    %v10405 = vld [vmem:[%s21 + $0x4a8] sm:$0xff]
    %v10406 = vld [vmem:[%s21 + $0x4b0] sm:$0xff]
    %v10407 = vld [vmem:[%s21 + $0x4b8] sm:$0xff]
    %v10408 = vld [vmem:[%s21 + $0x4c0] sm:$0xff]
    %v10409 = vld [vmem:[%s21 + $0x4c8] sm:$0xff]
    %v10410 = vld [vmem:[%s21 + $0x4d0] sm:$0xff]
    %v10411 = vld [vmem:[%s21 + $0x4d8] sm:$0xff]
    %v10412 = vld [vmem:[%s21 + $0x4e0] sm:$0xff]
    %v10413 = vld [vmem:[%s21 + $0x4e8] sm:$0xff]
    %v10414 = vld [vmem:[%s21 + $0x4f0] sm:$0xff]
    %v10415 = vld [vmem:[%s21 + $0x4f8] sm:$0xff]
    %v10416 = vld [vmem:[%s21 + $0x500] sm:$0xff]
    %v10417 = vld [vmem:[%s21 + $0x508] sm:$0xff]
    %v10418 = vld [vmem:[%s21 + $0x510] sm:$0xff]
    %v10419 = vld [vmem:[%s21 + $0x518] sm:$0xff]
    %v10420 = vld [vmem:[%s21 + $0x520] sm:$0xff]
    %v10421 = vld [vmem:[%s21 + $0x528] sm:$0xff]
    %v10422 = vld [vmem:[%s21 + $0x530] sm:$0xff]
    %v10423 = vld [vmem:[%s21 + $0x538] sm:$0xff]
    %v10424 = vld [vmem:[%s21 + $0x540] sm:$0xff]
    %v10425 = vld [vmem:[%s21 + $0x548] sm:$0xff]
    %v10426 = vld [vmem:[%s21 + $0x550] sm:$0xff]
    %v10427 = vld [vmem:[%s21 + $0x558] sm:$0xff]
    %v10428 = vld [vmem:[%s21 + $0x560] sm:$0xff]
    %v10429 = vld [vmem:[%s21 + $0x568] sm:$0xff]
    %v10430 = vld [vmem:[%s21 + $0x570] sm:$0xff]
    %v10431 = vld [vmem:[%s21 + $0x578] sm:$0xff]
    %v10432 = vld [vmem:[%s21 + $0x580] sm:$0xff]
    %v10433 = vld [vmem:[%s21 + $0x588] sm:$0xff]
    %v10434 = vld [vmem:[%s21 + $0x590] sm:$0xff]
    %v10435 = vld [vmem:[%s21 + $0x598] sm:$0xff]
    %v10436 = vld [vmem:[%s21 + $0x5a0] sm:$0xff]
    %v10437 = vld [vmem:[%s21 + $0x5a8] sm:$0xff]
    %v10438 = vld [vmem:[%s21 + $0x5b0] sm:$0xff]
    %v10439 = vld [vmem:[%s21 + $0x5b8] sm:$0xff]
    %v10440 = vld [vmem:[%s21 + $0x5c0] sm:$0xff]
    %v10441 = vld [vmem:[%s21 + $0x5c8] sm:$0xff]
    %v10442 = vld [vmem:[%s21 + $0x5d0] sm:$0xff]
    %v10443 = vld [vmem:[%s21 + $0x5d8] sm:$0xff]
    %v10444 = vld [vmem:[%s21 + $0x5e0] sm:$0xff]
    %v10445 = vld [vmem:[%s21 + $0x5e8] sm:$0xff]
    %v10446 = vld [vmem:[%s21 + $0x5f0] sm:$0xff]
    %v10447 = vld [vmem:[%s21 + $0x5f8] sm:$0xff]
    %v10448 = vld [vmem:[%s21 + $0x600] sm:$0xff]
    %v10449 = vld [vmem:[%s21 + $0x608] sm:$0xff]
    %v10450 = vld [vmem:[%s21 + $0x610] sm:$0xff]
    %v10451 = vld [vmem:[%s21 + $0x618] sm:$0xff]
    %v10452 = vld [vmem:[%s21 + $0x620] sm:$0xff]
    %v10453 = vld [vmem:[%s21 + $0x628] sm:$0xff]
    %v10454 = vld [vmem:[%s21 + $0x630] sm:$0xff]
    %v10455 = vld [vmem:[%s21 + $0x638] sm:$0xff]
    %v10456 = vld [vmem:[%s21 + $0x640] sm:$0xff]
    %v10457 = vld [vmem:[%s21 + $0x648] sm:$0xff]
    %v10458 = vld [vmem:[%s21 + $0x650] sm:$0xff]
    %v10459 = vld [vmem:[%s21 + $0x658] sm:$0xff]
    %v10460 = vld [vmem:[%s21 + $0x660] sm:$0xff]
    %v10461 = vld [vmem:[%s21 + $0x668] sm:$0xff]
    %v10462 = vld [vmem:[%s21 + $0x670] sm:$0xff]
    %v10463 = vld [vmem:[%s21 + $0x678] sm:$0xff]
    %v10464 = vld [vmem:[%s21 + $0x680] sm:$0xff]
    %v10465 = vld [vmem:[%s21 + $0x688] sm:$0xff]
    %v10466 = vld [vmem:[%s21 + $0x690] sm:$0xff]
    %v10467 = vld [vmem:[%s21 + $0x698] sm:$0xff]
    %v10468 = vld [vmem:[%s21 + $0x6a0] sm:$0xff]
    %v10469 = vld [vmem:[%s21 + $0x6a8] sm:$0xff]
    %v10470 = vld [vmem:[%s21 + $0x6b0] sm:$0xff]
    %v10471 = vld [vmem:[%s21 + $0x6b8] sm:$0xff]
    %v10472 = vld [vmem:[%s21 + $0x6c0] sm:$0xff]
    %v10473 = vld [vmem:[%s21 + $0x6c8] sm:$0xff]
    %v10474 = vld [vmem:[%s21 + $0x6d0] sm:$0xff]
    %v10475 = vld [vmem:[%s21 + $0x6d8] sm:$0xff]
    %v10476 = vld [vmem:[%s21 + $0x6e0] sm:$0xff]
    %v10477 = vld [vmem:[%s21 + $0x6e8] sm:$0xff]
    %v10478 = vld [vmem:[%s21 + $0x6f0] sm:$0xff]
    %v10479 = vld [vmem:[%s21 + $0x6f8] sm:$0xff]
    %v10480 = vld [vmem:[%s21 + $0x700] sm:$0xff]
    %v10481 = vld [vmem:[%s21 + $0x708] sm:$0xff]
    %v10482 = vld [vmem:[%s21 + $0x710] sm:$0xff]
    %v10483 = vld [vmem:[%s21 + $0x718] sm:$0xff]
    %v10484 = vld [vmem:[%s21 + $0x720] sm:$0xff]
    %v10485 = vld [vmem:[%s21 + $0x728] sm:$0xff]
    %v10486 = vld [vmem:[%s21 + $0x730] sm:$0xff]
    %v10487 = vld [vmem:[%s21 + $0x738] sm:$0xff]
    %v10488 = vld [vmem:[%s21 + $0x740] sm:$0xff]
    %v10489 = vld [vmem:[%s21 + $0x748] sm:$0xff]
    %v10490 = vld [vmem:[%s21 + $0x750] sm:$0xff]
    %v10491 = vld [vmem:[%s21 + $0x758] sm:$0xff]
    %v10492 = vld [vmem:[%s21 + $0x760] sm:$0xff]
    %v10493 = vld [vmem:[%s21 + $0x768] sm:$0xff]
    %v10494 = vld [vmem:[%s21 + $0x770] sm:$0xff]
    %v10495 = vld [vmem:[%s21 + $0x778] sm:$0xff]
    %v10496 = vld [vmem:[%s21 + $0x780] sm:$0xff]
    %v10497 = vld [vmem:[%s21 + $0x788] sm:$0xff]
    %v10498 = vld [vmem:[%s21 + $0x790] sm:$0xff]
    %v10499 = vld [vmem:[%s21 + $0x798] sm:$0xff]
    %v10500 = vld [vmem:[%s21 + $0x7a0] sm:$0xff]
    %v10501 = vld [vmem:[%s21 + $0x7a8] sm:$0xff]
    %v10502 = vld [vmem:[%s21 + $0x7b0] sm:$0xff]
    %v10503 = vld [vmem:[%s21 + $0x7b8] sm:$0xff]
    %v10504 = vld [vmem:[%s21 + $0x7c0] sm:$0xff]
    %v10505 = vld [vmem:[%s21 + $0x7c8] sm:$0xff]
    %v10506 = vld [vmem:[%s21 + $0x7d0] sm:$0xff]
    %v10507 = vld [vmem:[%s21 + $0x7d8] sm:$0xff]
    %v10508 = vld [vmem:[%s21 + $0x7e0] sm:$0xff]
    %v10509 = vld [vmem:[%s21 + $0x7e8] sm:$0xff]
    %v10510 = vld [vmem:[%s21 + $0x7f0] sm:$0xff]
    %v10511 = vld [vmem:[%s21 + $0x7f8] sm:$0xff]
    %v10512 = vld [vmem:[%s21 + $0x800] sm:$0xff]
    %v10513 = vld [vmem:[%s21 + $0x808] sm:$0xff]
    %v10514 = vld [vmem:[%s21 + $0x810] sm:$0xff]
    %v10515 = vld [vmem:[%s21 + $0x818] sm:$0xff]
    %v10516 = vld [vmem:[%s21 + $0x820] sm:$0xff]
    %v10517 = vld [vmem:[%s21 + $0x828] sm:$0xff]
    %v10518 = vld [vmem:[%s21 + $0x830] sm:$0xff]
    %v10519 = vld [vmem:[%s21 + $0x838] sm:$0xff]
    %v10520 = vld [vmem:[%s21 + $0x840] sm:$0xff]
    %v10521 = vld [vmem:[%s21 + $0x848] sm:$0xff]
    %v10522 = vld [vmem:[%s21 + $0x850] sm:$0xff]
    %v10523 = vld [vmem:[%s21 + $0x858] sm:$0xff]
    %v10524 = vld [vmem:[%s21 + $0x860] sm:$0xff]
    %v10525 = vld [vmem:[%s21 + $0x868] sm:$0xff]
    %v10526 = vld [vmem:[%s21 + $0x870] sm:$0xff]
    %v10527 = vld [vmem:[%s21 + $0x878] sm:$0xff]
    %v10528 = vld [vmem:[%s21 + $0x880] sm:$0xff]
    %v10529 = vld [vmem:[%s21 + $0x888] sm:$0xff]
    %v10530 = vld [vmem:[%s21 + $0x890] sm:$0xff]
    %v10531 = vld [vmem:[%s21 + $0x898] sm:$0xff]
    %v10532 = vld [vmem:[%s21 + $0x8a0] sm:$0xff]
    %v10533 = vld [vmem:[%s21 + $0x8a8] sm:$0xff]
    %v10534 = vld [vmem:[%s21 + $0x8b0] sm:$0xff]
    %v10535 = vld [vmem:[%s21 + $0x8b8] sm:$0xff]
    %v10536 = vld [vmem:[%s21 + $0x8c0] sm:$0xff]
    %v10537 = vld [vmem:[%s21 + $0x8c8] sm:$0xff]
    %v10538 = vld [vmem:[%s21 + $0x8d0] sm:$0xff]
    %v10539 = vld [vmem:[%s21 + $0x8d8] sm:$0xff]
    %v10540 = vld [vmem:[%s21 + $0x8e0] sm:$0xff]
    %v10541 = vld [vmem:[%s21 + $0x8e8] sm:$0xff]
    %v10542 = vld [vmem:[%s21 + $0x8f0] sm:$0xff]
    %v10543 = vld [vmem:[%s21 + $0x8f8] sm:$0xff]
    %v10544 = vld [vmem:[%s21 + $0x900] sm:$0xff]
    %v10545 = vld [vmem:[%s21 + $0x908] sm:$0xff]
    %v10546 = vld [vmem:[%s21 + $0x910] sm:$0xff]
    %v10547 = vld [vmem:[%s21 + $0x918] sm:$0xff]
    %v10548 = vld [vmem:[%s21 + $0x920] sm:$0xff]
    %v10549 = vld [vmem:[%s21 + $0x928] sm:$0xff]
    %v10550 = vld [vmem:[%s21 + $0x930] sm:$0xff]
    %v10551 = vld [vmem:[%s21 + $0x938] sm:$0xff]
    %v10552 = vld [vmem:[%s21 + $0x940] sm:$0xff]
    %v10553 = vld [vmem:[%s21 + $0x948] sm:$0xff]
    %v10554 = vld [vmem:[%s21 + $0x950] sm:$0xff]
    %v10555 = vld [vmem:[%s21 + $0x958] sm:$0xff]
    %v10556 = vld [vmem:[%s21 + $0x960] sm:$0xff]
    %v10557 = vld [vmem:[%s21 + $0x968] sm:$0xff]
    %v10558 = vld [vmem:[%s21 + $0x970] sm:$0xff]
    %v10559 = vld [vmem:[%s21 + $0x978] sm:$0xff]
    %v10560 = vld [vmem:[%s21 + $0x980] sm:$0xff]
    %v10561 = vld [vmem:[%s21 + $0x988] sm:$0xff]
    %v10562 = vld [vmem:[%s21 + $0x990] sm:$0xff]
    %v10563 = vld [vmem:[%s21 + $0x998] sm:$0xff]
    %v10564 = vld [vmem:[%s21 + $0x9a0] sm:$0xff]
    %v10565 = vld [vmem:[%s21 + $0x9a8] sm:$0xff]
    %v10566 = vld [vmem:[%s21 + $0x9b0] sm:$0xff]
    %v10567 = vld [vmem:[%s21 + $0x9b8] sm:$0xff]
    %v10568 = vld [vmem:[%s21 + $0x9c0] sm:$0xff]
    %v10569 = vld [vmem:[%s21 + $0x9c8] sm:$0xff]
    %v10570 = vld [vmem:[%s21 + $0x9d0] sm:$0xff]
    %v10571 = vld [vmem:[%s21 + $0x9d8] sm:$0xff]
    %v10572 = vld [vmem:[%s21 + $0x9e0] sm:$0xff]
    %v10573 = vld [vmem:[%s21 + $0x9e8] sm:$0xff]
    %v10574 = vld [vmem:[%s21 + $0x9f0] sm:$0xff]
    %v10575 = vld [vmem:[%s21 + $0x9f8] sm:$0xff]
    %v10576 = vld [vmem:[%s21 + $0xa00] sm:$0xff]
    %v10577 = vld [vmem:[%s21 + $0xa08] sm:$0xff]
    %v10578 = vld [vmem:[%s21 + $0xa10] sm:$0xff]
    %v10579 = vld [vmem:[%s21 + $0xa18] sm:$0xff]
    %v10580 = vld [vmem:[%s21 + $0xa20] sm:$0xff]
    %v10581 = vld [vmem:[%s21 + $0xa28] sm:$0xff]
    %v10582 = vld [vmem:[%s21 + $0xa30] sm:$0xff]
    %v10583 = vld [vmem:[%s21 + $0xa38] sm:$0xff]
    %v10584 = vld [vmem:[%s21 + $0xa40] sm:$0xff]
    %v10585 = vld [vmem:[%s21 + $0xa48] sm:$0xff]
    %v10586 = vld [vmem:[%s21 + $0xa50] sm:$0xff]
    %v10587 = vld [vmem:[%s21 + $0xa58] sm:$0xff]
    %v10588 = vld [vmem:[%s21 + $0xa60] sm:$0xff]
    %v10589 = vld [vmem:[%s21 + $0xa68] sm:$0xff]
    %v10590 = vld [vmem:[%s21 + $0xa70] sm:$0xff]
    %v10591 = vld [vmem:[%s21 + $0xa78] sm:$0xff]
    %v10592 = vld [vmem:[%s21 + $0xa80] sm:$0xff]
    %v10593 = vld [vmem:[%s21 + $0xa88] sm:$0xff]
    %v10594 = vld [vmem:[%s21 + $0xa90] sm:$0xff]
    %v10595 = vld [vmem:[%s21 + $0xa98] sm:$0xff]
    %v10596 = vld [vmem:[%s21 + $0xaa0] sm:$0xff]
    %v10597 = vld [vmem:[%s21 + $0xaa8] sm:$0xff]
    %v10598 = vld [vmem:[%s21 + $0xab0] sm:$0xff]
    %v10599 = vld [vmem:[%s21 + $0xab8] sm:$0xff]
    %v10600 = vld [vmem:[%s21 + $0xac0] sm:$0xff]
    %v10601 = vld [vmem:[%s21 + $0xac8] sm:$0xff]
    %v10602 = vld [vmem:[%s21 + $0xad0] sm:$0xff]
    %v10603 = vld [vmem:[%s21 + $0xad8] sm:$0xff]
    %v10604 = vld [vmem:[%s21 + $0xae0] sm:$0xff]
    %v10605 = vld [vmem:[%s21 + $0xae8] sm:$0xff]
    %v10606 = vld [vmem:[%s21 + $0xaf0] sm:$0xff]
    %v10607 = vld [vmem:[%s21 + $0xaf8] sm:$0xff]
    %v10608 = vld [vmem:[%s21 + $0xb00] sm:$0xff]
    %v10609 = vld [vmem:[%s21 + $0xb08] sm:$0xff]
    %v10610 = vld [vmem:[%s21 + $0xb10] sm:$0xff]
    %v10611 = vld [vmem:[%s21 + $0xb18] sm:$0xff]
    %v10612 = vld [vmem:[%s21 + $0xb20] sm:$0xff]
    %v10613 = vld [vmem:[%s21 + $0xb28] sm:$0xff]
    %v10614 = vld [vmem:[%s21 + $0xb30] sm:$0xff]
    %v10615 = vld [vmem:[%s21 + $0xb38] sm:$0xff]
    %v10616 = vld [vmem:[%s21 + $0xb40] sm:$0xff]
    %v10617 = vld [vmem:[%s21 + $0xb48] sm:$0xff]
    %v10618 = vld [vmem:[%s21 + $0xb50] sm:$0xff]
    %v10619 = vld [vmem:[%s21 + $0xb58] sm:$0xff]
    %v10620 = vld [vmem:[%s21 + $0xb60] sm:$0xff]
    %v10621 = vld [vmem:[%s21 + $0xb68] sm:$0xff]
    %v10622 = vld [vmem:[%s21 + $0xb70] sm:$0xff]
    %v10623 = vld [vmem:[%s21 + $0xb78] sm:$0xff]
    %v10624 = vld [vmem:[%s21 + $0xb80] sm:$0xff]
    %v10625 = vld [vmem:[%s21 + $0xb88] sm:$0xff]
    %v10626 = vld [vmem:[%s21 + $0xb90] sm:$0xff]
    %v10627 = vld [vmem:[%s21 + $0xb98] sm:$0xff]
    %v10628 = vld [vmem:[%s21 + $0xba0] sm:$0xff]
    %v10629 = vld [vmem:[%s21 + $0xba8] sm:$0xff]
    %v10630 = vld [vmem:[%s21 + $0xbb0] sm:$0xff]
    %v10631 = vld [vmem:[%s22] sm:$0xff]
    %v10632 = vld [vmem:[%s22 + $0x8] sm:$0x3]
    %v10635 = vlaneseq
    %v10636 = vshrl.u32 %v10635, 7
    %v10637 = vsub.s32 0, %v10636
    %v10638 = vrot.slane %v10631, %v10637
    %v10639 = vlaneseq
    %v10640 = vshrl.u32 %v10639, 7
    %v10641 = vsub.s32 1, %v10640
    %v10642 = vrot.slane %v10631, %v10641
    %v10643 = vlaneseq
    %v10644 = vshrl.u32 %v10643, 7
    %v10645 = vsub.s32 2, %v10644
    %v10646 = vrot.slane %v10631, %v10645
    %v10647 = vlaneseq
    %v10648 = vshrl.u32 %v10647, 7
    %v10649 = vsub.s32 3, %v10648
    %v10650 = vrot.slane %v10631, %v10649
    %v10651 = vlaneseq
    %v10652 = vshrl.u32 %v10651, 7
    %v10653 = vsub.s32 4, %v10652
    %v10654 = vrot.slane %v10631, %v10653
    %v10655 = vlaneseq
    %v10656 = vshrl.u32 %v10655, 7
    %v10657 = vsub.s32 5, %v10656
    %v10658 = vrot.slane %v10631, %v10657
    %v10659 = vlaneseq
    %v10660 = vshrl.u32 %v10659, 7
    %v10661 = vsub.s32 6, %v10660
    %v10662 = vrot.slane %v10631, %v10661
    %v10663 = vlaneseq
    %v10664 = vshrl.u32 %v10663, 7
    %v10665 = vsub.s32 7, %v10664
    %v10666 = vrot.slane %v10631, %v10665
    %v10667 = vlaneseq
    %v10668 = vshrl.u32 %v10667, 7
    %v10669 = vsub.s32 0, %v10668
    %v10670 = vrot.slane %v10632, %v10669
    %v10671 = vlaneseq
    %v10672 = vshrl.u32 %v10671, 7
    %v10673 = vsub.s32 1, %v10672
    %v10674 = vrot.slane %v10632, %v10673
    %v11060 = vunpack.c.l.b16 %v10256
    %v11061 = vunpack.c.h.b16 %v10256
    %v11062 = vunpack.c.l.b16 %v10257
    %v11063 = vunpack.c.h.b16 %v10257
    %v11064 = vunpack.c.l.b16 %v10258
    %v11065 = vunpack.c.h.b16 %v10258
    %v11066 = vunpack.c.l.b16 %v10259
    %v11067 = vunpack.c.h.b16 %v10259
    %v11068 = vunpack.c.l.b16 %v10260
    %v11069 = vunpack.c.h.b16 %v10260
    %v11070 = vunpack.c.l.b16 %v10261
    %v11071 = vunpack.c.h.b16 %v10261
    %v11072 = vunpack.c.l.b16 %v10262
    %v11073 = vunpack.c.h.b16 %v10262
    %v11074 = vunpack.c.l.b16 %v10263
    %v11075 = vunpack.c.h.b16 %v10263
    %v11076 = vunpack.c.l.b16 %v10264
    %v11077 = vunpack.c.h.b16 %v10264
    %v11078 = vunpack.c.l.b16 %v10265
    %v11079 = vunpack.c.h.b16 %v10265
    %v11080 = vunpack.c.l.b16 %v10266
    %v11081 = vunpack.c.h.b16 %v10266
    %v11082 = vunpack.c.l.b16 %v10267
    %v11083 = vunpack.c.h.b16 %v10267
    %v11084 = vunpack.c.l.b16 %v10268
    %v11085 = vunpack.c.h.b16 %v10268
    %v11086 = vunpack.c.l.b16 %v10269
    %v11087 = vunpack.c.h.b16 %v10269
    %v11088 = vunpack.c.l.b16 %v10270
    %v11089 = vunpack.c.h.b16 %v10270
    %v11090 = vunpack.c.l.b16 %v10271
    %v11091 = vunpack.c.h.b16 %v10271
    %v11092 = vunpack.c.l.b16 %v10272
    %v11093 = vunpack.c.h.b16 %v10272
    %v11094 = vunpack.c.l.b16 %v10273
    %v11095 = vunpack.c.h.b16 %v10273
    %v11096 = vunpack.c.l.b16 %v10274
    %v11097 = vunpack.c.h.b16 %v10274
    %v11098 = vunpack.c.l.b16 %v10275
    %v11099 = vunpack.c.h.b16 %v10275
    %v11100 = vunpack.c.l.b16 %v10276
    %v11101 = vunpack.c.h.b16 %v10276
    %v11102 = vunpack.c.l.b16 %v10277
    %v11103 = vunpack.c.h.b16 %v10277
    %v11104 = vunpack.c.l.b16 %v10278
    %v11105 = vunpack.c.h.b16 %v10278
    %v11106 = vunpack.c.l.b16 %v10279
    %v11107 = vunpack.c.h.b16 %v10279
    %v11108 = vunpack.c.l.b16 %v10280
    %v11109 = vunpack.c.h.b16 %v10280
    %v11110 = vunpack.c.l.b16 %v10281
    %v11111 = vunpack.c.h.b16 %v10281
    %v11112 = vunpack.c.l.b16 %v10282
    %v11113 = vunpack.c.h.b16 %v10282
    %v11114 = vunpack.c.l.b16 %v10283
    %v11115 = vunpack.c.h.b16 %v10283
    %v11116 = vunpack.c.l.b16 %v10284
    %v11117 = vunpack.c.h.b16 %v10284
    %v11118 = vunpack.c.l.b16 %v10285
    %v11119 = vunpack.c.h.b16 %v10285
    %v11120 = vunpack.c.l.b16 %v10286
    %v11121 = vunpack.c.h.b16 %v10286
    %v11122 = vunpack.c.l.b16 %v10287
    %v11123 = vunpack.c.h.b16 %v10287
    %v11124 = vunpack.c.l.b16 %v10288
    %v11125 = vunpack.c.h.b16 %v10288
    %v11126 = vunpack.c.l.b16 %v10289
    %v11127 = vunpack.c.h.b16 %v10289
    %v11128 = vunpack.c.l.b16 %v10290
    %v11129 = vunpack.c.h.b16 %v10290
    %v11130 = vunpack.c.l.b16 %v10291
    %v11131 = vunpack.c.h.b16 %v10291
    %v11132 = vunpack.c.l.b16 %v10292
    %v11133 = vunpack.c.h.b16 %v10292
    %v11134 = vunpack.c.l.b16 %v10293
    %v11135 = vunpack.c.h.b16 %v10293
    %v11136 = vunpack.c.l.b16 %v10294
    %v11137 = vunpack.c.h.b16 %v10294
    %v11138 = vunpack.c.l.b16 %v10295
    %v11139 = vunpack.c.h.b16 %v10295
    %v11140 = vunpack.c.l.b16 %v10296
    %v11141 = vunpack.c.h.b16 %v10296
    %v11142 = vunpack.c.l.b16 %v10297
    %v11143 = vunpack.c.h.b16 %v10297
    %v11144 = vunpack.c.l.b16 %v10298
    %v11145 = vunpack.c.h.b16 %v10298
    %v11146 = vunpack.c.l.b16 %v10299
    %v11147 = vunpack.c.h.b16 %v10299
    %v11148 = vunpack.c.l.b16 %v10300
    %v11149 = vunpack.c.h.b16 %v10300
    %v11150 = vunpack.c.l.b16 %v10301
    %v11151 = vunpack.c.h.b16 %v10301
    %v11152 = vunpack.c.l.b16 %v10302
    %v11153 = vunpack.c.h.b16 %v10302
    %v11154 = vunpack.c.l.b16 %v10303
    %v11155 = vunpack.c.h.b16 %v10303
    %v11156 = vunpack.c.l.b16 %v10304
    %v11157 = vunpack.c.h.b16 %v10304
    %v11158 = vunpack.c.l.b16 %v10305
    %v11159 = vunpack.c.h.b16 %v10305
    %v11160 = vunpack.c.l.b16 %v10306
    %v11161 = vunpack.c.h.b16 %v10306
    %v11162 = vunpack.c.l.b16 %v10307
    %v11163 = vunpack.c.h.b16 %v10307
    %v11164 = vunpack.c.l.b16 %v10308
    %v11165 = vunpack.c.h.b16 %v10308
    %v11166 = vunpack.c.l.b16 %v10309
    %v11167 = vunpack.c.h.b16 %v10309
    %v11168 = vunpack.c.l.b16 %v10310
    %v11169 = vunpack.c.h.b16 %v10310
    %v11170 = vunpack.c.l.b16 %v10311
    %v11171 = vunpack.c.h.b16 %v10311
    %v11172 = vunpack.c.l.b16 %v10312
    %v11173 = vunpack.c.h.b16 %v10312
    %v11174 = vunpack.c.l.b16 %v10313
    %v11175 = vunpack.c.h.b16 %v10313
    %v11176 = vunpack.c.l.b16 %v10314
    %v11177 = vunpack.c.h.b16 %v10314
    %v11178 = vunpack.c.l.b16 %v10315
    %v11179 = vunpack.c.h.b16 %v10315
    %v11180 = vunpack.c.l.b16 %v10316
    %v11181 = vunpack.c.h.b16 %v10316
    %v11182 = vunpack.c.l.b16 %v10317
    %v11183 = vunpack.c.h.b16 %v10317
    %v11184 = vunpack.c.l.b16 %v10318
    %v11185 = vunpack.c.h.b16 %v10318
    %v11186 = vunpack.c.l.b16 %v10319
    %v11187 = vunpack.c.h.b16 %v10319
    %v11188 = vunpack.c.l.b16 %v10320
    %v11189 = vunpack.c.h.b16 %v10320
    %v11190 = vunpack.c.l.b16 %v10321
    %v11191 = vunpack.c.h.b16 %v10321
    %v11192 = vunpack.c.l.b16 %v10322
    %v11193 = vunpack.c.h.b16 %v10322
    %v11194 = vunpack.c.l.b16 %v10323
    %v11195 = vunpack.c.h.b16 %v10323
    %v11196 = vunpack.c.l.b16 %v10324
    %v11197 = vunpack.c.h.b16 %v10324
    %v11198 = vunpack.c.l.b16 %v10325
    %v11199 = vunpack.c.h.b16 %v10325
    %v11200 = vunpack.c.l.b16 %v10326
    %v11201 = vunpack.c.h.b16 %v10326
    %v11202 = vunpack.c.l.b16 %v10327
    %v11203 = vunpack.c.h.b16 %v10327
    %v11204 = vunpack.c.l.b16 %v10328
    %v11205 = vunpack.c.h.b16 %v10328
    %v11206 = vunpack.c.l.b16 %v10329
    %v11207 = vunpack.c.h.b16 %v10329
    %v11208 = vunpack.c.l.b16 %v10330
    %v11209 = vunpack.c.h.b16 %v10330
    %v11210 = vunpack.c.l.b16 %v10331
    %v11211 = vunpack.c.h.b16 %v10331
    %v11212 = vunpack.c.l.b16 %v10332
    %v11213 = vunpack.c.h.b16 %v10332
    %v11214 = vunpack.c.l.b16 %v10333
    %v11215 = vunpack.c.h.b16 %v10333
    %v11216 = vunpack.c.l.b16 %v10334
    %v11217 = vunpack.c.h.b16 %v10334
    %v11218 = vunpack.c.l.b16 %v10335
    %v11219 = vunpack.c.h.b16 %v10335
    %v11220 = vunpack.c.l.b16 %v10336
    %v11221 = vunpack.c.h.b16 %v10336
    %v11222 = vunpack.c.l.b16 %v10337
    %v11223 = vunpack.c.h.b16 %v10337
    %v11224 = vunpack.c.l.b16 %v10338
    %v11225 = vunpack.c.h.b16 %v10338
    %v11226 = vunpack.c.l.b16 %v10339
    %v11227 = vunpack.c.h.b16 %v10339
    %v11228 = vunpack.c.l.b16 %v10340
    %v11229 = vunpack.c.h.b16 %v10340
    %v11230 = vunpack.c.l.b16 %v10341
    %v11231 = vunpack.c.h.b16 %v10341
    %v11232 = vunpack.c.l.b16 %v10342
    %v11233 = vunpack.c.h.b16 %v10342
    %v11234 = vunpack.c.l.b16 %v10343
    %v11235 = vunpack.c.h.b16 %v10343
    %v11236 = vunpack.c.l.b16 %v10344
    %v11237 = vunpack.c.h.b16 %v10344
    %v11238 = vunpack.c.l.b16 %v10345
    %v11239 = vunpack.c.h.b16 %v10345
    %v11240 = vunpack.c.l.b16 %v10346
    %v11241 = vunpack.c.h.b16 %v10346
    %v11242 = vunpack.c.l.b16 %v10347
    %v11243 = vunpack.c.h.b16 %v10347
    %v11244 = vunpack.c.l.b16 %v10348
    %v11245 = vunpack.c.h.b16 %v10348
    %v11246 = vunpack.c.l.b16 %v10349
    %v11247 = vunpack.c.h.b16 %v10349
    %v11248 = vunpack.c.l.b16 %v10350
    %v11249 = vunpack.c.h.b16 %v10350
    %v11250 = vunpack.c.l.b16 %v10351
    %v11251 = vunpack.c.h.b16 %v10351
    %v11252 = vunpack.c.l.b16 %v10352
    %v11253 = vunpack.c.h.b16 %v10352
    %v11254 = vunpack.c.l.b16 %v10353
    %v11255 = vunpack.c.h.b16 %v10353
    %v11256 = vunpack.c.l.b16 %v10354
    %v11257 = vunpack.c.h.b16 %v10354
    %v11258 = vunpack.c.l.b16 %v10355
    %v11259 = vunpack.c.h.b16 %v10355
    %v11260 = vunpack.c.l.b16 %v10356
    %v11261 = vunpack.c.h.b16 %v10356
    %v11262 = vunpack.c.l.b16 %v10357
    %v11263 = vunpack.c.h.b16 %v10357
    %v11264 = vunpack.c.l.b16 %v10358
    %v11265 = vunpack.c.h.b16 %v10358
    %v11266 = vunpack.c.l.b16 %v10359
    %v11267 = vunpack.c.h.b16 %v10359
    %v11268 = vunpack.c.l.b16 %v10360
    %v11269 = vunpack.c.h.b16 %v10360
    %v11270 = vunpack.c.l.b16 %v10361
    %v11271 = vunpack.c.h.b16 %v10361
    %v11272 = vunpack.c.l.b16 %v10362
    %v11273 = vunpack.c.h.b16 %v10362
    %v11274 = vunpack.c.l.b16 %v10363
    %v11275 = vunpack.c.h.b16 %v10363
    %v11276 = vunpack.c.l.b16 %v10364
    %v11277 = vunpack.c.h.b16 %v10364
    %v11278 = vunpack.c.l.b16 %v10365
    %v11279 = vunpack.c.h.b16 %v10365
    %v11280 = vunpack.c.l.b16 %v10366
    %v11281 = vunpack.c.h.b16 %v10366
    %v11282 = vunpack.c.l.b16 %v10367
    %v11283 = vunpack.c.h.b16 %v10367
    %v11284 = vunpack.c.l.b16 %v10368
    %v11285 = vunpack.c.h.b16 %v10368
    %v11286 = vunpack.c.l.b16 %v10369
    %v11287 = vunpack.c.h.b16 %v10369
    %v11288 = vunpack.c.l.b16 %v10370
    %v11289 = vunpack.c.h.b16 %v10370
    %v11290 = vunpack.c.l.b16 %v10371
    %v11291 = vunpack.c.h.b16 %v10371
    %v11292 = vunpack.c.l.b16 %v10372
    %v11293 = vunpack.c.h.b16 %v10372
    %v11294 = vunpack.c.l.b16 %v10373
    %v11295 = vunpack.c.h.b16 %v10373
    %v11296 = vunpack.c.l.b16 %v10374
    %v11297 = vunpack.c.h.b16 %v10374
    %v11298 = vunpack.c.l.b16 %v10375
    %v11299 = vunpack.c.h.b16 %v10375
    %v11300 = vunpack.c.l.b16 %v10376
    %v11301 = vunpack.c.h.b16 %v10376
    %v11302 = vunpack.c.l.b16 %v10377
    %v11303 = vunpack.c.h.b16 %v10377
    %v11304 = vunpack.c.l.b16 %v10378
    %v11305 = vunpack.c.h.b16 %v10378
    %v11306 = vunpack.c.l.b16 %v10379
    %v11307 = vunpack.c.h.b16 %v10379
    %v11308 = vunpack.c.l.b16 %v10380
    %v11309 = vunpack.c.h.b16 %v10380
    %v11310 = vunpack.c.l.b16 %v10381
    %v11311 = vunpack.c.h.b16 %v10381
    %v11312 = vunpack.c.l.b16 %v10382
    %v11313 = vunpack.c.h.b16 %v10382
    %v11314 = vunpack.c.l.b16 %v10383
    %v11315 = vunpack.c.h.b16 %v10383
    %v11316 = vunpack.c.l.b16 %v10384
    %v11317 = vunpack.c.h.b16 %v10384
    %v11318 = vunpack.c.l.b16 %v10385
    %v11319 = vunpack.c.h.b16 %v10385
    %v11320 = vunpack.c.l.b16 %v10386
    %v11321 = vunpack.c.h.b16 %v10386
    %v11322 = vunpack.c.l.b16 %v10387
    %v11323 = vunpack.c.h.b16 %v10387
    %v11324 = vunpack.c.l.b16 %v10388
    %v11325 = vunpack.c.h.b16 %v10388
    %v11326 = vunpack.c.l.b16 %v10389
    %v11327 = vunpack.c.h.b16 %v10389
    %v11328 = vunpack.c.l.b16 %v10390
    %v11329 = vunpack.c.h.b16 %v10390
    %v11330 = vunpack.c.l.b16 %v10391
    %v11331 = vunpack.c.h.b16 %v10391
    %v11332 = vunpack.c.l.b16 %v10392
    %v11333 = vunpack.c.h.b16 %v10392
    %v11334 = vunpack.c.l.b16 %v10393
    %v11335 = vunpack.c.h.b16 %v10393
    %v11336 = vunpack.c.l.b16 %v10394
    %v11337 = vunpack.c.h.b16 %v10394
    %v11338 = vunpack.c.l.b16 %v10395
    %v11339 = vunpack.c.h.b16 %v10395
    %v11340 = vunpack.c.l.b16 %v10396
    %v11341 = vunpack.c.h.b16 %v10396
    %v11342 = vunpack.c.l.b16 %v10397
    %v11343 = vunpack.c.h.b16 %v10397
    %v11344 = vunpack.c.l.b16 %v10398
    %v11345 = vunpack.c.h.b16 %v10398
    %v11346 = vunpack.c.l.b16 %v10399
    %v11347 = vunpack.c.h.b16 %v10399
    %v11348 = vunpack.c.l.b16 %v10400
    %v11349 = vunpack.c.h.b16 %v10400
    %v11350 = vunpack.c.l.b16 %v10401
    %v11351 = vunpack.c.h.b16 %v10401
    %v11352 = vunpack.c.l.b16 %v10402
    %v11353 = vunpack.c.h.b16 %v10402
    %v11354 = vunpack.c.l.b16 %v10403
    %v11355 = vunpack.c.h.b16 %v10403
    %v11356 = vunpack.c.l.b16 %v10404
    %v11357 = vunpack.c.h.b16 %v10404
    %v11358 = vunpack.c.l.b16 %v10405
    %v11359 = vunpack.c.h.b16 %v10405
    %v11360 = vunpack.c.l.b16 %v10406
    %v11361 = vunpack.c.h.b16 %v10406
    %v11362 = vunpack.c.l.b16 %v10407
    %v11363 = vunpack.c.h.b16 %v10407
    %v11364 = vunpack.c.l.b16 %v10408
    %v11365 = vunpack.c.h.b16 %v10408
    %v11366 = vunpack.c.l.b16 %v10409
    %v11367 = vunpack.c.h.b16 %v10409
    %v11368 = vunpack.c.l.b16 %v10410
    %v11369 = vunpack.c.h.b16 %v10410
    %v11370 = vunpack.c.l.b16 %v10411
    %v11371 = vunpack.c.h.b16 %v10411
    %v11372 = vunpack.c.l.b16 %v10412
    %v11373 = vunpack.c.h.b16 %v10412
    %v11374 = vunpack.c.l.b16 %v10413
    %v11375 = vunpack.c.h.b16 %v10413
    %v11376 = vunpack.c.l.b16 %v10414
    %v11377 = vunpack.c.h.b16 %v10414
    %v11378 = vunpack.c.l.b16 %v10415
    %v11379 = vunpack.c.h.b16 %v10415
    %v11380 = vunpack.c.l.b16 %v10416
    %v11381 = vunpack.c.h.b16 %v10416
    %v11382 = vunpack.c.l.b16 %v10417
    %v11383 = vunpack.c.h.b16 %v10417
    %v11384 = vunpack.c.l.b16 %v10418
    %v11385 = vunpack.c.h.b16 %v10418
    %v11386 = vunpack.c.l.b16 %v10419
    %v11387 = vunpack.c.h.b16 %v10419
    %v11388 = vunpack.c.l.b16 %v10420
    %v11389 = vunpack.c.h.b16 %v10420
    %v11390 = vunpack.c.l.b16 %v10421
    %v11391 = vunpack.c.h.b16 %v10421
    %v11392 = vunpack.c.l.b16 %v10422
    %v11393 = vunpack.c.h.b16 %v10422
    %v11394 = vunpack.c.l.b16 %v10423
    %v11395 = vunpack.c.h.b16 %v10423
    %v11396 = vunpack.c.l.b16 %v10424
    %v11397 = vunpack.c.h.b16 %v10424
    %v11398 = vunpack.c.l.b16 %v10425
    %v11399 = vunpack.c.h.b16 %v10425
    %v11400 = vunpack.c.l.b16 %v10426
    %v11401 = vunpack.c.h.b16 %v10426
    %v11402 = vunpack.c.l.b16 %v10427
    %v11403 = vunpack.c.h.b16 %v10427
    %v11404 = vunpack.c.l.b16 %v10428
    %v11405 = vunpack.c.h.b16 %v10428
    %v11406 = vunpack.c.l.b16 %v10429
    %v11407 = vunpack.c.h.b16 %v10429
    %v11408 = vunpack.c.l.b16 %v10430
    %v11409 = vunpack.c.h.b16 %v10430
    %v11410 = vunpack.c.l.b16 %v10431
    %v11411 = vunpack.c.h.b16 %v10431
    %v11412 = vunpack.c.l.b16 %v10432
    %v11413 = vunpack.c.h.b16 %v10432
    %v11414 = vunpack.c.l.b16 %v10433
    %v11415 = vunpack.c.h.b16 %v10433
    %v11416 = vunpack.c.l.b16 %v10434
    %v11417 = vunpack.c.h.b16 %v10434
    %v11418 = vunpack.c.l.b16 %v10435
    %v11419 = vunpack.c.h.b16 %v10435
    %v11420 = vunpack.c.l.b16 %v10436
    %v11421 = vunpack.c.h.b16 %v10436
    %v11422 = vunpack.c.l.b16 %v10437
    %v11423 = vunpack.c.h.b16 %v10437
    %v11424 = vunpack.c.l.b16 %v10438
    %v11425 = vunpack.c.h.b16 %v10438
    %v11426 = vunpack.c.l.b16 %v10439
    %v11427 = vunpack.c.h.b16 %v10439
    %v11428 = vunpack.c.l.b16 %v10440
    %v11429 = vunpack.c.h.b16 %v10440
    %v11430 = vunpack.c.l.b16 %v10441
    %v11431 = vunpack.c.h.b16 %v10441
    %v11432 = vunpack.c.l.b16 %v10442
    %v11433 = vunpack.c.h.b16 %v10442
    %v11434 = vunpack.c.l.b16 %v10443
    %v11435 = vunpack.c.h.b16 %v10443
    %v11436 = vunpack.c.l.b16 %v10444
    %v11437 = vunpack.c.h.b16 %v10444
    %v11438 = vunpack.c.l.b16 %v10445
    %v11439 = vunpack.c.h.b16 %v10445
    %v11440 = vunpack.c.l.b16 %v10446
    %v11441 = vunpack.c.h.b16 %v10446
    %v11442 = vunpack.c.l.b16 %v10447
    %v11443 = vunpack.c.h.b16 %v10447
    %v11444 = vunpack.c.l.b16 %v10448
    %v11445 = vunpack.c.h.b16 %v10448
    %v11446 = vunpack.c.l.b16 %v10449
    %v11447 = vunpack.c.h.b16 %v10449
    %v11448 = vunpack.c.l.b16 %v10450
    %v11449 = vunpack.c.h.b16 %v10450
    %v11450 = vunpack.c.l.b16 %v10451
    %v11451 = vunpack.c.h.b16 %v10451
    %v11452 = vunpack.c.l.b16 %v10452
    %v11453 = vunpack.c.h.b16 %v10452
    %v11454 = vunpack.c.l.b16 %v10453
    %v11455 = vunpack.c.h.b16 %v10453
    %v11456 = vunpack.c.l.b16 %v10454
    %v11457 = vunpack.c.h.b16 %v10454
    %v11458 = vunpack.c.l.b16 %v10455
    %v11459 = vunpack.c.h.b16 %v10455
    %v11460 = vunpack.c.l.b16 %v10456
    %v11461 = vunpack.c.h.b16 %v10456
    %v11462 = vunpack.c.l.b16 %v10457
    %v11463 = vunpack.c.h.b16 %v10457
    %v11464 = vunpack.c.l.b16 %v10458
    %v11465 = vunpack.c.h.b16 %v10458
    %v11466 = vunpack.c.l.b16 %v10459
    %v11467 = vunpack.c.h.b16 %v10459
    %v11468 = vunpack.c.l.b16 %v10460
    %v11469 = vunpack.c.h.b16 %v10460
    %v11470 = vunpack.c.l.b16 %v10461
    %v11471 = vunpack.c.h.b16 %v10461
    %v11472 = vunpack.c.l.b16 %v10462
    %v11473 = vunpack.c.h.b16 %v10462
    %v11474 = vunpack.c.l.b16 %v10463
    %v11475 = vunpack.c.h.b16 %v10463
    %v11476 = vunpack.c.l.b16 %v10464
    %v11477 = vunpack.c.h.b16 %v10464
    %v11478 = vunpack.c.l.b16 %v10465
    %v11479 = vunpack.c.h.b16 %v10465
    %v11480 = vunpack.c.l.b16 %v10466
    %v11481 = vunpack.c.h.b16 %v10466
    %v11482 = vunpack.c.l.b16 %v10467
    %v11483 = vunpack.c.h.b16 %v10467
    %v11484 = vunpack.c.l.b16 %v10468
    %v11485 = vunpack.c.h.b16 %v10468
    %v11486 = vunpack.c.l.b16 %v10469
    %v11487 = vunpack.c.h.b16 %v10469
    %v11488 = vunpack.c.l.b16 %v10470
    %v11489 = vunpack.c.h.b16 %v10470
    %v11490 = vunpack.c.l.b16 %v10471
    %v11491 = vunpack.c.h.b16 %v10471
    %v11492 = vunpack.c.l.b16 %v10472
    %v11493 = vunpack.c.h.b16 %v10472
    %v11494 = vunpack.c.l.b16 %v10473
    %v11495 = vunpack.c.h.b16 %v10473
    %v11496 = vunpack.c.l.b16 %v10474
    %v11497 = vunpack.c.h.b16 %v10474
    %v11498 = vunpack.c.l.b16 %v10475
    %v11499 = vunpack.c.h.b16 %v10475
    %v11500 = vunpack.c.l.b16 %v10476
    %v11501 = vunpack.c.h.b16 %v10476
    %v11502 = vunpack.c.l.b16 %v10477
    %v11503 = vunpack.c.h.b16 %v10477
    %v11504 = vunpack.c.l.b16 %v10478
    %v11505 = vunpack.c.h.b16 %v10478
    %v11506 = vunpack.c.l.b16 %v10479
    %v11507 = vunpack.c.h.b16 %v10479
    %v11508 = vunpack.c.l.b16 %v10480
    %v11509 = vunpack.c.h.b16 %v10480
    %v11510 = vunpack.c.l.b16 %v10481
    %v11511 = vunpack.c.h.b16 %v10481
    %v11512 = vunpack.c.l.b16 %v10482
    %v11513 = vunpack.c.h.b16 %v10482
    %v11514 = vunpack.c.l.b16 %v10483
    %v11515 = vunpack.c.h.b16 %v10483
    %v11516 = vunpack.c.l.b16 %v10484
    %v11517 = vunpack.c.h.b16 %v10484
    %v11518 = vunpack.c.l.b16 %v10485
    %v11519 = vunpack.c.h.b16 %v10485
    %v11520 = vunpack.c.l.b16 %v10486
    %v11521 = vunpack.c.h.b16 %v10486
    %v11522 = vunpack.c.l.b16 %v10487
    %v11523 = vunpack.c.h.b16 %v10487
    %v11524 = vunpack.c.l.b16 %v10488
    %v11525 = vunpack.c.h.b16 %v10488
    %v11526 = vunpack.c.l.b16 %v10489
    %v11527 = vunpack.c.h.b16 %v10489
    %v11528 = vunpack.c.l.b16 %v10490
    %v11529 = vunpack.c.h.b16 %v10490
    %v11530 = vunpack.c.l.b16 %v10491
    %v11531 = vunpack.c.h.b16 %v10491
    %v11532 = vunpack.c.l.b16 %v10492
    %v11533 = vunpack.c.h.b16 %v10492
    %v11534 = vunpack.c.l.b16 %v10493
    %v11535 = vunpack.c.h.b16 %v10493
    %v11536 = vunpack.c.l.b16 %v10494
    %v11537 = vunpack.c.h.b16 %v10494
    %v11538 = vunpack.c.l.b16 %v10495
    %v11539 = vunpack.c.h.b16 %v10495
    %v11540 = vunpack.c.l.b16 %v10496
    %v11541 = vunpack.c.h.b16 %v10496
    %v11542 = vunpack.c.l.b16 %v10497
    %v11543 = vunpack.c.h.b16 %v10497
    %v11544 = vunpack.c.l.b16 %v10498
    %v11545 = vunpack.c.h.b16 %v10498
    %v11546 = vunpack.c.l.b16 %v10499
    %v11547 = vunpack.c.h.b16 %v10499
    %v11548 = vunpack.c.l.b16 %v10500
    %v11549 = vunpack.c.h.b16 %v10500
    %v11550 = vunpack.c.l.b16 %v10501
    %v11551 = vunpack.c.h.b16 %v10501
    %v11552 = vunpack.c.l.b16 %v10502
    %v11553 = vunpack.c.h.b16 %v10502
    %v11554 = vunpack.c.l.b16 %v10503
    %v11555 = vunpack.c.h.b16 %v10503
    %v11556 = vunpack.c.l.b16 %v10504
    %v11557 = vunpack.c.h.b16 %v10504
    %v11558 = vunpack.c.l.b16 %v10505
    %v11559 = vunpack.c.h.b16 %v10505
    %v11560 = vunpack.c.l.b16 %v10506
    %v11561 = vunpack.c.h.b16 %v10506
    %v11562 = vunpack.c.l.b16 %v10507
    %v11563 = vunpack.c.h.b16 %v10507
    %v11564 = vunpack.c.l.b16 %v10508
    %v11565 = vunpack.c.h.b16 %v10508
    %v11566 = vunpack.c.l.b16 %v10509
    %v11567 = vunpack.c.h.b16 %v10509
    %v11568 = vunpack.c.l.b16 %v10510
    %v11569 = vunpack.c.h.b16 %v10510
    %v11570 = vunpack.c.l.b16 %v10511
    %v11571 = vunpack.c.h.b16 %v10511
    %v11572 = vunpack.c.l.b16 %v10512
    %v11573 = vunpack.c.h.b16 %v10512
    %v11574 = vunpack.c.l.b16 %v10513
    %v11575 = vunpack.c.h.b16 %v10513
    %v11576 = vunpack.c.l.b16 %v10514
    %v11577 = vunpack.c.h.b16 %v10514
    %v11578 = vunpack.c.l.b16 %v10515
    %v11579 = vunpack.c.h.b16 %v10515
    %v11580 = vunpack.c.l.b16 %v10516
    %v11581 = vunpack.c.h.b16 %v10516
    %v11582 = vunpack.c.l.b16 %v10517
    %v11583 = vunpack.c.h.b16 %v10517
    %v11584 = vunpack.c.l.b16 %v10518
    %v11585 = vunpack.c.h.b16 %v10518
    %v11586 = vunpack.c.l.b16 %v10519
    %v11587 = vunpack.c.h.b16 %v10519
    %v11588 = vunpack.c.l.b16 %v10520
    %v11589 = vunpack.c.h.b16 %v10520
    %v11590 = vunpack.c.l.b16 %v10521
    %v11591 = vunpack.c.h.b16 %v10521
    %v11592 = vunpack.c.l.b16 %v10522
    %v11593 = vunpack.c.h.b16 %v10522
    %v11594 = vunpack.c.l.b16 %v10523
    %v11595 = vunpack.c.h.b16 %v10523
    %v11596 = vunpack.c.l.b16 %v10524
    %v11597 = vunpack.c.h.b16 %v10524
    %v11598 = vunpack.c.l.b16 %v10525
    %v11599 = vunpack.c.h.b16 %v10525
    %v11600 = vunpack.c.l.b16 %v10526
    %v11601 = vunpack.c.h.b16 %v10526
    %v11602 = vunpack.c.l.b16 %v10527
    %v11603 = vunpack.c.h.b16 %v10527
    %v11604 = vunpack.c.l.b16 %v10528
    %v11605 = vunpack.c.h.b16 %v10528
    %v11606 = vunpack.c.l.b16 %v10529
    %v11607 = vunpack.c.h.b16 %v10529
    %v11608 = vunpack.c.l.b16 %v10530
    %v11609 = vunpack.c.h.b16 %v10530
    %v11610 = vunpack.c.l.b16 %v10531
    %v11611 = vunpack.c.h.b16 %v10531
    %v11612 = vunpack.c.l.b16 %v10532
    %v11613 = vunpack.c.h.b16 %v10532
    %v11614 = vunpack.c.l.b16 %v10533
    %v11615 = vunpack.c.h.b16 %v10533
    %v11616 = vunpack.c.l.b16 %v10534
    %v11617 = vunpack.c.h.b16 %v10534
    %v11618 = vunpack.c.l.b16 %v10535
    %v11619 = vunpack.c.h.b16 %v10535
    %v11620 = vunpack.c.l.b16 %v10536
    %v11621 = vunpack.c.h.b16 %v10536
    %v11622 = vunpack.c.l.b16 %v10537
    %v11623 = vunpack.c.h.b16 %v10537
    %v11624 = vunpack.c.l.b16 %v10538
    %v11625 = vunpack.c.h.b16 %v10538
    %v11626 = vunpack.c.l.b16 %v10539
    %v11627 = vunpack.c.h.b16 %v10539
    %v11628 = vunpack.c.l.b16 %v10540
    %v11629 = vunpack.c.h.b16 %v10540
    %v11630 = vunpack.c.l.b16 %v10541
    %v11631 = vunpack.c.h.b16 %v10541
    %v11632 = vunpack.c.l.b16 %v10542
    %v11633 = vunpack.c.h.b16 %v10542
    %v11634 = vunpack.c.l.b16 %v10543
    %v11635 = vunpack.c.h.b16 %v10543
    %v11636 = vunpack.c.l.b16 %v10544
    %v11637 = vunpack.c.h.b16 %v10544
    %v11638 = vunpack.c.l.b16 %v10545
    %v11639 = vunpack.c.h.b16 %v10545
    %v11640 = vunpack.c.l.b16 %v10546
    %v11641 = vunpack.c.h.b16 %v10546
    %v11642 = vunpack.c.l.b16 %v10547
    %v11643 = vunpack.c.h.b16 %v10547
    %v11644 = vunpack.c.l.b16 %v10548
    %v11645 = vunpack.c.h.b16 %v10548
    %v11646 = vunpack.c.l.b16 %v10549
    %v11647 = vunpack.c.h.b16 %v10549
    %v11648 = vunpack.c.l.b16 %v10550
    %v11649 = vunpack.c.h.b16 %v10550
    %v11650 = vunpack.c.l.b16 %v10551
    %v11651 = vunpack.c.h.b16 %v10551
    %v11652 = vunpack.c.l.b16 %v10552
    %v11653 = vunpack.c.h.b16 %v10552
    %v11654 = vunpack.c.l.b16 %v10553
    %v11655 = vunpack.c.h.b16 %v10553
    %v11656 = vunpack.c.l.b16 %v10554
    %v11657 = vunpack.c.h.b16 %v10554
    %v11658 = vunpack.c.l.b16 %v10555
    %v11659 = vunpack.c.h.b16 %v10555
    %v11660 = vunpack.c.l.b16 %v10556
    %v11661 = vunpack.c.h.b16 %v10556
    %v11662 = vunpack.c.l.b16 %v10557
    %v11663 = vunpack.c.h.b16 %v10557
    %v11664 = vunpack.c.l.b16 %v10558
    %v11665 = vunpack.c.h.b16 %v10558
    %v11666 = vunpack.c.l.b16 %v10559
    %v11667 = vunpack.c.h.b16 %v10559
    %v11668 = vunpack.c.l.b16 %v10560
    %v11669 = vunpack.c.h.b16 %v10560
    %v11670 = vunpack.c.l.b16 %v10561
    %v11671 = vunpack.c.h.b16 %v10561
    %v11672 = vunpack.c.l.b16 %v10562
    %v11673 = vunpack.c.h.b16 %v10562
    %v11674 = vunpack.c.l.b16 %v10563
    %v11675 = vunpack.c.h.b16 %v10563
    %v11676 = vunpack.c.l.b16 %v10564
    %v11677 = vunpack.c.h.b16 %v10564
    %v11678 = vunpack.c.l.b16 %v10565
    %v11679 = vunpack.c.h.b16 %v10565
    %v11680 = vunpack.c.l.b16 %v10566
    %v11681 = vunpack.c.h.b16 %v10566
    %v11682 = vunpack.c.l.b16 %v10567
    %v11683 = vunpack.c.h.b16 %v10567
    %v11684 = vunpack.c.l.b16 %v10568
    %v11685 = vunpack.c.h.b16 %v10568
    %v11686 = vunpack.c.l.b16 %v10569
    %v11687 = vunpack.c.h.b16 %v10569
    %v11688 = vunpack.c.l.b16 %v10570
    %v11689 = vunpack.c.h.b16 %v10570
    %v11690 = vunpack.c.l.b16 %v10571
    %v11691 = vunpack.c.h.b16 %v10571
    %v11692 = vunpack.c.l.b16 %v10572
    %v11693 = vunpack.c.h.b16 %v10572
    %v11694 = vunpack.c.l.b16 %v10573
    %v11695 = vunpack.c.h.b16 %v10573
    %v11696 = vunpack.c.l.b16 %v10574
    %v11697 = vunpack.c.h.b16 %v10574
    %v11698 = vunpack.c.l.b16 %v10575
    %v11699 = vunpack.c.h.b16 %v10575
    %v11700 = vunpack.c.l.b16 %v10576
    %v11701 = vunpack.c.h.b16 %v10576
    %v11702 = vunpack.c.l.b16 %v10577
    %v11703 = vunpack.c.h.b16 %v10577
    %v11704 = vunpack.c.l.b16 %v10578
    %v11705 = vunpack.c.h.b16 %v10578
    %v11706 = vunpack.c.l.b16 %v10579
    %v11707 = vunpack.c.h.b16 %v10579
    %v11708 = vunpack.c.l.b16 %v10580
    %v11709 = vunpack.c.h.b16 %v10580
    %v11710 = vunpack.c.l.b16 %v10581
    %v11711 = vunpack.c.h.b16 %v10581
    %v11712 = vunpack.c.l.b16 %v10582
    %v11713 = vunpack.c.h.b16 %v10582
    %v11714 = vunpack.c.l.b16 %v10583
    %v11715 = vunpack.c.h.b16 %v10583
    %v11716 = vunpack.c.l.b16 %v10584
    %v11717 = vunpack.c.h.b16 %v10584
    %v11718 = vunpack.c.l.b16 %v10585
    %v11719 = vunpack.c.h.b16 %v10585
    %v11720 = vunpack.c.l.b16 %v10586
    %v11721 = vunpack.c.h.b16 %v10586
    %v11722 = vunpack.c.l.b16 %v10587
    %v11723 = vunpack.c.h.b16 %v10587
    %v11724 = vunpack.c.l.b16 %v10588
    %v11725 = vunpack.c.h.b16 %v10588
    %v11726 = vunpack.c.l.b16 %v10589
    %v11727 = vunpack.c.h.b16 %v10589
    %v11728 = vunpack.c.l.b16 %v10590
    %v11729 = vunpack.c.h.b16 %v10590
    %v11730 = vunpack.c.l.b16 %v10591
    %v11731 = vunpack.c.h.b16 %v10591
    %v11732 = vunpack.c.l.b16 %v10592
    %v11733 = vunpack.c.h.b16 %v10592
    %v11734 = vunpack.c.l.b16 %v10593
    %v11735 = vunpack.c.h.b16 %v10593
    %v11736 = vunpack.c.l.b16 %v10594
    %v11737 = vunpack.c.h.b16 %v10594
    %v11738 = vunpack.c.l.b16 %v10595
    %v11739 = vunpack.c.h.b16 %v10595
    %v11740 = vunpack.c.l.b16 %v10596
    %v11741 = vunpack.c.h.b16 %v10596
    %v11742 = vunpack.c.l.b16 %v10597
    %v11743 = vunpack.c.h.b16 %v10597
    %v11744 = vunpack.c.l.b16 %v10598
    %v11745 = vunpack.c.h.b16 %v10598
    %v11746 = vunpack.c.l.b16 %v10599
    %v11747 = vunpack.c.h.b16 %v10599
    %v11748 = vunpack.c.l.b16 %v10600
    %v11749 = vunpack.c.h.b16 %v10600
    %v11750 = vunpack.c.l.b16 %v10601
    %v11751 = vunpack.c.h.b16 %v10601
    %v11752 = vunpack.c.l.b16 %v10602
    %v11753 = vunpack.c.h.b16 %v10602
    %v11754 = vunpack.c.l.b16 %v10603
    %v11755 = vunpack.c.h.b16 %v10603
    %v11756 = vunpack.c.l.b16 %v10604
    %v11757 = vunpack.c.h.b16 %v10604
    %v11758 = vunpack.c.l.b16 %v10605
    %v11759 = vunpack.c.h.b16 %v10605
    %v11760 = vunpack.c.l.b16 %v10606
    %v11761 = vunpack.c.h.b16 %v10606
    %v11762 = vunpack.c.l.b16 %v10607
    %v11763 = vunpack.c.h.b16 %v10607
    %v11764 = vunpack.c.l.b16 %v10608
    %v11765 = vunpack.c.h.b16 %v10608
    %v11766 = vunpack.c.l.b16 %v10609
    %v11767 = vunpack.c.h.b16 %v10609
    %v11768 = vunpack.c.l.b16 %v10610
    %v11769 = vunpack.c.h.b16 %v10610
    %v11770 = vunpack.c.l.b16 %v10611
    %v11771 = vunpack.c.h.b16 %v10611
    %v11772 = vunpack.c.l.b16 %v10612
    %v11773 = vunpack.c.h.b16 %v10612
    %v11774 = vunpack.c.l.b16 %v10613
    %v11775 = vunpack.c.h.b16 %v10613
    %v11776 = vunpack.c.l.b16 %v10614
    %v11777 = vunpack.c.h.b16 %v10614
    %v11778 = vunpack.c.l.b16 %v10615
    %v11779 = vunpack.c.h.b16 %v10615
    %v11780 = vunpack.c.l.b16 %v10616
    %v11781 = vunpack.c.h.b16 %v10616
    %v11782 = vunpack.c.l.b16 %v10617
    %v11783 = vunpack.c.h.b16 %v10617
    %v11784 = vunpack.c.l.b16 %v10618
    %v11785 = vunpack.c.h.b16 %v10618
    %v11786 = vunpack.c.l.b16 %v10619
    %v11787 = vunpack.c.h.b16 %v10619
    %v11788 = vunpack.c.l.b16 %v10620
    %v11789 = vunpack.c.h.b16 %v10620
    %v11790 = vunpack.c.l.b16 %v10621
    %v11791 = vunpack.c.h.b16 %v10621
    %v11792 = vunpack.c.l.b16 %v10622
    %v11793 = vunpack.c.h.b16 %v10622
    %v11794 = vunpack.c.l.b16 %v10623
    %v11795 = vunpack.c.h.b16 %v10623
    %v11796 = vunpack.c.l.b16 %v10624
    %v11797 = vunpack.c.h.b16 %v10624
    %v11798 = vunpack.c.l.b16 %v10625
    %v11799 = vunpack.c.h.b16 %v10625
    %v11800 = vunpack.c.l.b16 %v10626
    %v11801 = vunpack.c.h.b16 %v10626
    %v11802 = vunpack.c.l.b16 %v10627
    %v11803 = vunpack.c.h.b16 %v10627
    %v11804 = vunpack.c.l.b16 %v10628
    %v11805 = vunpack.c.h.b16 %v10628
    %v11806 = vunpack.c.l.b16 %v10629
    %v11807 = vunpack.c.h.b16 %v10629
    %v11808 = vunpack.c.l.b16 %v10630
    %v11809 = vunpack.c.h.b16 %v10630
    %v11810 = vpack.c.b16 %v11070, %v11060
    %v11811 = vpack.c.b16 %v11071, %v11061
    %v11812 = vpack.c.b16 %v11072, %v11062
    %v11813 = vpack.c.b16 %v11073, %v11063
    %v11814 = vpack.c.b16 %v11074, %v11064
    %v11815 = vpack.c.b16 %v11075, %v11065
    %v11816 = vpack.c.b16 %v11076, %v11066
    %v11817 = vpack.c.b16 %v11077, %v11067
    %v11818 = vpack.c.b16 %v11078, %v11068
    %v11819 = vpack.c.b16 %v11079, %v11069
    %v11820 = vpack.c.b16 %v11090, %v11080
    %v11821 = vpack.c.b16 %v11091, %v11081
    %v11822 = vpack.c.b16 %v11092, %v11082
    %v11823 = vpack.c.b16 %v11093, %v11083
    %v11824 = vpack.c.b16 %v11094, %v11084
    %v11825 = vpack.c.b16 %v11095, %v11085
    %v11826 = vpack.c.b16 %v11096, %v11086
    %v11827 = vpack.c.b16 %v11097, %v11087
    %v11828 = vpack.c.b16 %v11098, %v11088
    %v11829 = vpack.c.b16 %v11099, %v11089
    %v11830 = vpack.c.b16 %v11110, %v11100
    %v11831 = vpack.c.b16 %v11111, %v11101
    %v11832 = vpack.c.b16 %v11112, %v11102
    %v11833 = vpack.c.b16 %v11113, %v11103
    %v11834 = vpack.c.b16 %v11114, %v11104
    %v11835 = vpack.c.b16 %v11115, %v11105
    %v11836 = vpack.c.b16 %v11116, %v11106
    %v11837 = vpack.c.b16 %v11117, %v11107
    %v11838 = vpack.c.b16 %v11118, %v11108
    %v11839 = vpack.c.b16 %v11119, %v11109
    %v11840 = vpack.c.b16 %v11130, %v11120
    %v11841 = vpack.c.b16 %v11131, %v11121
    %v11842 = vpack.c.b16 %v11132, %v11122
    %v11843 = vpack.c.b16 %v11133, %v11123
    %v11844 = vpack.c.b16 %v11134, %v11124
    %v11845 = vpack.c.b16 %v11135, %v11125
    %v11846 = vpack.c.b16 %v11136, %v11126
    %v11847 = vpack.c.b16 %v11137, %v11127
    %v11848 = vpack.c.b16 %v11138, %v11128
    %v11849 = vpack.c.b16 %v11139, %v11129
    %v11850 = vpack.c.b16 %v11150, %v11140
    %v11851 = vpack.c.b16 %v11151, %v11141
    %v11852 = vpack.c.b16 %v11152, %v11142
    %v11853 = vpack.c.b16 %v11153, %v11143
    %v11854 = vpack.c.b16 %v11154, %v11144
    %v11855 = vpack.c.b16 %v11155, %v11145
    %v11856 = vpack.c.b16 %v11156, %v11146
    %v11857 = vpack.c.b16 %v11157, %v11147
    %v11858 = vpack.c.b16 %v11158, %v11148
    %v11859 = vpack.c.b16 %v11159, %v11149
    %v11860 = vpack.c.b16 %v11170, %v11160
    %v11861 = vpack.c.b16 %v11171, %v11161
    %v11862 = vpack.c.b16 %v11172, %v11162
    %v11863 = vpack.c.b16 %v11173, %v11163
    %v11864 = vpack.c.b16 %v11174, %v11164
    %v11865 = vpack.c.b16 %v11175, %v11165
    %v11866 = vpack.c.b16 %v11176, %v11166
    %v11867 = vpack.c.b16 %v11177, %v11167
    %v11868 = vpack.c.b16 %v11178, %v11168
    %v11869 = vpack.c.b16 %v11179, %v11169
    %v11870 = vpack.c.b16 %v11190, %v11180
    %v11871 = vpack.c.b16 %v11191, %v11181
    %v11872 = vpack.c.b16 %v11192, %v11182
    %v11873 = vpack.c.b16 %v11193, %v11183
    %v11874 = vpack.c.b16 %v11194, %v11184
    %v11875 = vpack.c.b16 %v11195, %v11185
    %v11876 = vpack.c.b16 %v11196, %v11186
    %v11877 = vpack.c.b16 %v11197, %v11187
    %v11878 = vpack.c.b16 %v11198, %v11188
    %v11879 = vpack.c.b16 %v11199, %v11189
    %v11880 = vpack.c.b16 %v11210, %v11200
    %v11881 = vpack.c.b16 %v11211, %v11201
    %v11882 = vpack.c.b16 %v11212, %v11202
    %v11883 = vpack.c.b16 %v11213, %v11203
    %v11884 = vpack.c.b16 %v11214, %v11204
    %v11885 = vpack.c.b16 %v11215, %v11205
    %v11886 = vpack.c.b16 %v11216, %v11206
    %v11887 = vpack.c.b16 %v11217, %v11207
    %v11888 = vpack.c.b16 %v11218, %v11208
    %v11889 = vpack.c.b16 %v11219, %v11209
    %v11890 = vpack.c.b16 %v11230, %v11220
    %v11891 = vpack.c.b16 %v11231, %v11221
    %v11892 = vpack.c.b16 %v11232, %v11222
    %v11893 = vpack.c.b16 %v11233, %v11223
    %v11894 = vpack.c.b16 %v11234, %v11224
    %v11895 = vpack.c.b16 %v11235, %v11225
    %v11896 = vpack.c.b16 %v11236, %v11226
    %v11897 = vpack.c.b16 %v11237, %v11227
    %v11898 = vpack.c.b16 %v11238, %v11228
    %v11899 = vpack.c.b16 %v11239, %v11229
    %v11900 = vpack.c.b16 %v11250, %v11240
    %v11901 = vpack.c.b16 %v11251, %v11241
    %v11902 = vpack.c.b16 %v11252, %v11242
    %v11903 = vpack.c.b16 %v11253, %v11243
    %v11904 = vpack.c.b16 %v11254, %v11244
    %v11905 = vpack.c.b16 %v11255, %v11245
    %v11906 = vpack.c.b16 %v11256, %v11246
    %v11907 = vpack.c.b16 %v11257, %v11247
    %v11908 = vpack.c.b16 %v11258, %v11248
    %v11909 = vpack.c.b16 %v11259, %v11249
    %v11910 = vpack.c.b16 %v11270, %v11260
    %v11911 = vpack.c.b16 %v11271, %v11261
    %v11912 = vpack.c.b16 %v11272, %v11262
    %v11913 = vpack.c.b16 %v11273, %v11263
    %v11914 = vpack.c.b16 %v11274, %v11264
    %v11915 = vpack.c.b16 %v11275, %v11265
    %v11916 = vpack.c.b16 %v11276, %v11266
    %v11917 = vpack.c.b16 %v11277, %v11267
    %v11918 = vpack.c.b16 %v11278, %v11268
    %v11919 = vpack.c.b16 %v11279, %v11269
    %v11920 = vpack.c.b16 %v11290, %v11280
    %v11921 = vpack.c.b16 %v11291, %v11281
    %v11922 = vpack.c.b16 %v11292, %v11282
    %v11923 = vpack.c.b16 %v11293, %v11283
    %v11924 = vpack.c.b16 %v11294, %v11284
    %v11925 = vpack.c.b16 %v11295, %v11285
    %v11926 = vpack.c.b16 %v11296, %v11286
    %v11927 = vpack.c.b16 %v11297, %v11287
    %v11928 = vpack.c.b16 %v11298, %v11288
    %v11929 = vpack.c.b16 %v11299, %v11289
    %v11930 = vpack.c.b16 %v11310, %v11300
    %v11931 = vpack.c.b16 %v11311, %v11301
    %v11932 = vpack.c.b16 %v11312, %v11302
    %v11933 = vpack.c.b16 %v11313, %v11303
    %v11934 = vpack.c.b16 %v11314, %v11304
    %v11935 = vpack.c.b16 %v11315, %v11305
    %v11936 = vpack.c.b16 %v11316, %v11306
    %v11937 = vpack.c.b16 %v11317, %v11307
    %v11938 = vpack.c.b16 %v11318, %v11308
    %v11939 = vpack.c.b16 %v11319, %v11309
    %v11940 = vpack.c.b16 %v11330, %v11320
    %v11941 = vpack.c.b16 %v11331, %v11321
    %v11942 = vpack.c.b16 %v11332, %v11322
    %v11943 = vpack.c.b16 %v11333, %v11323
    %v11944 = vpack.c.b16 %v11334, %v11324
    %v11945 = vpack.c.b16 %v11335, %v11325
    %v11946 = vpack.c.b16 %v11336, %v11326
    %v11947 = vpack.c.b16 %v11337, %v11327
    %v11948 = vpack.c.b16 %v11338, %v11328
    %v11949 = vpack.c.b16 %v11339, %v11329
    %v11950 = vpack.c.b16 %v11350, %v11340
    %v11951 = vpack.c.b16 %v11351, %v11341
    %v11952 = vpack.c.b16 %v11352, %v11342
    %v11953 = vpack.c.b16 %v11353, %v11343
    %v11954 = vpack.c.b16 %v11354, %v11344
    %v11955 = vpack.c.b16 %v11355, %v11345
    %v11956 = vpack.c.b16 %v11356, %v11346
    %v11957 = vpack.c.b16 %v11357, %v11347
    %v11958 = vpack.c.b16 %v11358, %v11348
    %v11959 = vpack.c.b16 %v11359, %v11349
    %v11960 = vpack.c.b16 %v11370, %v11360
    %v11961 = vpack.c.b16 %v11371, %v11361
    %v11962 = vpack.c.b16 %v11372, %v11362
    %v11963 = vpack.c.b16 %v11373, %v11363
    %v11964 = vpack.c.b16 %v11374, %v11364
    %v11965 = vpack.c.b16 %v11375, %v11365
    %v11966 = vpack.c.b16 %v11376, %v11366
    %v11967 = vpack.c.b16 %v11377, %v11367
    %v11968 = vpack.c.b16 %v11378, %v11368
    %v11969 = vpack.c.b16 %v11379, %v11369
    %v11970 = vpack.c.b16 %v11390, %v11380
    %v11971 = vpack.c.b16 %v11391, %v11381
    %v11972 = vpack.c.b16 %v11392, %v11382
    %v11973 = vpack.c.b16 %v11393, %v11383
    %v11974 = vpack.c.b16 %v11394, %v11384
    %v11975 = vpack.c.b16 %v11395, %v11385
    %v11976 = vpack.c.b16 %v11396, %v11386
    %v11977 = vpack.c.b16 %v11397, %v11387
    %v11978 = vpack.c.b16 %v11398, %v11388
    %v11979 = vpack.c.b16 %v11399, %v11389
    %v11980 = vpack.c.b16 %v11410, %v11400
    %v11981 = vpack.c.b16 %v11411, %v11401
    %v11982 = vpack.c.b16 %v11412, %v11402
    %v11983 = vpack.c.b16 %v11413, %v11403
    %v11984 = vpack.c.b16 %v11414, %v11404
    %v11985 = vpack.c.b16 %v11415, %v11405
    %v11986 = vpack.c.b16 %v11416, %v11406
    %v11987 = vpack.c.b16 %v11417, %v11407
    %v11988 = vpack.c.b16 %v11418, %v11408
    %v11989 = vpack.c.b16 %v11419, %v11409
    %v11990 = vpack.c.b16 %v11430, %v11420
    %v11991 = vpack.c.b16 %v11431, %v11421
    %v11992 = vpack.c.b16 %v11432, %v11422
    %v11993 = vpack.c.b16 %v11433, %v11423
    %v11994 = vpack.c.b16 %v11434, %v11424
    %v11995 = vpack.c.b16 %v11435, %v11425
    %v11996 = vpack.c.b16 %v11436, %v11426
    %v11997 = vpack.c.b16 %v11437, %v11427
    %v11998 = vpack.c.b16 %v11438, %v11428
    %v11999 = vpack.c.b16 %v11439, %v11429
    %v12000 = vpack.c.b16 %v11450, %v11440
    %v12001 = vpack.c.b16 %v11451, %v11441
    %v12002 = vpack.c.b16 %v11452, %v11442
    %v12003 = vpack.c.b16 %v11453, %v11443
    %v12004 = vpack.c.b16 %v11454, %v11444
    %v12005 = vpack.c.b16 %v11455, %v11445
    %v12006 = vpack.c.b16 %v11456, %v11446
    %v12007 = vpack.c.b16 %v11457, %v11447
    %v12008 = vpack.c.b16 %v11458, %v11448
    %v12009 = vpack.c.b16 %v11459, %v11449
    %v12010 = vpack.c.b16 %v11470, %v11460
    %v12011 = vpack.c.b16 %v11471, %v11461
    %v12012 = vpack.c.b16 %v11472, %v11462
    %v12013 = vpack.c.b16 %v11473, %v11463
    %v12014 = vpack.c.b16 %v11474, %v11464
    %v12015 = vpack.c.b16 %v11475, %v11465
    %v12016 = vpack.c.b16 %v11476, %v11466
    %v12017 = vpack.c.b16 %v11477, %v11467
    %v12018 = vpack.c.b16 %v11478, %v11468
    %v12019 = vpack.c.b16 %v11479, %v11469
    %v12020 = vpack.c.b16 %v11490, %v11480
    %v12021 = vpack.c.b16 %v11491, %v11481
    %v12022 = vpack.c.b16 %v11492, %v11482
    %v12023 = vpack.c.b16 %v11493, %v11483
    %v12024 = vpack.c.b16 %v11494, %v11484
    %v12025 = vpack.c.b16 %v11495, %v11485
    %v12026 = vpack.c.b16 %v11496, %v11486
    %v12027 = vpack.c.b16 %v11497, %v11487
    %v12028 = vpack.c.b16 %v11498, %v11488
    %v12029 = vpack.c.b16 %v11499, %v11489
    %v12030 = vpack.c.b16 %v11510, %v11500
    %v12031 = vpack.c.b16 %v11511, %v11501
    %v12032 = vpack.c.b16 %v11512, %v11502
    %v12033 = vpack.c.b16 %v11513, %v11503
    %v12034 = vpack.c.b16 %v11514, %v11504
    %v12035 = vpack.c.b16 %v11515, %v11505
    %v12036 = vpack.c.b16 %v11516, %v11506
    %v12037 = vpack.c.b16 %v11517, %v11507
    %v12038 = vpack.c.b16 %v11518, %v11508
    %v12039 = vpack.c.b16 %v11519, %v11509
    %v12040 = vpack.c.b16 %v11530, %v11520
    %v12041 = vpack.c.b16 %v11531, %v11521
    %v12042 = vpack.c.b16 %v11532, %v11522
    %v12043 = vpack.c.b16 %v11533, %v11523
    %v12044 = vpack.c.b16 %v11534, %v11524
    %v12045 = vpack.c.b16 %v11535, %v11525
    %v12046 = vpack.c.b16 %v11536, %v11526
    %v12047 = vpack.c.b16 %v11537, %v11527
    %v12048 = vpack.c.b16 %v11538, %v11528
    %v12049 = vpack.c.b16 %v11539, %v11529
    %v12050 = vpack.c.b16 %v11550, %v11540
    %v12051 = vpack.c.b16 %v11551, %v11541
    %v12052 = vpack.c.b16 %v11552, %v11542
    %v12053 = vpack.c.b16 %v11553, %v11543
    %v12054 = vpack.c.b16 %v11554, %v11544
    %v12055 = vpack.c.b16 %v11555, %v11545
    %v12056 = vpack.c.b16 %v11556, %v11546
    %v12057 = vpack.c.b16 %v11557, %v11547
    %v12058 = vpack.c.b16 %v11558, %v11548
    %v12059 = vpack.c.b16 %v11559, %v11549
    %v12060 = vpack.c.b16 %v11570, %v11560
    %v12061 = vpack.c.b16 %v11571, %v11561
    %v12062 = vpack.c.b16 %v11572, %v11562
    %v12063 = vpack.c.b16 %v11573, %v11563
    %v12064 = vpack.c.b16 %v11574, %v11564
    %v12065 = vpack.c.b16 %v11575, %v11565
    %v12066 = vpack.c.b16 %v11576, %v11566
    %v12067 = vpack.c.b16 %v11577, %v11567
    %v12068 = vpack.c.b16 %v11578, %v11568
    %v12069 = vpack.c.b16 %v11579, %v11569
    %v12070 = vpack.c.b16 %v11590, %v11580
    %v12071 = vpack.c.b16 %v11591, %v11581
    %v12072 = vpack.c.b16 %v11592, %v11582
    %v12073 = vpack.c.b16 %v11593, %v11583
    %v12074 = vpack.c.b16 %v11594, %v11584
    %v12075 = vpack.c.b16 %v11595, %v11585
    %v12076 = vpack.c.b16 %v11596, %v11586
    %v12077 = vpack.c.b16 %v11597, %v11587
    %v12078 = vpack.c.b16 %v11598, %v11588
    %v12079 = vpack.c.b16 %v11599, %v11589
    %v12080 = vpack.c.b16 %v11610, %v11600
    %v12081 = vpack.c.b16 %v11611, %v11601
    %v12082 = vpack.c.b16 %v11612, %v11602
    %v12083 = vpack.c.b16 %v11613, %v11603
    %v12084 = vpack.c.b16 %v11614, %v11604
    %v12085 = vpack.c.b16 %v11615, %v11605
    %v12086 = vpack.c.b16 %v11616, %v11606
    %v12087 = vpack.c.b16 %v11617, %v11607
    %v12088 = vpack.c.b16 %v11618, %v11608
    %v12089 = vpack.c.b16 %v11619, %v11609
    %v12090 = vpack.c.b16 %v11630, %v11620
    %v12091 = vpack.c.b16 %v11631, %v11621
    %v12092 = vpack.c.b16 %v11632, %v11622
    %v12093 = vpack.c.b16 %v11633, %v11623
    %v12094 = vpack.c.b16 %v11634, %v11624
    %v12095 = vpack.c.b16 %v11635, %v11625
    %v12096 = vpack.c.b16 %v11636, %v11626
    %v12097 = vpack.c.b16 %v11637, %v11627
    %v12098 = vpack.c.b16 %v11638, %v11628
    %v12099 = vpack.c.b16 %v11639, %v11629
    %v12100 = vpack.c.b16 %v11650, %v11640
    %v12101 = vpack.c.b16 %v11651, %v11641
    %v12102 = vpack.c.b16 %v11652, %v11642
    %v12103 = vpack.c.b16 %v11653, %v11643
    %v12104 = vpack.c.b16 %v11654, %v11644
    %v12105 = vpack.c.b16 %v11655, %v11645
    %v12106 = vpack.c.b16 %v11656, %v11646
    %v12107 = vpack.c.b16 %v11657, %v11647
    %v12108 = vpack.c.b16 %v11658, %v11648
    %v12109 = vpack.c.b16 %v11659, %v11649
    %v12110 = vpack.c.b16 %v11670, %v11660
    %v12111 = vpack.c.b16 %v11671, %v11661
    %v12112 = vpack.c.b16 %v11672, %v11662
    %v12113 = vpack.c.b16 %v11673, %v11663
    %v12114 = vpack.c.b16 %v11674, %v11664
    %v12115 = vpack.c.b16 %v11675, %v11665
    %v12116 = vpack.c.b16 %v11676, %v11666
    %v12117 = vpack.c.b16 %v11677, %v11667
    %v12118 = vpack.c.b16 %v11678, %v11668
    %v12119 = vpack.c.b16 %v11679, %v11669
    %v12120 = vpack.c.b16 %v11690, %v11680
    %v12121 = vpack.c.b16 %v11691, %v11681
    %v12122 = vpack.c.b16 %v11692, %v11682
    %v12123 = vpack.c.b16 %v11693, %v11683
    %v12124 = vpack.c.b16 %v11694, %v11684
    %v12125 = vpack.c.b16 %v11695, %v11685
    %v12126 = vpack.c.b16 %v11696, %v11686
    %v12127 = vpack.c.b16 %v11697, %v11687
    %v12128 = vpack.c.b16 %v11698, %v11688
    %v12129 = vpack.c.b16 %v11699, %v11689
    %v12130 = vpack.c.b16 %v11710, %v11700
    %v12131 = vpack.c.b16 %v11711, %v11701
    %v12132 = vpack.c.b16 %v11712, %v11702
    %v12133 = vpack.c.b16 %v11713, %v11703
    %v12134 = vpack.c.b16 %v11714, %v11704
    %v12135 = vpack.c.b16 %v11715, %v11705
    %v12136 = vpack.c.b16 %v11716, %v11706
    %v12137 = vpack.c.b16 %v11717, %v11707
    %v12138 = vpack.c.b16 %v11718, %v11708
    %v12139 = vpack.c.b16 %v11719, %v11709
    %v12140 = vpack.c.b16 %v11730, %v11720
    %v12141 = vpack.c.b16 %v11731, %v11721
    %v12142 = vpack.c.b16 %v11732, %v11722
    %v12143 = vpack.c.b16 %v11733, %v11723
    %v12144 = vpack.c.b16 %v11734, %v11724
    %v12145 = vpack.c.b16 %v11735, %v11725
    %v12146 = vpack.c.b16 %v11736, %v11726
    %v12147 = vpack.c.b16 %v11737, %v11727
    %v12148 = vpack.c.b16 %v11738, %v11728
    %v12149 = vpack.c.b16 %v11739, %v11729
    %v12150 = vpack.c.b16 %v11750, %v11740
    %v12151 = vpack.c.b16 %v11751, %v11741
    %v12152 = vpack.c.b16 %v11752, %v11742
    %v12153 = vpack.c.b16 %v11753, %v11743
    %v12154 = vpack.c.b16 %v11754, %v11744
    %v12155 = vpack.c.b16 %v11755, %v11745
    %v12156 = vpack.c.b16 %v11756, %v11746
    %v12157 = vpack.c.b16 %v11757, %v11747
    %v12158 = vpack.c.b16 %v11758, %v11748
    %v12159 = vpack.c.b16 %v11759, %v11749
    %v12160 = vpack.c.b16 %v11770, %v11760
    %v12161 = vpack.c.b16 %v11771, %v11761
    %v12162 = vpack.c.b16 %v11772, %v11762
    %v12163 = vpack.c.b16 %v11773, %v11763
    %v12164 = vpack.c.b16 %v11774, %v11764
    %v12165 = vpack.c.b16 %v11775, %v11765
    %v12166 = vpack.c.b16 %v11776, %v11766
    %v12167 = vpack.c.b16 %v11777, %v11767
    %v12168 = vpack.c.b16 %v11778, %v11768
    %v12169 = vpack.c.b16 %v11779, %v11769
    %v12170 = vpack.c.b16 %v11790, %v11780
    %v12171 = vpack.c.b16 %v11791, %v11781
    %v12172 = vpack.c.b16 %v11792, %v11782
    %v12173 = vpack.c.b16 %v11793, %v11783
    %v12174 = vpack.c.b16 %v11794, %v11784
    %v12175 = vpack.c.b16 %v11795, %v11785
    %v12176 = vpack.c.b16 %v11796, %v11786
    %v12177 = vpack.c.b16 %v11797, %v11787
    %v12178 = vpack.c.b16 %v11798, %v11788
    %v12179 = vpack.c.b16 %v11799, %v11789
    %v12180 = vpack.c.b16 %v11800, %v11800
    %v12181 = vpack.c.b16 %v11801, %v11801
    %v12182 = vpack.c.b16 %v11802, %v11802
    %v12183 = vpack.c.b16 %v11803, %v11803
    %v12184 = vpack.c.b16 %v11804, %v11804
    %v12185 = vpack.c.b16 %v11805, %v11805
    %v12186 = vpack.c.b16 %v11806, %v11806
    %v12187 = vpack.c.b16 %v11807, %v11807
    %v12188 = vpack.c.b16 %v11808, %v11808
    %v12189 = vpack.c.b16 %v11809, %v11809
    %v12561 = vsel %vm6312, %v10255, 0
    %v12564 = vsel %vm6316, %v12180, 0
    %v12567 = vsel %vm6316, %v12181, 0
    %v12570 = vsel %vm6316, %v12182, 0
    %v12573 = vsel %vm6316, %v12183, 0
    %v12576 = vsel %vm6316, %v12184, 0
    %v12579 = vsel %vm6316, %v12185, 0
    %v12582 = vsel %vm6316, %v12186, 0
    %v12585 = vsel %vm6316, %v12187, 0
    %v12588 = vsel %vm6316, %v12188, 0
    %v12591 = vsel %vm6316, %v12189, 0
    %12593 = vmatprep.subr.bf16.mxu0 %v11811
    %12594 = vmatpush1.bf16.msra.mxu0 %v11810
    %12595 = vmatprep.subr.bf16.mxu0 %v11821
    %12596 = vmatpush1.bf16.msra.mxu0 %v11820
    %12597 = vmatprep.subr.bf16.mxu0 %v11831
    %12598 = vmatpush1.bf16.msra.mxu0 %v11830
    %12599 = vmatprep.subr.bf16.mxu0 %v11841
    %12600 = vmatpush1.bf16.msra.mxu0 %v11840
    %12601 = vmatprep.subr.bf16.mxu0 %v11851
    %12602 = vmatpush1.bf16.msra.mxu0 %v11850
    %12603 = vmatprep.subr.bf16.mxu0 %v11861
    %12604 = vmatpush1.bf16.msra.mxu0 %v11860
    %12605 = vmatprep.subr.bf16.mxu0 %v11871
    %12606 = vmatpush1.bf16.msra.mxu0 %v11870
    %12607 = vmatprep.subr.bf16.mxu0 %v11881
    %12608 = vmatpush1.bf16.msra.mxu0 %v11880
    %12609 = vmatprep.subr.bf16.mxu0 %v11891
    %12610 = vmatpush1.bf16.msra.mxu0 %v11890
    %12611 = vmatprep.subr.bf16.mxu0 %v11901
    %12612 = vmatpush1.bf16.msra.mxu0 %v11900
    %12613 = vmatprep.subr.bf16.mxu0 %v11911
    %12614 = vmatpush1.bf16.msra.mxu0 %v11910
    %12615 = vmatprep.subr.bf16.mxu0 %v11921
    %12616 = vmatpush1.bf16.msra.mxu0 %v11920
    %12617 = vmatprep.subr.bf16.mxu0 %v11931
    %12618 = vmatpush1.bf16.msra.mxu0 %v11930
    %12619 = vmatprep.subr.bf16.mxu0 %v11941
    %12620 = vmatpush1.bf16.msra.mxu0 %v11940
    %12621 = vmatprep.subr.bf16.mxu0 %v11951
    %12622 = vmatpush1.bf16.msra.mxu0 %v11950
    %12623 = vmatprep.subr.bf16.mxu0 %v11961
    %12624 = vmatpush1.bf16.msra.mxu0 %v11960
    %12625 = vmatprep.mubr.bf16.mxu0 %v10252
    %12626 = vmatmul.mubr.bf16.gmra.mrb[0].mxu0 %v10251
    %v12627 = vpop.f32.mrb[0].mxu0
    %v12628 = vadd.f32 %v10638, %v12627
    %v12629 = vpop.f32.mrb[0].mxu0
    %v12630 = vadd.f32 %v10642, %v12629
    %v12631 = vpop.f32.mrb[0].mxu0
    %v12632 = vpop.f32.mrb[0].mxu0
    %12633 = vdwg.mxu0
    %12634 = vmatprep.subr.bf16.mxu0 %v11971
    %12635 = vmatpush1.bf16.msra.mxu0 %v11970
    %12636 = vmatprep.subr.bf16.mxu0 %v11981
    %12637 = vmatpush1.bf16.msra.mxu0 %v11980
    %12638 = vmatprep.subr.bf16.mxu0 %v11991
    %12639 = vmatpush1.bf16.msra.mxu0 %v11990
    %12640 = vmatprep.subr.bf16.mxu0 %v12001
    %12641 = vmatpush1.bf16.msra.mxu0 %v12000
    %12642 = vmatprep.subr.bf16.mxu0 %v12011
    %12643 = vmatpush1.bf16.msra.mxu0 %v12010
    %12644 = vmatprep.subr.bf16.mxu0 %v12021
    %12645 = vmatpush1.bf16.msra.mxu0 %v12020
    %12646 = vmatprep.subr.bf16.mxu0 %v12031
    %12647 = vmatpush1.bf16.msra.mxu0 %v12030
    %12648 = vmatprep.subr.bf16.mxu0 %v12041
    %12649 = vmatpush1.bf16.msra.mxu0 %v12040
    %12650 = vmatprep.subr.bf16.mxu0 %v12051
    %12651 = vmatpush1.bf16.msra.mxu0 %v12050
    %12652 = vmatprep.subr.bf16.mxu0 %v12061
    %12653 = vmatpush1.bf16.msra.mxu0 %v12060
    %12654 = vmatprep.subr.bf16.mxu0 %v12071
    %12655 = vmatpush1.bf16.msra.mxu0 %v12070
    %12656 = vmatprep.subr.bf16.mxu0 %v12081
    %12657 = vmatpush1.bf16.msra.mxu0 %v12080
    %12658 = vmatprep.subr.bf16.mxu0 %v12091
    %12659 = vmatpush1.bf16.msra.mxu0 %v12090
    %12660 = vmatprep.subr.bf16.mxu0 %v12101
    %12661 = vmatpush1.bf16.msra.mxu0 %v12100
    %12662 = vmatprep.subr.bf16.mxu0 %v12111
    %12663 = vmatpush1.bf16.msra.mxu0 %v12110
    %12664 = vmatprep.subr.bf16.mxu0 %v12121
    %12665 = vmatpush1.bf16.msra.mxu0 %v12120
    %12666 = vmatprep.mubr.bf16.mxu0 %v10254
    %12667 = vmatmul.mubr.bf16.gmra.mrb[0].mxu0 %v10253
    %v12668 = vpop.f32.mrb[0].mxu0
    %v12669 = vadd.f32 %v12628, %v12668
    %v12670 = vpop.f32.mrb[0].mxu0
    %v12671 = vadd.f32 %v12630, %v12670
    %v12672 = vpop.f32.mrb[0].mxu0
    %v12673 = vpop.f32.mrb[0].mxu0
    %12674 = vdwg.mxu0
    %12675 = vmatprep.subr.bf16.mxu0 %v12131
    %12676 = vmatpush1.bf16.msra.mxu0 %v12130
    %12677 = vmatprep.subr.bf16.mxu0 %v12141
    %12678 = vmatpush1.bf16.msra.mxu0 %v12140
    %12679 = vmatprep.subr.bf16.mxu0 %v12151
    %12680 = vmatpush1.bf16.msra.mxu0 %v12150
    %12681 = vmatprep.subr.bf16.mxu0 %v12161
    %12682 = vmatpush1.bf16.msra.mxu0 %v12160
    %12683 = vmatprep.subr.bf16.mxu0 %v12171
    %12684 = vmatpush1.bf16.msra.mxu0 %v12170
    %12685 = vmatprep.subr.bf16.mxu0 %v12567
    %12686 = vmatpush1.bf16.msra.mxu0 %v12564
    %12687 = vmatprep.subr.bf16.mxu0 0
    %12688 = vmatpush1.bf16.msra.mxu0 0
    %12689 = vmatprep.subr.bf16.mxu0 0
    %12690 = vmatpush1.bf16.msra.mxu0 0
    %12691 = vmatprep.subr.bf16.mxu0 0
    %12692 = vmatpush1.bf16.msra.mxu0 0
    %12693 = vmatprep.subr.bf16.mxu0 0
    %12694 = vmatpush1.bf16.msra.mxu0 0
    %12695 = vmatprep.subr.bf16.mxu0 0
    %12696 = vmatpush1.bf16.msra.mxu0 0
    %12697 = vmatprep.subr.bf16.mxu0 0
    %12698 = vmatpush1.bf16.msra.mxu0 0
    %12699 = vmatprep.subr.bf16.mxu0 0
    %12700 = vmatpush1.bf16.msra.mxu0 0
    %12701 = vmatprep.subr.bf16.mxu0 0
    %12702 = vmatpush1.bf16.msra.mxu0 0
    %12703 = vmatprep.subr.bf16.mxu0 0
    %12704 = vmatpush1.bf16.msra.mxu0 0
    %12705 = vmatprep.subr.bf16.mxu0 0
    %12706 = vmatpush1.bf16.msra.mxu0 0
    %12707 = vmatprep.mubr.bf16.mxu0 0
    %12708 = vmatmul.mubr.bf16.gmra.mrb[0].mxu0 %v12561
    %v12709 = vpop.f32.mrb[0].mxu0
    %v12710 = vadd.f32 %v12669, %v12709
    %v12711 = vpop.f32.mrb[0].mxu0
    %v12712 = vadd.f32 %v12671, %v12711
    %v12713 = vpop.f32.mrb[0].mxu0
    %v12714 = vpop.f32.mrb[0].mxu0
    %12715 = vdwg.mxu0
    %12716 = vmatprep.subr.bf16.mxu0 %v11813
    %12717 = vmatpush1.bf16.msra.mxu0 %v11812
    %12718 = vmatprep.subr.bf16.mxu0 %v11823
    %12719 = vmatpush1.bf16.msra.mxu0 %v11822
    %12720 = vmatprep.subr.bf16.mxu0 %v11833
    %12721 = vmatpush1.bf16.msra.mxu0 %v11832
    %12722 = vmatprep.subr.bf16.mxu0 %v11843
    %12723 = vmatpush1.bf16.msra.mxu0 %v11842
    %12724 = vmatprep.subr.bf16.mxu0 %v11853
    %12725 = vmatpush1.bf16.msra.mxu0 %v11852
    %12726 = vmatprep.subr.bf16.mxu0 %v11863
    %12727 = vmatpush1.bf16.msra.mxu0 %v11862
    %12728 = vmatprep.subr.bf16.mxu0 %v11873
    %12729 = vmatpush1.bf16.msra.mxu0 %v11872
    %12730 = vmatprep.subr.bf16.mxu0 %v11883
    %12731 = vmatpush1.bf16.msra.mxu0 %v11882
    %12732 = vmatprep.subr.bf16.mxu0 %v11893
    %12733 = vmatpush1.bf16.msra.mxu0 %v11892
    %12734 = vmatprep.subr.bf16.mxu0 %v11903
    %12735 = vmatpush1.bf16.msra.mxu0 %v11902
    %12736 = vmatprep.subr.bf16.mxu0 %v11913
    %12737 = vmatpush1.bf16.msra.mxu0 %v11912
    %12738 = vmatprep.subr.bf16.mxu0 %v11923
    %12739 = vmatpush1.bf16.msra.mxu0 %v11922
    %12740 = vmatprep.subr.bf16.mxu0 %v11933
    %12741 = vmatpush1.bf16.msra.mxu0 %v11932
    %12742 = vmatprep.subr.bf16.mxu0 %v11943
    %12743 = vmatpush1.bf16.msra.mxu0 %v11942
    %12744 = vmatprep.subr.bf16.mxu0 %v11953
    %12745 = vmatpush1.bf16.msra.mxu0 %v11952
    %12746 = vmatprep.subr.bf16.mxu0 %v11963
    %12747 = vmatpush1.bf16.msra.mxu0 %v11962
    %12748 = vmatprep.mubr.bf16.mxu0 %v10252
    %12749 = vmatmul.mubr.bf16.gmra.mrb[0].mxu0 %v10251
    %v12750 = vpop.f32.mrb[0].mxu0
    %v12751 = vadd.f32 %v10646, %v12750
    %v12752 = vpop.f32.mrb[0].mxu0
    %v12753 = vadd.f32 %v10650, %v12752
    %v12754 = vpop.f32.mrb[0].mxu0
    %v12755 = vpop.f32.mrb[0].mxu0
    %12756 = vdwg.mxu0
    %12757 = vmatprep.subr.bf16.mxu0 %v11973
    %12758 = vmatpush1.bf16.msra.mxu0 %v11972
    %12759 = vmatprep.subr.bf16.mxu0 %v11983
    %12760 = vmatpush1.bf16.msra.mxu0 %v11982
    %12761 = vmatprep.subr.bf16.mxu0 %v11993
    %12762 = vmatpush1.bf16.msra.mxu0 %v11992
    %12763 = vmatprep.subr.bf16.mxu0 %v12003
    %12764 = vmatpush1.bf16.msra.mxu0 %v12002
    %12765 = vmatprep.subr.bf16.mxu0 %v12013
    %12766 = vmatpush1.bf16.msra.mxu0 %v12012
    %12767 = vmatprep.subr.bf16.mxu0 %v12023
    %12768 = vmatpush1.bf16.msra.mxu0 %v12022
    %12769 = vmatprep.subr.bf16.mxu0 %v12033
    %12770 = vmatpush1.bf16.msra.mxu0 %v12032
    %12771 = vmatprep.subr.bf16.mxu0 %v12043
    %12772 = vmatpush1.bf16.msra.mxu0 %v12042
    %12773 = vmatprep.subr.bf16.mxu0 %v12053
    %12774 = vmatpush1.bf16.msra.mxu0 %v12052
    %12775 = vmatprep.subr.bf16.mxu0 %v12063
    %12776 = vmatpush1.bf16.msra.mxu0 %v12062
    %12777 = vmatprep.subr.bf16.mxu0 %v12073
    %12778 = vmatpush1.bf16.msra.mxu0 %v12072
    %12779 = vmatprep.subr.bf16.mxu0 %v12083
    %12780 = vmatpush1.bf16.msra.mxu0 %v12082
    %12781 = vmatprep.subr.bf16.mxu0 %v12093
    %12782 = vmatpush1.bf16.msra.mxu0 %v12092
    %12783 = vmatprep.subr.bf16.mxu0 %v12103
    %12784 = vmatpush1.bf16.msra.mxu0 %v12102
    %12785 = vmatprep.subr.bf16.mxu0 %v12113
    %12786 = vmatpush1.bf16.msra.mxu0 %v12112
    %12787 = vmatprep.subr.bf16.mxu0 %v12123
    %12788 = vmatpush1.bf16.msra.mxu0 %v12122
    %12789 = vmatprep.mubr.bf16.mxu0 %v10254
    %12790 = vmatmul.mubr.bf16.gmra.mrb[0].mxu0 %v10253
    %v12791 = vpop.f32.mrb[0].mxu0
    %v12792 = vadd.f32 %v12751, %v12791
    %v12793 = vpop.f32.mrb[0].mxu0
    %v12794 = vadd.f32 %v12753, %v12793
    %v12795 = vpop.f32.mrb[0].mxu0
    %v12796 = vpop.f32.mrb[0].mxu0
    %12797 = vdwg.mxu0
    %12798 = vmatprep.subr.bf16.mxu0 %v12133
    %12799 = vmatpush1.bf16.msra.mxu0 %v12132
    %12800 = vmatprep.subr.bf16.mxu0 %v12143
    %12801 = vmatpush1.bf16.msra.mxu0 %v12142
    %12802 = vmatprep.subr.bf16.mxu0 %v12153
    %12803 = vmatpush1.bf16.msra.mxu0 %v12152
    %12804 = vmatprep.subr.bf16.mxu0 %v12163
    %12805 = vmatpush1.bf16.msra.mxu0 %v12162
    %12806 = vmatprep.subr.bf16.mxu0 %v12173
    %12807 = vmatpush1.bf16.msra.mxu0 %v12172
    %12808 = vmatprep.subr.bf16.mxu0 %v12573
    %12809 = vmatpush1.bf16.msra.mxu0 %v12570
    %12810 = vmatprep.subr.bf16.mxu0 0
    %12811 = vmatpush1.bf16.msra.mxu0 0
    %12812 = vmatprep.subr.bf16.mxu0 0
    %12813 = vmatpush1.bf16.msra.mxu0 0
    %12814 = vmatprep.subr.bf16.mxu0 0
    %12815 = vmatpush1.bf16.msra.mxu0 0
    %12816 = vmatprep.subr.bf16.mxu0 0
    %12817 = vmatpush1.bf16.msra.mxu0 0
    %12818 = vmatprep.subr.bf16.mxu0 0
    %12819 = vmatpush1.bf16.msra.mxu0 0
    %12820 = vmatprep.subr.bf16.mxu0 0
    %12821 = vmatpush1.bf16.msra.mxu0 0
    %12822 = vmatprep.subr.bf16.mxu0 0
    %12823 = vmatpush1.bf16.msra.mxu0 0
    %12824 = vmatprep.subr.bf16.mxu0 0
    %12825 = vmatpush1.bf16.msra.mxu0 0
    %12826 = vmatprep.subr.bf16.mxu0 0
    %12827 = vmatpush1.bf16.msra.mxu0 0
    %12828 = vmatprep.subr.bf16.mxu0 0
    %12829 = vmatpush1.bf16.msra.mxu0 0
    %12830 = vmatprep.mubr.bf16.mxu0 0
    %12831 = vmatmul.mubr.bf16.gmra.mrb[0].mxu0 %v12561
    %v12832 = vpop.f32.mrb[0].mxu0
    %v12833 = vadd.f32 %v12792, %v12832
    %v12834 = vpop.f32.mrb[0].mxu0
    %v12835 = vadd.f32 %v12794, %v12834
    %v12836 = vpop.f32.mrb[0].mxu0
    %v12837 = vpop.f32.mrb[0].mxu0
    %12838 = vdwg.mxu0
    %12839 = vmatprep.subr.bf16.mxu0 %v11815
    %12840 = vmatpush1.bf16.msra.mxu0 %v11814
    %12841 = vmatprep.subr.bf16.mxu0 %v11825
    %12842 = vmatpush1.bf16.msra.mxu0 %v11824
    %12843 = vmatprep.subr.bf16.mxu0 %v11835
    %12844 = vmatpush1.bf16.msra.mxu0 %v11834
    %12845 = vmatprep.subr.bf16.mxu0 %v11845
    %12846 = vmatpush1.bf16.msra.mxu0 %v11844
    %12847 = vmatprep.subr.bf16.mxu0 %v11855
    %12848 = vmatpush1.bf16.msra.mxu0 %v11854
    %12849 = vmatprep.subr.bf16.mxu0 %v11865
    %12850 = vmatpush1.bf16.msra.mxu0 %v11864
    %12851 = vmatprep.subr.bf16.mxu0 %v11875
    %12852 = vmatpush1.bf16.msra.mxu0 %v11874
    %12853 = vmatprep.subr.bf16.mxu0 %v11885
    %12854 = vmatpush1.bf16.msra.mxu0 %v11884
    %12855 = vmatprep.subr.bf16.mxu0 %v11895
    %12856 = vmatpush1.bf16.msra.mxu0 %v11894
    %12857 = vmatprep.subr.bf16.mxu0 %v11905
    %12858 = vmatpush1.bf16.msra.mxu0 %v11904
    %12859 = vmatprep.subr.bf16.mxu0 %v11915
    %12860 = vmatpush1.bf16.msra.mxu0 %v11914
    %12861 = vmatprep.subr.bf16.mxu0 %v11925
    %12862 = vmatpush1.bf16.msra.mxu0 %v11924
    %12863 = vmatprep.subr.bf16.mxu0 %v11935
    %12864 = vmatpush1.bf16.msra.mxu0 %v11934
    %12865 = vmatprep.subr.bf16.mxu0 %v11945
    %12866 = vmatpush1.bf16.msra.mxu0 %v11944
    %12867 = vmatprep.subr.bf16.mxu0 %v11955
    %12868 = vmatpush1.bf16.msra.mxu0 %v11954
    %12869 = vmatprep.subr.bf16.mxu0 %v11965
    %12870 = vmatpush1.bf16.msra.mxu0 %v11964
    %12871 = vmatprep.mubr.bf16.mxu0 %v10252
    %12872 = vmatmul.mubr.bf16.gmra.mrb[0].mxu0 %v10251
    %v12873 = vpop.f32.mrb[0].mxu0
    %v12874 = vadd.f32 %v10654, %v12873
    %v12875 = vpop.f32.mrb[0].mxu0
    %v12876 = vadd.f32 %v10658, %v12875
    %v12877 = vpop.f32.mrb[0].mxu0
    %v12878 = vpop.f32.mrb[0].mxu0
    %12879 = vdwg.mxu0
    %12880 = vmatprep.subr.bf16.mxu0 %v11975
    %12881 = vmatpush1.bf16.msra.mxu0 %v11974
    %12882 = vmatprep.subr.bf16.mxu0 %v11985
    %12883 = vmatpush1.bf16.msra.mxu0 %v11984
    %12884 = vmatprep.subr.bf16.mxu0 %v11995
    %12885 = vmatpush1.bf16.msra.mxu0 %v11994
    %12886 = vmatprep.subr.bf16.mxu0 %v12005
    %12887 = vmatpush1.bf16.msra.mxu0 %v12004
    %12888 = vmatprep.subr.bf16.mxu0 %v12015
    %12889 = vmatpush1.bf16.msra.mxu0 %v12014
    %12890 = vmatprep.subr.bf16.mxu0 %v12025
    %12891 = vmatpush1.bf16.msra.mxu0 %v12024
    %12892 = vmatprep.subr.bf16.mxu0 %v12035
    %12893 = vmatpush1.bf16.msra.mxu0 %v12034
    %12894 = vmatprep.subr.bf16.mxu0 %v12045
    %12895 = vmatpush1.bf16.msra.mxu0 %v12044
    %12896 = vmatprep.subr.bf16.mxu0 %v12055
    %12897 = vmatpush1.bf16.msra.mxu0 %v12054
    %12898 = vmatprep.subr.bf16.mxu0 %v12065
    %12899 = vmatpush1.bf16.msra.mxu0 %v12064
    %12900 = vmatprep.subr.bf16.mxu0 %v12075
    %12901 = vmatpush1.bf16.msra.mxu0 %v12074
    %12902 = vmatprep.subr.bf16.mxu0 %v12085
    %12903 = vmatpush1.bf16.msra.mxu0 %v12084
    %12904 = vmatprep.subr.bf16.mxu0 %v12095
    %12905 = vmatpush1.bf16.msra.mxu0 %v12094
    %12906 = vmatprep.subr.bf16.mxu0 %v12105
    %12907 = vmatpush1.bf16.msra.mxu0 %v12104
    %12908 = vmatprep.subr.bf16.mxu0 %v12115
    %12909 = vmatpush1.bf16.msra.mxu0 %v12114
    %12910 = vmatprep.subr.bf16.mxu0 %v12125
    %12911 = vmatpush1.bf16.msra.mxu0 %v12124
    %12912 = vmatprep.mubr.bf16.mxu0 %v10254
    %12913 = vmatmul.mubr.bf16.gmra.mrb[0].mxu0 %v10253
    %v12914 = vpop.f32.mrb[0].mxu0
    %v12915 = vadd.f32 %v12874, %v12914
    %v12916 = vpop.f32.mrb[0].mxu0
    %v12917 = vadd.f32 %v12876, %v12916
    %v12918 = vpop.f32.mrb[0].mxu0
    %v12919 = vpop.f32.mrb[0].mxu0
    %12920 = vdwg.mxu0
    %12921 = vmatprep.subr.bf16.mxu0 %v12135
    %12922 = vmatpush1.bf16.msra.mxu0 %v12134
    %12923 = vmatprep.subr.bf16.mxu0 %v12145
    %12924 = vmatpush1.bf16.msra.mxu0 %v12144
    %12925 = vmatprep.subr.bf16.mxu0 %v12155
    %12926 = vmatpush1.bf16.msra.mxu0 %v12154
    %12927 = vmatprep.subr.bf16.mxu0 %v12165
    %12928 = vmatpush1.bf16.msra.mxu0 %v12164
    %12929 = vmatprep.subr.bf16.mxu0 %v12175
    %12930 = vmatpush1.bf16.msra.mxu0 %v12174
    %12931 = vmatprep.subr.bf16.mxu0 %v12579
    %12932 = vmatpush1.bf16.msra.mxu0 %v12576
    %12933 = vmatprep.subr.bf16.mxu0 0
    %12934 = vmatpush1.bf16.msra.mxu0 0
    %12935 = vmatprep.subr.bf16.mxu0 0
    %12936 = vmatpush1.bf16.msra.mxu0 0
    %12937 = vmatprep.subr.bf16.mxu0 0
    %12938 = vmatpush1.bf16.msra.mxu0 0
    %12939 = vmatprep.subr.bf16.mxu0 0
    %12940 = vmatpush1.bf16.msra.mxu0 0
    %12941 = vmatprep.subr.bf16.mxu0 0
    %12942 = vmatpush1.bf16.msra.mxu0 0
    %12943 = vmatprep.subr.bf16.mxu0 0
    %12944 = vmatpush1.bf16.msra.mxu0 0
    %12945 = vmatprep.subr.bf16.mxu0 0
    %12946 = vmatpush1.bf16.msra.mxu0 0
    %12947 = vmatprep.subr.bf16.mxu0 0
    %12948 = vmatpush1.bf16.msra.mxu0 0
    %12949 = vmatprep.subr.bf16.mxu0 0
    %12950 = vmatpush1.bf16.msra.mxu0 0
    %12951 = vmatprep.subr.bf16.mxu0 0
    %12952 = vmatpush1.bf16.msra.mxu0 0
    %12953 = vmatprep.mubr.bf16.mxu0 0
    %12954 = vmatmul.mubr.bf16.gmra.mrb[0].mxu0 %v12561
    %v12955 = vpop.f32.mrb[0].mxu0
    %v12956 = vadd.f32 %v12915, %v12955
    %v12957 = vpop.f32.mrb[0].mxu0
    %v12958 = vadd.f32 %v12917, %v12957
    %v12959 = vpop.f32.mrb[0].mxu0
    %v12960 = vpop.f32.mrb[0].mxu0
    %12961 = vdwg.mxu0
    %12962 = vmatprep.subr.bf16.mxu0 %v11817
    %12963 = vmatpush1.bf16.msra.mxu0 %v11816
    %12964 = vmatprep.subr.bf16.mxu0 %v11827
    %12965 = vmatpush1.bf16.msra.mxu0 %v11826
    %12966 = vmatprep.subr.bf16.mxu0 %v11837
    %12967 = vmatpush1.bf16.msra.mxu0 %v11836
    %12968 = vmatprep.subr.bf16.mxu0 %v11847
    %12969 = vmatpush1.bf16.msra.mxu0 %v11846
    %12970 = vmatprep.subr.bf16.mxu0 %v11857
    %12971 = vmatpush1.bf16.msra.mxu0 %v11856
    %12972 = vmatprep.subr.bf16.mxu0 %v11867
    %12973 = vmatpush1.bf16.msra.mxu0 %v11866
    %12974 = vmatprep.subr.bf16.mxu0 %v11877
    %12975 = vmatpush1.bf16.msra.mxu0 %v11876
    %12976 = vmatprep.subr.bf16.mxu0 %v11887
    %12977 = vmatpush1.bf16.msra.mxu0 %v11886
    %12978 = vmatprep.subr.bf16.mxu0 %v11897
    %12979 = vmatpush1.bf16.msra.mxu0 %v11896
    %12980 = vmatprep.subr.bf16.mxu0 %v11907
    %12981 = vmatpush1.bf16.msra.mxu0 %v11906
    %12982 = vmatprep.subr.bf16.mxu0 %v11917
    %12983 = vmatpush1.bf16.msra.mxu0 %v11916
    %12984 = vmatprep.subr.bf16.mxu0 %v11927
    %12985 = vmatpush1.bf16.msra.mxu0 %v11926
    %12986 = vmatprep.subr.bf16.mxu0 %v11937
    %12987 = vmatpush1.bf16.msra.mxu0 %v11936
    %12988 = vmatprep.subr.bf16.mxu0 %v11947
    %12989 = vmatpush1.bf16.msra.mxu0 %v11946
    %12990 = vmatprep.subr.bf16.mxu0 %v11957
    %12991 = vmatpush1.bf16.msra.mxu0 %v11956
    %12992 = vmatprep.subr.bf16.mxu0 %v11967
    %12993 = vmatpush1.bf16.msra.mxu0 %v11966
    %12994 = vmatprep.mubr.bf16.mxu0 %v10252
    %12995 = vmatmul.mubr.bf16.gmra.mrb[0].mxu0 %v10251
    %v12996 = vpop.f32.mrb[0].mxu0
    %v12997 = vadd.f32 %v10662, %v12996
    %v12998 = vpop.f32.mrb[0].mxu0
    %v12999 = vadd.f32 %v10666, %v12998
    %v13000 = vpop.f32.mrb[0].mxu0
    %v13001 = vpop.f32.mrb[0].mxu0
    %13002 = vdwg.mxu0
    %13003 = vmatprep.subr.bf16.mxu0 %v11977
    %13004 = vmatpush1.bf16.msra.mxu0 %v11976
    %13005 = vmatprep.subr.bf16.mxu0 %v11987
    %13006 = vmatpush1.bf16.msra.mxu0 %v11986
    %13007 = vmatprep.subr.bf16.mxu0 %v11997
    %13008 = vmatpush1.bf16.msra.mxu0 %v11996
    %13009 = vmatprep.subr.bf16.mxu0 %v12007
    %13010 = vmatpush1.bf16.msra.mxu0 %v12006
    %13011 = vmatprep.subr.bf16.mxu0 %v12017
    %13012 = vmatpush1.bf16.msra.mxu0 %v12016
    %13013 = vmatprep.subr.bf16.mxu0 %v12027
    %13014 = vmatpush1.bf16.msra.mxu0 %v12026
    %13015 = vmatprep.subr.bf16.mxu0 %v12037
    %13016 = vmatpush1.bf16.msra.mxu0 %v12036
    %13017 = vmatprep.subr.bf16.mxu0 %v12047
    %13018 = vmatpush1.bf16.msra.mxu0 %v12046
    %13019 = vmatprep.subr.bf16.mxu0 %v12057
    %13020 = vmatpush1.bf16.msra.mxu0 %v12056
    %13021 = vmatprep.subr.bf16.mxu0 %v12067
    %13022 = vmatpush1.bf16.msra.mxu0 %v12066
    %13023 = vmatprep.subr.bf16.mxu0 %v12077
    %13024 = vmatpush1.bf16.msra.mxu0 %v12076
    %13025 = vmatprep.subr.bf16.mxu0 %v12087
    %13026 = vmatpush1.bf16.msra.mxu0 %v12086
    %13027 = vmatprep.subr.bf16.mxu0 %v12097
    %13028 = vmatpush1.bf16.msra.mxu0 %v12096
    %13029 = vmatprep.subr.bf16.mxu0 %v12107
    %13030 = vmatpush1.bf16.msra.mxu0 %v12106
    %13031 = vmatprep.subr.bf16.mxu0 %v12117
    %13032 = vmatpush1.bf16.msra.mxu0 %v12116
    %13033 = vmatprep.subr.bf16.mxu0 %v12127
    %13034 = vmatpush1.bf16.msra.mxu0 %v12126
    %13035 = vmatprep.mubr.bf16.mxu0 %v10254
    %13036 = vmatmul.mubr.bf16.gmra.mrb[0].mxu0 %v10253
    %v13037 = vpop.f32.mrb[0].mxu0
    %v13038 = vadd.f32 %v12997, %v13037
    %v13039 = vpop.f32.mrb[0].mxu0
    %v13040 = vadd.f32 %v12999, %v13039
    %v13041 = vpop.f32.mrb[0].mxu0
    %v13042 = vpop.f32.mrb[0].mxu0
    %13043 = vdwg.mxu0
    %13044 = vmatprep.subr.bf16.mxu0 %v12137
    %13045 = vmatpush1.bf16.msra.mxu0 %v12136
    %13046 = vmatprep.subr.bf16.mxu0 %v12147
    %13047 = vmatpush1.bf16.msra.mxu0 %v12146
    %13048 = vmatprep.subr.bf16.mxu0 %v12157
    %13049 = vmatpush1.bf16.msra.mxu0 %v12156
    %13050 = vmatprep.subr.bf16.mxu0 %v12167
    %13051 = vmatpush1.bf16.msra.mxu0 %v12166
    %13052 = vmatprep.subr.bf16.mxu0 %v12177
    %13053 = vmatpush1.bf16.msra.mxu0 %v12176
    %13054 = vmatprep.subr.bf16.mxu0 %v12585
    %13055 = vmatpush1.bf16.msra.mxu0 %v12582
    %13056 = vmatprep.subr.bf16.mxu0 0
    %13057 = vmatpush1.bf16.msra.mxu0 0
    %13058 = vmatprep.subr.bf16.mxu0 0
    %13059 = vmatpush1.bf16.msra.mxu0 0
    %13060 = vmatprep.subr.bf16.mxu0 0
    %13061 = vmatpush1.bf16.msra.mxu0 0
    %13062 = vmatprep.subr.bf16.mxu0 0
    %13063 = vmatpush1.bf16.msra.mxu0 0
    %13064 = vmatprep.subr.bf16.mxu0 0
    %13065 = vmatpush1.bf16.msra.mxu0 0
    %13066 = vmatprep.subr.bf16.mxu0 0
    %13067 = vmatpush1.bf16.msra.mxu0 0
    %13068 = vmatprep.subr.bf16.mxu0 0
    %13069 = vmatpush1.bf16.msra.mxu0 0
    %13070 = vmatprep.subr.bf16.mxu0 0
    %13071 = vmatpush1.bf16.msra.mxu0 0
    %13072 = vmatprep.subr.bf16.mxu0 0
    %13073 = vmatpush1.bf16.msra.mxu0 0
    %13074 = vmatprep.subr.bf16.mxu0 0
    %13075 = vmatpush1.bf16.msra.mxu0 0
    %13076 = vmatprep.mubr.bf16.mxu0 0
    %13077 = vmatmul.mubr.bf16.gmra.mrb[0].mxu0 %v12561
    %v13078 = vpop.f32.mrb[0].mxu0
    %v13079 = vadd.f32 %v13038, %v13078
    %v13080 = vpop.f32.mrb[0].mxu0
    %v13081 = vadd.f32 %v13040, %v13080
    %v13082 = vpop.f32.mrb[0].mxu0
    %v13083 = vpop.f32.mrb[0].mxu0
    %13084 = vdwg.mxu0
    %13085 = vmatprep.subr.bf16.mxu0 %v11819
    %13086 = vmatpush1.bf16.msra.mxu0 %v11818
    %13087 = vmatprep.subr.bf16.mxu0 %v11829
    %13088 = vmatpush1.bf16.msra.mxu0 %v11828
    %13089 = vmatprep.subr.bf16.mxu0 %v11839
    %13090 = vmatpush1.bf16.msra.mxu0 %v11838
    %13091 = vmatprep.subr.bf16.mxu0 %v11849
    %13092 = vmatpush1.bf16.msra.mxu0 %v11848
    %13093 = vmatprep.subr.bf16.mxu0 %v11859
    %13094 = vmatpush1.bf16.msra.mxu0 %v11858
    %13095 = vmatprep.subr.bf16.mxu0 %v11869
    %13096 = vmatpush1.bf16.msra.mxu0 %v11868
    %13097 = vmatprep.subr.bf16.mxu0 %v11879
    %13098 = vmatpush1.bf16.msra.mxu0 %v11878
    %13099 = vmatprep.subr.bf16.mxu0 %v11889
    %13100 = vmatpush1.bf16.msra.mxu0 %v11888
    %13101 = vmatprep.subr.bf16.mxu0 %v11899
    %13102 = vmatpush1.bf16.msra.mxu0 %v11898
    %13103 = vmatprep.subr.bf16.mxu0 %v11909
    %13104 = vmatpush1.bf16.msra.mxu0 %v11908
    %13105 = vmatprep.subr.bf16.mxu0 %v11919
    %13106 = vmatpush1.bf16.msra.mxu0 %v11918
    %13107 = vmatprep.subr.bf16.mxu0 %v11929
    %13108 = vmatpush1.bf16.msra.mxu0 %v11928
    %13109 = vmatprep.subr.bf16.mxu0 %v11939
    %13110 = vmatpush1.bf16.msra.mxu0 %v11938
    %13111 = vmatprep.subr.bf16.mxu0 %v11949
    %13112 = vmatpush1.bf16.msra.mxu0 %v11948
    %13113 = vmatprep.subr.bf16.mxu0 %v11959
    %13114 = vmatpush1.bf16.msra.mxu0 %v11958
    %13115 = vmatprep.subr.bf16.mxu0 %v11969
    %13116 = vmatpush1.bf16.msra.mxu0 %v11968
    %13117 = vmatprep.mubr.bf16.mxu0 %v10252
    %13118 = vmatmul.mubr.bf16.gmra.mrb[0].mxu0 %v10251
    %v13119 = vpop.f32.mrb[0].mxu0
    %v13120 = vadd.f32 %v10670, %v13119
    %v13121 = vpop.f32.mrb[0].mxu0
    %v13122 = vadd.f32 %v10674, %v13121
    %v13123 = vpop.f32.mrb[0].mxu0
    %v13124 = vpop.f32.mrb[0].mxu0
    %13125 = vdwg.mxu0
    %13126 = vmatprep.subr.bf16.mxu0 %v11979
    %13127 = vmatpush1.bf16.msra.mxu0 %v11978
    %13128 = vmatprep.subr.bf16.mxu0 %v11989
    %13129 = vmatpush1.bf16.msra.mxu0 %v11988
    %13130 = vmatprep.subr.bf16.mxu0 %v11999
    %13131 = vmatpush1.bf16.msra.mxu0 %v11998
    %13132 = vmatprep.subr.bf16.mxu0 %v12009
    %13133 = vmatpush1.bf16.msra.mxu0 %v12008
    %13134 = vmatprep.subr.bf16.mxu0 %v12019
    %13135 = vmatpush1.bf16.msra.mxu0 %v12018
    %13136 = vmatprep.subr.bf16.mxu0 %v12029
    %13137 = vmatpush1.bf16.msra.mxu0 %v12028
    %13138 = vmatprep.subr.bf16.mxu0 %v12039
    %13139 = vmatpush1.bf16.msra.mxu0 %v12038
    %13140 = vmatprep.subr.bf16.mxu0 %v12049
    %13141 = vmatpush1.bf16.msra.mxu0 %v12048
    %13142 = vmatprep.subr.bf16.mxu0 %v12059
    %13143 = vmatpush1.bf16.msra.mxu0 %v12058
    %13144 = vmatprep.subr.bf16.mxu0 %v12069
    %13145 = vmatpush1.bf16.msra.mxu0 %v12068
    %13146 = vmatprep.subr.bf16.mxu0 %v12079
    %13147 = vmatpush1.bf16.msra.mxu0 %v12078
    %13148 = vmatprep.subr.bf16.mxu0 %v12089
    %13149 = vmatpush1.bf16.msra.mxu0 %v12088
    %13150 = vmatprep.subr.bf16.mxu0 %v12099
    %13151 = vmatpush1.bf16.msra.mxu0 %v12098
    %13152 = vmatprep.subr.bf16.mxu0 %v12109
    %13153 = vmatpush1.bf16.msra.mxu0 %v12108
    %13154 = vmatprep.subr.bf16.mxu0 %v12119
    %13155 = vmatpush1.bf16.msra.mxu0 %v12118
    %13156 = vmatprep.subr.bf16.mxu0 %v12129
    %13157 = vmatpush1.bf16.msra.mxu0 %v12128
    %13158 = vmatprep.mubr.bf16.mxu0 %v10254
    %13159 = vmatmul.mubr.bf16.gmra.mrb[0].mxu0 %v10253
    %v13160 = vpop.f32.mrb[0].mxu0
    %v13161 = vadd.f32 %v13120, %v13160
    %v13162 = vpop.f32.mrb[0].mxu0
    %v13163 = vadd.f32 %v13122, %v13162
    %v13164 = vpop.f32.mrb[0].mxu0
    %v13165 = vpop.f32.mrb[0].mxu0
    %13166 = vdwg.mxu0
    %13167 = vmatprep.subr.bf16.mxu0 %v12139
    %13168 = vmatpush1.bf16.msra.mxu0 %v12138
    %13169 = vmatprep.subr.bf16.mxu0 %v12149
    %13170 = vmatpush1.bf16.msra.mxu0 %v12148
    %13171 = vmatprep.subr.bf16.mxu0 %v12159
    %13172 = vmatpush1.bf16.msra.mxu0 %v12158
    %13173 = vmatprep.subr.bf16.mxu0 %v12169
    %13174 = vmatpush1.bf16.msra.mxu0 %v12168
    %13175 = vmatprep.subr.bf16.mxu0 %v12179
    %13176 = vmatpush1.bf16.msra.mxu0 %v12178
    %13177 = vmatprep.subr.bf16.mxu0 %v12591
    %13178 = vmatpush1.bf16.msra.mxu0 %v12588
    %13179 = vmatprep.subr.bf16.mxu0 0
    %13180 = vmatpush1.bf16.msra.mxu0 0
    %13181 = vmatprep.subr.bf16.mxu0 0
    %13182 = vmatpush1.bf16.msra.mxu0 0
    %13183 = vmatprep.subr.bf16.mxu0 0
    %13184 = vmatpush1.bf16.msra.mxu0 0
    %13185 = vmatprep.subr.bf16.mxu0 0
    %13186 = vmatpush1.bf16.msra.mxu0 0
    %13187 = vmatprep.subr.bf16.mxu0 0
    %13188 = vmatpush1.bf16.msra.mxu0 0
    %13189 = vmatprep.subr.bf16.mxu0 0
    %13190 = vmatpush1.bf16.msra.mxu0 0
    %13191 = vmatprep.subr.bf16.mxu0 0
    %13192 = vmatpush1.bf16.msra.mxu0 0
    %13193 = vmatprep.subr.bf16.mxu0 0
    %13194 = vmatpush1.bf16.msra.mxu0 0
    %13195 = vmatprep.subr.bf16.mxu0 0
    %13196 = vmatpush1.bf16.msra.mxu0 0
    %13197 = vmatprep.subr.bf16.mxu0 0
    %13198 = vmatpush1.bf16.msra.mxu0 0
    %13199 = vmatprep.mubr.bf16.mxu0 0
    %13200 = vmatmul.mubr.bf16.gmra.mrb[0].mxu0 %v12561
    %v13201 = vpop.f32.mrb[0].mxu0
    %v13202 = vadd.f32 %v13161, %v13201
    %v13203 = vpop.f32.mrb[0].mxu0
    %v13204 = vadd.f32 %v13163, %v13203
    %v13205 = vpop.f32.mrb[0].mxu0
    %v13206 = vpop.f32.mrb[0].mxu0
    %13207 = vdwg.mxu0
    %v13208 = vmax.f32 %v12710, 0.0
    %v13209 = vmax.f32 %v12712, 0.0
    %v13210 = vmax.f32 %v12833, 0.0
    %v13211 = vmax.f32 %v12835, 0.0
    %v13212 = vmax.f32 %v12956, 0.0
    %v13213 = vmax.f32 %v12958, 0.0
    %v13214 = vmax.f32 %v13079, 0.0
    %v13215 = vmax.f32 %v13081, 0.0
    %v13216 = vmax.f32 %v13202, 0.0
    %v13217 = vmax.f32 %v13204, 0.0
    %v13218 = vpack.c.bf16 %v13208, %v13208
    %v13219 = vpack.c.bf16 %v13209, %v13209
    %v13220 = vpack.c.bf16 %v13210, %v13210
    %v13221 = vpack.c.bf16 %v13211, %v13211
    %v13222 = vpack.c.bf16 %v13212, %v13212
    %v13223 = vpack.c.bf16 %v13213, %v13213
    %v13224 = vpack.c.bf16 %v13214, %v13214
    %v13225 = vpack.c.bf16 %v13215, %v13215
    %v13226 = vpack.c.bf16 %v13216, %v13216
    %v13227 = vpack.c.bf16 %v13217, %v13217
    %v13228 = vld [vmem:[%s23] sm:$0xf]
    %v13229 = vld [vmem:[%s23 + $0x4] sm:$0xf]
    %v13230 = vld [vmem:[%s23 + $0x8] sm:$0xf]
    %v13231 = vld [vmem:[%s23 + $0xc] sm:$0xf]
    %v13232 = vld [vmem:[%s23 + $0x10] sm:$0xf]
    %v13233 = vld [vmem:[%s23 + $0x14] sm:$0xf]
    %v13234 = vld [vmem:[%s23 + $0x18] sm:$0xf]
    %v13235 = vld [vmem:[%s23 + $0x1c] sm:$0xf]
    %v13236 = vld [vmem:[%s23 + $0x20] sm:$0xf]
    %v13237 = vld [vmem:[%s23 + $0x24] sm:$0xf]
    %v13238 = vld [vmem:[%s23 + $0x28] sm:$0xf]
    %v13239 = vld [vmem:[%s23 + $0x2c] sm:$0xf]
    %v13240 = vld [vmem:[%s23 + $0x30] sm:$0xf]
    %v13241 = vld [vmem:[%s23 + $0x34] sm:$0xf]
    %v13242 = vld [vmem:[%s23 + $0x38] sm:$0xf]
    %v13243 = vld [vmem:[%s23 + $0x3c] sm:$0xf]
    %v13244 = vld [vmem:[%s23 + $0x40] sm:$0xf]
    %v13245 = vld [vmem:[%s23 + $0x44] sm:$0xf]
    %v13246 = vld [vmem:[%s23 + $0x48] sm:$0xf]
    %v13247 = vld [vmem:[%s23 + $0x4c] sm:$0xf]
    %v13248 = vld [vmem:[%s23 + $0x50] sm:$0xf]
    %v13249 = vld [vmem:[%s23 + $0x54] sm:$0xf]
    %v13250 = vld [vmem:[%s23 + $0x58] sm:$0xf]
    %v13251 = vld [vmem:[%s23 + $0x5c] sm:$0xf]
    %v13252 = vld [vmem:[%s23 + $0x60] sm:$0xf]
    %v13253 = vld [vmem:[%s23 + $0x64] sm:$0xf]
    %v13254 = vld [vmem:[%s23 + $0x68] sm:$0xf]
    %v13255 = vld [vmem:[%s23 + $0x6c] sm:$0xf]
    %v13256 = vld [vmem:[%s23 + $0x70] sm:$0xf]
    %v13257 = vld [vmem:[%s23 + $0x74] sm:$0xf]
    %v13258 = vld [vmem:[%s23 + $0x78] sm:$0xf]
    %v13259 = vld [vmem:[%s23 + $0x7c] sm:$0xf]
    %v13260 = vld [vmem:[%s23 + $0x80] sm:$0xf]
    %v13261 = vld [vmem:[%s23 + $0x84] sm:$0xf]
    %v13262 = vld [vmem:[%s23 + $0x88] sm:$0xf]
    %v13263 = vld [vmem:[%s23 + $0x8c] sm:$0xf]
    %v13264 = vld [vmem:[%s23 + $0x90] sm:$0xf]
    %v13265 = vld [vmem:[%s23 + $0x94] sm:$0xf]
    %v13266 = vld [vmem:[%s23 + $0x98] sm:$0xf]
    %v13267 = vld [vmem:[%s23 + $0x9c] sm:$0xf]
    %v13268 = vld [vmem:[%s23 + $0xa0] sm:$0xf]
    %v13269 = vld [vmem:[%s23 + $0xa4] sm:$0xf]
    %v13270 = vld [vmem:[%s23 + $0xa8] sm:$0xf]
    %v13271 = vld [vmem:[%s23 + $0xac] sm:$0xf]
    %v13272 = vld [vmem:[%s23 + $0xb0] sm:$0xf]
    %v13273 = vld [vmem:[%s23 + $0xb4] sm:$0xf]
    %v13274 = vld [vmem:[%s23 + $0xb8] sm:$0xf]
    %v13275 = vld [vmem:[%s23 + $0xbc] sm:$0xf]
    %v13276 = vld [vmem:[%s23 + $0xc0] sm:$0xf]
    %v13277 = vld [vmem:[%s23 + $0xc4] sm:$0xf]
    %v13278 = vld [vmem:[%s23 + $0xc8] sm:$0xf]
    %v13279 = vld [vmem:[%s23 + $0xcc] sm:$0xf]
    %v13280 = vld [vmem:[%s23 + $0xd0] sm:$0xf]
    %v13281 = vld [vmem:[%s23 + $0xd4] sm:$0xf]
    %v13282 = vld [vmem:[%s23 + $0xd8] sm:$0xf]
    %v13283 = vld [vmem:[%s23 + $0xdc] sm:$0xf]
    %v13284 = vld [vmem:[%s23 + $0xe0] sm:$0xf]
    %v13285 = vld [vmem:[%s23 + $0xe4] sm:$0xf]
    %v13286 = vld [vmem:[%s23 + $0xe8] sm:$0xf]
    %v13287 = vld [vmem:[%s23 + $0xec] sm:$0xf]
    %v13288 = vld [vmem:[%s23 + $0xf0] sm:$0xf]
    %v13289 = vld [vmem:[%s23 + $0xf4] sm:$0xf]
    %v13290 = vld [vmem:[%s23 + $0xf8] sm:$0xf]
    %v13291 = vld [vmem:[%s23 + $0xfc] sm:$0xf]
    %v13292 = vld [vmem:[%s23 + $0x100] sm:$0xf]
    %v13293 = vld [vmem:[%s23 + $0x104] sm:$0xf]
    %v13294 = vld [vmem:[%s23 + $0x108] sm:$0xf]
    %v13295 = vld [vmem:[%s23 + $0x10c] sm:$0xf]
    %v13296 = vld [vmem:[%s23 + $0x110] sm:$0xf]
    %v13297 = vld [vmem:[%s23 + $0x114] sm:$0xf]
    %v13298 = vld [vmem:[%s23 + $0x118] sm:$0xf]
    %v13299 = vld [vmem:[%s23 + $0x11c] sm:$0xf]
    %v13300 = vld [vmem:[%s23 + $0x120] sm:$0xf]
    %v13301 = vld [vmem:[%s23 + $0x124] sm:$0xf]
    %v13302 = vld [vmem:[%s23 + $0x128] sm:$0xf]
    %v13303 = vld [vmem:[%s23 + $0x12c] sm:$0xf]
    %v13304 = vld [vmem:[%s23 + $0x130] sm:$0xf]
    %v13305 = vld [vmem:[%s23 + $0x134] sm:$0xf]
    %v13306 = vld [vmem:[%s23 + $0x138] sm:$0xf]
    %v13307 = vld [vmem:[%s23 + $0x13c] sm:$0xf]
    %v13308 = vld [vmem:[%s23 + $0x140] sm:$0xf]
    %v13309 = vld [vmem:[%s23 + $0x144] sm:$0xf]
    %v13310 = vld [vmem:[%s23 + $0x148] sm:$0xf]
    %v13311 = vld [vmem:[%s23 + $0x14c] sm:$0xf]
    %v13312 = vld [vmem:[%s23 + $0x150] sm:$0xf]
    %v13313 = vld [vmem:[%s23 + $0x154] sm:$0xf]
    %v13314 = vld [vmem:[%s23 + $0x158] sm:$0xf]
    %v13315 = vld [vmem:[%s23 + $0x15c] sm:$0xf]
    %v13316 = vld [vmem:[%s23 + $0x160] sm:$0xf]
    %v13317 = vld [vmem:[%s23 + $0x164] sm:$0xf]
    %v13318 = vld [vmem:[%s23 + $0x168] sm:$0xf]
    %v13319 = vld [vmem:[%s23 + $0x16c] sm:$0xf]
    %v13320 = vld [vmem:[%s23 + $0x170] sm:$0xf]
    %v13321 = vld [vmem:[%s23 + $0x174] sm:$0xf]
    %v13322 = vld [vmem:[%s23 + $0x178] sm:$0xf]
    %v13323 = vld [vmem:[%s23 + $0x17c] sm:$0xf]
    %v13324 = vld [vmem:[%s23 + $0x180] sm:$0xf]
    %v13325 = vld [vmem:[%s23 + $0x184] sm:$0xf]
    %v13326 = vld [vmem:[%s23 + $0x188] sm:$0xf]
    %v13327 = vld [vmem:[%s23 + $0x18c] sm:$0xf]
    %v13328 = vld [vmem:[%s23 + $0x190] sm:$0xf]
    %v13329 = vld [vmem:[%s23 + $0x194] sm:$0xf]
    %v13330 = vld [vmem:[%s23 + $0x198] sm:$0xf]
    %v13331 = vld [vmem:[%s23 + $0x19c] sm:$0xf]
    %v13332 = vld [vmem:[%s23 + $0x1a0] sm:$0xf]
    %v13333 = vld [vmem:[%s23 + $0x1a4] sm:$0xf]
    %v13334 = vld [vmem:[%s23 + $0x1a8] sm:$0xf]
    %v13335 = vld [vmem:[%s23 + $0x1ac] sm:$0xf]
    %v13336 = vld [vmem:[%s23 + $0x1b0] sm:$0xf]
    %v13337 = vld [vmem:[%s23 + $0x1b4] sm:$0xf]
    %v13338 = vld [vmem:[%s23 + $0x1b8] sm:$0xf]
    %v13339 = vld [vmem:[%s23 + $0x1bc] sm:$0xf]
    %v13340 = vld [vmem:[%s23 + $0x1c0] sm:$0xf]
    %v13341 = vld [vmem:[%s23 + $0x1c4] sm:$0xf]
    %v13342 = vld [vmem:[%s23 + $0x1c8] sm:$0xf]
    %v13343 = vld [vmem:[%s23 + $0x1cc] sm:$0xf]
    %v13344 = vld [vmem:[%s23 + $0x1d0] sm:$0xf]
    %v13345 = vld [vmem:[%s23 + $0x1d4] sm:$0xf]
    %v13346 = vld [vmem:[%s23 + $0x1d8] sm:$0xf]
    %v13347 = vld [vmem:[%s23 + $0x1dc] sm:$0xf]
    %v13348 = vld [vmem:[%s23 + $0x1e0] sm:$0xf]
    %v13349 = vld [vmem:[%s23 + $0x1e4] sm:$0xf]
    %v13350 = vld [vmem:[%s23 + $0x1e8] sm:$0xf]
    %v13351 = vld [vmem:[%s23 + $0x1ec] sm:$0xf]
    %v13352 = vld [vmem:[%s23 + $0x1f0] sm:$0xf]
    %v13353 = vld [vmem:[%s23 + $0x1f4] sm:$0xf]
    %v13354 = vld [vmem:[%s23 + $0x1f8] sm:$0xf]
    %v13355 = vld [vmem:[%s23 + $0x1fc] sm:$0xf]
    %v13356 = vld [vmem:[%s23 + $0x200] sm:$0xf]
    %v13357 = vld [vmem:[%s23 + $0x204] sm:$0xf]
    %v13358 = vld [vmem:[%s23 + $0x208] sm:$0xf]
    %v13359 = vld [vmem:[%s23 + $0x20c] sm:$0xf]
    %v13360 = vld [vmem:[%s23 + $0x210] sm:$0xf]
    %v13361 = vld [vmem:[%s23 + $0x214] sm:$0xf]
    %v13362 = vld [vmem:[%s23 + $0x218] sm:$0xf]
    %v13363 = vld [vmem:[%s23 + $0x21c] sm:$0xf]
    %v13364 = vld [vmem:[%s23 + $0x220] sm:$0xf]
    %v13365 = vld [vmem:[%s23 + $0x224] sm:$0xf]
    %v13366 = vld [vmem:[%s23 + $0x228] sm:$0xf]
    %v13367 = vld [vmem:[%s23 + $0x22c] sm:$0xf]
    %v13368 = vld [vmem:[%s23 + $0x230] sm:$0xf]
    %v13369 = vld [vmem:[%s23 + $0x234] sm:$0xf]
    %v13370 = vld [vmem:[%s23 + $0x238] sm:$0xf]
    %v13371 = vld [vmem:[%s23 + $0x23c] sm:$0xf]
    %v13372 = vld [vmem:[%s23 + $0x240] sm:$0xf]
    %v13373 = vld [vmem:[%s23 + $0x244] sm:$0xf]
    %v13374 = vld [vmem:[%s23 + $0x248] sm:$0xf]
    %v13375 = vld [vmem:[%s23 + $0x24c] sm:$0xf]
    %v13376 = vld [vmem:[%s23 + $0x250] sm:$0xf]
    %v13377 = vld [vmem:[%s23 + $0x254] sm:$0xf]
    %v13378 = vld [vmem:[%s24] sm:$0x1]
    %v13380 = vlaneseq
    %v13381 = vshrl.u32 %v13380, 7
    %v13382 = vsub.s32 0, %v13381
    %v13383 = vrot.slane %v13378, %v13382
    %v13535 = vunpack.c.l.b16 %v13228
    %v13536 = vunpack.c.l.b16 %v13229
    %v13537 = vunpack.c.l.b16 %v13230
    %v13538 = vunpack.c.l.b16 %v13231
    %v13539 = vunpack.c.l.b16 %v13232
    %v13540 = vunpack.c.l.b16 %v13233
    %v13541 = vunpack.c.l.b16 %v13234
    %v13542 = vunpack.c.l.b16 %v13235
    %v13543 = vunpack.c.l.b16 %v13236
    %v13544 = vunpack.c.l.b16 %v13237
    %v13545 = vunpack.c.l.b16 %v13238
    %v13546 = vunpack.c.l.b16 %v13239
    %v13547 = vunpack.c.l.b16 %v13240
    %v13548 = vunpack.c.l.b16 %v13241
    %v13549 = vunpack.c.l.b16 %v13242
    %v13550 = vunpack.c.l.b16 %v13243
    %v13551 = vunpack.c.l.b16 %v13244
    %v13552 = vunpack.c.l.b16 %v13245
    %v13553 = vunpack.c.l.b16 %v13246
    %v13554 = vunpack.c.l.b16 %v13247
    %v13555 = vunpack.c.l.b16 %v13248
    %v13556 = vunpack.c.l.b16 %v13249
    %v13557 = vunpack.c.l.b16 %v13250
    %v13558 = vunpack.c.l.b16 %v13251
    %v13559 = vunpack.c.l.b16 %v13252
    %v13560 = vunpack.c.l.b16 %v13253
    %v13561 = vunpack.c.l.b16 %v13254
    %v13562 = vunpack.c.l.b16 %v13255
    %v13563 = vunpack.c.l.b16 %v13256
    %v13564 = vunpack.c.l.b16 %v13257
    %v13565 = vunpack.c.l.b16 %v13258
    %v13566 = vunpack.c.l.b16 %v13259
    %v13567 = vunpack.c.l.b16 %v13260
    %v13568 = vunpack.c.l.b16 %v13261
    %v13569 = vunpack.c.l.b16 %v13262
    %v13570 = vunpack.c.l.b16 %v13263
    %v13571 = vunpack.c.l.b16 %v13264
    %v13572 = vunpack.c.l.b16 %v13265
    %v13573 = vunpack.c.l.b16 %v13266
    %v13574 = vunpack.c.l.b16 %v13267
    %v13575 = vunpack.c.l.b16 %v13268
    %v13576 = vunpack.c.l.b16 %v13269
    %v13577 = vunpack.c.l.b16 %v13270
    %v13578 = vunpack.c.l.b16 %v13271
    %v13579 = vunpack.c.l.b16 %v13272
    %v13580 = vunpack.c.l.b16 %v13273
    %v13581 = vunpack.c.l.b16 %v13274
    %v13582 = vunpack.c.l.b16 %v13275
    %v13583 = vunpack.c.l.b16 %v13276
    %v13584 = vunpack.c.l.b16 %v13277
    %v13585 = vunpack.c.l.b16 %v13278
    %v13586 = vunpack.c.l.b16 %v13279
    %v13587 = vunpack.c.l.b16 %v13280
    %v13588 = vunpack.c.l.b16 %v13281
    %v13589 = vunpack.c.l.b16 %v13282
    %v13590 = vunpack.c.l.b16 %v13283
    %v13591 = vunpack.c.l.b16 %v13284
    %v13592 = vunpack.c.l.b16 %v13285
    %v13593 = vunpack.c.l.b16 %v13286
    %v13594 = vunpack.c.l.b16 %v13287
    %v13595 = vunpack.c.l.b16 %v13288
    %v13596 = vunpack.c.l.b16 %v13289
    %v13597 = vunpack.c.l.b16 %v13290
    %v13598 = vunpack.c.l.b16 %v13291
    %v13599 = vunpack.c.l.b16 %v13292
    %v13600 = vunpack.c.l.b16 %v13293
    %v13601 = vunpack.c.l.b16 %v13294
    %v13602 = vunpack.c.l.b16 %v13295
    %v13603 = vunpack.c.l.b16 %v13296
    %v13604 = vunpack.c.l.b16 %v13297
    %v13605 = vunpack.c.l.b16 %v13298
    %v13606 = vunpack.c.l.b16 %v13299
    %v13607 = vunpack.c.l.b16 %v13300
    %v13608 = vunpack.c.l.b16 %v13301
    %v13609 = vunpack.c.l.b16 %v13302
    %v13610 = vunpack.c.l.b16 %v13303
    %v13611 = vunpack.c.l.b16 %v13304
    %v13612 = vunpack.c.l.b16 %v13305
    %v13613 = vunpack.c.l.b16 %v13306
    %v13614 = vunpack.c.l.b16 %v13307
    %v13615 = vunpack.c.l.b16 %v13308
    %v13616 = vunpack.c.l.b16 %v13309
    %v13617 = vunpack.c.l.b16 %v13310
    %v13618 = vunpack.c.l.b16 %v13311
    %v13619 = vunpack.c.l.b16 %v13312
    %v13620 = vunpack.c.l.b16 %v13313
    %v13621 = vunpack.c.l.b16 %v13314
    %v13622 = vunpack.c.l.b16 %v13315
    %v13623 = vunpack.c.l.b16 %v13316
    %v13624 = vunpack.c.l.b16 %v13317
    %v13625 = vunpack.c.l.b16 %v13318
    %v13626 = vunpack.c.l.b16 %v13319
    %v13627 = vunpack.c.l.b16 %v13320
    %v13628 = vunpack.c.l.b16 %v13321
    %v13629 = vunpack.c.l.b16 %v13322
    %v13630 = vunpack.c.l.b16 %v13323
    %v13631 = vunpack.c.l.b16 %v13324
    %v13632 = vunpack.c.l.b16 %v13325
    %v13633 = vunpack.c.l.b16 %v13326
    %v13634 = vunpack.c.l.b16 %v13327
    %v13635 = vunpack.c.l.b16 %v13328
    %v13636 = vunpack.c.l.b16 %v13329
    %v13637 = vunpack.c.l.b16 %v13330
    %v13638 = vunpack.c.l.b16 %v13331
    %v13639 = vunpack.c.l.b16 %v13332
    %v13640 = vunpack.c.l.b16 %v13333
    %v13641 = vunpack.c.l.b16 %v13334
    %v13642 = vunpack.c.l.b16 %v13335
    %v13643 = vunpack.c.l.b16 %v13336
    %v13644 = vunpack.c.l.b16 %v13337
    %v13645 = vunpack.c.l.b16 %v13338
    %v13646 = vunpack.c.l.b16 %v13339
    %v13647 = vunpack.c.l.b16 %v13340
    %v13648 = vunpack.c.l.b16 %v13341
    %v13649 = vunpack.c.l.b16 %v13342
    %v13650 = vunpack.c.l.b16 %v13343
    %v13651 = vunpack.c.l.b16 %v13344
    %v13652 = vunpack.c.l.b16 %v13345
    %v13653 = vunpack.c.l.b16 %v13346
    %v13654 = vunpack.c.l.b16 %v13347
    %v13655 = vunpack.c.l.b16 %v13348
    %v13656 = vunpack.c.l.b16 %v13349
    %v13657 = vunpack.c.l.b16 %v13350
    %v13658 = vunpack.c.l.b16 %v13351
    %v13659 = vunpack.c.l.b16 %v13352
    %v13660 = vunpack.c.l.b16 %v13353
    %v13661 = vunpack.c.l.b16 %v13354
    %v13662 = vunpack.c.l.b16 %v13355
    %v13663 = vunpack.c.l.b16 %v13356
    %v13664 = vunpack.c.l.b16 %v13357
    %v13665 = vunpack.c.l.b16 %v13358
    %v13666 = vunpack.c.l.b16 %v13359
    %v13667 = vunpack.c.l.b16 %v13360
    %v13668 = vunpack.c.l.b16 %v13361
    %v13669 = vunpack.c.l.b16 %v13362
    %v13670 = vunpack.c.l.b16 %v13363
    %v13671 = vunpack.c.l.b16 %v13364
    %v13672 = vunpack.c.l.b16 %v13365
    %v13673 = vunpack.c.l.b16 %v13366
    %v13674 = vunpack.c.l.b16 %v13367
    %v13675 = vunpack.c.l.b16 %v13368
    %v13676 = vunpack.c.l.b16 %v13369
    %v13677 = vunpack.c.l.b16 %v13370
    %v13678 = vunpack.c.l.b16 %v13371
    %v13679 = vunpack.c.l.b16 %v13372
    %v13680 = vunpack.c.l.b16 %v13373
    %v13681 = vunpack.c.l.b16 %v13374
    %v13682 = vunpack.c.l.b16 %v13375
    %v13683 = vunpack.c.l.b16 %v13376
    %v13684 = vunpack.c.l.b16 %v13377
    %v13685 = vpack.c.b16 %v13536, %v13535
    %v13686 = vpack.c.b16 %v13538, %v13537
    %v13687 = vpack.c.b16 %v13540, %v13539
    %v13688 = vpack.c.b16 %v13542, %v13541
    %v13689 = vpack.c.b16 %v13544, %v13543
    %v13690 = vpack.c.b16 %v13546, %v13545
    %v13691 = vpack.c.b16 %v13548, %v13547
    %v13692 = vpack.c.b16 %v13550, %v13549
    %v13693 = vpack.c.b16 %v13552, %v13551
    %v13694 = vpack.c.b16 %v13554, %v13553
    %v13695 = vpack.c.b16 %v13556, %v13555
    %v13696 = vpack.c.b16 %v13558, %v13557
    %v13697 = vpack.c.b16 %v13560, %v13559
    %v13698 = vpack.c.b16 %v13562, %v13561
    %v13699 = vpack.c.b16 %v13564, %v13563
    %v13700 = vpack.c.b16 %v13566, %v13565
    %v13701 = vpack.c.b16 %v13568, %v13567
    %v13702 = vpack.c.b16 %v13570, %v13569
    %v13703 = vpack.c.b16 %v13572, %v13571
    %v13704 = vpack.c.b16 %v13574, %v13573
    %v13705 = vpack.c.b16 %v13576, %v13575
    %v13706 = vpack.c.b16 %v13578, %v13577
    %v13707 = vpack.c.b16 %v13580, %v13579
    %v13708 = vpack.c.b16 %v13582, %v13581
    %v13709 = vpack.c.b16 %v13584, %v13583
    %v13710 = vpack.c.b16 %v13586, %v13585
    %v13711 = vpack.c.b16 %v13588, %v13587
    %v13712 = vpack.c.b16 %v13590, %v13589
    %v13713 = vpack.c.b16 %v13592, %v13591
    %v13714 = vpack.c.b16 %v13594, %v13593
    %v13715 = vpack.c.b16 %v13596, %v13595
    %v13716 = vpack.c.b16 %v13598, %v13597
    %v13717 = vpack.c.b16 %v13600, %v13599
    %v13718 = vpack.c.b16 %v13602, %v13601
    %v13719 = vpack.c.b16 %v13604, %v13603
    %v13720 = vpack.c.b16 %v13606, %v13605
    %v13721 = vpack.c.b16 %v13608, %v13607
    %v13722 = vpack.c.b16 %v13610, %v13609
    %v13723 = vpack.c.b16 %v13612, %v13611
    %v13724 = vpack.c.b16 %v13614, %v13613
    %v13725 = vpack.c.b16 %v13616, %v13615
    %v13726 = vpack.c.b16 %v13618, %v13617
    %v13727 = vpack.c.b16 %v13620, %v13619
    %v13728 = vpack.c.b16 %v13622, %v13621
    %v13729 = vpack.c.b16 %v13624, %v13623
    %v13730 = vpack.c.b16 %v13626, %v13625
    %v13731 = vpack.c.b16 %v13628, %v13627
    %v13732 = vpack.c.b16 %v13630, %v13629
    %v13733 = vpack.c.b16 %v13632, %v13631
    %v13734 = vpack.c.b16 %v13634, %v13633
    %v13735 = vpack.c.b16 %v13636, %v13635
    %v13736 = vpack.c.b16 %v13638, %v13637
    %v13737 = vpack.c.b16 %v13640, %v13639
    %v13738 = vpack.c.b16 %v13642, %v13641
    %v13739 = vpack.c.b16 %v13644, %v13643
    %v13740 = vpack.c.b16 %v13646, %v13645
    %v13741 = vpack.c.b16 %v13648, %v13647
    %v13742 = vpack.c.b16 %v13650, %v13649
    %v13743 = vpack.c.b16 %v13652, %v13651
    %v13744 = vpack.c.b16 %v13654, %v13653
    %v13745 = vpack.c.b16 %v13656, %v13655
    %v13746 = vpack.c.b16 %v13658, %v13657
    %v13747 = vpack.c.b16 %v13660, %v13659
    %v13748 = vpack.c.b16 %v13662, %v13661
    %v13749 = vpack.c.b16 %v13664, %v13663
    %v13750 = vpack.c.b16 %v13666, %v13665
    %v13751 = vpack.c.b16 %v13668, %v13667
    %v13752 = vpack.c.b16 %v13670, %v13669
    %v13753 = vpack.c.b16 %v13672, %v13671
    %v13754 = vpack.c.b16 %v13674, %v13673
    %v13755 = vpack.c.b16 %v13676, %v13675
    %v13756 = vpack.c.b16 %v13678, %v13677
    %v13757 = vpack.c.b16 %v13680, %v13679
    %v13758 = vpack.c.b16 %v13682, %v13681
    %v13759 = vpack.c.b16 %v13684, %v13683
    %vm13835 = vcmask 392192
    %v13837 = vsel %vm13835, %v13227, 0
    %13839 = vmatprep.subr.bf16.mxu0 0
    %13840 = vmatpush1.bf16.msra.mxu0 %v13685
    %13841 = vmatprep.subr.bf16.mxu0 0
    %13842 = vmatpush1.bf16.msra.mxu0 %v13686
    %13843 = vmatprep.subr.bf16.mxu0 0
    %13844 = vmatpush1.bf16.msra.mxu0 %v13687
    %13845 = vmatprep.subr.bf16.mxu0 0
    %13846 = vmatpush1.bf16.msra.mxu0 %v13688
    %13847 = vmatprep.subr.bf16.mxu0 0
    %13848 = vmatpush1.bf16.msra.mxu0 %v13689
    %13849 = vmatprep.subr.bf16.mxu0 0
    %13850 = vmatpush1.bf16.msra.mxu0 %v13690
    %13851 = vmatprep.subr.bf16.mxu0 0
    %13852 = vmatpush1.bf16.msra.mxu0 %v13691
    %13853 = vmatprep.subr.bf16.mxu0 0
    %13854 = vmatpush1.bf16.msra.mxu0 %v13692
    %13855 = vmatprep.subr.bf16.mxu0 0
    %13856 = vmatpush1.bf16.msra.mxu0 %v13693
    %13857 = vmatprep.subr.bf16.mxu0 0
    %13858 = vmatpush1.bf16.msra.mxu0 %v13694
    %13859 = vmatprep.subr.bf16.mxu0 0
    %13860 = vmatpush1.bf16.msra.mxu0 %v13695
    %13861 = vmatprep.subr.bf16.mxu0 0
    %13862 = vmatpush1.bf16.msra.mxu0 %v13696
    %13863 = vmatprep.subr.bf16.mxu0 0
    %13864 = vmatpush1.bf16.msra.mxu0 %v13697
    %13865 = vmatprep.subr.bf16.mxu0 0
    %13866 = vmatpush1.bf16.msra.mxu0 %v13698
    %13867 = vmatprep.subr.bf16.mxu0 0
    %13868 = vmatpush1.bf16.msra.mxu0 %v13699
    %13869 = vmatprep.subr.bf16.mxu0 0
    %13870 = vmatpush1.bf16.msra.mxu0 %v13700
    %13871 = vmatprep.mubr.bf16.mxu0 %v13219
    %13872 = vmatmul.mubr.bf16.gmra.mrb[0].mxu0 %v13218
    %v13873 = vpop.f32.mrb[0].mxu0
    %v13874 = vadd.f32 %v13383, %v13873
    %v13875 = vpop.f32.mrb[0].mxu0
    %v13876 = vpop.f32.mrb[0].mxu0
    %v13877 = vpop.f32.mrb[0].mxu0
    %13878 = vdwg.mxu0
    %13879 = vmatprep.subr.bf16.mxu0 0
    %13880 = vmatpush1.bf16.msra.mxu0 %v13701
    %13881 = vmatprep.subr.bf16.mxu0 0
    %13882 = vmatpush1.bf16.msra.mxu0 %v13702
    %13883 = vmatprep.subr.bf16.mxu0 0
    %13884 = vmatpush1.bf16.msra.mxu0 %v13703
    %13885 = vmatprep.subr.bf16.mxu0 0
    %13886 = vmatpush1.bf16.msra.mxu0 %v13704
    %13887 = vmatprep.subr.bf16.mxu0 0
    %13888 = vmatpush1.bf16.msra.mxu0 %v13705
    %13889 = vmatprep.subr.bf16.mxu0 0
    %13890 = vmatpush1.bf16.msra.mxu0 %v13706
    %13891 = vmatprep.subr.bf16.mxu0 0
    %13892 = vmatpush1.bf16.msra.mxu0 %v13707
    %13893 = vmatprep.subr.bf16.mxu0 0
    %13894 = vmatpush1.bf16.msra.mxu0 %v13708
    %13895 = vmatprep.subr.bf16.mxu0 0
    %13896 = vmatpush1.bf16.msra.mxu0 %v13709
    %13897 = vmatprep.subr.bf16.mxu0 0
    %13898 = vmatpush1.bf16.msra.mxu0 %v13710
    %13899 = vmatprep.subr.bf16.mxu0 0
    %13900 = vmatpush1.bf16.msra.mxu0 %v13711
    %13901 = vmatprep.subr.bf16.mxu0 0
    %13902 = vmatpush1.bf16.msra.mxu0 %v13712
    %13903 = vmatprep.subr.bf16.mxu0 0
    %13904 = vmatpush1.bf16.msra.mxu0 %v13713
    %13905 = vmatprep.subr.bf16.mxu0 0
    %13906 = vmatpush1.bf16.msra.mxu0 %v13714
    %13907 = vmatprep.subr.bf16.mxu0 0
    %13908 = vmatpush1.bf16.msra.mxu0 %v13715
    %13909 = vmatprep.subr.bf16.mxu0 0
    %13910 = vmatpush1.bf16.msra.mxu0 %v13716
    %13911 = vmatprep.mubr.bf16.mxu0 %v13221
    %13912 = vmatmul.mubr.bf16.gmra.mrb[0].mxu0 %v13220
    %v13913 = vpop.f32.mrb[0].mxu0
    %v13914 = vadd.f32 %v13874, %v13913
    %v13915 = vpop.f32.mrb[0].mxu0
    %v13916 = vpop.f32.mrb[0].mxu0
    %v13917 = vpop.f32.mrb[0].mxu0
    %13918 = vdwg.mxu0
    %13919 = vmatprep.subr.bf16.mxu0 0
    %13920 = vmatpush1.bf16.msra.mxu0 %v13717
    %13921 = vmatprep.subr.bf16.mxu0 0
    %13922 = vmatpush1.bf16.msra.mxu0 %v13718
    %13923 = vmatprep.subr.bf16.mxu0 0
    %13924 = vmatpush1.bf16.msra.mxu0 %v13719
    %13925 = vmatprep.subr.bf16.mxu0 0
    %13926 = vmatpush1.bf16.msra.mxu0 %v13720
    %13927 = vmatprep.subr.bf16.mxu0 0
    %13928 = vmatpush1.bf16.msra.mxu0 %v13721
    %13929 = vmatprep.subr.bf16.mxu0 0
    %13930 = vmatpush1.bf16.msra.mxu0 %v13722
    %13931 = vmatprep.subr.bf16.mxu0 0
    %13932 = vmatpush1.bf16.msra.mxu0 %v13723
    %13933 = vmatprep.subr.bf16.mxu0 0
    %13934 = vmatpush1.bf16.msra.mxu0 %v13724
    %13935 = vmatprep.subr.bf16.mxu0 0
    %13936 = vmatpush1.bf16.msra.mxu0 %v13725
    %13937 = vmatprep.subr.bf16.mxu0 0
    %13938 = vmatpush1.bf16.msra.mxu0 %v13726
    %13939 = vmatprep.subr.bf16.mxu0 0
    %13940 = vmatpush1.bf16.msra.mxu0 %v13727
    %13941 = vmatprep.subr.bf16.mxu0 0
    %13942 = vmatpush1.bf16.msra.mxu0 %v13728
    %13943 = vmatprep.subr.bf16.mxu0 0
    %13944 = vmatpush1.bf16.msra.mxu0 %v13729
    %13945 = vmatprep.subr.bf16.mxu0 0
    %13946 = vmatpush1.bf16.msra.mxu0 %v13730
    %13947 = vmatprep.subr.bf16.mxu0 0
    %13948 = vmatpush1.bf16.msra.mxu0 %v13731
    %13949 = vmatprep.subr.bf16.mxu0 0
    %13950 = vmatpush1.bf16.msra.mxu0 %v13732
    %13951 = vmatprep.mubr.bf16.mxu0 %v13223
    %13952 = vmatmul.mubr.bf16.gmra.mrb[0].mxu0 %v13222
    %v13953 = vpop.f32.mrb[0].mxu0
    %v13954 = vadd.f32 %v13914, %v13953
    %v13955 = vpop.f32.mrb[0].mxu0
    %v13956 = vpop.f32.mrb[0].mxu0
    %v13957 = vpop.f32.mrb[0].mxu0
    %13958 = vdwg.mxu0
    %13959 = vmatprep.subr.bf16.mxu0 0
    %13960 = vmatpush1.bf16.msra.mxu0 %v13733
    %13961 = vmatprep.subr.bf16.mxu0 0
    %13962 = vmatpush1.bf16.msra.mxu0 %v13734
    %13963 = vmatprep.subr.bf16.mxu0 0
    %13964 = vmatpush1.bf16.msra.mxu0 %v13735
    %13965 = vmatprep.subr.bf16.mxu0 0
    %13966 = vmatpush1.bf16.msra.mxu0 %v13736
    %13967 = vmatprep.subr.bf16.mxu0 0
    %13968 = vmatpush1.bf16.msra.mxu0 %v13737
    %13969 = vmatprep.subr.bf16.mxu0 0
    %13970 = vmatpush1.bf16.msra.mxu0 %v13738
    %13971 = vmatprep.subr.bf16.mxu0 0
    %13972 = vmatpush1.bf16.msra.mxu0 %v13739
    %13973 = vmatprep.subr.bf16.mxu0 0
    %13974 = vmatpush1.bf16.msra.mxu0 %v13740
    %13975 = vmatprep.subr.bf16.mxu0 0
    %13976 = vmatpush1.bf16.msra.mxu0 %v13741
    %13977 = vmatprep.subr.bf16.mxu0 0
    %13978 = vmatpush1.bf16.msra.mxu0 %v13742
    %13979 = vmatprep.subr.bf16.mxu0 0
    %13980 = vmatpush1.bf16.msra.mxu0 %v13743
    %13981 = vmatprep.subr.bf16.mxu0 0
    %13982 = vmatpush1.bf16.msra.mxu0 %v13744
    %13983 = vmatprep.subr.bf16.mxu0 0
    %13984 = vmatpush1.bf16.msra.mxu0 %v13745
    %13985 = vmatprep.subr.bf16.mxu0 0
    %13986 = vmatpush1.bf16.msra.mxu0 %v13746
    %13987 = vmatprep.subr.bf16.mxu0 0
    %13988 = vmatpush1.bf16.msra.mxu0 %v13747
    %13989 = vmatprep.subr.bf16.mxu0 0
    %13990 = vmatpush1.bf16.msra.mxu0 %v13748
    %13991 = vmatprep.mubr.bf16.mxu0 %v13225
    %13992 = vmatmul.mubr.bf16.gmra.mrb[0].mxu0 %v13224
    %v13993 = vpop.f32.mrb[0].mxu0
    %v13994 = vadd.f32 %v13954, %v13993
    %v13995 = vpop.f32.mrb[0].mxu0
    %v13996 = vpop.f32.mrb[0].mxu0
    %v13997 = vpop.f32.mrb[0].mxu0
    %13998 = vdwg.mxu0
    %13999 = vmatprep.subr.bf16.mxu0 0
    %14000 = vmatpush1.bf16.msra.mxu0 %v13749
    %14001 = vmatprep.subr.bf16.mxu0 0
    %14002 = vmatpush1.bf16.msra.mxu0 %v13750
    %14003 = vmatprep.subr.bf16.mxu0 0
    %14004 = vmatpush1.bf16.msra.mxu0 %v13751
    %14005 = vmatprep.subr.bf16.mxu0 0
    %14006 = vmatpush1.bf16.msra.mxu0 %v13752
    %14007 = vmatprep.subr.bf16.mxu0 0
    %14008 = vmatpush1.bf16.msra.mxu0 %v13753
    %14009 = vmatprep.subr.bf16.mxu0 0
    %14010 = vmatpush1.bf16.msra.mxu0 %v13754
    %14011 = vmatprep.subr.bf16.mxu0 0
    %14012 = vmatpush1.bf16.msra.mxu0 %v13755
    %14013 = vmatprep.subr.bf16.mxu0 0
    %14014 = vmatpush1.bf16.msra.mxu0 %v13756
    %14015 = vmatprep.subr.bf16.mxu0 0
    %14016 = vmatpush1.bf16.msra.mxu0 %v13757
    %14017 = vmatprep.subr.bf16.mxu0 0
    %14018 = vmatpush1.bf16.msra.mxu0 %v13758
    %14019 = vmatprep.subr.bf16.mxu0 0
    %14020 = vmatpush1.bf16.msra.mxu0 %v13759
    %14021 = vmatprep.subr.bf16.mxu0 0
    %14022 = vmatpush1.bf16.msra.mxu0 0
    %14023 = vmatprep.subr.bf16.mxu0 0
    %14024 = vmatpush1.bf16.msra.mxu0 0
    %14025 = vmatprep.subr.bf16.mxu0 0
    %14026 = vmatpush1.bf16.msra.mxu0 0
    %14027 = vmatprep.subr.bf16.mxu0 0
    %14028 = vmatpush1.bf16.msra.mxu0 0
    %14029 = vmatprep.subr.bf16.mxu0 0
    %14030 = vmatpush1.bf16.msra.mxu0 0
    %14031 = vmatprep.mubr.bf16.mxu0 %v13837
    %14032 = vmatmul.mubr.bf16.gmra.mrb[0].mxu0 %v13226
    %v14033 = vpop.f32.mrb[0].mxu0
    %v14034 = vadd.f32 %v13994, %v14033
    %v14035 = vpop.f32.mrb[0].mxu0
    %v14036 = vpop.f32.mrb[0].mxu0
    %v14037 = vpop.f32.mrb[0].mxu0
    %14038 = vdwg.mxu0
    %vm14039 = vcmask 91136
    %v14040 = vsel %vm14039, %v14034, -inf
    %14041 = vmax.xlane.f32.xlu0 %v14040
    %v14042 = vpop.xlane.xlu0 %14041
    %v14043 = vsub.f32 %v14034, %v14042
    %v14044 = vmul.f32 %v14043, 1.442695
    %v14045 = vpow.pop %v14044
    %v14046 = vsel %vm14039, %v14045, 0.0
    %14047 = vadd.xlane.f32.xlu0 %v14046
    %v14048 = vpop.xlane.xlu0 %14047
    %v14049 = vrcp.pop %v14048
    %v14050 = vmul.f32 %v14045, %v14049
    %14051 = vst.msk [vmem:[#allocation2] sm:$0x3] %vm14039, %v14050
    // Predicated region
    $region102: #{model_forward.1} parent=1 // pred_check
      _
    $region103: #{model_forward.1} parent=1 // pred_check_branch
      %14053 = sbr.rel (0) target = $region105
    $region104: #{model_forward.1} parent=1 // pred_region
      %s14055 = ssub.s32 32, 32
      %14056 = vsyncadd [#allocation3], %s14055
      %s14058 = sshll.u32 [#allocation2], 4
      %s14059 = int_to_ptr.vmem [resolvable:$true] %s14058
      %14061 = dma.vmem_to_hbm [thread:$0]  %s14059, 32, %s25, [#allocation3]
    $region105: #{model_forward.1} parent=1 // pred_fallthru
      _
    // Predicated region
    $region106: #{model_forward.1} parent=1 // pred_check
      _
    $region107: #{model_forward.1} parent=1 // pred_check_branch
      %14063 = sbr.rel (0) target = $region109
    $region108: #{model_forward.1} parent=1 // pred_region
      %14064 = dma.done [#allocation3], 32
    $region109: #{model_forward.1} parent=1 // pred_fallthru
      _
    %14065 = vsyncpa [#allocation3], 1

</llo_original>
